<compile_context>
chip_gen: v7x
topology: tpu7x:2x2x1
jax: 0.10.0
libtpu: 0.0.40
codegen_flags: <defaults>
</compile_context>

<pallas_src>
import functools
import math

import jax
import jax.numpy as jnp
from jax.experimental import pallas as pl
from jax.experimental.pallas import tpu as pltpu
from jax.scipy.linalg import block_diag

# ---------------- small, module-consistent config ----------------
PATCH = 4          # ClimaX patch_size=4
EMBED_DIM = 128    # (512 in the real model; shrunk for a small synthetic run)
DEPTH = 2          # (8 in the real model)
NUM_HEADS = 4      # (8 in the real model)
MLP_RATIO = 4
DECODER_DEPTH = 2
INPUT_VARS = 4     # number of input variables / channels
OUT_VARS = 1       # PM2.5 only (adapted head: out dim = 1 * patch**2)
LANE = 128         # TPU lane width
VMEM_LIMIT = 48 * 1024 * 1024   # explicit scoped-VMEM budget (v7x-safe)


# ---------------- in-kernel math helpers (f32 stats, bf16 MXU) ----------------
def _bf16(x):
    return x.astype(jnp.bfloat16)


def _dot(a, b):
    # bf16 MXU operands, f32 accumulation.
    return jnp.dot(_bf16(a), _bf16(b), preferred_element_type=jnp.float32)


def _layernorm(x, g, b, eps=1e-5):
    mu = jnp.mean(x, axis=-1, keepdims=True)
    xc = x - mu
    var = jnp.mean(xc * xc, axis=-1, keepdims=True)
    return xc * jax.lax.rsqrt(var + eps) * g + b


def _erf(x):
    # Abramowitz & Stegun 7.1.26 rational approximation, |err| <= 1.5e-7,
    # matches nn.GELU() (exact erf) to well below bf16 noise.
    a1, a2, a3, a4, a5 = (0.254829592, -0.284496736, 1.421413741,
                          -1.453152027, 1.061405429)
    pp = 0.3275911
    ax = jnp.abs(x)
    t = 1.0 / (1.0 + pp * ax)
    poly = ((((a5 * t + a4) * t + a3) * t + a2) * t + a1) * t
    y = 1.0 - poly * jnp.exp(-ax * ax)
    return jnp.where(x < 0.0, -y, y)


def _gelu(x):
    return 0.5 * x * (1.0 + _erf(x * 0.7071067811865476))


def _round_up(x, m):
    return ((x + m - 1) // m) * m


# ---------------- tiling helpers ----------------
def _row_cap():
    # Per-generation row-tile cap: v7x has 64 MiB VMEM (keep tiles smaller),
    # v5e/v6e have 128 MiB (bigger tiles recover the last % of HBM roofline).
    try:
        if pltpu.get_tpu_info().vmem_capacity_bytes <= 64 * 1024 * 1024:
            return 256
    except Exception:
        pass
    return 512


def _rows_tile(m, cap):
    """Row tile: multiple of 8, <= cap, >= 2 grid steps when possible (megacore)."""
    m8 = _round_up(max(m, 1), 8)
    t = min(cap, m8)
    if m8 > 8 and m8 <= t:           # would otherwise be a single grid step
        t = _round_up(m8 // 2, 8)
    return t


def _batch_tile(batch, seq, row_cap):
    """Largest divisor bt of batch with bt*seq <= row_cap and >=2 grid steps."""
    best = 1
    for bt in range(1, batch + 1):
        if batch % bt != 0 or bt * seq > row_cap:
            continue
        if batch >= 2 and batch // bt < 2:
            continue                  # keep both v7x TensorCores busy
        best = bt
    return best


def _const_spec(a):
    nd = a.ndim
    return pl.BlockSpec(a.shape, lambda *_: (0,) * nd)


# ---------------- Pallas kernels ----------------
def _var_agg_kernel(xp_ref, wsc_ref, bsc_ref, wval_ref, bval_ref, e_ref,
                    wo_ref, extra_ref, o_ref, *, n_vars, heads, d_model):
    """Lane-packed patch embed + Lq=1 variable-aggregation MHA + out proj."""
    xp = xp_ref[...]                                            # (TM, V*P2)
    scores = _dot(xp, wsc_ref[...]) + bsc_ref[...]              # (TM, V*H)
    vals = _dot(xp, wval_ref[...]) + bval_ref[...]              # (TM, V*D)

    # softmax over variables, per head (f32 stats)
    chunks = [scores[:, v * heads:(v + 1) * heads] for v in range(n_vars)]
    m = chunks[0]
    for c in chunks[1:]:
        m = jnp.maximum(m, c)
    exps = [jnp.exp(c - m) for c in chunks]
    den = exps[0]
    for ex in exps[1:]:
        den = den + ex
    inv = pl.reciprocal(den, approx=True)                       # EUP slot

    agg = None
    for v in range(n_vars):
        w_full = _dot(exps[v] * inv, e_ref[...])                # (TM, D) head-broadcast
        contrib = w_full * vals[:, v * d_model:(v + 1) * d_model]
        agg = contrib if agg is None else agg + contrib

    o_ref[...] = _dot(agg, wo_ref[...]) + extra_ref[...]        # + pos + lt + bo


def _encoder_head_kernel(x_ref,
                         ln1g_ref, ln1b_ref, qkvw_ref, qkvb_ref,
                         projw_ref, projb_ref, ln2g_ref, ln2b_ref,
                         fc1w_ref, fc1b_ref, fc2w_ref, fc2b_ref,
                         ng_ref, nb_ref, hw_ref, hb_ref, w2_ref, b2_ref,
                         o_ref,
                         xs_ref, att_ref,
                         *, num_heads, head_dim, bt, seq, n_dec):
    """Full encoder stack (one depth step per grid iter) + final norm + head.

    Activations live in the VMEM scratch xs_ref across all depth steps; the
    prediction-head output is written only at the last depth step.
    """
    d = num_heads * head_dim
    rows = bt * seq
    dd = pl.program_id(1)

    @pl.when(dd == 0)
    def _():
        xs_ref[...] = x_ref[...].reshape(rows, d)

    x = xs_ref[...]                                             # (rows, D) f32

    # ---- attention (Q pre-scaled into the QKV weights) ----
    h1 = _layernorm(x, ln1g_ref[0], ln1b_ref[0])
    qkv = _dot(h1, qkvw_ref[0]) + qkvb_ref[0]                   # (rows, 3D)
    q3 = qkv[:, :d].reshape(bt, seq, d)
    k3 = qkv[:, d:2 * d].reshape(bt, seq, d)
    v3 = qkv[:, 2 * d:].reshape(bt, seq, d)
    for h in range(num_heads):
        sl = slice(h * head_dim, (h + 1) * head_dim)
        s = jnp.einsum("bqd,bkd->bqk", _bf16(q3[:, :, sl]), _bf16(k3[:, :, sl]),
                       preferred_element_type=jnp.float32)      # (bt, seq, seq)
        s = s - jnp.max(s, axis=-1, keepdims=True)
        p = jnp.exp(s)
        p = p * pl.reciprocal(jnp.sum(p, axis=-1, keepdims=True), approx=True)
        oh = jnp.einsum("bqk,bkd->bqd", _bf16(p), _bf16(v3[:, :, sl]),
                        preferred_element_type=jnp.float32)     # (bt, seq, dh)
        att_ref[:, :, sl] = oh                                  # write into slab
    att = att_ref[...].reshape(rows, d)

    x = x + _dot(att, projw_ref[0]) + projb_ref[0]              # residual 1

    # ---- MLP ----
    h2 = _layernorm(x, ln2g_ref[0], ln2b_ref[0])
    ff = _gelu(_dot(h2, fc1w_ref[0]) + fc1b_ref[0])             # (rows, 4D), f32 GELU
    x = x + _dot(ff, fc2w_ref[0]) + fc2b_ref[0]                 # residual 2
    xs_ref[...] = x

    # ---- final norm + prediction head, only at the last depth step ----
    @pl.when(dd == pl.num_programs(1) - 1)
    def _():
        hfin = _layernorm(x, ng_ref[...], nb_ref[...])
        for i in range(n_dec):
            hfin = _gelu(_dot(hfin, hw_ref[i]) + hb_ref[i])
        pred = _dot(hfin, w2_ref[...]) + b2_ref[...]            # (rows, out_pad)
        o_ref[...] = pred.reshape(o_ref.shape)


# ---------------- pallas_call wrappers ----------------
def fused_var_agg(xp, agg, extra, *, heads):
    m, vp2 = xp.shape
    d = agg["wo"].shape[-1]
    n_vars = agg["wsc"].shape[1] // heads

    tm = _rows_tile(m, cap=_row_cap())
    grid_m = pl.cdiv(m, tm)
    m_pad = grid_m * tm
    if m_pad != m:
        xp = jnp.pad(xp, ((0, m_pad - m), (0, 0)))
        extra = jnp.pad(extra, ((0, m_pad - m), (0, 0)))

    kernel = functools.partial(_var_agg_kernel, n_vars=n_vars, heads=heads,
                               d_model=d)
    out = pl.pallas_call(
        kernel,
        out_shape=jax.ShapeDtypeStruct((m_pad, d), jnp.float32),
        grid=(grid_m,),
        in_specs=[pl.BlockSpec((tm, vp2), lambda i: (i, 0)),
                  _const_spec(agg["wsc"]), _const_spec(agg["bsc"]),
                  _const_spec(agg["wval"]), _const_spec(agg["bval"]),
                  _const_spec(agg["e"]), _const_spec(agg["wo"]),
                  pl.BlockSpec((tm, d), lambda i: (i, 0))],
        out_specs=pl.BlockSpec((tm, d), lambda i: (i, 0)),
        input_output_aliases={7: 0},      # alias `extra` with the output
        compiler_params=pltpu.CompilerParams(
            dimension_semantics=("parallel",),
            vmem_limit_bytes=VMEM_LIMIT),
    )(xp, agg["wsc"], agg["bsc"], agg["wval"], agg["bval"],
      agg["e"], agg["wo"], extra)
    return out[:m] if m_pad != m else out


def fused_encoder_head(x3, enc, head, *, num_heads, head_dim):
    b, seq, d = x3.shape
    depth = enc["qkv_w"].shape[0]
    hidden = enc["fc1_w"].shape[-1]
    n_dec = head["hw"].shape[0]
    out_pad = head["w2"].shape[-1]

    bt = _batch_tile(b, seq, row_cap=min(256, _row_cap()))
    kernel = functools.partial(_encoder_head_kernel, num_heads=num_heads,
                               head_dim=head_dim, bt=bt, seq=seq, n_dec=n_dec)

    def xmap(i, dd):
        return (i, 0, 0)

    def wmap(i, dd):
        return (dd, 0, 0)

    # NOTE: constant-index blocks are DMA'd once by the pipeline; the
    # depth-indexed weight blocks double-buffer so block d+1 prefetches while
    # block d computes.
    return pl.pallas_call(
        kernel,
        out_shape=jax.ShapeDtypeStruct((b, seq, out_pad), jnp.float32),
        grid=(b // bt, depth),
        in_specs=[
            pl.BlockSpec((bt, seq, d), xmap),
            pl.BlockSpec((1, 1, d), wmap),        # ln1_g
            pl.BlockSpec((1, 1, d), wmap),        # ln1_b
            pl.BlockSpec((1, d, 3 * d), wmap),    # qkv_w
            pl.BlockSpec((1, 1, 3 * d), wmap),    # qkv_b
            pl.BlockSpec((1, d, d), wmap),        # proj_w
            pl.BlockSpec((1, 1, d), wmap),        # proj_b
            pl.BlockSpec((1, 1, d), wmap),        # ln2_g
            pl.BlockSpec((1, 1, d), wmap),        # ln2_b
            pl.BlockSpec((1, d, hidden), wmap),   # fc1_w
            pl.BlockSpec((1, 1, hidden), wmap),   # fc1_b
            pl.BlockSpec((1, hidden, d), wmap),   # fc2_w
            pl.BlockSpec((1, 1, d), wmap),        # fc2_b
            _const_spec(head["norm_g"]), _const_spec(head["norm_b"]),
            _const_spec(head["hw"]), _const_spec(head["hb"]),
            _const_spec(head["w2"]), _const_spec(head["b2"]),
        ],
        out_specs=pl.BlockSpec((bt, seq, out_pad), xmap),
        scratch_shapes=[pltpu.VMEM((bt * seq, d), jnp.float32),   # resident x
                        pltpu.VMEM((bt, seq, d), jnp.float32)],   # head slab
        compiler_params=pltpu.CompilerParams(
            dimension_semantics=("parallel", "arbitrary"),
            vmem_limit_bytes=VMEM_LIMIT),
    )(x3,
      enc["ln1_g"], enc["ln1_b"], enc["qkv_w"], enc["qkv_b"],
      enc["proj_w"], enc["proj_b"], enc["ln2_g"], enc["ln2_b"],
      enc["fc1_w"], enc["fc1_b"], enc["fc2_w"], enc["fc2_b"],
      head["norm_g"], head["norm_b"], head["hw"], head["hb"],
      head["w2"], head["b2"])


# ---------------- deterministic parameter init ----------------
def init_params(key, V, D, depth, heads, mlp_ratio, patch, L,
                decoder_depth, out_dim):
    def nrm(k, shape, scale=0.02):
        return scale * jax.random.normal(k, shape, dtype=jnp.float32)

    keys = iter(jax.random.split(key, 128))
    P2 = patch * patch
    hidden = int(D * mlp_ratio)
    p = {
        "patch_w": nrm(next(keys), (V, P2, D)),
        "patch_b": nrm(next(keys), (V, 1, D)),
        "var_embed": nrm(next(keys), (V, D)),
        "var_query": nrm(next(keys), (1, D)),
        "agg_wq": nrm(next(keys), (D, D)), "agg_bq": jnp.zeros((D,), jnp.float32),
        "agg_wk": nrm(next(keys), (D, D)), "agg_bk": jnp.zeros((D,), jnp.float32),
        "agg_wv": nrm(next(keys), (D, D)), "agg_bv": jnp.zeros((D,), jnp.float32),
        "agg_wo": nrm(next(keys), (D, D)), "agg_bo": jnp.zeros((D,), jnp.float32),
        "pos_embed": nrm(next(keys), (1, L, D)),
        "lt_w": nrm(next(keys), (1, D)), "lt_b": jnp.zeros((D,), jnp.float32),
        "norm_g": jnp.ones((D,), jnp.float32),
        "norm_b": jnp.zeros((D,), jnp.float32),
    }
    blocks = []
    for _ in range(depth):
        blocks.append({
            "ln1_g": jnp.ones((D,), jnp.float32), "ln1_b": jnp.zeros((D,), jnp.float32),
            "qkv_w": nrm(next(keys), (D, 3 * D)), "qkv_b": jnp.zeros((3 * D,), jnp.float32),
            "proj_w": nrm(next(keys), (D, D)), "proj_b": jnp.zeros((D,), jnp.float32),
            "ln2_g": jnp.ones((D,), jnp.float32), "ln2_b": jnp.zeros((D,), jnp.float32),
            "fc1_w": nrm(next(keys), (D, hidden)), "fc1_b": jnp.zeros((hidden,), jnp.float32),
            "fc2_w": nrm(next(keys), (hidden, D)), "fc2_b": jnp.zeros((D,), jnp.float32),
        })
    p["blocks"] = blocks
    head = []
    for _ in range(decoder_depth):
        head.append((nrm(next(keys), (D, D)), jnp.zeros((D,), jnp.float32)))
    head.append((nrm(next(keys), (D, out_dim)), jnp.zeros((out_dim,), jnp.float32)))
    p["head"] = head
    return p


# ---------------- one-time parameter folding / bf16 casting (hoisted) ----------------
def prepare_params(params, *, heads):
    """Fold patch-embed + aggregation-Q into the score/value weights, stack the
    per-block encoder weights along a depth axis, pre-scale Q, cast MXU weights
    to bf16.  Called ONCE (eagerly), outside the jitted forward."""
    f32, bf16 = jnp.float32, jnp.bfloat16
    V, P2, D = params["patch_w"].shape
    dh = D // heads
    scale = 1.0 / math.sqrt(dh)

    # ---- variable-aggregation folds ----
    wk_fold = jnp.einsum("vpd,de->vpe", params["patch_w"], params["agg_wk"])
    wv_fold = jnp.einsum("vpd,de->vpe", params["patch_w"], params["agg_wv"])
    base = params["patch_b"][:, 0, :] + params["var_embed"]            # (V, D)
    bk_fold = base @ params["agg_wk"] + params["agg_bk"][None, :]      # (V, D)
    bv_fold = base @ params["agg_wv"] + params["agg_bv"][None, :]      # (V, D)

    qvec = ((params["var_query"] @ params["agg_wq"]
             + params["agg_bq"][None, :]) * scale)[0]                  # (D,)
    head_id = jnp.arange(D) // dh
    qh = jnp.where(head_id[:, None] == jnp.arange(heads)[None, :],
                   qvec[:, None], 0.0)                                 # (D, H)
    e = (jnp.arange(heads)[:, None] == head_id[None, :]).astype(f32)   # (H, D)

    # fold qh into the K path: scores_v = xv @ (wk_fold_v @ qh) + bk_fold_v @ qh
    ws = jnp.einsum("vpd,dh->vph", wk_fold, qh)                        # (V, P2, H)
    bs = bk_fold @ qh                                                  # (V, H)
    wsc = block_diag(*[ws[v] for v in range(V)])                       # (V*P2, V*H)
    wval = block_diag(*[wv_fold[v] for v in range(V)])                 # (V*P2, V*D)

    # pos embed + lead-time(6.0) embed + out-proj bias, per sequence position
    # TODO(synk): lead time is hard-coded to 6.0 to match the torch wrapper.
    lt_vec = 6.0 * params["lt_w"][0] + params["lt_b"]                  # (D,)
    extra_l = params["pos_embed"][0] + lt_vec[None, :] + params["agg_bo"][None, :]

    agg = dict(
        wsc=wsc.astype(bf16), bsc=bs.reshape(1, V * heads),
        wval=wval.astype(bf16), bval=bv_fold.reshape(1, V * D),
        e=e.astype(bf16), wo=params["agg_wo"].astype(bf16),
        extra_l=extra_l)

    # ---- encoder: stack weights along depth, fold attn scale into Q ----
    depth = len(params["blocks"])
    hidden = params["blocks"][0]["fc1_w"].shape[-1]
    qscale = jnp.concatenate([jnp.full((D,), scale, f32),
                              jnp.ones((2 * D,), f32)])

    def stack(name):
        return jnp.stack([blk[name] for blk in params["blocks"]])

    enc = dict(
        ln1_g=stack("ln1_g").reshape(depth, 1, D),
        ln1_b=stack("ln1_b").reshape(depth, 1, D),
        qkv_w=(stack("qkv_w") * qscale[None, None, :]).astype(bf16),
        qkv_b=(stack("qkv_b") * qscale[None, :]).reshape(depth, 1, 3 * D),
        proj_w=stack("proj_w").astype(bf16),
        proj_b=stack("proj_b").reshape(depth, 1, D),
        ln2_g=stack("ln2_g").reshape(depth, 1, D),
        ln2_b=stack("ln2_b").reshape(depth, 1, D),
        fc1_w=stack("fc1_w").astype(bf16),
        fc1_b=stack("fc1_b").reshape(depth, 1, hidden),
        fc2_w=stack("fc2_w").astype(bf16),
        fc2_b=stack("fc2_b").reshape(depth, 1, D))

    # ---- head: final norm + decoder MLPs, last layer padded to 128 lanes ----
    hidden_layers = params["head"][:-1]
    w2, b2 = params["head"][-1]
    out_dim = w2.shape[1]
    out_pad = max(LANE, _round_up(out_dim, LANE))
    hw = jnp.stack([w for (w, _) in hidden_layers]).astype(bf16)       # (ndec, D, D)
    hb = jnp.stack([b.reshape(1, D) for (_, b) in hidden_layers])      # (ndec, 1, D)
    w2p = jnp.zeros((D, out_pad), f32).at[:, :out_dim].set(w2).astype(bf16)
    b2p = jnp.zeros((1, out_pad), f32).at[0, :out_dim].set(b2)
    head = dict(norm_g=params["norm_g"].reshape(1, D),
                norm_b=params["norm_b"].reshape(1, D),
                hw=hw, hb=hb, w2=w2p, b2=b2p)

    return dict(agg=agg, enc=enc, head=head)


# ---------------- forward pass ----------------
def climax_pm25_forward(prep, x):
    if x.ndim == 5:                       # (B, T, V, H, W) -> keep last time step
        x = x[:, -1]
    B, V, H, W = x.shape
    p = PATCH
    h, w = H // p, W // p
    L = h * w
    M = B * L
    D = prep["agg"]["wo"].shape[-1]
    heads = NUM_HEADS
    dh = D // heads
    out_dim = OUT_VARS * p * p

    # ---- patchify to (M, V*P2): lane-packed variables -- layout glue only ----
    xp = x.reshape(B, V, h, p, w, p)
    xp = xp.transpose(0, 2, 4, 1, 3, 5).reshape(M, V * p * p)

    # pos + lead-time + out-bias term, broadcast over batch (lead time constant)
    extra = jnp.broadcast_to(prep["agg"]["extra_l"][None], (B, L, D)).reshape(M, D)

    # ---- kernel 1: fused patch-embed + variable aggregation + embeds ----
    x2d = fused_var_agg(xp, prep["agg"], extra, heads=heads)           # (M, D)

    # ---- kernel 2: fused encoder stack + final norm + prediction head ----
    x3 = x2d.reshape(B, L, D)
    preds = fused_encoder_head(x3, prep["enc"], prep["head"],
                               num_heads=heads, head_dim=dh)           # (B, L, pad)
    preds = preds[..., :out_dim]                                       # (B, L, p*p*c)

    # ---- unpatchify to (B, 1, H, W) ----
    c = out_dim // (p * p)
    preds = preds.reshape(B, h, w, p, p, c)
    preds = jnp.einsum("nhwpqc->nchpwq", preds)
    return preds.reshape(B, c, H, W)


if __name__ == "__main__":
    key = jax.random.PRNGKey(0)
    kx, kp = jax.random.split(key)

    B, T, V, H, W = 2, 3, INPUT_VARS, 16, 16
    x = jax.random.normal(kx, (B, T, V, H, W), dtype=jnp.float32)

    L = (H // PATCH) * (W // PATCH)
    params = init_params(kp, V, EMBED_DIM, DEPTH, NUM_HEADS, MLP_RATIO,
                         PATCH, L, DECODER_DEPTH, OUT_VARS * PATCH * PATCH)

    # Weight folding / bf16 casting hoisted out of the per-call forward.
    prep = prepare_params(params, heads=NUM_HEADS)

    fwd = jax.jit(climax_pm25_forward)
    out = jax.block_until_ready(fwd(prep, x))
    assert out.shape == (B, 1, H, W), out.shape
    assert bool(jnp.all(jnp.isfinite(out)))
    print("KERNEL_OK")
</pallas_src>

<mosaic_0001>
module attributes {stable_mosaic.version = 11 : i64} {
  func.func @_var_agg_kernel(%arg0: i32, %arg1: memref<16x64xf32, #tpu.memory_space<vmem>>, %arg2: memref<64x16xbf16, #tpu.memory_space<vmem>>, %arg3: memref<1x16xf32, #tpu.memory_space<vmem>>, %arg4: memref<64x512xbf16, #tpu.memory_space<vmem>>, %arg5: memref<1x512xf32, #tpu.memory_space<vmem>>, %arg6: memref<4x128xbf16, #tpu.memory_space<vmem>>, %arg7: memref<128x128xbf16, #tpu.memory_space<vmem>>, %arg8: memref<16x128xf32, #tpu.memory_space<vmem>>, %arg9: memref<16x128xf32, #tpu.memory_space<vmem>>) attributes {dimension_semantics = [#tpu.dimension_semantics<parallel>], iteration_bounds = array<i64: 2>, scalar_prefetch = 0 : i64, scratch_operands = 0 : i64, tpu.core_type = #tpu.core_type<tc>, window_params = [{transform_indices = @transform_0, window_bounds = array<i64: 16, 64>}, {pipeline_mode = #tpu.pipeline_mode<synchronous>, transform_indices = @transform_1, window_bounds = array<i64: 64, 16>}, {pipeline_mode = #tpu.pipeline_mode<synchronous>, transform_indices = @transform_2, window_bounds = array<i64: 1, 16>}, {pipeline_mode = #tpu.pipeline_mode<synchronous>, transform_indices = @transform_3, window_bounds = array<i64: 64, 512>}, {pipeline_mode = #tpu.pipeline_mode<synchronous>, transform_indices = @transform_4, window_bounds = array<i64: 1, 512>}, {pipeline_mode = #tpu.pipeline_mode<synchronous>, transform_indices = @transform_5, window_bounds = array<i64: 4, 128>}, {pipeline_mode = #tpu.pipeline_mode<synchronous>, transform_indices = @transform_6, window_bounds = array<i64: 128, 128>}, {transform_indices = @transform_7, window_bounds = array<i64: 16, 128>}, {transform_indices = @transform_8, window_bounds = array<i64: 16, 128>}]} {
    %c0 = arith.constant 0 : index
    %c0_0 = arith.constant 0 : index
    %0 = vector.load %arg1[%c0, %c0_0] : memref<16x64xf32, #tpu.memory_space<vmem>>, vector<16x64xf32>
    %c0_1 = arith.constant 0 : index
    %c0_2 = arith.constant 0 : index
    %1 = vector.load %arg2[%c0_1, %c0_2] : memref<64x16xbf16, #tpu.memory_space<vmem>>, vector<64x16xbf16>
    %2 = arith.truncf %0 : vector<16x64xf32> to vector<16x64xbf16>
    %cst = arith.constant dense<0.000000e+00> : vector<16x16xf32>
    %3 = tpu.matmul %2, %1, %cst {dimension_numbers = #tpu.dot_dimension_numbers<[1], [0], [0], [1], [0, 0, 1, 1], [], []>} : vector<16x64xbf16>, vector<64x16xbf16>, vector<16x16xf32> -> vector<16x16xf32>
    %c0_3 = arith.constant 0 : index
    %c0_4 = arith.constant 0 : index
    %4 = vector.load %arg3[%c0_3, %c0_4] : memref<1x16xf32, #tpu.memory_space<vmem>>, vector<1x16xf32>
    %5 = vector.broadcast %4 : vector<1x16xf32> to vector<16x16xf32>
    %6 = arith.addf %3, %5 : vector<16x16xf32>
    %c0_5 = arith.constant 0 : index
    %c0_6 = arith.constant 0 : index
    %7 = vector.load %arg4[%c0_5, %c0_6] : memref<64x512xbf16, #tpu.memory_space<vmem>>, vector<64x512xbf16>
    %8 = arith.truncf %0 : vector<16x64xf32> to vector<16x64xbf16>
    %cst_7 = arith.constant dense<0.000000e+00> : vector<16x512xf32>
    %9 = tpu.matmul %8, %7, %cst_7 {dimension_numbers = #tpu.dot_dimension_numbers<[1], [0], [0], [1], [0, 0, 1, 1], [], []>} : vector<16x64xbf16>, vector<64x512xbf16>, vector<16x512xf32> -> vector<16x512xf32>
    %c0_8 = arith.constant 0 : index
    %c0_9 = arith.constant 0 : index
    %10 = vector.load %arg5[%c0_8, %c0_9] : memref<1x512xf32, #tpu.memory_space<vmem>>, vector<1x512xf32>
    %11 = vector.broadcast %10 : vector<1x512xf32> to vector<16x512xf32>
    %12 = arith.addf %9, %11 : vector<16x512xf32>
    %13 = vector.extract_strided_slice %6 {offsets = [0, 0], sizes = [16, 4], strides = [1, 1]} : vector<16x16xf32> to vector<16x4xf32>
    %14 = vector.extract_strided_slice %6 {offsets = [0, 4], sizes = [16, 4], strides = [1, 1]} : vector<16x16xf32> to vector<16x4xf32>
    %15 = vector.extract_strided_slice %6 {offsets = [0, 8], sizes = [16, 4], strides = [1, 1]} : vector<16x16xf32> to vector<16x4xf32>
    %16 = vector.extract_strided_slice %6 {offsets = [0, 12], sizes = [16, 4], strides = [1, 1]} : vector<16x16xf32> to vector<16x4xf32>
    %17 = arith.maximumf %13, %14 : vector<16x4xf32>
    %18 = arith.maximumf %17, %15 : vector<16x4xf32>
    %19 = arith.maximumf %18, %16 : vector<16x4xf32>
    %20 = arith.subf %13, %19 : vector<16x4xf32>
    %21 = math.exp %20 : vector<16x4xf32>
    %22 = arith.subf %14, %19 : vector<16x4xf32>
    %23 = math.exp %22 : vector<16x4xf32>
    %24 = arith.subf %15, %19 : vector<16x4xf32>
    %25 = math.exp %24 : vector<16x4xf32>
    %26 = arith.subf %16, %19 : vector<16x4xf32>
    %27 = math.exp %26 : vector<16x4xf32>
    %28 = arith.addf %21, %23 : vector<16x4xf32>
    %29 = arith.addf %28, %25 : vector<16x4xf32>
    %30 = arith.addf %29, %27 : vector<16x4xf32>
    %31 = tpu.reciprocal %30 {approx = true} : vector<16x4xf32> -> vector<16x4xf32>
    %32 = arith.mulf %21, %31 : vector<16x4xf32>
    %c0_10 = arith.constant 0 : index
    %c0_11 = arith.constant 0 : index
    %33 = vector.load %arg6[%c0_10, %c0_11] : memref<4x128xbf16, #tpu.memory_space<vmem>>, vector<4x128xbf16>
    %34 = arith.truncf %32 : vector<16x4xf32> to vector<16x4xbf16>
    %cst_12 = arith.constant dense<0.000000e+00> : vector<16x128xf32>
    %35 = tpu.matmul %34, %33, %cst_12 {dimension_numbers = #tpu.dot_dimension_numbers<[1], [0], [0], [1], [0, 0, 1, 1], [], []>} : vector<16x4xbf16>, vector<4x128xbf16>, vector<16x128xf32> -> vector<16x128xf32>
    %36 = vector.extract_strided_slice %12 {offsets = [0, 0], sizes = [16, 128], strides = [1, 1]} : vector<16x512xf32> to vector<16x128xf32>
    %37 = arith.mulf %35, %36 : vector<16x128xf32>
    %38 = arith.mulf %23, %31 : vector<16x4xf32>
    %c0_13 = arith.constant 0 : index
    %c0_14 = arith.constant 0 : index
    %39 = vector.load %arg6[%c0_13, %c0_14] : memref<4x128xbf16, #tpu.memory_space<vmem>>, vector<4x128xbf16>
    %40 = arith.truncf %38 : vector<16x4xf32> to vector<16x4xbf16>
    %cst_15 = arith.constant dense<0.000000e+00> : vector<16x128xf32>
    %41 = tpu.matmul %40, %39, %cst_15 {dimension_numbers = #tpu.dot_dimension_numbers<[1], [0], [0], [1], [0, 0, 1, 1], [], []>} : vector<16x4xbf16>, vector<4x128xbf16>, vector<16x128xf32> -> vector<16x128xf32>
    %42 = vector.extract_strided_slice %12 {offsets = [0, 128], sizes = [16, 128], strides = [1, 1]} : vector<16x512xf32> to vector<16x128xf32>
    %43 = arith.mulf %41, %42 : vector<16x128xf32>
    %44 = arith.addf %37, %43 : vector<16x128xf32>
    %45 = arith.mulf %25, %31 : vector<16x4xf32>
    %c0_16 = arith.constant 0 : index
    %c0_17 = arith.constant 0 : index
    %46 = vector.load %arg6[%c0_16, %c0_17] : memref<4x128xbf16, #tpu.memory_space<vmem>>, vector<4x128xbf16>
    %47 = arith.truncf %45 : vector<16x4xf32> to vector<16x4xbf16>
    %cst_18 = arith.constant dense<0.000000e+00> : vector<16x128xf32>
    %48 = tpu.matmul %47, %46, %cst_18 {dimension_numbers = #tpu.dot_dimension_numbers<[1], [0], [0], [1], [0, 0, 1, 1], [], []>} : vector<16x4xbf16>, vector<4x128xbf16>, vector<16x128xf32> -> vector<16x128xf32>
    %49 = vector.extract_strided_slice %12 {offsets = [0, 256], sizes = [16, 128], strides = [1, 1]} : vector<16x512xf32> to vector<16x128xf32>
    %50 = arith.mulf %48, %49 : vector<16x128xf32>
    %51 = arith.addf %44, %50 : vector<16x128xf32>
    %52 = arith.mulf %27, %31 : vector<16x4xf32>
    %c0_19 = arith.constant 0 : index
    %c0_20 = arith.constant 0 : index
    %53 = vector.load %arg6[%c0_19, %c0_20] : memref<4x128xbf16, #tpu.memory_space<vmem>>, vector<4x128xbf16>
    %54 = arith.truncf %52 : vector<16x4xf32> to vector<16x4xbf16>
    %cst_21 = arith.constant dense<0.000000e+00> : vector<16x128xf32>
    %55 = tpu.matmul %54, %53, %cst_21 {dimension_numbers = #tpu.dot_dimension_numbers<[1], [0], [0], [1], [0, 0, 1, 1], [], []>} : vector<16x4xbf16>, vector<4x128xbf16>, vector<16x128xf32> -> vector<16x128xf32>
    %56 = vector.extract_strided_slice %12 {offsets = [0, 384], sizes = [16, 128], strides = [1, 1]} : vector<16x512xf32> to vector<16x128xf32>
    %57 = arith.mulf %55, %56 : vector<16x128xf32>
    %58 = arith.addf %51, %57 : vector<16x128xf32>
    %c0_22 = arith.constant 0 : index
    %c0_23 = arith.constant 0 : index
    %59 = vector.load %arg7[%c0_22, %c0_23] : memref<128x128xbf16, #tpu.memory_space<vmem>>, vector<128x128xbf16>
    %60 = arith.truncf %58 : vector<16x128xf32> to vector<16x128xbf16>
    %cst_24 = arith.constant dense<0.000000e+00> : vector<16x128xf32>
    %61 = tpu.matmul %60, %59, %cst_24 {dimension_numbers = #tpu.dot_dimension_numbers<[1], [0], [0], [1], [0, 0, 1, 1], [], []>} : vector<16x128xbf16>, vector<128x128xbf16>, vector<16x128xf32> -> vector<16x128xf32>
    %c0_25 = arith.constant 0 : index
    %c0_26 = arith.constant 0 : index
    %62 = vector.load %arg8[%c0_25, %c0_26] : memref<16x128xf32, #tpu.memory_space<vmem>>, vector<16x128xf32>
    %63 = arith.addf %61, %62 : vector<16x128xf32>
    %c0_27 = arith.constant 0 : index
    %c0_28 = arith.constant 0 : index
    %64 = vector.load %arg9[%c0_27, %c0_28] : memref<16x128xf32, #tpu.memory_space<vmem>>, vector<16x128xf32>
    tpu.vector_store %arg9[%c0_27, %c0_28], %63 {strides = array<i32>} : memref<16x128xf32, #tpu.memory_space<vmem>>, vector<16x128xf32>,
    return
  }
  func.func @transform_0(%arg0: i32) -> (i32, i32) {
    %c0_i32 = arith.constant 0 : i32
    %c0_i32_0 = arith.constant 0 : i32
    return %arg0, %c0_i32 : i32, i32
  }
  func.func @transform_1(%arg0: i32) -> (i32, i32) {
    %c0_i32 = arith.constant 0 : i32
    %c0_i32_0 = arith.constant 0 : i32
    %c0_i32_1 = arith.constant 0 : i32
    return %c0_i32, %c0_i32_0 : i32, i32
  }
  func.func @transform_2(%arg0: i32) -> (i32, i32) {
    %c0_i32 = arith.constant 0 : i32
    %c0_i32_0 = arith.constant 0 : i32
    %c0_i32_1 = arith.constant 0 : i32
    return %c0_i32, %c0_i32_0 : i32, i32
  }
  func.func @transform_3(%arg0: i32) -> (i32, i32) {
    %c0_i32 = arith.constant 0 : i32
    %c0_i32_0 = arith.constant 0 : i32
    %c0_i32_1 = arith.constant 0 : i32
    return %c0_i32, %c0_i32_0 : i32, i32
  }
  func.func @transform_4(%arg0: i32) -> (i32, i32) {
    %c0_i32 = arith.constant 0 : i32
    %c0_i32_0 = arith.constant 0 : i32
    %c0_i32_1 = arith.constant 0 : i32
    return %c0_i32, %c0_i32_0 : i32, i32
  }
  func.func @transform_5(%arg0: i32) -> (i32, i32) {
    %c0_i32 = arith.constant 0 : i32
    %c0_i32_0 = arith.constant 0 : i32
    %c0_i32_1 = arith.constant 0 : i32
    return %c0_i32, %c0_i32_0 : i32, i32
  }
  func.func @transform_6(%arg0: i32) -> (i32, i32) {
    %c0_i32 = arith.constant 0 : i32
    %c0_i32_0 = arith.constant 0 : i32
    %c0_i32_1 = arith.constant 0 : i32
    return %c0_i32, %c0_i32_0 : i32, i32
  }
  func.func @transform_7(%arg0: i32) -> (i32, i32) {
    %c0_i32 = arith.constant 0 : i32
    %c0_i32_0 = arith.constant 0 : i32
    return %arg0, %c0_i32 : i32, i32
  }
  func.func @transform_8(%arg0: i32) -> (i32, i32) {
    %c0_i32 = arith.constant 0 : i32
    %c0_i32_0 = arith.constant 0 : i32
    return %arg0, %c0_i32 : i32, i32
  }
}

module attributes {stable_mosaic.version = 11 : i64} {
  func.func @_encoder_head_kernel(%arg0: i32, %arg1: i32, %arg2: memref<1x16x128xf32, #tpu.memory_space<vmem>>, %arg3: memref<1x1x128xf32, #tpu.memory_space<vmem>>, %arg4: memref<1x1x128xf32, #tpu.memory_space<vmem>>, %arg5: memref<1x128x384xbf16, #tpu.memory_space<vmem>>, %arg6: memref<1x1x384xf32, #tpu.memory_space<vmem>>, %arg7: memref<1x128x128xbf16, #tpu.memory_space<vmem>>, %arg8: memref<1x1x128xf32, #tpu.memory_space<vmem>>, %arg9: memref<1x1x128xf32, #tpu.memory_space<vmem>>, %arg10: memref<1x1x128xf32, #tpu.memory_space<vmem>>, %arg11: memref<1x128x512xbf16, #tpu.memory_space<vmem>>, %arg12: memref<1x1x512xf32, #tpu.memory_space<vmem>>, %arg13: memref<1x512x128xbf16, #tpu.memory_space<vmem>>, %arg14: memref<1x1x128xf32, #tpu.memory_space<vmem>>, %arg15: memref<1x128xf32, #tpu.memory_space<vmem>>, %arg16: memref<1x128xf32, #tpu.memory_space<vmem>>, %arg17: memref<2x128x128xbf16, #tpu.memory_space<vmem>>, %arg18: memref<2x1x128xf32, #tpu.memory_space<vmem>>, %arg19: memref<128x128xbf16, #tpu.memory_space<vmem>>, %arg20: memref<1x128xf32, #tpu.memory_space<vmem>>, %arg21: memref<1x16x128xf32, #tpu.memory_space<vmem>>, %arg22: memref<16x128xf32, #tpu.memory_space<vmem>>, %arg23: memref<1x16x128xf32, #tpu.memory_space<vmem>>) attributes {dimension_semantics = [#tpu.dimension_semantics<parallel>, #tpu.dimension_semantics<arbitrary>], iteration_bounds = array<i64: 2, 2>, scalar_prefetch = 0 : i64, scratch_operands = 2 : i64, tpu.core_type = #tpu.core_type<tc>, window_params = [{transform_indices = @transform_0, window_bounds = array<i64: 1, 16, 128>}, {transform_indices = @transform_1, window_bounds = array<i64: 1, 1, 128>}, {transform_indices = @transform_2, window_bounds = array<i64: 1, 1, 128>}, {transform_indices = @transform_3, window_bounds = array<i64: 1, 128, 384>}, {transform_indices = @transform_4, window_bounds = array<i64: 1, 1, 384>}, {transform_indices = @transform_5, window_bounds = array<i64: 1, 128, 128>}, {transform_indices = @transform_6, window_bounds = array<i64: 1, 1, 128>}, {transform_indices = @transform_7, window_bounds = array<i64: 1, 1, 128>}, {transform_indices = @transform_8, window_bounds = array<i64: 1, 1, 128>}, {transform_indices = @transform_9, window_bounds = array<i64: 1, 128, 512>}, {transform_indices = @transform_10, window_bounds = array<i64: 1, 1, 512>}, {transform_indices = @transform_11, window_bounds = array<i64: 1, 512, 128>}, {transform_indices = @transform_12, window_bounds = array<i64: 1, 1, 128>}, {pipeline_mode = #tpu.pipeline_mode<synchronous>, transform_indices = @transform_13, window_bounds = array<i64: 1, 128>}, {pipeline_mode = #tpu.pipeline_mode<synchronous>, transform_indices = @transform_14, window_bounds = array<i64: 1, 128>}, {pipeline_mode = #tpu.pipeline_mode<synchronous>, transform_indices = @transform_15, window_bounds = array<i64: 2, 128, 128>}, {pipeline_mode = #tpu.pipeline_mode<synchronous>, transform_indices = @transform_16, window_bounds = array<i64: 2, 1, 128>}, {pipeline_mode = #tpu.pipeline_mode<synchronous>, transform_indices = @transform_17, window_bounds = array<i64: 128, 128>}, {pipeline_mode = #tpu.pipeline_mode<synchronous>, transform_indices = @transform_18, window_bounds = array<i64: 1, 128>}, {transform_indices = @transform_19, window_bounds = array<i64: 1, 16, 128>}]} {
    %c0_i32 = arith.constant 0 : i32
    %0 = arith.cmpi eq, %arg1, %c0_i32 : i32
    %1 = arith.extui %0 : i1 to i32
    %c0_i32_0 = arith.constant 0 : i32
    %2 = arith.cmpi ne, %1, %c0_i32_0 : i32
    scf.if %2 {
      %c0_97 = arith.constant 0 : index
      %c0_98 = arith.constant 0 : index
      %c0_99 = arith.constant 0 : index
      %218 = vector.load %arg2[%c0_97, %c0_98, %c0_99] : memref<1x16x128xf32, #tpu.memory_space<vmem>>, vector<1x16x128xf32>
      %219 = vector.shape_cast %218 : vector<1x16x128xf32> to vector<16x128xf32>
      %c0_100 = arith.constant 0 : index
      %c0_101 = arith.constant 0 : index
      %220 = vector.load %arg22[%c0_100, %c0_101] : memref<16x128xf32, #tpu.memory_space<vmem>>, vector<16x128xf32>
      tpu.vector_store %arg22[%c0_100, %c0_101], %219 {strides = array<i32>} : memref<16x128xf32, #tpu.memory_space<vmem>>, vector<16x128xf32>,
    } else {
    }
    %c0 = arith.constant 0 : index
    %c0_1 = arith.constant 0 : index
    %3 = vector.load %arg22[%c0, %c0_1] : memref<16x128xf32, #tpu.memory_space<vmem>>, vector<16x128xf32>
    %c0_2 = arith.constant 0 : index
    %c0_3 = arith.constant 0 : index
    %c0_4 = arith.constant 0 : index
    %4 = vector.load %arg3[%c0_2, %c0_3, %c0_4] : memref<1x1x128xf32, #tpu.memory_space<vmem>>, vector<1x1x128xf32>
    %5 = vector.shape_cast %4 : vector<1x1x128xf32> to vector<1x128xf32>
    %c0_5 = arith.constant 0 : index
    %c0_6 = arith.constant 0 : index
    %c0_7 = arith.constant 0 : index
    %6 = vector.load %arg4[%c0_5, %c0_6, %c0_7] : memref<1x1x128xf32, #tpu.memory_space<vmem>>, vector<1x1x128xf32>
    %7 = vector.shape_cast %6 : vector<1x1x128xf32> to vector<1x128xf32>
    %cst = arith.constant dense<0.000000e+00> : vector<16xf32>
    %8 = vector.multi_reduction <add>, %3, %cst [1] : vector<16x128xf32> to vector<16xf32>
    %9 = vector.shape_cast %8 : vector<16xf32> to vector<16x1xf32>
    %cst_8 = arith.constant 1.280000e+02 : f32
    %10 = vector.broadcast %cst_8 : f32 to vector<16x1xf32>
    %11 = arith.divf %9, %10 : vector<16x1xf32>
    %12 = vector.broadcast %11 : vector<16x1xf32> to vector<16x128xf32>
    %13 = arith.subf %3, %12 : vector<16x128xf32>
    %14 = arith.mulf %13, %13 : vector<16x128xf32>
    %cst_9 = arith.constant dense<0.000000e+00> : vector<16xf32>
    %15 = vector.multi_reduction <add>, %14, %cst_9 [1] : vector<16x128xf32> to vector<16xf32>
    %16 = vector.shape_cast %15 : vector<16xf32> to vector<16x1xf32>
    %cst_10 = arith.constant 1.280000e+02 : f32
    %17 = vector.broadcast %cst_10 : f32 to vector<16x1xf32>
    %18 = arith.divf %16, %17 : vector<16x1xf32>
    %cst_11 = arith.constant 9.99999974E-6 : f32
    %19 = vector.broadcast %cst_11 : f32 to vector<16x1xf32>
    %20 = arith.addf %18, %19 : vector<16x1xf32>
    %21 = math.rsqrt %20 : vector<16x1xf32>
    %22 = vector.broadcast %21 : vector<16x1xf32> to vector<16x128xf32>
    %23 = arith.mulf %13, %22 : vector<16x128xf32>
    %24 = vector.broadcast %5 : vector<1x128xf32> to vector<16x128xf32>
    %25 = arith.mulf %23, %24 : vector<16x128xf32>
    %26 = vector.broadcast %7 : vector<1x128xf32> to vector<16x128xf32>
    %27 = arith.addf %25, %26 : vector<16x128xf32>
    %c0_12 = arith.constant 0 : index
    %c0_13 = arith.constant 0 : index
    %c0_14 = arith.constant 0 : index
    %28 = vector.load %arg5[%c0_12, %c0_13, %c0_14] : memref<1x128x384xbf16, #tpu.memory_space<vmem>>, vector<1x128x384xbf16>
    %29 = vector.shape_cast %28 : vector<1x128x384xbf16> to vector<128x384xbf16>
    %30 = arith.truncf %27 : vector<16x128xf32> to vector<16x128xbf16>
    %cst_15 = arith.constant dense<0.000000e+00> : vector<16x384xf32>
    %31 = tpu.matmul %30, %29, %cst_15 {dimension_numbers = #tpu.dot_dimension_numbers<[1], [0], [0], [1], [0, 0, 1, 1], [], []>} : vector<16x128xbf16>, vector<128x384xbf16>, vector<16x384xf32> -> vector<16x384xf32>
    %c0_16 = arith.constant 0 : index
    %c0_17 = arith.constant 0 : index
    %c0_18 = arith.constant 0 : index
    %32 = vector.load %arg6[%c0_16, %c0_17, %c0_18] : memref<1x1x384xf32, #tpu.memory_space<vmem>>, vector<1x1x384xf32>
    %33 = vector.shape_cast %32 : vector<1x1x384xf32> to vector<1x384xf32>
    %34 = vector.broadcast %33 : vector<1x384xf32> to vector<16x384xf32>
    %35 = arith.addf %31, %34 : vector<16x384xf32>
    %36 = vector.extract_strided_slice %35 {offsets = [0, 0], sizes = [16, 128], strides = [1, 1]} : vector<16x384xf32> to vector<16x128xf32>
    %37 = vector.shape_cast %36 : vector<16x128xf32> to vector<1x16x128xf32>
    %38 = vector.extract_strided_slice %35 {offsets = [0, 128], sizes = [16, 128], strides = [1, 1]} : vector<16x384xf32> to vector<16x128xf32>
    %39 = vector.shape_cast %38 : vector<16x128xf32> to vector<1x16x128xf32>
    %40 = vector.extract_strided_slice %35 {offsets = [0, 256], sizes = [16, 128], strides = [1, 1]} : vector<16x384xf32> to vector<16x128xf32>
    %41 = vector.shape_cast %40 : vector<16x128xf32> to vector<1x16x128xf32>
    %42 = vector.extract_strided_slice %37 {offsets = [0, 0, 0], sizes = [1, 16, 32], strides = [1, 1, 1]} : vector<1x16x128xf32> to vector<1x16x32xf32>
    %43 = arith.truncf %42 : vector<1x16x32xf32> to vector<1x16x32xbf16>
    %44 = vector.extract_strided_slice %39 {offsets = [0, 0, 0], sizes = [1, 16, 32], strides = [1, 1, 1]} : vector<1x16x128xf32> to vector<1x16x32xf32>
    %45 = arith.truncf %44 : vector<1x16x32xf32> to vector<1x16x32xbf16>
    "tpu.trace_start"() <{level = 10 : i32, message = "bqd,bkd->bqk"}> : () -> ()
    %cst_19 = arith.constant dense<0.000000e+00> : vector<1x16x16xf32>
    %46 = tpu.matmul %43, %45, %cst_19 {dimension_numbers = #tpu.dot_dimension_numbers<[2], [2], [1], [1], [0, 0, 0, 1, 1, 1], [0], [0]>} : vector<1x16x32xbf16>, vector<1x16x32xbf16>, vector<1x16x16xf32> -> vector<1x16x16xf32>
    "tpu.trace_stop"() : () -> ()
    %cst_20 = arith.constant dense<0xFF800000> : vector<1x16xf32>
    %47 = vector.multi_reduction <maximumf>, %46, %cst_20 [2] : vector<1x16x16xf32> to vector<1x16xf32>
    %48 = vector.shape_cast %47 : vector<1x16xf32> to vector<1x16x1xf32>
    %49 = vector.broadcast %48 : vector<1x16x1xf32> to vector<1x16x16xf32>
    %50 = arith.subf %46, %49 : vector<1x16x16xf32>
    %51 = math.exp %50 : vector<1x16x16xf32>
    %cst_21 = arith.constant dense<0.000000e+00> : vector<1x16xf32>
    %52 = vector.multi_reduction <add>, %51, %cst_21 [2] : vector<1x16x16xf32> to vector<1x16xf32>
    %53 = vector.shape_cast %52 : vector<1x16xf32> to vector<1x16x1xf32>
    %54 = tpu.reciprocal %53 {approx = true} : vector<1x16x1xf32> -> vector<1x16x1xf32>
    %55 = vector.broadcast %54 : vector<1x16x1xf32> to vector<1x16x16xf32>
    %56 = arith.mulf %51, %55 : vector<1x16x16xf32>
    %57 = arith.truncf %56 : vector<1x16x16xf32> to vector<1x16x16xbf16>
    %58 = vector.extract_strided_slice %41 {offsets = [0, 0, 0], sizes = [1, 16, 32], strides = [1, 1, 1]} : vector<1x16x128xf32> to vector<1x16x32xf32>
    %59 = arith.truncf %58 : vector<1x16x32xf32> to vector<1x16x32xbf16>
    "tpu.trace_start"() <{level = 10 : i32, message = "bqk,bkd->bqd"}> : () -> ()
    %cst_22 = arith.constant dense<0.000000e+00> : vector<1x16x32xf32>
    %60 = tpu.matmul %57, %59, %cst_22 {dimension_numbers = #tpu.dot_dimension_numbers<[2], [1], [1], [2], [0, 0, 0, 1, 1, 2], [0], [0]>} : vector<1x16x16xbf16>, vector<1x16x32xbf16>, vector<1x16x32xf32> -> vector<1x16x32xf32>
    "tpu.trace_stop"() : () -> ()
    %c0_23 = arith.constant 0 : index
    %c0_24 = arith.constant 0 : index
    %c0_25 = arith.constant 0 : index
    %61 = vector.load %arg23[%c0_23, %c0_24, %c0_25] : memref<1x16x128xf32, #tpu.memory_space<vmem>>, vector<1x16x32xf32>
    tpu.vector_store %arg23[%c0_23, %c0_24, %c0_25], %60 {strides = array<i32>} : memref<1x16x128xf32, #tpu.memory_space<vmem>>, vector<1x16x32xf32>,
    %62 = vector.extract_strided_slice %37 {offsets = [0, 0, 32], sizes = [1, 16, 32], strides = [1, 1, 1]} : vector<1x16x128xf32> to vector<1x16x32xf32>
    %63 = arith.truncf %62 : vector<1x16x32xf32> to vector<1x16x32xbf16>
    %64 = vector.extract_strided_slice %39 {offsets = [0, 0, 32], sizes = [1, 16, 32], strides = [1, 1, 1]} : vector<1x16x128xf32> to vector<1x16x32xf32>
    %65 = arith.truncf %64 : vector<1x16x32xf32> to vector<1x16x32xbf16>
    "tpu.trace_start"() <{level = 10 : i32, message = "bqd,bkd->bqk"}> : () -> ()
    %cst_26 = arith.constant dense<0.000000e+00> : vector<1x16x16xf32>
    %66 = tpu.matmul %63, %65, %cst_26 {dimension_numbers = #tpu.dot_dimension_numbers<[2], [2], [1], [1], [0, 0, 0, 1, 1, 1], [0], [0]>} : vector<1x16x32xbf16>, vector<1x16x32xbf16>, vector<1x16x16xf32> -> vector<1x16x16xf32>
    "tpu.trace_stop"() : () -> ()
    %cst_27 = arith.constant dense<0xFF800000> : vector<1x16xf32>
    %67 = vector.multi_reduction <maximumf>, %66, %cst_27 [2] : vector<1x16x16xf32> to vector<1x16xf32>
    %68 = vector.shape_cast %67 : vector<1x16xf32> to vector<1x16x1xf32>
    %69 = vector.broadcast %68 : vector<1x16x1xf32> to vector<1x16x16xf32>
    %70 = arith.subf %66, %69 : vector<1x16x16xf32>
    %71 = math.exp %70 : vector<1x16x16xf32>
    %cst_28 = arith.constant dense<0.000000e+00> : vector<1x16xf32>
    %72 = vector.multi_reduction <add>, %71, %cst_28 [2] : vector<1x16x16xf32> to vector<1x16xf32>
    %73 = vector.shape_cast %72 : vector<1x16xf32> to vector<1x16x1xf32>
    %74 = tpu.reciprocal %73 {approx = true} : vector<1x16x1xf32> -> vector<1x16x1xf32>
    %75 = vector.broadcast %74 : vector<1x16x1xf32> to vector<1x16x16xf32>
    %76 = arith.mulf %71, %75 : vector<1x16x16xf32>
    %77 = arith.truncf %76 : vector<1x16x16xf32> to vector<1x16x16xbf16>
    %78 = vector.extract_strided_slice %41 {offsets = [0, 0, 32], sizes = [1, 16, 32], strides = [1, 1, 1]} : vector<1x16x128xf32> to vector<1x16x32xf32>
    %79 = arith.truncf %78 : vector<1x16x32xf32> to vector<1x16x32xbf16>
    "tpu.trace_start"() <{level = 10 : i32, message = "bqk,bkd->bqd"}> : () -> ()
    %cst_29 = arith.constant dense<0.000000e+00> : vector<1x16x32xf32>
    %80 = tpu.matmul %77, %79, %cst_29 {dimension_numbers = #tpu.dot_dimension_numbers<[2], [1], [1], [2], [0, 0, 0, 1, 1, 2], [0], [0]>} : vector<1x16x16xbf16>, vector<1x16x32xbf16>, vector<1x16x32xf32> -> vector<1x16x32xf32>
    "tpu.trace_stop"() : () -> ()
    %c0_30 = arith.constant 0 : index
    %c0_31 = arith.constant 0 : index
    %c32 = arith.constant 32 : index
    %81 = vector.load %arg23[%c0_30, %c0_31, %c32] : memref<1x16x128xf32, #tpu.memory_space<vmem>>, vector<1x16x32xf32>
    tpu.vector_store %arg23[%c0_30, %c0_31, %c32], %80 {strides = array<i32>} : memref<1x16x128xf32, #tpu.memory_space<vmem>>, vector<1x16x32xf32>,
    %82 = vector.extract_strided_slice %37 {offsets = [0, 0, 64], sizes = [1, 16, 32], strides = [1, 1, 1]} : vector<1x16x128xf32> to vector<1x16x32xf32>
    %83 = arith.truncf %82 : vector<1x16x32xf32> to vector<1x16x32xbf16>
    %84 = vector.extract_strided_slice %39 {offsets = [0, 0, 64], sizes = [1, 16, 32], strides = [1, 1, 1]} : vector<1x16x128xf32> to vector<1x16x32xf32>
    %85 = arith.truncf %84 : vector<1x16x32xf32> to vector<1x16x32xbf16>
    "tpu.trace_start"() <{level = 10 : i32, message = "bqd,bkd->bqk"}> : () -> ()
    %cst_32 = arith.constant dense<0.000000e+00> : vector<1x16x16xf32>
    %86 = tpu.matmul %83, %85, %cst_32 {dimension_numbers = #tpu.dot_dimension_numbers<[2], [2], [1], [1], [0, 0, 0, 1, 1, 1], [0], [0]>} : vector<1x16x32xbf16>, vector<1x16x32xbf16>, vector<1x16x16xf32> -> vector<1x16x16xf32>
    "tpu.trace_stop"() : () -> ()
    %cst_33 = arith.constant dense<0xFF800000> : vector<1x16xf32>
    %87 = vector.multi_reduction <maximumf>, %86, %cst_33 [2] : vector<1x16x16xf32> to vector<1x16xf32>
    %88 = vector.shape_cast %87 : vector<1x16xf32> to vector<1x16x1xf32>
    %89 = vector.broadcast %88 : vector<1x16x1xf32> to vector<1x16x16xf32>
    %90 = arith.subf %86, %89 : vector<1x16x16xf32>
    %91 = math.exp %90 : vector<1x16x16xf32>
    %cst_34 = arith.constant dense<0.000000e+00> : vector<1x16xf32>
    %92 = vector.multi_reduction <add>, %91, %cst_34 [2] : vector<1x16x16xf32> to vector<1x16xf32>
    %93 = vector.shape_cast %92 : vector<1x16xf32> to vector<1x16x1xf32>
    %94 = tpu.reciprocal %93 {approx = true} : vector<1x16x1xf32> -> vector<1x16x1xf32>
    %95 = vector.broadcast %94 : vector<1x16x1xf32> to vector<1x16x16xf32>
    %96 = arith.mulf %91, %95 : vector<1x16x16xf32>
    %97 = arith.truncf %96 : vector<1x16x16xf32> to vector<1x16x16xbf16>
    %98 = vector.extract_strided_slice %41 {offsets = [0, 0, 64], sizes = [1, 16, 32], strides = [1, 1, 1]} : vector<1x16x128xf32> to vector<1x16x32xf32>
    %99 = arith.truncf %98 : vector<1x16x32xf32> to vector<1x16x32xbf16>
    "tpu.trace_start"() <{level = 10 : i32, message = "bqk,bkd->bqd"}> : () -> ()
    %cst_35 = arith.constant dense<0.000000e+00> : vector<1x16x32xf32>
    %100 = tpu.matmul %97, %99, %cst_35 {dimension_numbers = #tpu.dot_dimension_numbers<[2], [1], [1], [2], [0, 0, 0, 1, 1, 2], [0], [0]>} : vector<1x16x16xbf16>, vector<1x16x32xbf16>, vector<1x16x32xf32> -> vector<1x16x32xf32>
    "tpu.trace_stop"() : () -> ()
    %c0_36 = arith.constant 0 : index
    %c0_37 = arith.constant 0 : index
    %c64 = arith.constant 64 : index
    %101 = vector.load %arg23[%c0_36, %c0_37, %c64] : memref<1x16x128xf32, #tpu.memory_space<vmem>>, vector<1x16x32xf32>
    tpu.vector_store %arg23[%c0_36, %c0_37, %c64], %100 {strides = array<i32>} : memref<1x16x128xf32, #tpu.memory_space<vmem>>, vector<1x16x32xf32>,
    %102 = vector.extract_strided_slice %37 {offsets = [0, 0, 96], sizes = [1, 16, 32], strides = [1, 1, 1]} : vector<1x16x128xf32> to vector<1x16x32xf32>
    %103 = arith.truncf %102 : vector<1x16x32xf32> to vector<1x16x32xbf16>
    %104 = vector.extract_strided_slice %39 {offsets = [0, 0, 96], sizes = [1, 16, 32], strides = [1, 1, 1]} : vector<1x16x128xf32> to vector<1x16x32xf32>
    %105 = arith.truncf %104 : vector<1x16x32xf32> to vector<1x16x32xbf16>
    "tpu.trace_start"() <{level = 10 : i32, message = "bqd,bkd->bqk"}> : () -> ()
    %cst_38 = arith.constant dense<0.000000e+00> : vector<1x16x16xf32>
    %106 = tpu.matmul %103, %105, %cst_38 {dimension_numbers = #tpu.dot_dimension_numbers<[2], [2], [1], [1], [0, 0, 0, 1, 1, 1], [0], [0]>} : vector<1x16x32xbf16>, vector<1x16x32xbf16>, vector<1x16x16xf32> -> vector<1x16x16xf32>
    "tpu.trace_stop"() : () -> ()
    %cst_39 = arith.constant dense<0xFF800000> : vector<1x16xf32>
    %107 = vector.multi_reduction <maximumf>, %106, %cst_39 [2] : vector<1x16x16xf32> to vector<1x16xf32>
    %108 = vector.shape_cast %107 : vector<1x16xf32> to vector<1x16x1xf32>
    %109 = vector.broadcast %108 : vector<1x16x1xf32> to vector<1x16x16xf32>
    %110 = arith.subf %106, %109 : vector<1x16x16xf32>
    %111 = math.exp %110 : vector<1x16x16xf32>
    %cst_40 = arith.constant dense<0.000000e+00> : vector<1x16xf32>
    %112 = vector.multi_reduction <add>, %111, %cst_40 [2] : vector<1x16x16xf32> to vector<1x16xf32>
    %113 = vector.shape_cast %112 : vector<1x16xf32> to vector<1x16x1xf32>
    %114 = tpu.reciprocal %113 {approx = true} : vector<1x16x1xf32> -> vector<1x16x1xf32>
    %115 = vector.broadcast %114 : vector<1x16x1xf32> to vector<1x16x16xf32>
    %116 = arith.mulf %111, %115 : vector<1x16x16xf32>
    %117 = arith.truncf %116 : vector<1x16x16xf32> to vector<1x16x16xbf16>
    %118 = vector.extract_strided_slice %41 {offsets = [0, 0, 96], sizes = [1, 16, 32], strides = [1, 1, 1]} : vector<1x16x128xf32> to vector<1x16x32xf32>
    %119 = arith.truncf %118 : vector<1x16x32xf32> to vector<1x16x32xbf16>
    "tpu.trace_start"() <{level = 10 : i32, message = "bqk,bkd->bqd"}> : () -> ()
    %cst_41 = arith.constant dense<0.000000e+00> : vector<1x16x32xf32>
    %120 = tpu.matmul %117, %119, %cst_41 {dimension_numbers = #tpu.dot_dimension_numbers<[2], [1], [1], [2], [0, 0, 0, 1, 1, 2], [0], [0]>} : vector<1x16x16xbf16>, vector<1x16x32xbf16>, vector<1x16x32xf32> -> vector<1x16x32xf32>
    "tpu.trace_stop"() : () -> ()
    %c0_42 = arith.constant 0 : index
    %c0_43 = arith.constant 0 : index
    %c96 = arith.constant 96 : index
    %121 = vector.load %arg23[%c0_42, %c0_43, %c96] : memref<1x16x128xf32, #tpu.memory_space<vmem>>, vector<1x16x32xf32>
    tpu.vector_store %arg23[%c0_42, %c0_43, %c96], %120 {strides = array<i32>} : memref<1x16x128xf32, #tpu.memory_space<vmem>>, vector<1x16x32xf32>,
    %c0_44 = arith.constant 0 : index
    %c0_45 = arith.constant 0 : index
    %c0_46 = arith.constant 0 : index
    %122 = vector.load %arg23[%c0_44, %c0_45, %c0_46] : memref<1x16x128xf32, #tpu.memory_space<vmem>>, vector<1x16x128xf32>
    %123 = vector.shape_cast %122 : vector<1x16x128xf32> to vector<16x128xf32>
    %c0_47 = arith.constant 0 : index
    %c0_48 = arith.constant 0 : index
    %c0_49 = arith.constant 0 : index
    %124 = vector.load %arg7[%c0_47, %c0_48, %c0_49] : memref<1x128x128xbf16, #tpu.memory_space<vmem>>, vector<1x128x128xbf16>
    %125 = vector.shape_cast %124 : vector<1x128x128xbf16> to vector<128x128xbf16>
    %126 = arith.truncf %123 : vector<16x128xf32> to vector<16x128xbf16>
    %cst_50 = arith.constant dense<0.000000e+00> : vector<16x128xf32>
    %127 = tpu.matmul %126, %125, %cst_50 {dimension_numbers = #tpu.dot_dimension_numbers<[1], [0], [0], [1], [0, 0, 1, 1], [], []>} : vector<16x128xbf16>, vector<128x128xbf16>, vector<16x128xf32> -> vector<16x128xf32>
    %128 = arith.addf %3, %127 : vector<16x128xf32>
    %c0_51 = arith.constant 0 : index
    %c0_52 = arith.constant 0 : index
    %c0_53 = arith.constant 0 : index
    %129 = vector.load %arg8[%c0_51, %c0_52, %c0_53] : memref<1x1x128xf32, #tpu.memory_space<vmem>>, vector<1x1x128xf32>
    %130 = vector.shape_cast %129 : vector<1x1x128xf32> to vector<1x128xf32>
    %131 = vector.broadcast %130 : vector<1x128xf32> to vector<16x128xf32>
    %132 = arith.addf %128, %131 : vector<16x128xf32>
    %c0_54 = arith.constant 0 : index
    %c0_55 = arith.constant 0 : index
    %c0_56 = arith.constant 0 : index
    %133 = vector.load %arg9[%c0_54, %c0_55, %c0_56] : memref<1x1x128xf32, #tpu.memory_space<vmem>>, vector<1x1x128xf32>
    %134 = vector.shape_cast %133 : vector<1x1x128xf32> to vector<1x128xf32>
    %c0_57 = arith.constant 0 : index
    %c0_58 = arith.constant 0 : index
    %c0_59 = arith.constant 0 : index
    %135 = vector.load %arg10[%c0_57, %c0_58, %c0_59] : memref<1x1x128xf32, #tpu.memory_space<vmem>>, vector<1x1x128xf32>
    %136 = vector.shape_cast %135 : vector<1x1x128xf32> to vector<1x128xf32>
    %cst_60 = arith.constant dense<0.000000e+00> : vector<16xf32>
    %137 = vector.multi_reduction <add>, %132, %cst_60 [1] : vector<16x128xf32> to vector<16xf32>
    %138 = vector.shape_cast %137 : vector<16xf32> to vector<16x1xf32>
    %cst_61 = arith.constant 1.280000e+02 : f32
    %139 = vector.broadcast %cst_61 : f32 to vector<16x1xf32>
    %140 = arith.divf %138, %139 : vector<16x1xf32>
    %141 = vector.broadcast %140 : vector<16x1xf32> to vector<16x128xf32>
    %142 = arith.subf %132, %141 : vector<16x128xf32>
    %143 = arith.mulf %142, %142 : vector<16x128xf32>
    %cst_62 = arith.constant dense<0.000000e+00> : vector<16xf32>
    %144 = vector.multi_reduction <add>, %143, %cst_62 [1] : vector<16x128xf32> to vector<16xf32>
    %145 = vector.shape_cast %144 : vector<16xf32> to vector<16x1xf32>
    %cst_63 = arith.constant 1.280000e+02 : f32
    %146 = vector.broadcast %cst_63 : f32 to vector<16x1xf32>
    %147 = arith.divf %145, %146 : vector<16x1xf32>
    %cst_64 = arith.constant 9.99999974E-6 : f32
    %148 = vector.broadcast %cst_64 : f32 to vector<16x1xf32>
    %149 = arith.addf %147, %148 : vector<16x1xf32>
    %150 = math.rsqrt %149 : vector<16x1xf32>
    %151 = vector.broadcast %150 : vector<16x1xf32> to vector<16x128xf32>
    %152 = arith.mulf %142, %151 : vector<16x128xf32>
    %153 = vector.broadcast %134 : vector<1x128xf32> to vector<16x128xf32>
    %154 = arith.mulf %152, %153 : vector<16x128xf32>
    %155 = vector.broadcast %136 : vector<1x128xf32> to vector<16x128xf32>
    %156 = arith.addf %154, %155 : vector<16x128xf32>
    %c0_65 = arith.constant 0 : index
    %c0_66 = arith.constant 0 : index
    %c0_67 = arith.constant 0 : index
    %157 = vector.load %arg11[%c0_65, %c0_66, %c0_67] : memref<1x128x512xbf16, #tpu.memory_space<vmem>>, vector<1x128x512xbf16>
    %158 = vector.shape_cast %157 : vector<1x128x512xbf16> to vector<128x512xbf16>
    %159 = arith.truncf %156 : vector<16x128xf32> to vector<16x128xbf16>
    %cst_68 = arith.constant dense<0.000000e+00> : vector<16x512xf32>
    %160 = tpu.matmul %159, %158, %cst_68 {dimension_numbers = #tpu.dot_dimension_numbers<[1], [0], [0], [1], [0, 0, 1, 1], [], []>} : vector<16x128xbf16>, vector<128x512xbf16>, vector<16x512xf32> -> vector<16x512xf32>
    %c0_69 = arith.constant 0 : index
    %c0_70 = arith.constant 0 : index
    %c0_71 = arith.constant 0 : index
    %161 = vector.load %arg12[%c0_69, %c0_70, %c0_71] : memref<1x1x512xf32, #tpu.memory_space<vmem>>, vector<1x1x512xf32>
    %162 = vector.shape_cast %161 : vector<1x1x512xf32> to vector<1x512xf32>
    %163 = vector.broadcast %162 : vector<1x512xf32> to vector<16x512xf32>
    %164 = arith.addf %160, %163 : vector<16x512xf32>
    %cst_72 = arith.constant 5.000000e-01 : f32
    %165 = vector.broadcast %cst_72 : f32 to vector<16x512xf32>
    %166 = arith.mulf %165, %164 : vector<16x512xf32>
    %cst_73 = arith.constant 0.707106769 : f32
    %167 = vector.broadcast %cst_73 : f32 to vector<16x512xf32>
    %168 = arith.mulf %164, %167 : vector<16x512xf32>
    %169 = math.absf %168 : vector<16x512xf32>
    %cst_74 = arith.constant 0.327591091 : f32
    %170 = vector.broadcast %cst_74 : f32 to vector<16x512xf32>
    %171 = arith.mulf %170, %169 : vector<16x512xf32>
    %cst_75 = arith.constant 1.000000e+00 : f32
    %172 = vector.broadcast %cst_75 : f32 to vector<16x512xf32>
    %173 = arith.addf %172, %171 : vector<16x512xf32>
    %cst_76 = arith.constant 1.000000e+00 : f32
    %174 = vector.broadcast %cst_76 : f32 to vector<16x512xf32>
    %175 = arith.divf %174, %173 : vector<16x512xf32>
    %cst_77 = arith.constant 1.06140542 : f32
    %176 = vector.broadcast %cst_77 : f32 to vector<16x512xf32>
    %177 = arith.mulf %176, %175 : vector<16x512xf32>
    %cst_78 = arith.constant -1.45315206 : f32
    %178 = vector.broadcast %cst_78 : f32 to vector<16x512xf32>
    %179 = arith.addf %177, %178 : vector<16x512xf32>
    %180 = arith.mulf %179, %175 : vector<16x512xf32>
    %cst_79 = arith.constant 1.42141378 : f32
    %181 = vector.broadcast %cst_79 : f32 to vector<16x512xf32>
    %182 = arith.addf %180, %181 : vector<16x512xf32>
    %183 = arith.mulf %182, %175 : vector<16x512xf32>
    %cst_80 = arith.constant -0.284496725 : f32
    %184 = vector.broadcast %cst_80 : f32 to vector<16x512xf32>
    %185 = arith.addf %183, %184 : vector<16x512xf32>
    %186 = arith.mulf %185, %175 : vector<16x512xf32>
    %cst_81 = arith.constant 0.254829586 : f32
    %187 = vector.broadcast %cst_81 : f32 to vector<16x512xf32>
    %188 = arith.addf %186, %187 : vector<16x512xf32>
    %189 = arith.mulf %188, %175 : vector<16x512xf32>
    %cst_82 = arith.constant 0.000000e+00 : f32
    %190 = vector.broadcast %cst_82 : f32 to vector<16x512xf32>
    %191 = arith.subf %190, %169 : vector<16x512xf32>
    %192 = arith.mulf %191, %169 : vector<16x512xf32>
    %193 = math.exp %192 : vector<16x512xf32>
    %194 = arith.mulf %189, %193 : vector<16x512xf32>
    %cst_83 = arith.constant 1.000000e+00 : f32
    %195 = vector.broadcast %cst_83 : f32 to vector<16x512xf32>
    %196 = arith.subf %195, %194 : vector<16x512xf32>
    %cst_84 = arith.constant 0.000000e+00 : f32
    %197 = vector.broadcast %cst_84 : f32 to vector<16x512xf32>
    %198 = arith.cmpf olt, %168, %197 : vector<16x512xf32>
    %cst_85 = arith.constant 0.000000e+00 : f32
    %199 = vector.broadcast %cst_85 : f32 to vector<16x512xf32>
    %200 = arith.subf %199, %196 : vector<16x512xf32>
    %201 = arith.select %198, %200, %196 : vector<16x512xi1>, vector<16x512xf32>
    %cst_86 = arith.constant 1.000000e+00 : f32
    %202 = vector.broadcast %cst_86 : f32 to vector<16x512xf32>
    %203 = arith.addf %202, %201 : vector<16x512xf32>
    %204 = arith.mulf %166, %203 : vector<16x512xf32>
    %c0_87 = arith.constant 0 : index
    %c0_88 = arith.constant 0 : index
    %c0_89 = arith.constant 0 : index
    %205 = vector.load %arg13[%c0_87, %c0_88, %c0_89] : memref<1x512x128xbf16, #tpu.memory_space<vmem>>, vector<1x512x128xbf16>
    %206 = vector.shape_cast %205 : vector<1x512x128xbf16> to vector<512x128xbf16>
    %207 = arith.truncf %204 : vector<16x512xf32> to vector<16x512xbf16>
    %cst_90 = arith.constant dense<0.000000e+00> : vector<16x128xf32>
    %208 = tpu.matmul %207, %206, %cst_90 {dimension_numbers = #tpu.dot_dimension_numbers<[1], [0], [0], [1], [0, 0, 1, 1], [], []>} : vector<16x512xbf16>, vector<512x128xbf16>, vector<16x128xf32> -> vector<16x128xf32>
    %209 = arith.addf %132, %208 : vector<16x128xf32>
    %c0_91 = arith.constant 0 : index
    %c0_92 = arith.constant 0 : index
    %c0_93 = arith.constant 0 : index
    %210 = vector.load %arg14[%c0_91, %c0_92, %c0_93] : memref<1x1x128xf32, #tpu.memory_space<vmem>>, vector<1x1x128xf32>
    %211 = vector.shape_cast %210 : vector<1x1x128xf32> to vector<1x128xf32>
    %212 = vector.broadcast %211 : vector<1x128xf32> to vector<16x128xf32>
    %213 = arith.addf %209, %212 : vector<16x128xf32>
    %c0_94 = arith.constant 0 : index
    %c0_95 = arith.constant 0 : index
    %214 = vector.load %arg22[%c0_94, %c0_95] : memref<16x128xf32, #tpu.memory_space<vmem>>, vector<16x128xf32>
    tpu.vector_store %arg22[%c0_94, %c0_95], %213 {strides = array<i32>} : memref<16x128xf32, #tpu.memory_space<vmem>>, vector<16x128xf32>,
    %c1_i32 = arith.constant 1 : i32
    %215 = arith.cmpi eq, %arg1, %c1_i32 : i32
    %216 = arith.extui %215 : i1 to i32
    %c0_i32_96 = arith.constant 0 : i32
    %217 = arith.cmpi ne, %216, %c0_i32_96 : i32
    scf.if %217 {
      %c0_97 = arith.constant 0 : index
      %c0_98 = arith.constant 0 : index
      %218 = vector.load %arg15[%c0_97, %c0_98] : memref<1x128xf32, #tpu.memory_space<vmem>>, vector<1x128xf32>
      %c0_99 = arith.constant 0 : index
      %c0_100 = arith.constant 0 : index
      %219 = vector.load %arg16[%c0_99, %c0_100] : memref<1x128xf32, #tpu.memory_space<vmem>>, vector<1x128xf32>
      %cst_101 = arith.constant dense<0.000000e+00> : vector<16xf32>
      %220 = vector.multi_reduction <add>, %213, %cst_101 [1] : vector<16x128xf32> to vector<16xf32>
      %221 = vector.shape_cast %220 : vector<16xf32> to vector<16x1xf32>
      %cst_102 = arith.constant 1.280000e+02 : f32
      %222 = vector.broadcast %cst_102 : f32 to vector<16x1xf32>
      %223 = arith.divf %221, %222 : vector<16x1xf32>
      %224 = vector.broadcast %223 : vector<16x1xf32> to vector<16x128xf32>
      %225 = arith.subf %213, %224 : vector<16x128xf32>
      %226 = arith.mulf %225, %225 : vector<16x128xf32>
      %cst_103 = arith.constant dense<0.000000e+00> : vector<16xf32>
      %227 = vector.multi_reduction <add>, %226, %cst_103 [1] : vector<16x128xf32> to vector<16xf32>
      %228 = vector.shape_cast %227 : vector<16xf32> to vector<16x1xf32>
      %cst_104 = arith.constant 1.280000e+02 : f32
      %229 = vector.broadcast %cst_104 : f32 to vector<16x1xf32>
      %230 = arith.divf %228, %229 : vector<16x1xf32>
      %cst_105 = arith.constant 9.99999974E-6 : f32
      %231 = vector.broadcast %cst_105 : f32 to vector<16x1xf32>
      %232 = arith.addf %230, %231 : vector<16x1xf32>
      %233 = math.rsqrt %232 : vector<16x1xf32>
      %234 = vector.broadcast %233 : vector<16x1xf32> to vector<16x128xf32>
      %235 = arith.mulf %225, %234 : vector<16x128xf32>
      %236 = vector.broadcast %218 : vector<1x128xf32> to vector<16x128xf32>
      %237 = arith.mulf %235, %236 : vector<16x128xf32>
      %238 = vector.broadcast %219 : vector<1x128xf32> to vector<16x128xf32>
      %239 = arith.addf %237, %238 : vector<16x128xf32>
      %c0_106 = arith.constant 0 : index
      %c0_107 = arith.constant 0 : index
      %c0_108 = arith.constant 0 : index
      %240 = vector.load %arg17[%c0_106, %c0_107, %c0_108] : memref<2x128x128xbf16, #tpu.memory_space<vmem>>, vector<1x128x128xbf16>
      %241 = vector.shape_cast %240 : vector<1x128x128xbf16> to vector<128x128xbf16>
      %242 = arith.truncf %239 : vector<16x128xf32> to vector<16x128xbf16>
      %cst_109 = arith.constant dense<0.000000e+00> : vector<16x128xf32>
      %243 = tpu.matmul %242, %241, %cst_109 {dimension_numbers = #tpu.dot_dimension_numbers<[1], [0], [0], [1], [0, 0, 1, 1], [], []>} : vector<16x128xbf16>, vector<128x128xbf16>, vector<16x128xf32> -> vector<16x128xf32>
      %c0_110 = arith.constant 0 : index
      %c0_111 = arith.constant 0 : index
      %c0_112 = arith.constant 0 : index
      %244 = vector.load %arg18[%c0_110, %c0_111, %c0_112] : memref<2x1x128xf32, #tpu.memory_space<vmem>>, vector<1x1x128xf32>
      %245 = vector.shape_cast %244 : vector<1x1x128xf32> to vector<1x128xf32>
      %246 = vector.broadcast %245 : vector<1x128xf32> to vector<16x128xf32>
      %247 = arith.addf %243, %246 : vector<16x128xf32>
      %cst_113 = arith.constant 5.000000e-01 : f32
      %248 = vector.broadcast %cst_113 : f32 to vector<16x128xf32>
      %249 = arith.mulf %248, %247 : vector<16x128xf32>
      %cst_114 = arith.constant 0.707106769 : f32
      %250 = vector.broadcast %cst_114 : f32 to vector<16x128xf32>
      %251 = arith.mulf %247, %250 : vector<16x128xf32>
      %252 = math.absf %251 : vector<16x128xf32>
      %cst_115 = arith.constant 0.327591091 : f32
      %253 = vector.broadcast %cst_115 : f32 to vector<16x128xf32>
      %254 = arith.mulf %253, %252 : vector<16x128xf32>
      %cst_116 = arith.constant 1.000000e+00 : f32
      %255 = vector.broadcast %cst_116 : f32 to vector<16x128xf32>
      %256 = arith.addf %255, %254 : vector<16x128xf32>
      %cst_117 = arith.constant 1.000000e+00 : f32
      %257 = vector.broadcast %cst_117 : f32 to vector<16x128xf32>
      %258 = arith.divf %257, %256 : vector<16x128xf32>
      %cst_118 = arith.constant 1.06140542 : f32
      %259 = vector.broadcast %cst_118 : f32 to vector<16x128xf32>
      %260 = arith.mulf %259, %258 : vector<16x128xf32>
      %cst_119 = arith.constant -1.45315206 : f32
      %261 = vector.broadcast %cst_119 : f32 to vector<16x128xf32>
      %262 = arith.addf %260, %261 : vector<16x128xf32>
      %263 = arith.mulf %262, %258 : vector<16x128xf32>
      %cst_120 = arith.constant 1.42141378 : f32
      %264 = vector.broadcast %cst_120 : f32 to vector<16x128xf32>
      %265 = arith.addf %263, %264 : vector<16x128xf32>
      %266 = arith.mulf %265, %258 : vector<16x128xf32>
      %cst_121 = arith.constant -0.284496725 : f32
      %267 = vector.broadcast %cst_121 : f32 to vector<16x128xf32>
      %268 = arith.addf %266, %267 : vector<16x128xf32>
      %269 = arith.mulf %268, %258 : vector<16x128xf32>
      %cst_122 = arith.constant 0.254829586 : f32
      %270 = vector.broadcast %cst_122 : f32 to vector<16x128xf32>
      %271 = arith.addf %269, %270 : vector<16x128xf32>
      %272 = arith.mulf %271, %258 : vector<16x128xf32>
      %cst_123 = arith.constant 0.000000e+00 : f32
      %273 = vector.broadcast %cst_123 : f32 to vector<16x128xf32>
      %274 = arith.subf %273, %252 : vector<16x128xf32>
      %275 = arith.mulf %274, %252 : vector<16x128xf32>
      %276 = math.exp %275 : vector<16x128xf32>
      %277 = arith.mulf %272, %276 : vector<16x128xf32>
      %cst_124 = arith.constant 1.000000e+00 : f32
      %278 = vector.broadcast %cst_124 : f32 to vector<16x128xf32>
      %279 = arith.subf %278, %277 : vector<16x128xf32>
      %cst_125 = arith.constant 0.000000e+00 : f32
      %280 = vector.broadcast %cst_125 : f32 to vector<16x128xf32>
      %281 = arith.cmpf olt, %251, %280 : vector<16x128xf32>
      %cst_126 = arith.constant 0.000000e+00 : f32
      %282 = vector.broadcast %cst_126 : f32 to vector<16x128xf32>
      %283 = arith.subf %282, %279 : vector<16x128xf32>
      %284 = arith.select %281, %283, %279 : vector<16x128xi1>, vector<16x128xf32>
      %cst_127 = arith.constant 1.000000e+00 : f32
      %285 = vector.broadcast %cst_127 : f32 to vector<16x128xf32>
      %286 = arith.addf %285, %284 : vector<16x128xf32>
      %287 = arith.mulf %249, %286 : vector<16x128xf32>
      %c1 = arith.constant 1 : index
      %c0_128 = arith.constant 0 : index
      %c0_129 = arith.constant 0 : index
      %288 = vector.load %arg17[%c1, %c0_128, %c0_129] : memref<2x128x128xbf16, #tpu.memory_space<vmem>>, vector<1x128x128xbf16>
      %289 = vector.shape_cast %288 : vector<1x128x128xbf16> to vector<128x128xbf16>
      %290 = arith.truncf %287 : vector<16x128xf32> to vector<16x128xbf16>
      %cst_130 = arith.constant dense<0.000000e+00> : vector<16x128xf32>
      %291 = tpu.matmul %290, %289, %cst_130 {dimension_numbers = #tpu.dot_dimension_numbers<[1], [0], [0], [1], [0, 0, 1, 1], [], []>} : vector<16x128xbf16>, vector<128x128xbf16>, vector<16x128xf32> -> vector<16x128xf32>
      %c1_131 = arith.constant 1 : index
      %c0_132 = arith.constant 0 : index
      %c0_133 = arith.constant 0 : index
      %292 = vector.load %arg18[%c1_131, %c0_132, %c0_133] : memref<2x1x128xf32, #tpu.memory_space<vmem>>, vector<1x1x128xf32>
      %293 = vector.shape_cast %292 : vector<1x1x128xf32> to vector<1x128xf32>
      %294 = vector.broadcast %293 : vector<1x128xf32> to vector<16x128xf32>
      %295 = arith.addf %291, %294 : vector<16x128xf32>
      %cst_134 = arith.constant 5.000000e-01 : f32
      %296 = vector.broadcast %cst_134 : f32 to vector<16x128xf32>
      %297 = arith.mulf %296, %295 : vector<16x128xf32>
      %cst_135 = arith.constant 0.707106769 : f32
      %298 = vector.broadcast %cst_135 : f32 to vector<16x128xf32>
      %299 = arith.mulf %295, %298 : vector<16x128xf32>
      %300 = math.absf %299 : vector<16x128xf32>
      %cst_136 = arith.constant 0.327591091 : f32
      %301 = vector.broadcast %cst_136 : f32 to vector<16x128xf32>
      %302 = arith.mulf %301, %300 : vector<16x128xf32>
      %cst_137 = arith.constant 1.000000e+00 : f32
      %303 = vector.broadcast %cst_137 : f32 to vector<16x128xf32>
      %304 = arith.addf %303, %302 : vector<16x128xf32>
      %cst_138 = arith.constant 1.000000e+00 : f32
      %305 = vector.broadcast %cst_138 : f32 to vector<16x128xf32>
      %306 = arith.divf %305, %304 : vector<16x128xf32>
      %cst_139 = arith.constant 1.06140542 : f32
      %307 = vector.broadcast %cst_139 : f32 to vector<16x128xf32>
      %308 = arith.mulf %307, %306 : vector<16x128xf32>
      %cst_140 = arith.constant -1.45315206 : f32
      %309 = vector.broadcast %cst_140 : f32 to vector<16x128xf32>
      %310 = arith.addf %308, %309 : vector<16x128xf32>
      %311 = arith.mulf %310, %306 : vector<16x128xf32>
      %cst_141 = arith.constant 1.42141378 : f32
      %312 = vector.broadcast %cst_141 : f32 to vector<16x128xf32>
      %313 = arith.addf %311, %312 : vector<16x128xf32>
      %314 = arith.mulf %313, %306 : vector<16x128xf32>
      %cst_142 = arith.constant -0.284496725 : f32
      %315 = vector.broadcast %cst_142 : f32 to vector<16x128xf32>
      %316 = arith.addf %314, %315 : vector<16x128xf32>
      %317 = arith.mulf %316, %306 : vector<16x128xf32>
      %cst_143 = arith.constant 0.254829586 : f32
      %318 = vector.broadcast %cst_143 : f32 to vector<16x128xf32>
      %319 = arith.addf %317, %318 : vector<16x128xf32>
      %320 = arith.mulf %319, %306 : vector<16x128xf32>
      %cst_144 = arith.constant 0.000000e+00 : f32
      %321 = vector.broadcast %cst_144 : f32 to vector<16x128xf32>
      %322 = arith.subf %321, %300 : vector<16x128xf32>
      %323 = arith.mulf %322, %300 : vector<16x128xf32>
      %324 = math.exp %323 : vector<16x128xf32>
      %325 = arith.mulf %320, %324 : vector<16x128xf32>
      %cst_145 = arith.constant 1.000000e+00 : f32
      %326 = vector.broadcast %cst_145 : f32 to vector<16x128xf32>
      %327 = arith.subf %326, %325 : vector<16x128xf32>
      %cst_146 = arith.constant 0.000000e+00 : f32
      %328 = vector.broadcast %cst_146 : f32 to vector<16x128xf32>
      %329 = arith.cmpf olt, %299, %328 : vector<16x128xf32>
      %cst_147 = arith.constant 0.000000e+00 : f32
      %330 = vector.broadcast %cst_147 : f32 to vector<16x128xf32>
      %331 = arith.subf %330, %327 : vector<16x128xf32>
      %332 = arith.select %329, %331, %327 : vector<16x128xi1>, vector<16x128xf32>
      %cst_148 = arith.constant 1.000000e+00 : f32
      %333 = vector.broadcast %cst_148 : f32 to vector<16x128xf32>
      %334 = arith.addf %333, %332 : vector<16x128xf32>
      %335 = arith.mulf %297, %334 : vector<16x128xf32>
      %c0_149 = arith.constant 0 : index
      %c0_150 = arith.constant 0 : index
      %336 = vector.load %arg19[%c0_149, %c0_150] : memref<128x128xbf16, #tpu.memory_space<vmem>>, vector<128x128xbf16>
      %337 = arith.truncf %335 : vector<16x128xf32> to vector<16x128xbf16>
      %cst_151 = arith.constant dense<0.000000e+00> : vector<16x128xf32>
      %338 = tpu.matmul %337, %336, %cst_151 {dimension_numbers = #tpu.dot_dimension_numbers<[1], [0], [0], [1], [0, 0, 1, 1], [], []>} : vector<16x128xbf16>, vector<128x128xbf16>, vector<16x128xf32> -> vector<16x128xf32>
      %c0_152 = arith.constant 0 : index
      %c0_153 = arith.constant 0 : index
      %339 = vector.load %arg20[%c0_152, %c0_153] : memref<1x128xf32, #tpu.memory_space<vmem>>, vector<1x128xf32>
      %340 = vector.broadcast %339 : vector<1x128xf32> to vector<16x128xf32>
      %341 = arith.addf %338, %340 : vector<16x128xf32>
      %342 = vector.shape_cast %341 : vector<16x128xf32> to vector<1x16x128xf32>
      %c0_154 = arith.constant 0 : index
      %c0_155 = arith.constant 0 : index
      %c0_156 = arith.constant 0 : index
      %343 = vector.load %arg21[%c0_154, %c0_155, %c0_156] : memref<1x16x128xf32, #tpu.memory_space<vmem>>, vector<1x16x128xf32>
      tpu.vector_store %arg21[%c0_154, %c0_155, %c0_156], %342 {strides = array<i32>} : memref<1x16x128xf32, #tpu.memory_space<vmem>>, vector<1x16x128xf32>,
    } else {
    }
    return
  }
  func.func @transform_0(%arg0: i32, %arg1: i32) -> (i32, i32, i32) {
    %c0_i32 = arith.constant 0 : i32
    %c0_i32_0 = arith.constant 0 : i32
    %c0_i32_1 = arith.constant 0 : i32
    return %arg0, %c0_i32, %c0_i32_0 : i32, i32, i32
  }
  func.func @transform_1(%arg0: i32, %arg1: i32) -> (i32, i32, i32) {
    %c0_i32 = arith.constant 0 : i32
    %c0_i32_0 = arith.constant 0 : i32
    %c0_i32_1 = arith.constant 0 : i32
    return %arg1, %c0_i32, %c0_i32_0 : i32, i32, i32
  }
  func.func @transform_2(%arg0: i32, %arg1: i32) -> (i32, i32, i32) {
    %c0_i32 = arith.constant 0 : i32
    %c0_i32_0 = arith.constant 0 : i32
    %c0_i32_1 = arith.constant 0 : i32
    return %arg1, %c0_i32, %c0_i32_0 : i32, i32, i32
  }
  func.func @transform_3(%arg0: i32, %arg1: i32) -> (i32, i32, i32) {
    %c0_i32 = arith.constant 0 : i32
    %c0_i32_0 = arith.constant 0 : i32
    %c0_i32_1 = arith.constant 0 : i32
    return %arg1, %c0_i32, %c0_i32_0 : i32, i32, i32
  }
  func.func @transform_4(%arg0: i32, %arg1: i32) -> (i32, i32, i32) {
    %c0_i32 = arith.constant 0 : i32
    %c0_i32_0 = arith.constant 0 : i32
    %c0_i32_1 = arith.constant 0 : i32
    return %arg1, %c0_i32, %c0_i32_0 : i32, i32, i32
  }
  func.func @transform_5(%arg0: i32, %arg1: i32) -> (i32, i32, i32) {
    %c0_i32 = arith.constant 0 : i32
    %c0_i32_0 = arith.constant 0 : i32
    %c0_i32_1 = arith.constant 0 : i32
    return %arg1, %c0_i32, %c0_i32_0 : i32, i32, i32
  }
  func.func @transform_6(%arg0: i32, %arg1: i32) -> (i32, i32, i32) {
    %c0_i32 = arith.constant 0 : i32
    %c0_i32_0 = arith.constant 0 : i32
    %c0_i32_1 = arith.constant 0 : i32
    return %arg1, %c0_i32, %c0_i32_0 : i32, i32, i32
  }
  func.func @transform_7(%arg0: i32, %arg1: i32) -> (i32, i32, i32) {
    %c0_i32 = arith.constant 0 : i32
    %c0_i32_0 = arith.constant 0 : i32
    %c0_i32_1 = arith.constant 0 : i32
    return %arg1, %c0_i32, %c0_i32_0 : i32, i32, i32
  }
  func.func @transform_8(%arg0: i32, %arg1: i32) -> (i32, i32, i32) {
    %c0_i32 = arith.constant 0 : i32
    %c0_i32_0 = arith.constant 0 : i32
    %c0_i32_1 = arith.constant 0 : i32
    return %arg1, %c0_i32, %c0_i32_0 : i32, i32, i32
  }
  func.func @transform_9(%arg0: i32, %arg1: i32) -> (i32, i32, i32) {
    %c0_i32 = arith.constant 0 : i32
    %c0_i32_0 = arith.constant 0 : i32
    %c0_i32_1 = arith.constant 0 : i32
    return %arg1, %c0_i32, %c0_i32_0 : i32, i32, i32
  }
  func.func @transform_10(%arg0: i32, %arg1: i32) -> (i32, i32, i32) {
    %c0_i32 = arith.constant 0 : i32
    %c0_i32_0 = arith.constant 0 : i32
    %c0_i32_1 = arith.constant 0 : i32
    return %arg1, %c0_i32, %c0_i32_0 : i32, i32, i32
  }
  func.func @transform_11(%arg0: i32, %arg1: i32) -> (i32, i32, i32) {
    %c0_i32 = arith.constant 0 : i32
    %c0_i32_0 = arith.constant 0 : i32
    %c0_i32_1 = arith.constant 0 : i32
    return %arg1, %c0_i32, %c0_i32_0 : i32, i32, i32
  }
  func.func @transform_12(%arg0: i32, %arg1: i32) -> (i32, i32, i32) {
    %c0_i32 = arith.constant 0 : i32
    %c0_i32_0 = arith.constant 0 : i32
    %c0_i32_1 = arith.constant 0 : i32
    return %arg1, %c0_i32, %c0_i32_0 : i32, i32, i32
  }
  func.func @transform_13(%arg0: i32, %arg1: i32) -> (i32, i32) {
    %c0_i32 = arith.constant 0 : i32
    %c0_i32_0 = arith.constant 0 : i32
    %c0_i32_1 = arith.constant 0 : i32
    return %c0_i32, %c0_i32_0 : i32, i32
  }
  func.func @transform_14(%arg0: i32, %arg1: i32) -> (i32, i32) {
    %c0_i32 = arith.constant 0 : i32
    %c0_i32_0 = arith.constant 0 : i32
    %c0_i32_1 = arith.constant 0 : i32
    return %c0_i32, %c0_i32_0 : i32, i32
  }
  func.func @transform_15(%arg0: i32, %arg1: i32) -> (i32, i32, i32) {
    %c0_i32 = arith.constant 0 : i32
    %c0_i32_0 = arith.constant 0 : i32
    %c0_i32_1 = arith.constant 0 : i32
    %c0_i32_2 = arith.constant 0 : i32
    return %c0_i32, %c0_i32_0, %c0_i32_1 : i32, i32, i32
  }
  func.func @transform_16(%arg0: i32, %arg1: i32) -> (i32, i32, i32) {
    %c0_i32 = arith.constant 0 : i32
    %c0_i32_0 = arith.constant 0 : i32
    %c0_i32_1 = arith.constant 0 : i32
    %c0_i32_2 = arith.constant 0 : i32
    return %c0_i32, %c0_i32_0, %c0_i32_1 : i32, i32, i32
  }
  func.func @transform_17(%arg0: i32, %arg1: i32) -> (i32, i32) {
    %c0_i32 = arith.constant 0 : i32
    %c0_i32_0 = arith.constant 0 : i32
    %c0_i32_1 = arith.constant 0 : i32
    return %c0_i32, %c0_i32_0 : i32, i32
  }
  func.func @transform_18(%arg0: i32, %arg1: i32) -> (i32, i32) {
    %c0_i32 = arith.constant 0 : i32
    %c0_i32_0 = arith.constant 0 : i32
    %c0_i32_1 = arith.constant 0 : i32
    return %c0_i32, %c0_i32_0 : i32, i32
  }
  func.func @transform_19(%arg0: i32, %arg1: i32) -> (i32, i32, i32) {
    %c0_i32 = arith.constant 0 : i32
    %c0_i32_0 = arith.constant 0 : i32
    %c0_i32_1 = arith.constant 0 : i32
    return %arg0, %c0_i32, %c0_i32_0 : i32, i32, i32
  }
}

</mosaic_0001>

<llo_original>
// kernel: squeeze.1
$region0: #{squeeze.1}
  %s0 = inlined_call_operand.vmem [shape: f32[2,1,4,16,16], index: 0, kind: input, shape index: {}]
  %s1 = inlined_call_operand.vmem [shape: f32[2,4,4,4,4,4], index: 1, kind: output, shape index: {}]
  $region1: #{squeeze.1} parent=0
    #allocation0 [shape = 'u8[524288]{0}', space=vmem, size = 0x80000, scoped, tag = 'scoped mem for output reshape']
    %v2 = vld [vmem:[%s0] sm:$0xff]
    %vm3 = vcmask 31744
    %4 = vst.msk [vmem:[#allocation0] ss:$8 sm:$0xf] %vm3, %v2
    %5 = vst.msk [vmem:[#allocation0] ss:$8 sm:$0xf0] %vm3, %v2
    %s6 = scalar_lea.vmem %s0, 8
    %v7 = vld [vmem:[%s6] sm:$0xff]
    %vm8 = vcmask 31744
    %s9 = scalar_lea.vmem [#allocation0], 64
    %10 = vst.msk [vmem:[%s9] ss:$8 sm:$0xf] %vm8, %v7
    %s11 = scalar_lea.vmem [#allocation0], 64
    %12 = vst.msk [vmem:[%s11] ss:$8 sm:$0xf0] %vm8, %v7
    %s13 = scalar_lea.vmem %s0, 16
    %v14 = vld [vmem:[%s13] sm:$0xff]
    %vm15 = vcmask 31744
    %s16 = scalar_lea.vmem [#allocation0], 128
    %17 = vst.msk [vmem:[%s16] ss:$8 sm:$0xf] %vm15, %v14
    %s18 = scalar_lea.vmem [#allocation0], 128
    %19 = vst.msk [vmem:[%s18] ss:$8 sm:$0xf0] %vm15, %v14
    %s20 = scalar_lea.vmem %s0, 24
    %v21 = vld [vmem:[%s20] sm:$0xff]
    %vm22 = vcmask 31744
    %s23 = scalar_lea.vmem [#allocation0], 192
    %24 = vst.msk [vmem:[%s23] ss:$8 sm:$0xf] %vm22, %v21
    %s25 = scalar_lea.vmem [#allocation0], 192
    %26 = vst.msk [vmem:[%s25] ss:$8 sm:$0xf0] %vm22, %v21
    %s27 = scalar_lea.vmem %s0, 32
    %v28 = vld [vmem:[%s27] sm:$0xff]
    %vm29 = vcmask 31744
    %s30 = scalar_lea.vmem [#allocation0], 256
    %31 = vst.msk [vmem:[%s30] ss:$8 sm:$0xf] %vm29, %v28
    %s32 = scalar_lea.vmem [#allocation0], 256
    %33 = vst.msk [vmem:[%s32] ss:$8 sm:$0xf0] %vm29, %v28
    %s34 = scalar_lea.vmem %s0, 40
    %v35 = vld [vmem:[%s34] sm:$0xff]
    %vm36 = vcmask 31744
    %s37 = scalar_lea.vmem [#allocation0], 320
    %38 = vst.msk [vmem:[%s37] ss:$8 sm:$0xf] %vm36, %v35
    %s39 = scalar_lea.vmem [#allocation0], 320
    %40 = vst.msk [vmem:[%s39] ss:$8 sm:$0xf0] %vm36, %v35
    %s41 = scalar_lea.vmem %s0, 48
    %v42 = vld [vmem:[%s41] sm:$0xff]
    %vm43 = vcmask 31744
    %s44 = scalar_lea.vmem [#allocation0], 384
    %45 = vst.msk [vmem:[%s44] ss:$8 sm:$0xf] %vm43, %v42
    %s46 = scalar_lea.vmem [#allocation0], 384
    %47 = vst.msk [vmem:[%s46] ss:$8 sm:$0xf0] %vm43, %v42
    %s48 = scalar_lea.vmem %s0, 56
    %v49 = vld [vmem:[%s48] sm:$0xff]
    %vm50 = vcmask 31744
    %s51 = scalar_lea.vmem [#allocation0], 448
    %52 = vst.msk [vmem:[%s51] ss:$8 sm:$0xf] %vm50, %v49
    %s53 = scalar_lea.vmem [#allocation0], 448
    %54 = vst.msk [vmem:[%s53] ss:$8 sm:$0xf0] %vm50, %v49
    %s55 = scalar_lea.vmem %s0, 64
    %v56 = vld [vmem:[%s55] sm:$0xff]
    %vm57 = vcmask 31744
    %s58 = scalar_lea.vmem [#allocation0], 512
    %59 = vst.msk [vmem:[%s58] ss:$8 sm:$0xf] %vm57, %v56
    %s60 = scalar_lea.vmem [#allocation0], 512
    %61 = vst.msk [vmem:[%s60] ss:$8 sm:$0xf0] %vm57, %v56
    %s62 = scalar_lea.vmem %s0, 72
    %v63 = vld [vmem:[%s62] sm:$0xff]
    %vm64 = vcmask 31744
    %s65 = scalar_lea.vmem [#allocation0], 576
    %66 = vst.msk [vmem:[%s65] ss:$8 sm:$0xf] %vm64, %v63
    %s67 = scalar_lea.vmem [#allocation0], 576
    %68 = vst.msk [vmem:[%s67] ss:$8 sm:$0xf0] %vm64, %v63
    %s69 = scalar_lea.vmem %s0, 80
    %v70 = vld [vmem:[%s69] sm:$0xff]
    %vm71 = vcmask 31744
    %s72 = scalar_lea.vmem [#allocation0], 640
    %73 = vst.msk [vmem:[%s72] ss:$8 sm:$0xf] %vm71, %v70
    %s74 = scalar_lea.vmem [#allocation0], 640
    %75 = vst.msk [vmem:[%s74] ss:$8 sm:$0xf0] %vm71, %v70
    %s76 = scalar_lea.vmem %s0, 88
    %v77 = vld [vmem:[%s76] sm:$0xff]
    %vm78 = vcmask 31744
    %s79 = scalar_lea.vmem [#allocation0], 704
    %80 = vst.msk [vmem:[%s79] ss:$8 sm:$0xf] %vm78, %v77
    %s81 = scalar_lea.vmem [#allocation0], 704
    %82 = vst.msk [vmem:[%s81] ss:$8 sm:$0xf0] %vm78, %v77
    %s83 = scalar_lea.vmem %s0, 96
    %v84 = vld [vmem:[%s83] sm:$0xff]
    %vm85 = vcmask 31744
    %s86 = scalar_lea.vmem [#allocation0], 768
    %87 = vst.msk [vmem:[%s86] ss:$8 sm:$0xf] %vm85, %v84
    %s88 = scalar_lea.vmem [#allocation0], 768
    %89 = vst.msk [vmem:[%s88] ss:$8 sm:$0xf0] %vm85, %v84
    %s90 = scalar_lea.vmem %s0, 104
    %v91 = vld [vmem:[%s90] sm:$0xff]
    %vm92 = vcmask 31744
    %s93 = scalar_lea.vmem [#allocation0], 832
    %94 = vst.msk [vmem:[%s93] ss:$8 sm:$0xf] %vm92, %v91
    %s95 = scalar_lea.vmem [#allocation0], 832
    %96 = vst.msk [vmem:[%s95] ss:$8 sm:$0xf0] %vm92, %v91
    %s97 = scalar_lea.vmem %s0, 112
    %v98 = vld [vmem:[%s97] sm:$0xff]
    %vm99 = vcmask 31744
    %s100 = scalar_lea.vmem [#allocation0], 896
    %101 = vst.msk [vmem:[%s100] ss:$8 sm:$0xf] %vm99, %v98
    %s102 = scalar_lea.vmem [#allocation0], 896
    %103 = vst.msk [vmem:[%s102] ss:$8 sm:$0xf0] %vm99, %v98
    %s104 = scalar_lea.vmem %s0, 120
    %v105 = vld [vmem:[%s104] sm:$0xff]
    %vm106 = vcmask 31744
    %s107 = scalar_lea.vmem [#allocation0], 960
    %108 = vst.msk [vmem:[%s107] ss:$8 sm:$0xf] %vm106, %v105
    %s109 = scalar_lea.vmem [#allocation0], 960
    %110 = vst.msk [vmem:[%s109] ss:$8 sm:$0xf0] %vm106, %v105
    %v111 = vld [vmem:[%s0] sm:$0xff]
    %112 = vrot.lane.b32.xlu0 %v111, 124
    %v113 = vpop.permute.xlu0 %112
    %vm114 = vcmask 31744
    %s115 = scalar_lea.vmem [#allocation0], 1
    %116 = vst.msk [vmem:[%s115] ss:$8 sm:$0xf] %vm114, %v113
    %s117 = scalar_lea.vmem [#allocation0], 1
    %118 = vst.msk [vmem:[%s117] ss:$8 sm:$0xf0] %vm114, %v113
    %s119 = scalar_lea.vmem %s0, 8
    %v120 = vld [vmem:[%s119] sm:$0xff]
    %121 = vrot.lane.b32.xlu0 %v120, 124
    %v122 = vpop.permute.xlu0 %121
    %vm123 = vcmask 31744
    %s124 = scalar_lea.vmem [#allocation0], 65
    %125 = vst.msk [vmem:[%s124] ss:$8 sm:$0xf] %vm123, %v122
    %s126 = scalar_lea.vmem [#allocation0], 65
    %127 = vst.msk [vmem:[%s126] ss:$8 sm:$0xf0] %vm123, %v122
    %s128 = scalar_lea.vmem %s0, 16
    %v129 = vld [vmem:[%s128] sm:$0xff]
    %130 = vrot.lane.b32.xlu0 %v129, 124
    %v131 = vpop.permute.xlu0 %130
    %vm132 = vcmask 31744
    %s133 = scalar_lea.vmem [#allocation0], 129
    %134 = vst.msk [vmem:[%s133] ss:$8 sm:$0xf] %vm132, %v131
    %s135 = scalar_lea.vmem [#allocation0], 129
    %136 = vst.msk [vmem:[%s135] ss:$8 sm:$0xf0] %vm132, %v131
    %s137 = scalar_lea.vmem %s0, 24
    %v138 = vld [vmem:[%s137] sm:$0xff]
    %139 = vrot.lane.b32.xlu0 %v138, 124
    %v140 = vpop.permute.xlu0 %139
    %vm141 = vcmask 31744
    %s142 = scalar_lea.vmem [#allocation0], 193
    %143 = vst.msk [vmem:[%s142] ss:$8 sm:$0xf] %vm141, %v140
    %s144 = scalar_lea.vmem [#allocation0], 193
    %145 = vst.msk [vmem:[%s144] ss:$8 sm:$0xf0] %vm141, %v140
    %s146 = scalar_lea.vmem %s0, 32
    %v147 = vld [vmem:[%s146] sm:$0xff]
    %148 = vrot.lane.b32.xlu0 %v147, 124
    %v149 = vpop.permute.xlu0 %148
    %vm150 = vcmask 31744
    %s151 = scalar_lea.vmem [#allocation0], 257
    %152 = vst.msk [vmem:[%s151] ss:$8 sm:$0xf] %vm150, %v149
    %s153 = scalar_lea.vmem [#allocation0], 257
    %154 = vst.msk [vmem:[%s153] ss:$8 sm:$0xf0] %vm150, %v149
    %s155 = scalar_lea.vmem %s0, 40
    %v156 = vld [vmem:[%s155] sm:$0xff]
    %157 = vrot.lane.b32.xlu0 %v156, 124
    %v158 = vpop.permute.xlu0 %157
    %vm159 = vcmask 31744
    %s160 = scalar_lea.vmem [#allocation0], 321
    %161 = vst.msk [vmem:[%s160] ss:$8 sm:$0xf] %vm159, %v158
    %s162 = scalar_lea.vmem [#allocation0], 321
    %163 = vst.msk [vmem:[%s162] ss:$8 sm:$0xf0] %vm159, %v158
    %s164 = scalar_lea.vmem %s0, 48
    %v165 = vld [vmem:[%s164] sm:$0xff]
    %166 = vrot.lane.b32.xlu0 %v165, 124
    %v167 = vpop.permute.xlu0 %166
    %vm168 = vcmask 31744
    %s169 = scalar_lea.vmem [#allocation0], 385
    %170 = vst.msk [vmem:[%s169] ss:$8 sm:$0xf] %vm168, %v167
    %s171 = scalar_lea.vmem [#allocation0], 385
    %172 = vst.msk [vmem:[%s171] ss:$8 sm:$0xf0] %vm168, %v167
    %s173 = scalar_lea.vmem %s0, 56
    %v174 = vld [vmem:[%s173] sm:$0xff]
    %175 = vrot.lane.b32.xlu0 %v174, 124
    %v176 = vpop.permute.xlu0 %175
    %vm177 = vcmask 31744
    %s178 = scalar_lea.vmem [#allocation0], 449
    %179 = vst.msk [vmem:[%s178] ss:$8 sm:$0xf] %vm177, %v176
    %s180 = scalar_lea.vmem [#allocation0], 449
    %181 = vst.msk [vmem:[%s180] ss:$8 sm:$0xf0] %vm177, %v176
    %s182 = scalar_lea.vmem %s0, 64
    %v183 = vld [vmem:[%s182] sm:$0xff]
    %184 = vrot.lane.b32.xlu0 %v183, 124
    %v185 = vpop.permute.xlu0 %184
    %vm186 = vcmask 31744
    %s187 = scalar_lea.vmem [#allocation0], 513
    %188 = vst.msk [vmem:[%s187] ss:$8 sm:$0xf] %vm186, %v185
    %s189 = scalar_lea.vmem [#allocation0], 513
    %190 = vst.msk [vmem:[%s189] ss:$8 sm:$0xf0] %vm186, %v185
    %s191 = scalar_lea.vmem %s0, 72
    %v192 = vld [vmem:[%s191] sm:$0xff]
    %193 = vrot.lane.b32.xlu0 %v192, 124
    %v194 = vpop.permute.xlu0 %193
    %vm195 = vcmask 31744
    %s196 = scalar_lea.vmem [#allocation0], 577
    %197 = vst.msk [vmem:[%s196] ss:$8 sm:$0xf] %vm195, %v194
    %s198 = scalar_lea.vmem [#allocation0], 577
    %199 = vst.msk [vmem:[%s198] ss:$8 sm:$0xf0] %vm195, %v194
    %s200 = scalar_lea.vmem %s0, 80
    %v201 = vld [vmem:[%s200] sm:$0xff]
    %202 = vrot.lane.b32.xlu0 %v201, 124
    %v203 = vpop.permute.xlu0 %202
    %vm204 = vcmask 31744
    %s205 = scalar_lea.vmem [#allocation0], 641
    %206 = vst.msk [vmem:[%s205] ss:$8 sm:$0xf] %vm204, %v203
    %s207 = scalar_lea.vmem [#allocation0], 641
    %208 = vst.msk [vmem:[%s207] ss:$8 sm:$0xf0] %vm204, %v203
    %s209 = scalar_lea.vmem %s0, 88
    %v210 = vld [vmem:[%s209] sm:$0xff]
    %211 = vrot.lane.b32.xlu0 %v210, 124
    %v212 = vpop.permute.xlu0 %211
    %vm213 = vcmask 31744
    %s214 = scalar_lea.vmem [#allocation0], 705
    %215 = vst.msk [vmem:[%s214] ss:$8 sm:$0xf] %vm213, %v212
    %s216 = scalar_lea.vmem [#allocation0], 705
    %217 = vst.msk [vmem:[%s216] ss:$8 sm:$0xf0] %vm213, %v212
    %s218 = scalar_lea.vmem %s0, 96
    %v219 = vld [vmem:[%s218] sm:$0xff]
    %220 = vrot.lane.b32.xlu0 %v219, 124
    %v221 = vpop.permute.xlu0 %220
    %vm222 = vcmask 31744
    %s223 = scalar_lea.vmem [#allocation0], 769
    %224 = vst.msk [vmem:[%s223] ss:$8 sm:$0xf] %vm222, %v221
    %s225 = scalar_lea.vmem [#allocation0], 769
    %226 = vst.msk [vmem:[%s225] ss:$8 sm:$0xf0] %vm222, %v221
    %s227 = scalar_lea.vmem %s0, 104
    %v228 = vld [vmem:[%s227] sm:$0xff]
    %229 = vrot.lane.b32.xlu0 %v228, 124
    %v230 = vpop.permute.xlu0 %229
    %vm231 = vcmask 31744
    %s232 = scalar_lea.vmem [#allocation0], 833
    %233 = vst.msk [vmem:[%s232] ss:$8 sm:$0xf] %vm231, %v230
    %s234 = scalar_lea.vmem [#allocation0], 833
    %235 = vst.msk [vmem:[%s234] ss:$8 sm:$0xf0] %vm231, %v230
    %s236 = scalar_lea.vmem %s0, 112
    %v237 = vld [vmem:[%s236] sm:$0xff]
    %238 = vrot.lane.b32.xlu0 %v237, 124
    %v239 = vpop.permute.xlu0 %238
    %vm240 = vcmask 31744
    %s241 = scalar_lea.vmem [#allocation0], 897
    %242 = vst.msk [vmem:[%s241] ss:$8 sm:$0xf] %vm240, %v239
    %s243 = scalar_lea.vmem [#allocation0], 897
    %244 = vst.msk [vmem:[%s243] ss:$8 sm:$0xf0] %vm240, %v239
    %s245 = scalar_lea.vmem %s0, 120
    %v246 = vld [vmem:[%s245] sm:$0xff]
    %247 = vrot.lane.b32.xlu0 %v246, 124
    %v248 = vpop.permute.xlu0 %247
    %vm249 = vcmask 31744
    %s250 = scalar_lea.vmem [#allocation0], 961
    %251 = vst.msk [vmem:[%s250] ss:$8 sm:$0xf] %vm249, %v248
    %s252 = scalar_lea.vmem [#allocation0], 961
    %253 = vst.msk [vmem:[%s252] ss:$8 sm:$0xf0] %vm249, %v248
    %v254 = vld [vmem:[%s0] sm:$0xff]
    %255 = vrot.lane.b32.xlu0 %v254, 120
    %v256 = vpop.permute.xlu0 %255
    %vm257 = vcmask 31744
    %s258 = scalar_lea.vmem [#allocation0], 2
    %259 = vst.msk [vmem:[%s258] ss:$8 sm:$0xf] %vm257, %v256
    %s260 = scalar_lea.vmem [#allocation0], 2
    %261 = vst.msk [vmem:[%s260] ss:$8 sm:$0xf0] %vm257, %v256
    %s262 = scalar_lea.vmem %s0, 8
    %v263 = vld [vmem:[%s262] sm:$0xff]
    %264 = vrot.lane.b32.xlu0 %v263, 120
    %v265 = vpop.permute.xlu0 %264
    %vm266 = vcmask 31744
    %s267 = scalar_lea.vmem [#allocation0], 66
    %268 = vst.msk [vmem:[%s267] ss:$8 sm:$0xf] %vm266, %v265
    %s269 = scalar_lea.vmem [#allocation0], 66
    %270 = vst.msk [vmem:[%s269] ss:$8 sm:$0xf0] %vm266, %v265
    %s271 = scalar_lea.vmem %s0, 16
    %v272 = vld [vmem:[%s271] sm:$0xff]
    %273 = vrot.lane.b32.xlu0 %v272, 120
    %v274 = vpop.permute.xlu0 %273
    %vm275 = vcmask 31744
    %s276 = scalar_lea.vmem [#allocation0], 130
    %277 = vst.msk [vmem:[%s276] ss:$8 sm:$0xf] %vm275, %v274
    %s278 = scalar_lea.vmem [#allocation0], 130
    %279 = vst.msk [vmem:[%s278] ss:$8 sm:$0xf0] %vm275, %v274
    %s280 = scalar_lea.vmem %s0, 24
    %v281 = vld [vmem:[%s280] sm:$0xff]
    %282 = vrot.lane.b32.xlu0 %v281, 120
    %v283 = vpop.permute.xlu0 %282
    %vm284 = vcmask 31744
    %s285 = scalar_lea.vmem [#allocation0], 194
    %286 = vst.msk [vmem:[%s285] ss:$8 sm:$0xf] %vm284, %v283
    %s287 = scalar_lea.vmem [#allocation0], 194
    %288 = vst.msk [vmem:[%s287] ss:$8 sm:$0xf0] %vm284, %v283
    %s289 = scalar_lea.vmem %s0, 32
    %v290 = vld [vmem:[%s289] sm:$0xff]
    %291 = vrot.lane.b32.xlu0 %v290, 120
    %v292 = vpop.permute.xlu0 %291
    %vm293 = vcmask 31744
    %s294 = scalar_lea.vmem [#allocation0], 258
    %295 = vst.msk [vmem:[%s294] ss:$8 sm:$0xf] %vm293, %v292
    %s296 = scalar_lea.vmem [#allocation0], 258
    %297 = vst.msk [vmem:[%s296] ss:$8 sm:$0xf0] %vm293, %v292
    %s298 = scalar_lea.vmem %s0, 40
    %v299 = vld [vmem:[%s298] sm:$0xff]
    %300 = vrot.lane.b32.xlu0 %v299, 120
    %v301 = vpop.permute.xlu0 %300
    %vm302 = vcmask 31744
    %s303 = scalar_lea.vmem [#allocation0], 322
    %304 = vst.msk [vmem:[%s303] ss:$8 sm:$0xf] %vm302, %v301
    %s305 = scalar_lea.vmem [#allocation0], 322
    %306 = vst.msk [vmem:[%s305] ss:$8 sm:$0xf0] %vm302, %v301
    %s307 = scalar_lea.vmem %s0, 48
    %v308 = vld [vmem:[%s307] sm:$0xff]
    %309 = vrot.lane.b32.xlu0 %v308, 120
    %v310 = vpop.permute.xlu0 %309
    %vm311 = vcmask 31744
    %s312 = scalar_lea.vmem [#allocation0], 386
    %313 = vst.msk [vmem:[%s312] ss:$8 sm:$0xf] %vm311, %v310
    %s314 = scalar_lea.vmem [#allocation0], 386
    %315 = vst.msk [vmem:[%s314] ss:$8 sm:$0xf0] %vm311, %v310
    %s316 = scalar_lea.vmem %s0, 56
    %v317 = vld [vmem:[%s316] sm:$0xff]
    %318 = vrot.lane.b32.xlu0 %v317, 120
    %v319 = vpop.permute.xlu0 %318
    %vm320 = vcmask 31744
    %s321 = scalar_lea.vmem [#allocation0], 450
    %322 = vst.msk [vmem:[%s321] ss:$8 sm:$0xf] %vm320, %v319
    %s323 = scalar_lea.vmem [#allocation0], 450
    %324 = vst.msk [vmem:[%s323] ss:$8 sm:$0xf0] %vm320, %v319
    %s325 = scalar_lea.vmem %s0, 64
    %v326 = vld [vmem:[%s325] sm:$0xff]
    %327 = vrot.lane.b32.xlu0 %v326, 120
    %v328 = vpop.permute.xlu0 %327
    %vm329 = vcmask 31744
    %s330 = scalar_lea.vmem [#allocation0], 514
    %331 = vst.msk [vmem:[%s330] ss:$8 sm:$0xf] %vm329, %v328
    %s332 = scalar_lea.vmem [#allocation0], 514
    %333 = vst.msk [vmem:[%s332] ss:$8 sm:$0xf0] %vm329, %v328
    %s334 = scalar_lea.vmem %s0, 72
    %v335 = vld [vmem:[%s334] sm:$0xff]
    %336 = vrot.lane.b32.xlu0 %v335, 120
    %v337 = vpop.permute.xlu0 %336
    %vm338 = vcmask 31744
    %s339 = scalar_lea.vmem [#allocation0], 578
    %340 = vst.msk [vmem:[%s339] ss:$8 sm:$0xf] %vm338, %v337
    %s341 = scalar_lea.vmem [#allocation0], 578
    %342 = vst.msk [vmem:[%s341] ss:$8 sm:$0xf0] %vm338, %v337
    %s343 = scalar_lea.vmem %s0, 80
    %v344 = vld [vmem:[%s343] sm:$0xff]
    %345 = vrot.lane.b32.xlu0 %v344, 120
    %v346 = vpop.permute.xlu0 %345
    %vm347 = vcmask 31744
    %s348 = scalar_lea.vmem [#allocation0], 642
    %349 = vst.msk [vmem:[%s348] ss:$8 sm:$0xf] %vm347, %v346
    %s350 = scalar_lea.vmem [#allocation0], 642
    %351 = vst.msk [vmem:[%s350] ss:$8 sm:$0xf0] %vm347, %v346
    %s352 = scalar_lea.vmem %s0, 88
    %v353 = vld [vmem:[%s352] sm:$0xff]
    %354 = vrot.lane.b32.xlu0 %v353, 120
    %v355 = vpop.permute.xlu0 %354
    %vm356 = vcmask 31744
    %s357 = scalar_lea.vmem [#allocation0], 706
    %358 = vst.msk [vmem:[%s357] ss:$8 sm:$0xf] %vm356, %v355
    %s359 = scalar_lea.vmem [#allocation0], 706
    %360 = vst.msk [vmem:[%s359] ss:$8 sm:$0xf0] %vm356, %v355
    %s361 = scalar_lea.vmem %s0, 96
    %v362 = vld [vmem:[%s361] sm:$0xff]
    %363 = vrot.lane.b32.xlu0 %v362, 120
    %v364 = vpop.permute.xlu0 %363
    %vm365 = vcmask 31744
    %s366 = scalar_lea.vmem [#allocation0], 770
    %367 = vst.msk [vmem:[%s366] ss:$8 sm:$0xf] %vm365, %v364
    %s368 = scalar_lea.vmem [#allocation0], 770
    %369 = vst.msk [vmem:[%s368] ss:$8 sm:$0xf0] %vm365, %v364
    %s370 = scalar_lea.vmem %s0, 104
    %v371 = vld [vmem:[%s370] sm:$0xff]
    %372 = vrot.lane.b32.xlu0 %v371, 120
    %v373 = vpop.permute.xlu0 %372
    %vm374 = vcmask 31744
    %s375 = scalar_lea.vmem [#allocation0], 834
    %376 = vst.msk [vmem:[%s375] ss:$8 sm:$0xf] %vm374, %v373
    %s377 = scalar_lea.vmem [#allocation0], 834
    %378 = vst.msk [vmem:[%s377] ss:$8 sm:$0xf0] %vm374, %v373
    %s379 = scalar_lea.vmem %s0, 112
    %v380 = vld [vmem:[%s379] sm:$0xff]
    %381 = vrot.lane.b32.xlu0 %v380, 120
    %v382 = vpop.permute.xlu0 %381
    %vm383 = vcmask 31744
    %s384 = scalar_lea.vmem [#allocation0], 898
    %385 = vst.msk [vmem:[%s384] ss:$8 sm:$0xf] %vm383, %v382
    %s386 = scalar_lea.vmem [#allocation0], 898
    %387 = vst.msk [vmem:[%s386] ss:$8 sm:$0xf0] %vm383, %v382
    %s388 = scalar_lea.vmem %s0, 120
    %v389 = vld [vmem:[%s388] sm:$0xff]
    %390 = vrot.lane.b32.xlu0 %v389, 120
    %v391 = vpop.permute.xlu0 %390
    %vm392 = vcmask 31744
    %s393 = scalar_lea.vmem [#allocation0], 962
    %394 = vst.msk [vmem:[%s393] ss:$8 sm:$0xf] %vm392, %v391
    %s395 = scalar_lea.vmem [#allocation0], 962
    %396 = vst.msk [vmem:[%s395] ss:$8 sm:$0xf0] %vm392, %v391
    %v397 = vld [vmem:[%s0] sm:$0xff]
    %398 = vrot.lane.b32.xlu0 %v397, 116
    %v399 = vpop.permute.xlu0 %398
    %vm400 = vcmask 31744
    %s401 = scalar_lea.vmem [#allocation0], 3
    %402 = vst.msk [vmem:[%s401] ss:$8 sm:$0xf] %vm400, %v399
    %s403 = scalar_lea.vmem [#allocation0], 3
    %404 = vst.msk [vmem:[%s403] ss:$8 sm:$0xf0] %vm400, %v399
    %s405 = scalar_lea.vmem %s0, 8
    %v406 = vld [vmem:[%s405] sm:$0xff]
    %407 = vrot.lane.b32.xlu0 %v406, 116
    %v408 = vpop.permute.xlu0 %407
    %vm409 = vcmask 31744
    %s410 = scalar_lea.vmem [#allocation0], 67
    %411 = vst.msk [vmem:[%s410] ss:$8 sm:$0xf] %vm409, %v408
    %s412 = scalar_lea.vmem [#allocation0], 67
    %413 = vst.msk [vmem:[%s412] ss:$8 sm:$0xf0] %vm409, %v408
    %s414 = scalar_lea.vmem %s0, 16
    %v415 = vld [vmem:[%s414] sm:$0xff]
    %416 = vrot.lane.b32.xlu0 %v415, 116
    %v417 = vpop.permute.xlu0 %416
    %vm418 = vcmask 31744
    %s419 = scalar_lea.vmem [#allocation0], 131
    %420 = vst.msk [vmem:[%s419] ss:$8 sm:$0xf] %vm418, %v417
    %s421 = scalar_lea.vmem [#allocation0], 131
    %422 = vst.msk [vmem:[%s421] ss:$8 sm:$0xf0] %vm418, %v417
    %s423 = scalar_lea.vmem %s0, 24
    %v424 = vld [vmem:[%s423] sm:$0xff]
    %425 = vrot.lane.b32.xlu0 %v424, 116
    %v426 = vpop.permute.xlu0 %425
    %vm427 = vcmask 31744
    %s428 = scalar_lea.vmem [#allocation0], 195
    %429 = vst.msk [vmem:[%s428] ss:$8 sm:$0xf] %vm427, %v426
    %s430 = scalar_lea.vmem [#allocation0], 195
    %431 = vst.msk [vmem:[%s430] ss:$8 sm:$0xf0] %vm427, %v426
    %s432 = scalar_lea.vmem %s0, 32
    %v433 = vld [vmem:[%s432] sm:$0xff]
    %434 = vrot.lane.b32.xlu0 %v433, 116
    %v435 = vpop.permute.xlu0 %434
    %vm436 = vcmask 31744
    %s437 = scalar_lea.vmem [#allocation0], 259
    %438 = vst.msk [vmem:[%s437] ss:$8 sm:$0xf] %vm436, %v435
    %s439 = scalar_lea.vmem [#allocation0], 259
    %440 = vst.msk [vmem:[%s439] ss:$8 sm:$0xf0] %vm436, %v435
    %s441 = scalar_lea.vmem %s0, 40
    %v442 = vld [vmem:[%s441] sm:$0xff]
    %443 = vrot.lane.b32.xlu0 %v442, 116
    %v444 = vpop.permute.xlu0 %443
    %vm445 = vcmask 31744
    %s446 = scalar_lea.vmem [#allocation0], 323
    %447 = vst.msk [vmem:[%s446] ss:$8 sm:$0xf] %vm445, %v444
    %s448 = scalar_lea.vmem [#allocation0], 323
    %449 = vst.msk [vmem:[%s448] ss:$8 sm:$0xf0] %vm445, %v444
    %s450 = scalar_lea.vmem %s0, 48
    %v451 = vld [vmem:[%s450] sm:$0xff]
    %452 = vrot.lane.b32.xlu0 %v451, 116
    %v453 = vpop.permute.xlu0 %452
    %vm454 = vcmask 31744
    %s455 = scalar_lea.vmem [#allocation0], 387
    %456 = vst.msk [vmem:[%s455] ss:$8 sm:$0xf] %vm454, %v453
    %s457 = scalar_lea.vmem [#allocation0], 387
    %458 = vst.msk [vmem:[%s457] ss:$8 sm:$0xf0] %vm454, %v453
    %s459 = scalar_lea.vmem %s0, 56
    %v460 = vld [vmem:[%s459] sm:$0xff]
    %461 = vrot.lane.b32.xlu0 %v460, 116
    %v462 = vpop.permute.xlu0 %461
    %vm463 = vcmask 31744
    %s464 = scalar_lea.vmem [#allocation0], 451
    %465 = vst.msk [vmem:[%s464] ss:$8 sm:$0xf] %vm463, %v462
    %s466 = scalar_lea.vmem [#allocation0], 451
    %467 = vst.msk [vmem:[%s466] ss:$8 sm:$0xf0] %vm463, %v462
    %s468 = scalar_lea.vmem %s0, 64
    %v469 = vld [vmem:[%s468] sm:$0xff]
    %470 = vrot.lane.b32.xlu0 %v469, 116
    %v471 = vpop.permute.xlu0 %470
    %vm472 = vcmask 31744
    %s473 = scalar_lea.vmem [#allocation0], 515
    %474 = vst.msk [vmem:[%s473] ss:$8 sm:$0xf] %vm472, %v471
    %s475 = scalar_lea.vmem [#allocation0], 515
    %476 = vst.msk [vmem:[%s475] ss:$8 sm:$0xf0] %vm472, %v471
    %s477 = scalar_lea.vmem %s0, 72
    %v478 = vld [vmem:[%s477] sm:$0xff]
    %479 = vrot.lane.b32.xlu0 %v478, 116
    %v480 = vpop.permute.xlu0 %479
    %vm481 = vcmask 31744
    %s482 = scalar_lea.vmem [#allocation0], 579
    %483 = vst.msk [vmem:[%s482] ss:$8 sm:$0xf] %vm481, %v480
    %s484 = scalar_lea.vmem [#allocation0], 579
    %485 = vst.msk [vmem:[%s484] ss:$8 sm:$0xf0] %vm481, %v480
    %s486 = scalar_lea.vmem %s0, 80
    %v487 = vld [vmem:[%s486] sm:$0xff]
    %488 = vrot.lane.b32.xlu0 %v487, 116
    %v489 = vpop.permute.xlu0 %488
    %vm490 = vcmask 31744
    %s491 = scalar_lea.vmem [#allocation0], 643
    %492 = vst.msk [vmem:[%s491] ss:$8 sm:$0xf] %vm490, %v489
    %s493 = scalar_lea.vmem [#allocation0], 643
    %494 = vst.msk [vmem:[%s493] ss:$8 sm:$0xf0] %vm490, %v489
    %s495 = scalar_lea.vmem %s0, 88
    %v496 = vld [vmem:[%s495] sm:$0xff]
    %497 = vrot.lane.b32.xlu0 %v496, 116
    %v498 = vpop.permute.xlu0 %497
    %vm499 = vcmask 31744
    %s500 = scalar_lea.vmem [#allocation0], 707
    %501 = vst.msk [vmem:[%s500] ss:$8 sm:$0xf] %vm499, %v498
    %s502 = scalar_lea.vmem [#allocation0], 707
    %503 = vst.msk [vmem:[%s502] ss:$8 sm:$0xf0] %vm499, %v498
    %s504 = scalar_lea.vmem %s0, 96
    %v505 = vld [vmem:[%s504] sm:$0xff]
    %506 = vrot.lane.b32.xlu0 %v505, 116
    %v507 = vpop.permute.xlu0 %506
    %vm508 = vcmask 31744
    %s509 = scalar_lea.vmem [#allocation0], 771
    %510 = vst.msk [vmem:[%s509] ss:$8 sm:$0xf] %vm508, %v507
    %s511 = scalar_lea.vmem [#allocation0], 771
    %512 = vst.msk [vmem:[%s511] ss:$8 sm:$0xf0] %vm508, %v507
    %s513 = scalar_lea.vmem %s0, 104
    %v514 = vld [vmem:[%s513] sm:$0xff]
    %515 = vrot.lane.b32.xlu0 %v514, 116
    %v516 = vpop.permute.xlu0 %515
    %vm517 = vcmask 31744
    %s518 = scalar_lea.vmem [#allocation0], 835
    %519 = vst.msk [vmem:[%s518] ss:$8 sm:$0xf] %vm517, %v516
    %s520 = scalar_lea.vmem [#allocation0], 835
    %521 = vst.msk [vmem:[%s520] ss:$8 sm:$0xf0] %vm517, %v516
    %s522 = scalar_lea.vmem %s0, 112
    %v523 = vld [vmem:[%s522] sm:$0xff]
    %524 = vrot.lane.b32.xlu0 %v523, 116
    %v525 = vpop.permute.xlu0 %524
    %vm526 = vcmask 31744
    %s527 = scalar_lea.vmem [#allocation0], 899
    %528 = vst.msk [vmem:[%s527] ss:$8 sm:$0xf] %vm526, %v525
    %s529 = scalar_lea.vmem [#allocation0], 899
    %530 = vst.msk [vmem:[%s529] ss:$8 sm:$0xf0] %vm526, %v525
    %s531 = scalar_lea.vmem %s0, 120
    %v532 = vld [vmem:[%s531] sm:$0xff]
    %533 = vrot.lane.b32.xlu0 %v532, 116
    %v534 = vpop.permute.xlu0 %533
    %vm535 = vcmask 31744
    %s536 = scalar_lea.vmem [#allocation0], 963
    %537 = vst.msk [vmem:[%s536] ss:$8 sm:$0xf] %vm535, %v534
    %s538 = scalar_lea.vmem [#allocation0], 963
    %539 = vst.msk [vmem:[%s538] ss:$8 sm:$0xf0] %vm535, %v534
    %s541 = sshllo.u32 0, 4
    %v543 = vld [vmem:[#allocation0] sm:%s541]
    %s544 = sshllo.u32 0, 4
    %545 = vst [vmem:[%s1] sm:%s544] %v543
    %s546 = scalar_lea.vmem [#allocation0], 8
    %v547 = vld [vmem:[%s546] sm:%s541]
    %s548 = sshllo.u32 0, 4
    %s549 = scalar_lea.vmem %s1, 4
    %550 = vst [vmem:[%s549] sm:%s548] %v547
    %s551 = scalar_lea.vmem [#allocation0], 16
    %v552 = vld [vmem:[%s551] sm:%s541]
    %s553 = sshllo.u32 0, 4
    %s554 = smul.addr 4, 2
    %s555 = scalar_lea.vmem %s1, %s554
    %556 = vst [vmem:[%s555] sm:%s553] %v552
    %s557 = scalar_lea.vmem [#allocation0], 24
    %v558 = vld [vmem:[%s557] sm:%s541]
    %s559 = sshllo.u32 0, 4
    %s560 = smul.addr 4, 3
    %s561 = scalar_lea.vmem %s1, %s560
    %562 = vst [vmem:[%s561] sm:%s559] %v558
    %s563 = scalar_lea.vmem [#allocation0], 32
    %v564 = vld [vmem:[%s563] sm:%s541]
    %s565 = sshllo.u32 0, 4
    %s566 = smul.addr 4, 4
    %s567 = scalar_lea.vmem %s1, %s566
    %568 = vst [vmem:[%s567] sm:%s565] %v564
    %s569 = scalar_lea.vmem [#allocation0], 40
    %v570 = vld [vmem:[%s569] sm:%s541]
    %s571 = sshllo.u32 0, 4
    %s572 = smul.addr 4, 5
    %s573 = scalar_lea.vmem %s1, %s572
    %574 = vst [vmem:[%s573] sm:%s571] %v570
    %s575 = scalar_lea.vmem [#allocation0], 48
    %v576 = vld [vmem:[%s575] sm:%s541]
    %s577 = sshllo.u32 0, 4
    %s578 = smul.addr 4, 6
    %s579 = scalar_lea.vmem %s1, %s578
    %580 = vst [vmem:[%s579] sm:%s577] %v576
    %s581 = scalar_lea.vmem [#allocation0], 56
    %v582 = vld [vmem:[%s581] sm:%s541]
    %s583 = sshllo.u32 0, 4
    %s584 = smul.addr 4, 7
    %s585 = scalar_lea.vmem %s1, %s584
    %586 = vst [vmem:[%s585] sm:%s583] %v582
    %s587 = scalar_lea.vmem [#allocation0], 64
    %v588 = vld [vmem:[%s587] sm:%s541]
    %s589 = sshllo.u32 0, 4
    %s590 = smul.addr 4, 8
    %s591 = scalar_lea.vmem %s1, %s590
    %592 = vst [vmem:[%s591] sm:%s589] %v588
    %s593 = scalar_lea.vmem [#allocation0], 72
    %v594 = vld [vmem:[%s593] sm:%s541]
    %s595 = sshllo.u32 0, 4
    %s596 = smul.addr 4, 9
    %s597 = scalar_lea.vmem %s1, %s596
    %598 = vst [vmem:[%s597] sm:%s595] %v594
    %s599 = scalar_lea.vmem [#allocation0], 80
    %v600 = vld [vmem:[%s599] sm:%s541]
    %s601 = sshllo.u32 0, 4
    %s602 = smul.addr 4, 10
    %s603 = scalar_lea.vmem %s1, %s602
    %604 = vst [vmem:[%s603] sm:%s601] %v600
    %s605 = scalar_lea.vmem [#allocation0], 88
    %v606 = vld [vmem:[%s605] sm:%s541]
    %s607 = sshllo.u32 0, 4
    %s608 = smul.addr 4, 11
    %s609 = scalar_lea.vmem %s1, %s608
    %610 = vst [vmem:[%s609] sm:%s607] %v606
    %s611 = scalar_lea.vmem [#allocation0], 96
    %v612 = vld [vmem:[%s611] sm:%s541]
    %s613 = sshllo.u32 0, 4
    %s614 = smul.addr 4, 12
    %s615 = scalar_lea.vmem %s1, %s614
    %616 = vst [vmem:[%s615] sm:%s613] %v612
    %s617 = scalar_lea.vmem [#allocation0], 104
    %v618 = vld [vmem:[%s617] sm:%s541]
    %s619 = sshllo.u32 0, 4
    %s620 = smul.addr 4, 13
    %s621 = scalar_lea.vmem %s1, %s620
    %622 = vst [vmem:[%s621] sm:%s619] %v618
    %s623 = scalar_lea.vmem [#allocation0], 112
    %v624 = vld [vmem:[%s623] sm:%s541]
    %s625 = sshllo.u32 0, 4
    %s626 = smul.addr 4, 14
    %s627 = scalar_lea.vmem %s1, %s626
    %628 = vst [vmem:[%s627] sm:%s625] %v624
    %s629 = scalar_lea.vmem [#allocation0], 120
    %v630 = vld [vmem:[%s629] sm:%s541]
    %s631 = sshllo.u32 0, 4
    %s632 = smul.addr 4, 15
    %s633 = scalar_lea.vmem %s1, %s632
    %634 = vst [vmem:[%s633] sm:%s631] %v630
    %s635 = scalar_lea.vmem [#allocation0], 128
    %v636 = vld [vmem:[%s635] sm:%s541]
    %s637 = sshllo.u32 0, 4
    %s638 = smul.addr 4, 16
    %s639 = scalar_lea.vmem %s1, %s638
    %640 = vst [vmem:[%s639] sm:%s637] %v636
    %s641 = scalar_lea.vmem [#allocation0], 136
    %v642 = vld [vmem:[%s641] sm:%s541]
    %s643 = sshllo.u32 0, 4
    %s644 = smul.addr 4, 17
    %s645 = scalar_lea.vmem %s1, %s644
    %646 = vst [vmem:[%s645] sm:%s643] %v642
    %s647 = scalar_lea.vmem [#allocation0], 144
    %v648 = vld [vmem:[%s647] sm:%s541]
    %s649 = sshllo.u32 0, 4
    %s650 = smul.addr 4, 18
    %s651 = scalar_lea.vmem %s1, %s650
    %652 = vst [vmem:[%s651] sm:%s649] %v648
    %s653 = scalar_lea.vmem [#allocation0], 152
    %v654 = vld [vmem:[%s653] sm:%s541]
    %s655 = sshllo.u32 0, 4
    %s656 = smul.addr 4, 19
    %s657 = scalar_lea.vmem %s1, %s656
    %658 = vst [vmem:[%s657] sm:%s655] %v654
    %s659 = scalar_lea.vmem [#allocation0], 160
    %v660 = vld [vmem:[%s659] sm:%s541]
    %s661 = sshllo.u32 0, 4
    %s662 = smul.addr 4, 20
    %s663 = scalar_lea.vmem %s1, %s662
    %664 = vst [vmem:[%s663] sm:%s661] %v660
    %s665 = scalar_lea.vmem [#allocation0], 168
    %v666 = vld [vmem:[%s665] sm:%s541]
    %s667 = sshllo.u32 0, 4
    %s668 = smul.addr 4, 21
    %s669 = scalar_lea.vmem %s1, %s668
    %670 = vst [vmem:[%s669] sm:%s667] %v666
    %s671 = scalar_lea.vmem [#allocation0], 176
    %v672 = vld [vmem:[%s671] sm:%s541]
    %s673 = sshllo.u32 0, 4
    %s674 = smul.addr 4, 22
    %s675 = scalar_lea.vmem %s1, %s674
    %676 = vst [vmem:[%s675] sm:%s673] %v672
    %s677 = scalar_lea.vmem [#allocation0], 184
    %v678 = vld [vmem:[%s677] sm:%s541]
    %s679 = sshllo.u32 0, 4
    %s680 = smul.addr 4, 23
    %s681 = scalar_lea.vmem %s1, %s680
    %682 = vst [vmem:[%s681] sm:%s679] %v678
    %s683 = scalar_lea.vmem [#allocation0], 192
    %v684 = vld [vmem:[%s683] sm:%s541]
    %s685 = sshllo.u32 0, 4
    %s686 = smul.addr 4, 24
    %s687 = scalar_lea.vmem %s1, %s686
    %688 = vst [vmem:[%s687] sm:%s685] %v684
    %s689 = scalar_lea.vmem [#allocation0], 200
    %v690 = vld [vmem:[%s689] sm:%s541]
    %s691 = sshllo.u32 0, 4
    %s692 = smul.addr 4, 25
    %s693 = scalar_lea.vmem %s1, %s692
    %694 = vst [vmem:[%s693] sm:%s691] %v690
    %s695 = scalar_lea.vmem [#allocation0], 208
    %v696 = vld [vmem:[%s695] sm:%s541]
    %s697 = sshllo.u32 0, 4
    %s698 = smul.addr 4, 26
    %s699 = scalar_lea.vmem %s1, %s698
    %700 = vst [vmem:[%s699] sm:%s697] %v696
    %s701 = scalar_lea.vmem [#allocation0], 216
    %v702 = vld [vmem:[%s701] sm:%s541]
    %s703 = sshllo.u32 0, 4
    %s704 = smul.addr 4, 27
    %s705 = scalar_lea.vmem %s1, %s704
    %706 = vst [vmem:[%s705] sm:%s703] %v702
    %s707 = scalar_lea.vmem [#allocation0], 224
    %v708 = vld [vmem:[%s707] sm:%s541]
    %s709 = sshllo.u32 0, 4
    %s710 = smul.addr 4, 28
    %s711 = scalar_lea.vmem %s1, %s710
    %712 = vst [vmem:[%s711] sm:%s709] %v708
    %s713 = scalar_lea.vmem [#allocation0], 232
    %v714 = vld [vmem:[%s713] sm:%s541]
    %s715 = sshllo.u32 0, 4
    %s716 = smul.addr 4, 29
    %s717 = scalar_lea.vmem %s1, %s716
    %718 = vst [vmem:[%s717] sm:%s715] %v714
    %s719 = scalar_lea.vmem [#allocation0], 240
    %v720 = vld [vmem:[%s719] sm:%s541]
    %s721 = sshllo.u32 0, 4
    %s722 = smul.addr 4, 30
    %s723 = scalar_lea.vmem %s1, %s722
    %724 = vst [vmem:[%s723] sm:%s721] %v720
    %s725 = scalar_lea.vmem [#allocation0], 248
    %v726 = vld [vmem:[%s725] sm:%s541]
    %s727 = sshllo.u32 0, 4
    %s728 = smul.addr 4, 31
    %s729 = scalar_lea.vmem %s1, %s728
    %730 = vst [vmem:[%s729] sm:%s727] %v726
    %s731 = scalar_lea.vmem [#allocation0], 256
    %v732 = vld [vmem:[%s731] sm:%s541]
    %s733 = sshllo.u32 0, 4
    %s734 = smul.addr 4, 32
    %s735 = scalar_lea.vmem %s1, %s734
    %736 = vst [vmem:[%s735] sm:%s733] %v732
    %s737 = scalar_lea.vmem [#allocation0], 264
    %v738 = vld [vmem:[%s737] sm:%s541]
    %s739 = sshllo.u32 0, 4
    %s740 = smul.addr 4, 33
    %s741 = scalar_lea.vmem %s1, %s740
    %742 = vst [vmem:[%s741] sm:%s739] %v738
    %s743 = scalar_lea.vmem [#allocation0], 272
    %v744 = vld [vmem:[%s743] sm:%s541]
    %s745 = sshllo.u32 0, 4
    %s746 = smul.addr 4, 34
    %s747 = scalar_lea.vmem %s1, %s746
    %748 = vst [vmem:[%s747] sm:%s745] %v744
    %s749 = scalar_lea.vmem [#allocation0], 280
    %v750 = vld [vmem:[%s749] sm:%s541]
    %s751 = sshllo.u32 0, 4
    %s752 = smul.addr 4, 35
    %s753 = scalar_lea.vmem %s1, %s752
    %754 = vst [vmem:[%s753] sm:%s751] %v750
    %s755 = scalar_lea.vmem [#allocation0], 288
    %v756 = vld [vmem:[%s755] sm:%s541]
    %s757 = sshllo.u32 0, 4
    %s758 = smul.addr 4, 36
    %s759 = scalar_lea.vmem %s1, %s758
    %760 = vst [vmem:[%s759] sm:%s757] %v756
    %s761 = scalar_lea.vmem [#allocation0], 296
    %v762 = vld [vmem:[%s761] sm:%s541]
    %s763 = sshllo.u32 0, 4
    %s764 = smul.addr 4, 37
    %s765 = scalar_lea.vmem %s1, %s764
    %766 = vst [vmem:[%s765] sm:%s763] %v762
    %s767 = scalar_lea.vmem [#allocation0], 304
    %v768 = vld [vmem:[%s767] sm:%s541]
    %s769 = sshllo.u32 0, 4
    %s770 = smul.addr 4, 38
    %s771 = scalar_lea.vmem %s1, %s770
    %772 = vst [vmem:[%s771] sm:%s769] %v768
    %s773 = scalar_lea.vmem [#allocation0], 312
    %v774 = vld [vmem:[%s773] sm:%s541]
    %s775 = sshllo.u32 0, 4
    %s776 = smul.addr 4, 39
    %s777 = scalar_lea.vmem %s1, %s776
    %778 = vst [vmem:[%s777] sm:%s775] %v774
    %s779 = scalar_lea.vmem [#allocation0], 320
    %v780 = vld [vmem:[%s779] sm:%s541]
    %s781 = sshllo.u32 0, 4
    %s782 = smul.addr 4, 40
    %s783 = scalar_lea.vmem %s1, %s782
    %784 = vst [vmem:[%s783] sm:%s781] %v780
    %s785 = scalar_lea.vmem [#allocation0], 328
    %v786 = vld [vmem:[%s785] sm:%s541]
    %s787 = sshllo.u32 0, 4
    %s788 = smul.addr 4, 41
    %s789 = scalar_lea.vmem %s1, %s788
    %790 = vst [vmem:[%s789] sm:%s787] %v786
    %s791 = scalar_lea.vmem [#allocation0], 336
    %v792 = vld [vmem:[%s791] sm:%s541]
    %s793 = sshllo.u32 0, 4
    %s794 = smul.addr 4, 42
    %s795 = scalar_lea.vmem %s1, %s794
    %796 = vst [vmem:[%s795] sm:%s793] %v792
    %s797 = scalar_lea.vmem [#allocation0], 344
    %v798 = vld [vmem:[%s797] sm:%s541]
    %s799 = sshllo.u32 0, 4
    %s800 = smul.addr 4, 43
    %s801 = scalar_lea.vmem %s1, %s800
    %802 = vst [vmem:[%s801] sm:%s799] %v798
    %s803 = scalar_lea.vmem [#allocation0], 352
    %v804 = vld [vmem:[%s803] sm:%s541]
    %s805 = sshllo.u32 0, 4
    %s806 = smul.addr 4, 44
    %s807 = scalar_lea.vmem %s1, %s806
    %808 = vst [vmem:[%s807] sm:%s805] %v804
    %s809 = scalar_lea.vmem [#allocation0], 360
    %v810 = vld [vmem:[%s809] sm:%s541]
    %s811 = sshllo.u32 0, 4
    %s812 = smul.addr 4, 45
    %s813 = scalar_lea.vmem %s1, %s812
    %814 = vst [vmem:[%s813] sm:%s811] %v810
    %s815 = scalar_lea.vmem [#allocation0], 368
    %v816 = vld [vmem:[%s815] sm:%s541]
    %s817 = sshllo.u32 0, 4
    %s818 = smul.addr 4, 46
    %s819 = scalar_lea.vmem %s1, %s818
    %820 = vst [vmem:[%s819] sm:%s817] %v816
    %s821 = scalar_lea.vmem [#allocation0], 376
    %v822 = vld [vmem:[%s821] sm:%s541]
    %s823 = sshllo.u32 0, 4
    %s824 = smul.addr 4, 47
    %s825 = scalar_lea.vmem %s1, %s824
    %826 = vst [vmem:[%s825] sm:%s823] %v822
    %s827 = scalar_lea.vmem [#allocation0], 384
    %v828 = vld [vmem:[%s827] sm:%s541]
    %s829 = sshllo.u32 0, 4
    %s830 = smul.addr 4, 48
    %s831 = scalar_lea.vmem %s1, %s830
    %832 = vst [vmem:[%s831] sm:%s829] %v828
    %s833 = scalar_lea.vmem [#allocation0], 392
    %v834 = vld [vmem:[%s833] sm:%s541]
    %s835 = sshllo.u32 0, 4
    %s836 = smul.addr 4, 49
    %s837 = scalar_lea.vmem %s1, %s836
    %838 = vst [vmem:[%s837] sm:%s835] %v834
    %s839 = scalar_lea.vmem [#allocation0], 400
    %v840 = vld [vmem:[%s839] sm:%s541]
    %s841 = sshllo.u32 0, 4
    %s842 = smul.addr 4, 50
    %s843 = scalar_lea.vmem %s1, %s842
    %844 = vst [vmem:[%s843] sm:%s841] %v840
    %s845 = scalar_lea.vmem [#allocation0], 408
    %v846 = vld [vmem:[%s845] sm:%s541]
    %s847 = sshllo.u32 0, 4
    %s848 = smul.addr 4, 51
    %s849 = scalar_lea.vmem %s1, %s848
    %850 = vst [vmem:[%s849] sm:%s847] %v846
    %s851 = scalar_lea.vmem [#allocation0], 416
    %v852 = vld [vmem:[%s851] sm:%s541]
    %s853 = sshllo.u32 0, 4
    %s854 = smul.addr 4, 52
    %s855 = scalar_lea.vmem %s1, %s854
    %856 = vst [vmem:[%s855] sm:%s853] %v852
    %s857 = scalar_lea.vmem [#allocation0], 424
    %v858 = vld [vmem:[%s857] sm:%s541]
    %s859 = sshllo.u32 0, 4
    %s860 = smul.addr 4, 53
    %s861 = scalar_lea.vmem %s1, %s860
    %862 = vst [vmem:[%s861] sm:%s859] %v858
    %s863 = scalar_lea.vmem [#allocation0], 432
    %v864 = vld [vmem:[%s863] sm:%s541]
    %s865 = sshllo.u32 0, 4
    %s866 = smul.addr 4, 54
    %s867 = scalar_lea.vmem %s1, %s866
    %868 = vst [vmem:[%s867] sm:%s865] %v864
    %s869 = scalar_lea.vmem [#allocation0], 440
    %v870 = vld [vmem:[%s869] sm:%s541]
    %s871 = sshllo.u32 0, 4
    %s872 = smul.addr 4, 55
    %s873 = scalar_lea.vmem %s1, %s872
    %874 = vst [vmem:[%s873] sm:%s871] %v870
    %s875 = scalar_lea.vmem [#allocation0], 448
    %v876 = vld [vmem:[%s875] sm:%s541]
    %s877 = sshllo.u32 0, 4
    %s878 = smul.addr 4, 56
    %s879 = scalar_lea.vmem %s1, %s878
    %880 = vst [vmem:[%s879] sm:%s877] %v876
    %s881 = scalar_lea.vmem [#allocation0], 456
    %v882 = vld [vmem:[%s881] sm:%s541]
    %s883 = sshllo.u32 0, 4
    %s884 = smul.addr 4, 57
    %s885 = scalar_lea.vmem %s1, %s884
    %886 = vst [vmem:[%s885] sm:%s883] %v882
    %s887 = scalar_lea.vmem [#allocation0], 464
    %v888 = vld [vmem:[%s887] sm:%s541]
    %s889 = sshllo.u32 0, 4
    %s890 = smul.addr 4, 58
    %s891 = scalar_lea.vmem %s1, %s890
    %892 = vst [vmem:[%s891] sm:%s889] %v888
    %s893 = scalar_lea.vmem [#allocation0], 472
    %v894 = vld [vmem:[%s893] sm:%s541]
    %s895 = sshllo.u32 0, 4
    %s896 = smul.addr 4, 59
    %s897 = scalar_lea.vmem %s1, %s896
    %898 = vst [vmem:[%s897] sm:%s895] %v894
    %s899 = scalar_lea.vmem [#allocation0], 480
    %v900 = vld [vmem:[%s899] sm:%s541]
    %s901 = sshllo.u32 0, 4
    %s902 = smul.addr 4, 60
    %s903 = scalar_lea.vmem %s1, %s902
    %904 = vst [vmem:[%s903] sm:%s901] %v900
    %s905 = scalar_lea.vmem [#allocation0], 488
    %v906 = vld [vmem:[%s905] sm:%s541]
    %s907 = sshllo.u32 0, 4
    %s908 = smul.addr 4, 61
    %s909 = scalar_lea.vmem %s1, %s908
    %910 = vst [vmem:[%s909] sm:%s907] %v906
    %s911 = scalar_lea.vmem [#allocation0], 496
    %v912 = vld [vmem:[%s911] sm:%s541]
    %s913 = sshllo.u32 0, 4
    %s914 = smul.addr 4, 62
    %s915 = scalar_lea.vmem %s1, %s914
    %916 = vst [vmem:[%s915] sm:%s913] %v912
    %s917 = scalar_lea.vmem [#allocation0], 504
    %v918 = vld [vmem:[%s917] sm:%s541]
    %s919 = sshllo.u32 0, 4
    %s920 = smul.addr 4, 63
    %s921 = scalar_lea.vmem %s1, %s920
    %922 = vst [vmem:[%s921] sm:%s919] %v918
    %s923 = scalar_lea.vmem [#allocation0], 512
    %v924 = vld [vmem:[%s923] sm:%s541]
    %s925 = sshllo.u32 0, 4
    %s926 = smul.addr 4, 64
    %s927 = scalar_lea.vmem %s1, %s926
    %928 = vst [vmem:[%s927] sm:%s925] %v924
    %s929 = scalar_lea.vmem [#allocation0], 520
    %v930 = vld [vmem:[%s929] sm:%s541]
    %s931 = sshllo.u32 0, 4
    %s932 = smul.addr 4, 65
    %s933 = scalar_lea.vmem %s1, %s932
    %934 = vst [vmem:[%s933] sm:%s931] %v930
    %s935 = scalar_lea.vmem [#allocation0], 528
    %v936 = vld [vmem:[%s935] sm:%s541]
    %s937 = sshllo.u32 0, 4
    %s938 = smul.addr 4, 66
    %s939 = scalar_lea.vmem %s1, %s938
    %940 = vst [vmem:[%s939] sm:%s937] %v936
    %s941 = scalar_lea.vmem [#allocation0], 536
    %v942 = vld [vmem:[%s941] sm:%s541]
    %s943 = sshllo.u32 0, 4
    %s944 = smul.addr 4, 67
    %s945 = scalar_lea.vmem %s1, %s944
    %946 = vst [vmem:[%s945] sm:%s943] %v942
    %s947 = scalar_lea.vmem [#allocation0], 544
    %v948 = vld [vmem:[%s947] sm:%s541]
    %s949 = sshllo.u32 0, 4
    %s950 = smul.addr 4, 68
    %s951 = scalar_lea.vmem %s1, %s950
    %952 = vst [vmem:[%s951] sm:%s949] %v948
    %s953 = scalar_lea.vmem [#allocation0], 552
    %v954 = vld [vmem:[%s953] sm:%s541]
    %s955 = sshllo.u32 0, 4
    %s956 = smul.addr 4, 69
    %s957 = scalar_lea.vmem %s1, %s956
    %958 = vst [vmem:[%s957] sm:%s955] %v954
    %s959 = scalar_lea.vmem [#allocation0], 560
    %v960 = vld [vmem:[%s959] sm:%s541]
    %s961 = sshllo.u32 0, 4
    %s962 = smul.addr 4, 70
    %s963 = scalar_lea.vmem %s1, %s962
    %964 = vst [vmem:[%s963] sm:%s961] %v960
    %s965 = scalar_lea.vmem [#allocation0], 568
    %v966 = vld [vmem:[%s965] sm:%s541]
    %s967 = sshllo.u32 0, 4
    %s968 = smul.addr 4, 71
    %s969 = scalar_lea.vmem %s1, %s968
    %970 = vst [vmem:[%s969] sm:%s967] %v966
    %s971 = scalar_lea.vmem [#allocation0], 576
    %v972 = vld [vmem:[%s971] sm:%s541]
    %s973 = sshllo.u32 0, 4
    %s974 = smul.addr 4, 72
    %s975 = scalar_lea.vmem %s1, %s974
    %976 = vst [vmem:[%s975] sm:%s973] %v972
    %s977 = scalar_lea.vmem [#allocation0], 584
    %v978 = vld [vmem:[%s977] sm:%s541]
    %s979 = sshllo.u32 0, 4
    %s980 = smul.addr 4, 73
    %s981 = scalar_lea.vmem %s1, %s980
    %982 = vst [vmem:[%s981] sm:%s979] %v978
    %s983 = scalar_lea.vmem [#allocation0], 592
    %v984 = vld [vmem:[%s983] sm:%s541]
    %s985 = sshllo.u32 0, 4
    %s986 = smul.addr 4, 74
    %s987 = scalar_lea.vmem %s1, %s986
    %988 = vst [vmem:[%s987] sm:%s985] %v984
    %s989 = scalar_lea.vmem [#allocation0], 600
    %v990 = vld [vmem:[%s989] sm:%s541]
    %s991 = sshllo.u32 0, 4
    %s992 = smul.addr 4, 75
    %s993 = scalar_lea.vmem %s1, %s992
    %994 = vst [vmem:[%s993] sm:%s991] %v990
    %s995 = scalar_lea.vmem [#allocation0], 608
    %v996 = vld [vmem:[%s995] sm:%s541]
    %s997 = sshllo.u32 0, 4
    %s998 = smul.addr 4, 76
    %s999 = scalar_lea.vmem %s1, %s998
    %1000 = vst [vmem:[%s999] sm:%s997] %v996
    %s1001 = scalar_lea.vmem [#allocation0], 616
    %v1002 = vld [vmem:[%s1001] sm:%s541]
    %s1003 = sshllo.u32 0, 4
    %s1004 = smul.addr 4, 77
    %s1005 = scalar_lea.vmem %s1, %s1004
    %1006 = vst [vmem:[%s1005] sm:%s1003] %v1002
    %s1007 = scalar_lea.vmem [#allocation0], 624
    %v1008 = vld [vmem:[%s1007] sm:%s541]
    %s1009 = sshllo.u32 0, 4
    %s1010 = smul.addr 4, 78
    %s1011 = scalar_lea.vmem %s1, %s1010
    %1012 = vst [vmem:[%s1011] sm:%s1009] %v1008
    %s1013 = scalar_lea.vmem [#allocation0], 632
    %v1014 = vld [vmem:[%s1013] sm:%s541]
    %s1015 = sshllo.u32 0, 4
    %s1016 = smul.addr 4, 79
    %s1017 = scalar_lea.vmem %s1, %s1016
    %1018 = vst [vmem:[%s1017] sm:%s1015] %v1014
    %s1019 = scalar_lea.vmem [#allocation0], 640
    %v1020 = vld [vmem:[%s1019] sm:%s541]
    %s1021 = sshllo.u32 0, 4
    %s1022 = smul.addr 4, 80
    %s1023 = scalar_lea.vmem %s1, %s1022
    %1024 = vst [vmem:[%s1023] sm:%s1021] %v1020
    %s1025 = scalar_lea.vmem [#allocation0], 648
    %v1026 = vld [vmem:[%s1025] sm:%s541]
    %s1027 = sshllo.u32 0, 4
    %s1028 = smul.addr 4, 81
    %s1029 = scalar_lea.vmem %s1, %s1028
    %1030 = vst [vmem:[%s1029] sm:%s1027] %v1026
    %s1031 = scalar_lea.vmem [#allocation0], 656
    %v1032 = vld [vmem:[%s1031] sm:%s541]
    %s1033 = sshllo.u32 0, 4
    %s1034 = smul.addr 4, 82
    %s1035 = scalar_lea.vmem %s1, %s1034
    %1036 = vst [vmem:[%s1035] sm:%s1033] %v1032
    %s1037 = scalar_lea.vmem [#allocation0], 664
    %v1038 = vld [vmem:[%s1037] sm:%s541]
    %s1039 = sshllo.u32 0, 4
    %s1040 = smul.addr 4, 83
    %s1041 = scalar_lea.vmem %s1, %s1040
    %1042 = vst [vmem:[%s1041] sm:%s1039] %v1038
    %s1043 = scalar_lea.vmem [#allocation0], 672
    %v1044 = vld [vmem:[%s1043] sm:%s541]
    %s1045 = sshllo.u32 0, 4
    %s1046 = smul.addr 4, 84
    %s1047 = scalar_lea.vmem %s1, %s1046
    %1048 = vst [vmem:[%s1047] sm:%s1045] %v1044
    %s1049 = scalar_lea.vmem [#allocation0], 680
    %v1050 = vld [vmem:[%s1049] sm:%s541]
    %s1051 = sshllo.u32 0, 4
    %s1052 = smul.addr 4, 85
    %s1053 = scalar_lea.vmem %s1, %s1052
    %1054 = vst [vmem:[%s1053] sm:%s1051] %v1050
    %s1055 = scalar_lea.vmem [#allocation0], 688
    %v1056 = vld [vmem:[%s1055] sm:%s541]
    %s1057 = sshllo.u32 0, 4
    %s1058 = smul.addr 4, 86
    %s1059 = scalar_lea.vmem %s1, %s1058
    %1060 = vst [vmem:[%s1059] sm:%s1057] %v1056
    %s1061 = scalar_lea.vmem [#allocation0], 696
    %v1062 = vld [vmem:[%s1061] sm:%s541]
    %s1063 = sshllo.u32 0, 4
    %s1064 = smul.addr 4, 87
    %s1065 = scalar_lea.vmem %s1, %s1064
    %1066 = vst [vmem:[%s1065] sm:%s1063] %v1062
    %s1067 = scalar_lea.vmem [#allocation0], 704
    %v1068 = vld [vmem:[%s1067] sm:%s541]
    %s1069 = sshllo.u32 0, 4
    %s1070 = smul.addr 4, 88
    %s1071 = scalar_lea.vmem %s1, %s1070
    %1072 = vst [vmem:[%s1071] sm:%s1069] %v1068
    %s1073 = scalar_lea.vmem [#allocation0], 712
    %v1074 = vld [vmem:[%s1073] sm:%s541]
    %s1075 = sshllo.u32 0, 4
    %s1076 = smul.addr 4, 89
    %s1077 = scalar_lea.vmem %s1, %s1076
    %1078 = vst [vmem:[%s1077] sm:%s1075] %v1074
    %s1079 = scalar_lea.vmem [#allocation0], 720
    %v1080 = vld [vmem:[%s1079] sm:%s541]
    %s1081 = sshllo.u32 0, 4
    %s1082 = smul.addr 4, 90
    %s1083 = scalar_lea.vmem %s1, %s1082
    %1084 = vst [vmem:[%s1083] sm:%s1081] %v1080
    %s1085 = scalar_lea.vmem [#allocation0], 728
    %v1086 = vld [vmem:[%s1085] sm:%s541]
    %s1087 = sshllo.u32 0, 4
    %s1088 = smul.addr 4, 91
    %s1089 = scalar_lea.vmem %s1, %s1088
    %1090 = vst [vmem:[%s1089] sm:%s1087] %v1086
    %s1091 = scalar_lea.vmem [#allocation0], 736
    %v1092 = vld [vmem:[%s1091] sm:%s541]
    %s1093 = sshllo.u32 0, 4
    %s1094 = smul.addr 4, 92
    %s1095 = scalar_lea.vmem %s1, %s1094
    %1096 = vst [vmem:[%s1095] sm:%s1093] %v1092
    %s1097 = scalar_lea.vmem [#allocation0], 744
    %v1098 = vld [vmem:[%s1097] sm:%s541]
    %s1099 = sshllo.u32 0, 4
    %s1100 = smul.addr 4, 93
    %s1101 = scalar_lea.vmem %s1, %s1100
    %1102 = vst [vmem:[%s1101] sm:%s1099] %v1098
    %s1103 = scalar_lea.vmem [#allocation0], 752
    %v1104 = vld [vmem:[%s1103] sm:%s541]
    %s1105 = sshllo.u32 0, 4
    %s1106 = smul.addr 4, 94
    %s1107 = scalar_lea.vmem %s1, %s1106
    %1108 = vst [vmem:[%s1107] sm:%s1105] %v1104
    %s1109 = scalar_lea.vmem [#allocation0], 760
    %v1110 = vld [vmem:[%s1109] sm:%s541]
    %s1111 = sshllo.u32 0, 4
    %s1112 = smul.addr 4, 95
    %s1113 = scalar_lea.vmem %s1, %s1112
    %1114 = vst [vmem:[%s1113] sm:%s1111] %v1110
    %s1115 = scalar_lea.vmem [#allocation0], 768
    %v1116 = vld [vmem:[%s1115] sm:%s541]
    %s1117 = sshllo.u32 0, 4
    %s1118 = smul.addr 4, 96
    %s1119 = scalar_lea.vmem %s1, %s1118
    %1120 = vst [vmem:[%s1119] sm:%s1117] %v1116
    %s1121 = scalar_lea.vmem [#allocation0], 776
    %v1122 = vld [vmem:[%s1121] sm:%s541]
    %s1123 = sshllo.u32 0, 4
    %s1124 = smul.addr 4, 97
    %s1125 = scalar_lea.vmem %s1, %s1124
    %1126 = vst [vmem:[%s1125] sm:%s1123] %v1122
    %s1127 = scalar_lea.vmem [#allocation0], 784
    %v1128 = vld [vmem:[%s1127] sm:%s541]
    %s1129 = sshllo.u32 0, 4
    %s1130 = smul.addr 4, 98
    %s1131 = scalar_lea.vmem %s1, %s1130
    %1132 = vst [vmem:[%s1131] sm:%s1129] %v1128
    %s1133 = scalar_lea.vmem [#allocation0], 792
    %v1134 = vld [vmem:[%s1133] sm:%s541]
    %s1135 = sshllo.u32 0, 4
    %s1136 = smul.addr 4, 99
    %s1137 = scalar_lea.vmem %s1, %s1136
    %1138 = vst [vmem:[%s1137] sm:%s1135] %v1134
    %s1139 = scalar_lea.vmem [#allocation0], 800
    %v1140 = vld [vmem:[%s1139] sm:%s541]
    %s1141 = sshllo.u32 0, 4
    %s1142 = smul.addr 4, 100
    %s1143 = scalar_lea.vmem %s1, %s1142
    %1144 = vst [vmem:[%s1143] sm:%s1141] %v1140
    %s1145 = scalar_lea.vmem [#allocation0], 808
    %v1146 = vld [vmem:[%s1145] sm:%s541]
    %s1147 = sshllo.u32 0, 4
    %s1148 = smul.addr 4, 101
    %s1149 = scalar_lea.vmem %s1, %s1148
    %1150 = vst [vmem:[%s1149] sm:%s1147] %v1146
    %s1151 = scalar_lea.vmem [#allocation0], 816
    %v1152 = vld [vmem:[%s1151] sm:%s541]
    %s1153 = sshllo.u32 0, 4
    %s1154 = smul.addr 4, 102
    %s1155 = scalar_lea.vmem %s1, %s1154
    %1156 = vst [vmem:[%s1155] sm:%s1153] %v1152
    %s1157 = scalar_lea.vmem [#allocation0], 824
    %v1158 = vld [vmem:[%s1157] sm:%s541]
    %s1159 = sshllo.u32 0, 4
    %s1160 = smul.addr 4, 103
    %s1161 = scalar_lea.vmem %s1, %s1160
    %1162 = vst [vmem:[%s1161] sm:%s1159] %v1158
    %s1163 = scalar_lea.vmem [#allocation0], 832
    %v1164 = vld [vmem:[%s1163] sm:%s541]
    %s1165 = sshllo.u32 0, 4
    %s1166 = smul.addr 4, 104
    %s1167 = scalar_lea.vmem %s1, %s1166
    %1168 = vst [vmem:[%s1167] sm:%s1165] %v1164
    %s1169 = scalar_lea.vmem [#allocation0], 840
    %v1170 = vld [vmem:[%s1169] sm:%s541]
    %s1171 = sshllo.u32 0, 4
    %s1172 = smul.addr 4, 105
    %s1173 = scalar_lea.vmem %s1, %s1172
    %1174 = vst [vmem:[%s1173] sm:%s1171] %v1170
    %s1175 = scalar_lea.vmem [#allocation0], 848
    %v1176 = vld [vmem:[%s1175] sm:%s541]
    %s1177 = sshllo.u32 0, 4
    %s1178 = smul.addr 4, 106
    %s1179 = scalar_lea.vmem %s1, %s1178
    %1180 = vst [vmem:[%s1179] sm:%s1177] %v1176
    %s1181 = scalar_lea.vmem [#allocation0], 856
    %v1182 = vld [vmem:[%s1181] sm:%s541]
    %s1183 = sshllo.u32 0, 4
    %s1184 = smul.addr 4, 107
    %s1185 = scalar_lea.vmem %s1, %s1184
    %1186 = vst [vmem:[%s1185] sm:%s1183] %v1182
    %s1187 = scalar_lea.vmem [#allocation0], 864
    %v1188 = vld [vmem:[%s1187] sm:%s541]
    %s1189 = sshllo.u32 0, 4
    %s1190 = smul.addr 4, 108
    %s1191 = scalar_lea.vmem %s1, %s1190
    %1192 = vst [vmem:[%s1191] sm:%s1189] %v1188
    %s1193 = scalar_lea.vmem [#allocation0], 872
    %v1194 = vld [vmem:[%s1193] sm:%s541]
    %s1195 = sshllo.u32 0, 4
    %s1196 = smul.addr 4, 109
    %s1197 = scalar_lea.vmem %s1, %s1196
    %1198 = vst [vmem:[%s1197] sm:%s1195] %v1194
    %s1199 = scalar_lea.vmem [#allocation0], 880
    %v1200 = vld [vmem:[%s1199] sm:%s541]
    %s1201 = sshllo.u32 0, 4
    %s1202 = smul.addr 4, 110
    %s1203 = scalar_lea.vmem %s1, %s1202
    %1204 = vst [vmem:[%s1203] sm:%s1201] %v1200
    %s1205 = scalar_lea.vmem [#allocation0], 888
    %v1206 = vld [vmem:[%s1205] sm:%s541]
    %s1207 = sshllo.u32 0, 4
    %s1208 = smul.addr 4, 111
    %s1209 = scalar_lea.vmem %s1, %s1208
    %1210 = vst [vmem:[%s1209] sm:%s1207] %v1206
    %s1211 = scalar_lea.vmem [#allocation0], 896
    %v1212 = vld [vmem:[%s1211] sm:%s541]
    %s1213 = sshllo.u32 0, 4
    %s1214 = smul.addr 4, 112
    %s1215 = scalar_lea.vmem %s1, %s1214
    %1216 = vst [vmem:[%s1215] sm:%s1213] %v1212
    %s1217 = scalar_lea.vmem [#allocation0], 904
    %v1218 = vld [vmem:[%s1217] sm:%s541]
    %s1219 = sshllo.u32 0, 4
    %s1220 = smul.addr 4, 113
    %s1221 = scalar_lea.vmem %s1, %s1220
    %1222 = vst [vmem:[%s1221] sm:%s1219] %v1218
    %s1223 = scalar_lea.vmem [#allocation0], 912
    %v1224 = vld [vmem:[%s1223] sm:%s541]
    %s1225 = sshllo.u32 0, 4
    %s1226 = smul.addr 4, 114
    %s1227 = scalar_lea.vmem %s1, %s1226
    %1228 = vst [vmem:[%s1227] sm:%s1225] %v1224
    %s1229 = scalar_lea.vmem [#allocation0], 920
    %v1230 = vld [vmem:[%s1229] sm:%s541]
    %s1231 = sshllo.u32 0, 4
    %s1232 = smul.addr 4, 115
    %s1233 = scalar_lea.vmem %s1, %s1232
    %1234 = vst [vmem:[%s1233] sm:%s1231] %v1230
    %s1235 = scalar_lea.vmem [#allocation0], 928
    %v1236 = vld [vmem:[%s1235] sm:%s541]
    %s1237 = sshllo.u32 0, 4
    %s1238 = smul.addr 4, 116
    %s1239 = scalar_lea.vmem %s1, %s1238
    %1240 = vst [vmem:[%s1239] sm:%s1237] %v1236
    %s1241 = scalar_lea.vmem [#allocation0], 936
    %v1242 = vld [vmem:[%s1241] sm:%s541]
    %s1243 = sshllo.u32 0, 4
    %s1244 = smul.addr 4, 117
    %s1245 = scalar_lea.vmem %s1, %s1244
    %1246 = vst [vmem:[%s1245] sm:%s1243] %v1242
    %s1247 = scalar_lea.vmem [#allocation0], 944
    %v1248 = vld [vmem:[%s1247] sm:%s541]
    %s1249 = sshllo.u32 0, 4
    %s1250 = smul.addr 4, 118
    %s1251 = scalar_lea.vmem %s1, %s1250
    %1252 = vst [vmem:[%s1251] sm:%s1249] %v1248
    %s1253 = scalar_lea.vmem [#allocation0], 952
    %v1254 = vld [vmem:[%s1253] sm:%s541]
    %s1255 = sshllo.u32 0, 4
    %s1256 = smul.addr 4, 119
    %s1257 = scalar_lea.vmem %s1, %s1256
    %1258 = vst [vmem:[%s1257] sm:%s1255] %v1254
    %s1259 = scalar_lea.vmem [#allocation0], 960
    %v1260 = vld [vmem:[%s1259] sm:%s541]
    %s1261 = sshllo.u32 0, 4
    %s1262 = smul.addr 4, 120
    %s1263 = scalar_lea.vmem %s1, %s1262
    %1264 = vst [vmem:[%s1263] sm:%s1261] %v1260
    %s1265 = scalar_lea.vmem [#allocation0], 968
    %v1266 = vld [vmem:[%s1265] sm:%s541]
    %s1267 = sshllo.u32 0, 4
    %s1268 = smul.addr 4, 121
    %s1269 = scalar_lea.vmem %s1, %s1268
    %1270 = vst [vmem:[%s1269] sm:%s1267] %v1266
    %s1271 = scalar_lea.vmem [#allocation0], 976
    %v1272 = vld [vmem:[%s1271] sm:%s541]
    %s1273 = sshllo.u32 0, 4
    %s1274 = smul.addr 4, 122
    %s1275 = scalar_lea.vmem %s1, %s1274
    %1276 = vst [vmem:[%s1275] sm:%s1273] %v1272
    %s1277 = scalar_lea.vmem [#allocation0], 984
    %v1278 = vld [vmem:[%s1277] sm:%s541]
    %s1279 = sshllo.u32 0, 4
    %s1280 = smul.addr 4, 123
    %s1281 = scalar_lea.vmem %s1, %s1280
    %1282 = vst [vmem:[%s1281] sm:%s1279] %v1278
    %s1283 = scalar_lea.vmem [#allocation0], 992
    %v1284 = vld [vmem:[%s1283] sm:%s541]
    %s1285 = sshllo.u32 0, 4
    %s1286 = smul.addr 4, 124
    %s1287 = scalar_lea.vmem %s1, %s1286
    %1288 = vst [vmem:[%s1287] sm:%s1285] %v1284
    %s1289 = scalar_lea.vmem [#allocation0], 1000
    %v1290 = vld [vmem:[%s1289] sm:%s541]
    %s1291 = sshllo.u32 0, 4
    %s1292 = smul.addr 4, 125
    %s1293 = scalar_lea.vmem %s1, %s1292
    %1294 = vst [vmem:[%s1293] sm:%s1291] %v1290
    %s1295 = scalar_lea.vmem [#allocation0], 1008
    %v1296 = vld [vmem:[%s1295] sm:%s541]
    %s1297 = sshllo.u32 0, 4
    %s1298 = smul.addr 4, 126
    %s1299 = scalar_lea.vmem %s1, %s1298
    %1300 = vst [vmem:[%s1299] sm:%s1297] %v1296
    %s1301 = scalar_lea.vmem [#allocation0], 1016
    %v1302 = vld [vmem:[%s1301] sm:%s541]
    %s1303 = sshllo.u32 0, 4
    %s1304 = smul.addr 4, 127
    %s1305 = scalar_lea.vmem %s1, %s1304
    %1306 = vst [vmem:[%s1305] sm:%s1303] %v1302

// kernel: climax_pm25_forward.2
$region0: #{climax_pm25_forward.2}
  #allocation0 [shape = 'u32[]', space=smem, size = 0x4, offset = 0x4, fixed_abs, tag = 'smem constant byte address 0x4 - core index']
  #allocation1 [shape = 'u32[144,128]{1,0:T(1,128)}', space=vmem, size = 0x12000, scoped, tag = 'internal scratch']
  %s0 = inlined_call_operand.vmem [shape: f32[32,64], index: 0, kind: input, shape index: {}]
  %s1 = inlined_call_operand.vmem [shape: bf16[64,16], index: 1, kind: input, shape index: {}]
  %s2 = inlined_call_operand.vmem [shape: f32[1,16], index: 2, kind: input, shape index: {}]
  %s3 = inlined_call_operand.vmem [shape: bf16[64,512], index: 3, kind: input, shape index: {}]
  %s4 = inlined_call_operand.vmem [shape: f32[1,512], index: 4, kind: input, shape index: {}]
  %s5 = inlined_call_operand.vmem [shape: bf16[4,128], index: 5, kind: input, shape index: {}]
  %s6 = inlined_call_operand.vmem [shape: bf16[128,128], index: 6, kind: input, shape index: {}]
  %s7 = inlined_call_operand.vmem [shape: f32[32,128], index: 7, kind: input, shape index: {}, may-alias: {7,8}]
  %s8 = inlined_call_operand.vmem [shape: f32[32,128], index: 8, kind: output, shape index: {}, may-alias: {7,8}]
  %s9 = sld [smem:[#allocation0]]
  $region65: #{climax_pm25_forward.2} parent=0
    _
  %s11 = ssub.s32 1, %s9
  %s12 = scalar_select 0, %s11, %s9
  loop: start=0, step=1, limit=4
  $region2: #{climax_pm25_forward.2} parent=0 // loop_pre_header
    _
  $region3: #{climax_pm25_forward.2} parent=0 // loop_header
    %s14 = sphi 0, %s18
    %p15 = scmp.ge.s32.totalorder %s14, 4
    %s24 = sphi 0, %s26
    %s27 = sphi 0, %s24
    %s28 = sphi 0, %s27
    %s44 = sphi 0, %s28
    %s48 = sphi 0, %s48
    %s50 = sphi 0, %s48
    %s51 = sphi 0, %s50
    %s65 = sphi 0, %s51
    %s69 = sphi 0, %s69
    %s71 = sphi 0, %s69
    %s72 = sphi 0, %s71
    %s86 = sphi 0, %s72
    %s90 = sphi 0, %s90
    %s92 = sphi 0, %s90
    %s93 = sphi 0, %s92
    %s107 = sphi 0, %s93
    %s111 = sphi 0, %s111
    %s113 = sphi 0, %s111
    %s114 = sphi 0, %s113
    %s128 = sphi 0, %s114
    %s132 = sphi 0, %s132
    %s134 = sphi 0, %s132
    %s135 = sphi 0, %s134
    %s149 = sphi 0, %s135
    %s153 = sphi 0, %s153
    %s155 = sphi 0, %s153
    %s156 = sphi 0, %s155
    %s170 = sphi 0, %s156
    %s176 = sphi 0, %s178
    %s179 = sphi 0, %s176
    %s180 = sphi 0, %s179
    %s196 = sphi 0, %s180
    %s202 = sphi 0, %s204
    %s205 = sphi 0, %s202
    %s206 = sphi 0, %s205
    %s222 = sphi 0, %s206
  $region4: #{climax_pm25_forward.2} parent=0 // loop_header_branch
    %17 = sbr.rel (%p15) target = $region8
  $region5: #{climax_pm25_forward.2} parent=0 // loop_body
    %s19 = ssub.s32 %s14, 1
    %s20 = ssub.s32 %s14, 2
    %s21 = sadd.s32 %s14, 1
    %s22 = ssub.s32 %s14, %s21
    %p23 = scmp.eq.s32.totalorder %s22, 0
    %s25 = sadd.s32 %s24, 1
    %s26 = scalar_select %p23, %s24, %s25
    %p29 = pneg %p23
    %p30 = scmp.eq.s32.totalorder %s14, 1
    %p31 = por %p29, %p30
    %p32 = scmp.ne.s32.totalorder %s24, %s27
    %p33 = scmp.eq.s32.totalorder %s14, 0
    %p34 = por %p32, %p33
    %p35 = scmp.ne.s32.totalorder %s24, %s27
    %p36 = scmp.eq.s32.totalorder %s19, 1
    %p37 = por %p35, %p36
    %p38 = scmp.ne.s32.totalorder %s27, %s28
    %p39 = scmp.eq.s32.totalorder %s19, 0
    %p40 = por %p38, %p39
    %p41 = scmp.ne.s32.totalorder %s27, %s28
    %p42 = scmp.eq.s32.totalorder %s20, 1
    %p43 = por %p41, %p42
    %p45 = scmp.ne.s32.totalorder %s28, %s44
    %p46 = scmp.eq.s32.totalorder %s20, 0
    %p47 = por %p45, %p46
    %s49 = sadd.s32 %s48, 1
    %p52 = scmp.eq.s32.totalorder %s14, 1
    %p53 = scmp.ne.s32.totalorder %s48, %s50
    %p54 = scmp.eq.s32.totalorder %s14, 0
    %p55 = por %p53, %p54
    %p56 = scmp.ne.s32.totalorder %s48, %s50
    %p57 = scmp.eq.s32.totalorder %s19, 1
    %p58 = por %p56, %p57
    %p59 = scmp.ne.s32.totalorder %s50, %s51
    %p60 = scmp.eq.s32.totalorder %s19, 0
    %p61 = por %p59, %p60
    %p62 = scmp.ne.s32.totalorder %s50, %s51
    %p63 = scmp.eq.s32.totalorder %s20, 1
    %p64 = por %p62, %p63
    %p66 = scmp.ne.s32.totalorder %s51, %s65
    %p67 = scmp.eq.s32.totalorder %s20, 0
    %p68 = por %p66, %p67
    %s70 = sadd.s32 %s69, 1
    %p73 = scmp.eq.s32.totalorder %s14, 1
    %p74 = scmp.ne.s32.totalorder %s69, %s71
    %p75 = scmp.eq.s32.totalorder %s14, 0
    %p76 = por %p74, %p75
    %p77 = scmp.ne.s32.totalorder %s69, %s71
    %p78 = scmp.eq.s32.totalorder %s19, 1
    %p79 = por %p77, %p78
    %p80 = scmp.ne.s32.totalorder %s71, %s72
    %p81 = scmp.eq.s32.totalorder %s19, 0
    %p82 = por %p80, %p81
    %p83 = scmp.ne.s32.totalorder %s71, %s72
    %p84 = scmp.eq.s32.totalorder %s20, 1
    %p85 = por %p83, %p84
    %p87 = scmp.ne.s32.totalorder %s72, %s86
    %p88 = scmp.eq.s32.totalorder %s20, 0
    %p89 = por %p87, %p88
    %s91 = sadd.s32 %s90, 1
    %p94 = scmp.eq.s32.totalorder %s14, 1
    %p95 = scmp.ne.s32.totalorder %s90, %s92
    %p96 = scmp.eq.s32.totalorder %s14, 0
    %p97 = por %p95, %p96
    %p98 = scmp.ne.s32.totalorder %s90, %s92
    %p99 = scmp.eq.s32.totalorder %s19, 1
    %p100 = por %p98, %p99
    %p101 = scmp.ne.s32.totalorder %s92, %s93
    %p102 = scmp.eq.s32.totalorder %s19, 0
    %p103 = por %p101, %p102
    %p104 = scmp.ne.s32.totalorder %s92, %s93
    %p105 = scmp.eq.s32.totalorder %s20, 1
    %p106 = por %p104, %p105
    %p108 = scmp.ne.s32.totalorder %s93, %s107
    %p109 = scmp.eq.s32.totalorder %s20, 0
    %p110 = por %p108, %p109
    %s112 = sadd.s32 %s111, 1
    %p115 = scmp.eq.s32.totalorder %s14, 1
    %p116 = scmp.ne.s32.totalorder %s111, %s113
    %p117 = scmp.eq.s32.totalorder %s14, 0
    %p118 = por %p116, %p117
    %p119 = scmp.ne.s32.totalorder %s111, %s113
    %p120 = scmp.eq.s32.totalorder %s19, 1
    %p121 = por %p119, %p120
    %p122 = scmp.ne.s32.totalorder %s113, %s114
    %p123 = scmp.eq.s32.totalorder %s19, 0
    %p124 = por %p122, %p123
    %p125 = scmp.ne.s32.totalorder %s113, %s114
    %p126 = scmp.eq.s32.totalorder %s20, 1
    %p127 = por %p125, %p126
    %p129 = scmp.ne.s32.totalorder %s114, %s128
    %p130 = scmp.eq.s32.totalorder %s20, 0
    %p131 = por %p129, %p130
    %s133 = sadd.s32 %s132, 1
    %p136 = scmp.eq.s32.totalorder %s14, 1
    %p137 = scmp.ne.s32.totalorder %s132, %s134
    %p138 = scmp.eq.s32.totalorder %s14, 0
    %p139 = por %p137, %p138
    %p140 = scmp.ne.s32.totalorder %s132, %s134
    %p141 = scmp.eq.s32.totalorder %s19, 1
    %p142 = por %p140, %p141
    %p143 = scmp.ne.s32.totalorder %s134, %s135
    %p144 = scmp.eq.s32.totalorder %s19, 0
    %p145 = por %p143, %p144
    %p146 = scmp.ne.s32.totalorder %s134, %s135
    %p147 = scmp.eq.s32.totalorder %s20, 1
    %p148 = por %p146, %p147
    %p150 = scmp.ne.s32.totalorder %s135, %s149
    %p151 = scmp.eq.s32.totalorder %s20, 0
    %p152 = por %p150, %p151
    %s154 = sadd.s32 %s153, 1
    %p157 = scmp.eq.s32.totalorder %s14, 1
    %p158 = scmp.ne.s32.totalorder %s153, %s155
    %p159 = scmp.eq.s32.totalorder %s14, 0
    %p160 = por %p158, %p159
    %p161 = scmp.ne.s32.totalorder %s153, %s155
    %p162 = scmp.eq.s32.totalorder %s19, 1
    %p163 = por %p161, %p162
    %p164 = scmp.ne.s32.totalorder %s155, %s156
    %p165 = scmp.eq.s32.totalorder %s19, 0
    %p166 = por %p164, %p165
    %p167 = scmp.ne.s32.totalorder %s155, %s156
    %p168 = scmp.eq.s32.totalorder %s20, 1
    %p169 = por %p167, %p168
    %p171 = scmp.ne.s32.totalorder %s156, %s170
    %p172 = scmp.eq.s32.totalorder %s20, 0
    %p173 = por %p171, %p172
    %s174 = ssub.s32 %s14, %s21
    %p175 = scmp.eq.s32.totalorder %s174, 0
    %s177 = sadd.s32 %s176, 1
    %s178 = scalar_select %p175, %s176, %s177
    %p181 = pneg %p175
    %p182 = scmp.eq.s32.totalorder %s14, 1
    %p183 = por %p181, %p182
    %p184 = scmp.ne.s32.totalorder %s176, %s179
    %p185 = scmp.eq.s32.totalorder %s14, 0
    %p186 = por %p184, %p185
    %p187 = scmp.ne.s32.totalorder %s176, %s179
    %p188 = scmp.eq.s32.totalorder %s19, 1
    %p189 = por %p187, %p188
    %p190 = scmp.ne.s32.totalorder %s179, %s180
    %p191 = scmp.eq.s32.totalorder %s19, 0
    %p192 = por %p190, %p191
    %p193 = scmp.ne.s32.totalorder %s179, %s180
    %p194 = scmp.eq.s32.totalorder %s20, 1
    %p195 = por %p193, %p194
    %p197 = scmp.ne.s32.totalorder %s180, %s196
    %p198 = scmp.eq.s32.totalorder %s20, 0
    %p199 = por %p197, %p198
    %s200 = ssub.s32 %s14, %s21
    %p201 = scmp.eq.s32.totalorder %s200, 0
    %s203 = sadd.s32 %s202, 1
    %s204 = scalar_select %p201, %s202, %s203
    %p207 = pneg %p201
    %p208 = scmp.eq.s32.totalorder %s14, 1
    %p209 = por %p207, %p208
    %p210 = scmp.ne.s32.totalorder %s202, %s205
    %p211 = scmp.eq.s32.totalorder %s14, 0
    %p212 = por %p210, %p211
    %p213 = scmp.ne.s32.totalorder %s202, %s205
    %p214 = scmp.eq.s32.totalorder %s19, 1
    %p215 = por %p213, %p214
    %p216 = scmp.ne.s32.totalorder %s205, %s206
    %p217 = scmp.eq.s32.totalorder %s19, 0
    %p218 = por %p216, %p217
    %p219 = scmp.ne.s32.totalorder %s205, %s206
    %p220 = scmp.eq.s32.totalorder %s20, 1
    %p221 = por %p219, %p220
    %p223 = scmp.ne.s32.totalorder %s206, %s222
    %p224 = scmp.eq.s32.totalorder %s20, 0
    %p225 = por %p223, %p224
    %p226 = scmp.le.s32.totalorder 1, %s14
    %p227 = scmp.lt.s32.totalorder %s14, 3
    %p228 = pnand %p226, %p227
    %p229 = pneg %p228
    // Predicated region
    $region9: #{climax_pm25_forward.2} parent=5 // pred_check
      _
    $region10: #{climax_pm25_forward.2} parent=5 // pred_check_branch
      %231 = sbr.rel (%p228) target = $region12
    $region11: #{climax_pm25_forward.2} parent=5 // pred_region
      %s232 = ssub.s32 %s14, 1
      // Predicated region
      $region13: #{climax_pm25_forward.2} parent=11 // pred_check
        %p233 = pneg %p61
      $region14: #{climax_pm25_forward.2} parent=11 // pred_check_branch
        %235 = sbr.rel (%p233) target = $region16
      $region15: #{climax_pm25_forward.2} parent=11 // pred_region
        _
      $region16: #{climax_pm25_forward.2} parent=11 // pred_fallthru
        _
      // Predicated region
      $region17: #{climax_pm25_forward.2} parent=11 // pred_check
        %p236 = pneg %p82
      $region18: #{climax_pm25_forward.2} parent=11 // pred_check_branch
        %238 = sbr.rel (%p236) target = $region20
      $region19: #{climax_pm25_forward.2} parent=11 // pred_region
        _
      $region20: #{climax_pm25_forward.2} parent=11 // pred_fallthru
        _
      // Predicated region
      $region21: #{climax_pm25_forward.2} parent=11 // pred_check
        %p239 = pneg %p103
      $region22: #{climax_pm25_forward.2} parent=11 // pred_check_branch
        %241 = sbr.rel (%p239) target = $region24
      $region23: #{climax_pm25_forward.2} parent=11 // pred_region
        _
      $region24: #{climax_pm25_forward.2} parent=11 // pred_fallthru
        _
      // Predicated region
      $region25: #{climax_pm25_forward.2} parent=11 // pred_check
        %p242 = pneg %p124
      $region26: #{climax_pm25_forward.2} parent=11 // pred_check_branch
        %244 = sbr.rel (%p242) target = $region28
      $region27: #{climax_pm25_forward.2} parent=11 // pred_region
        _
      $region28: #{climax_pm25_forward.2} parent=11 // pred_fallthru
        _
      // Predicated region
      $region29: #{climax_pm25_forward.2} parent=11 // pred_check
        %p245 = pneg %p145
      $region30: #{climax_pm25_forward.2} parent=11 // pred_check_branch
        %247 = sbr.rel (%p245) target = $region32
      $region31: #{climax_pm25_forward.2} parent=11 // pred_region
        _
      $region32: #{climax_pm25_forward.2} parent=11 // pred_fallthru
        _
      // Predicated region
      $region33: #{climax_pm25_forward.2} parent=11 // pred_check
        %p248 = pneg %p166
      $region34: #{climax_pm25_forward.2} parent=11 // pred_check_branch
        %250 = sbr.rel (%p248) target = $region36
      $region35: #{climax_pm25_forward.2} parent=11 // pred_region
        _
      $region36: #{climax_pm25_forward.2} parent=11 // pred_fallthru
        _
    $region12: #{climax_pm25_forward.2} parent=5 // pred_fallthru
      _
    %p251 = scmp.lt.s32.totalorder %s14, 2
    // Predicated region
    $region37: #{climax_pm25_forward.2} parent=5 // pred_check
      %p252 = pneg %p251
    $region38: #{climax_pm25_forward.2} parent=5 // pred_check_branch
      %254 = sbr.rel (%p252) target = $region40
    $region39: #{climax_pm25_forward.2} parent=5 // pred_region
      // Predicated region
      $region41: #{climax_pm25_forward.2} parent=39 // pred_check
        %p255 = pneg %p34
      $region42: #{climax_pm25_forward.2} parent=39 // pred_check_branch
        %257 = sbr.rel (%p255) target = $region44
      $region43: #{climax_pm25_forward.2} parent=39 // pred_region
        %s258 = smul.u32 2, %s14
        %p259 = scmp.lt.s32.totalorder %s258, 3
        %s260 = scalar_select %p259, %s258, 3
        %s261 = smul.addr %s260, 8
        %s262 = scalar_lea.vmem %s0, %s261
        %s263 = smul.u32 2, %s14
      $region44: #{climax_pm25_forward.2} parent=39 // pred_fallthru
        _
      // Predicated region
      $region45: #{climax_pm25_forward.2} parent=39 // pred_check
        %p264 = pneg %p186
      $region46: #{climax_pm25_forward.2} parent=39 // pred_check_branch
        %266 = sbr.rel (%p264) target = $region48
      $region47: #{climax_pm25_forward.2} parent=39 // pred_region
        %s267 = smul.u32 2, %s14
        %p268 = scmp.lt.s32.totalorder %s267, 3
        %s269 = scalar_select %p268, %s267, 3
        %s270 = smul.addr %s269, 8
        %s271 = scalar_lea.vmem %s7, %s270
        %s272 = smul.u32 2, %s14
      $region48: #{climax_pm25_forward.2} parent=39 // pred_fallthru
        _
    $region40: #{climax_pm25_forward.2} parent=5 // pred_fallthru
      _
    %p273 = scmp.le.s32.totalorder 1, %s14
    %p274 = scmp.lt.s32.totalorder %s14, 3
    %p275 = pnand %p273, %p274
    %p276 = pneg %p275
    // Predicated region
    $region49: #{climax_pm25_forward.2} parent=5 // pred_check
      _
    $region50: #{climax_pm25_forward.2} parent=5 // pred_check_branch
      %278 = sbr.rel (%p275) target = $region52
    $region51: #{climax_pm25_forward.2} parent=5 // pred_region
      %s279 = ssub.s32 %s14, 1
      %s280 = smul.u32 2, %s19
      %p281 = scmp.lt.s32.totalorder %s280, 3
      %s282 = scalar_select %p281, %s280, 3
      %s283 = smul.addr %s282, 8
      %s284 = scalar_lea.vmem %s0, %s283
      %p285 = pneg %p40
      %p286 = pneg %p37
      %p287 = pneg %p61
      %p288 = pneg %p58
      %p289 = pneg %p82
      %p290 = pneg %p79
      %p291 = pneg %p103
      %p292 = pneg %p100
      %p293 = pneg %p124
      %p294 = pneg %p121
      %p295 = pneg %p145
      %p296 = pneg %p142
      %p297 = pneg %p166
      %p298 = pneg %p163
      %s299 = smul.u32 2, %s19
      %p300 = scmp.lt.s32.totalorder %s299, 3
      %s301 = scalar_select %p300, %s299, 3
      %s302 = smul.addr %s301, 8
      %s303 = scalar_lea.vmem %s7, %s302
      %p304 = pneg %p192
      %p305 = pneg %p189
      %p306 = pneg %p218
      %p307 = pneg %p215
      %s308 = smul.u32 2, %s19
      %p309 = scmp.lt.s32.totalorder %s308, 3
      %s310 = scalar_select %p309, %s308, 3
      %s311 = smul.addr %s310, 8
      %s312 = scalar_lea.vmem %s8, %s311
      %s313 = smul.u32 2, %s19
      %p314 = scmp.lt.s32.totalorder %s313, 3
      %s315 = scalar_select %p314, %s313, 3
      %s316 = smul.addr %s315, 8
      %s317 = scalar_lea.vmem %s0, %s316
      %s318 = smul.u32 2, %s19
      %s319 = smul.u32 2, %s19
      %p320 = scmp.lt.s32.totalorder %s319, 3
      %s321 = scalar_select %p320, %s319, 3
      %s322 = smul.addr %s321, 8
      %s323 = scalar_lea.vmem %s7, %s322
      %s324 = smul.u32 2, %s19
      %s325 = smul.u32 2, %s19
      %p326 = scmp.lt.s32.totalorder %s325, 3
      %s327 = scalar_select %p326, %s325, 3
      %s328 = smul.addr %s327, 8
      %s329 = scalar_lea.vmem %s8, %s328
      %s330 = smul.u32 2, %s19
      %v332 = vld [vmem:[%s317] sm:$0xff]
      %v333 = vld [vmem:[%s317 + $0x8] sm:$0xff]
      %v334 = vld [vmem:[%s1] sm:$0xf]
      %v335 = vld [vmem:[%s1 + $0x4] sm:$0xf]
      %v336 = vld [vmem:[%s1 + $0x8] sm:$0xf]
      %v337 = vld [vmem:[%s1 + $0xc] sm:$0xf]
      %v338 = vld [vmem:[%s1 + $0x10] sm:$0xf]
      %v339 = vld [vmem:[%s1 + $0x14] sm:$0xf]
      %v340 = vld [vmem:[%s1 + $0x18] sm:$0xf]
      %v341 = vld [vmem:[%s1 + $0x1c] sm:$0xf]
      %v342 = vpack.c.bf16 %v333, %v332
      %v343 = vld [vmem:[%s2] sm:$0x1]
      %v345 = vlaneseq
      %v346 = vshrl.u32 %v345, 7
      %v347 = vsub.s32 0, %v346
      %v348 = vrot.slane %v343, %v347
      %v358 = vunpack.c.l.b16 %v334
      %v359 = vunpack.c.l.b16 %v335
      %v360 = vunpack.c.l.b16 %v336
      %v361 = vunpack.c.l.b16 %v337
      %v362 = vunpack.c.l.b16 %v338
      %v363 = vunpack.c.l.b16 %v339
      %v364 = vunpack.c.l.b16 %v340
      %v365 = vunpack.c.l.b16 %v341
      %v366 = vpack.c.b16 %v359, %v358
      %v367 = vpack.c.b16 %v361, %v360
      %v368 = vpack.c.b16 %v363, %v362
      %v369 = vpack.c.b16 %v365, %v364
      %vm374 = vcmask 523264
      %v376 = vsel %vm374, %v342, 0
      %378 = vmatprep.subr.bf16.mxu0 0
      %379 = vmatpush1.bf16.msra.mxu0 %v366
      %380 = vmatprep.subr.bf16.mxu0 0
      %381 = vmatpush1.bf16.msra.mxu0 %v367
      %382 = vmatprep.subr.bf16.mxu0 0
      %383 = vmatpush1.bf16.msra.mxu0 %v368
      %384 = vmatprep.subr.bf16.mxu0 0
      %385 = vmatpush1.bf16.msra.mxu0 %v369
      %386 = vmatprep.subr.bf16.mxu0 0
      %387 = vmatpush1.bf16.msra.mxu0 0
      %388 = vmatprep.subr.bf16.mxu0 0
      %389 = vmatpush1.bf16.msra.mxu0 0
      %390 = vmatprep.subr.bf16.mxu0 0
      %391 = vmatpush1.bf16.msra.mxu0 0
      %392 = vmatprep.subr.bf16.mxu0 0
      %393 = vmatpush1.bf16.msra.mxu0 0
      %394 = vmatprep.subr.bf16.mxu0 0
      %395 = vmatpush1.bf16.msra.mxu0 0
      %396 = vmatprep.subr.bf16.mxu0 0
      %397 = vmatpush1.bf16.msra.mxu0 0
      %398 = vmatprep.subr.bf16.mxu0 0
      %399 = vmatpush1.bf16.msra.mxu0 0
      %400 = vmatprep.subr.bf16.mxu0 0
      %401 = vmatpush1.bf16.msra.mxu0 0
      %402 = vmatprep.subr.bf16.mxu0 0
      %403 = vmatpush1.bf16.msra.mxu0 0
      %404 = vmatprep.subr.bf16.mxu0 0
      %405 = vmatpush1.bf16.msra.mxu0 0
      %406 = vmatprep.subr.bf16.mxu0 0
      %407 = vmatpush1.bf16.msra.mxu0 0
      %408 = vmatprep.subr.bf16.mxu0 0
      %409 = vmatpush1.bf16.msra.mxu0 0
      %410 = vmatprep.mubr.bf16.mxu0 0
      %411 = vmatmul.mubr.bf16.gmra.mrb[0].mxu0 %v376
      %v412 = vpop.f32.mrb[0].mxu0
      %v413 = vadd.f32 %v348, %v412
      %v414 = vpop.f32.mrb[0].mxu0
      %v415 = vpop.f32.mrb[0].mxu0
      %v416 = vadd.f32 %v348, %v415
      %v417 = vpop.f32.mrb[0].mxu0
      %418 = vdwg.mxu0
      %v419 = vld [vmem:[%s3] sm:$0xff]
      %v420 = vld [vmem:[%s3 + $0x8] sm:$0xff]
      %v421 = vld [vmem:[%s3 + $0x10] sm:$0xff]
      %v422 = vld [vmem:[%s3 + $0x18] sm:$0xff]
      %v423 = vld [vmem:[%s3 + $0x20] sm:$0xff]
      %v424 = vld [vmem:[%s3 + $0x28] sm:$0xff]
      %v425 = vld [vmem:[%s3 + $0x30] sm:$0xff]
      %v426 = vld [vmem:[%s3 + $0x38] sm:$0xff]
      %v427 = vld [vmem:[%s3 + $0x40] sm:$0xff]
      %v428 = vld [vmem:[%s3 + $0x48] sm:$0xff]
      %v429 = vld [vmem:[%s3 + $0x50] sm:$0xff]
      %v430 = vld [vmem:[%s3 + $0x58] sm:$0xff]
      %v431 = vld [vmem:[%s3 + $0x60] sm:$0xff]
      %v432 = vld [vmem:[%s3 + $0x68] sm:$0xff]
      %v433 = vld [vmem:[%s3 + $0x70] sm:$0xff]
      %v434 = vld [vmem:[%s3 + $0x78] sm:$0xff]
      %v435 = vld [vmem:[%s4] sm:$0xf]
      %v437 = vlaneseq
      %v438 = vshrl.u32 %v437, 7
      %v439 = vsub.s32 0, %v438
      %v440 = vrot.slane %v435, %v439
      %v441 = vlaneseq
      %v442 = vshrl.u32 %v441, 7
      %v443 = vsub.s32 1, %v442
      %v444 = vrot.slane %v435, %v443
      %v445 = vlaneseq
      %v446 = vshrl.u32 %v445, 7
      %v447 = vsub.s32 2, %v446
      %v448 = vrot.slane %v435, %v447
      %v449 = vlaneseq
      %v450 = vshrl.u32 %v449, 7
      %v451 = vsub.s32 3, %v450
      %v452 = vrot.slane %v435, %v451
      %v473 = vunpack.c.l.b16 %v419
      %v474 = vunpack.c.h.b16 %v419
      %v475 = vunpack.c.l.b16 %v420
      %v476 = vunpack.c.h.b16 %v420
      %v477 = vunpack.c.l.b16 %v421
      %v478 = vunpack.c.h.b16 %v421
      %v479 = vunpack.c.l.b16 %v422
      %v480 = vunpack.c.h.b16 %v422
      %v481 = vunpack.c.l.b16 %v423
      %v482 = vunpack.c.h.b16 %v423
      %v483 = vunpack.c.l.b16 %v424
      %v484 = vunpack.c.h.b16 %v424
      %v485 = vunpack.c.l.b16 %v425
      %v486 = vunpack.c.h.b16 %v425
      %v487 = vunpack.c.l.b16 %v426
      %v488 = vunpack.c.h.b16 %v426
      %v489 = vunpack.c.l.b16 %v427
      %v490 = vunpack.c.h.b16 %v427
      %v491 = vunpack.c.l.b16 %v428
      %v492 = vunpack.c.h.b16 %v428
      %v493 = vunpack.c.l.b16 %v429
      %v494 = vunpack.c.h.b16 %v429
      %v495 = vunpack.c.l.b16 %v430
      %v496 = vunpack.c.h.b16 %v430
      %v497 = vunpack.c.l.b16 %v431
      %v498 = vunpack.c.h.b16 %v431
      %v499 = vunpack.c.l.b16 %v432
      %v500 = vunpack.c.h.b16 %v432
      %v501 = vunpack.c.l.b16 %v433
      %v502 = vunpack.c.h.b16 %v433
      %v503 = vunpack.c.l.b16 %v434
      %v504 = vunpack.c.h.b16 %v434
      %v505 = vpack.c.b16 %v477, %v473
      %v506 = vpack.c.b16 %v478, %v474
      %v507 = vpack.c.b16 %v479, %v475
      %v508 = vpack.c.b16 %v480, %v476
      %v509 = vpack.c.b16 %v485, %v481
      %v510 = vpack.c.b16 %v486, %v482
      %v511 = vpack.c.b16 %v487, %v483
      %v512 = vpack.c.b16 %v488, %v484
      %v513 = vpack.c.b16 %v493, %v489
      %v514 = vpack.c.b16 %v494, %v490
      %v515 = vpack.c.b16 %v495, %v491
      %v516 = vpack.c.b16 %v496, %v492
      %v517 = vpack.c.b16 %v501, %v497
      %v518 = vpack.c.b16 %v502, %v498
      %v519 = vpack.c.b16 %v503, %v499
      %v520 = vpack.c.b16 %v504, %v500
      %537 = vmatprep.subr.bf16.mxu0 %v506
      %538 = vmatpush1.bf16.msra.mxu0 %v505
      %539 = vmatprep.subr.bf16.mxu0 %v510
      %540 = vmatpush1.bf16.msra.mxu0 %v509
      %541 = vmatprep.subr.bf16.mxu0 %v514
      %542 = vmatpush1.bf16.msra.mxu0 %v513
      %543 = vmatprep.subr.bf16.mxu0 %v518
      %544 = vmatpush1.bf16.msra.mxu0 %v517
      %545 = vmatprep.subr.bf16.mxu0 0
      %546 = vmatpush1.bf16.msra.mxu0 0
      %547 = vmatprep.subr.bf16.mxu0 0
      %548 = vmatpush1.bf16.msra.mxu0 0
      %549 = vmatprep.subr.bf16.mxu0 0
      %550 = vmatpush1.bf16.msra.mxu0 0
      %551 = vmatprep.subr.bf16.mxu0 0
      %552 = vmatpush1.bf16.msra.mxu0 0
      %553 = vmatprep.subr.bf16.mxu0 0
      %554 = vmatpush1.bf16.msra.mxu0 0
      %555 = vmatprep.subr.bf16.mxu0 0
      %556 = vmatpush1.bf16.msra.mxu0 0
      %557 = vmatprep.subr.bf16.mxu0 0
      %558 = vmatpush1.bf16.msra.mxu0 0
      %559 = vmatprep.subr.bf16.mxu0 0
      %560 = vmatpush1.bf16.msra.mxu0 0
      %561 = vmatprep.subr.bf16.mxu0 0
      %562 = vmatpush1.bf16.msra.mxu0 0
      %563 = vmatprep.subr.bf16.mxu0 0
      %564 = vmatpush1.bf16.msra.mxu0 0
      %565 = vmatprep.subr.bf16.mxu0 0
      %566 = vmatpush1.bf16.msra.mxu0 0
      %567 = vmatprep.subr.bf16.mxu0 0
      %568 = vmatpush1.bf16.msra.mxu0 0
      %569 = vmatprep.mubr.bf16.mxu0 0
      %570 = vmatmul.mubr.bf16.gmra.mrb[0].mxu0 %v376
      %v571 = vpop.f32.mrb[0].mxu0
      %v572 = vadd.f32 %v440, %v571
      %v573 = vpop.f32.mrb[0].mxu0
      %v574 = vadd.f32 %v444, %v573
      %v575 = vpop.f32.mrb[0].mxu0
      %v576 = vadd.f32 %v440, %v575
      %v577 = vpop.f32.mrb[0].mxu0
      %v578 = vadd.f32 %v444, %v577
      %579 = vdwg.mxu0
      %580 = vmatprep.subr.bf16.mxu0 %v508
      %581 = vmatpush1.bf16.msra.mxu0 %v507
      %582 = vmatprep.subr.bf16.mxu0 %v512
      %583 = vmatpush1.bf16.msra.mxu0 %v511
      %584 = vmatprep.subr.bf16.mxu0 %v516
      %585 = vmatpush1.bf16.msra.mxu0 %v515
      %586 = vmatprep.subr.bf16.mxu0 %v520
      %587 = vmatpush1.bf16.msra.mxu0 %v519
      %588 = vmatprep.subr.bf16.mxu0 0
      %589 = vmatpush1.bf16.msra.mxu0 0
      %590 = vmatprep.subr.bf16.mxu0 0
      %591 = vmatpush1.bf16.msra.mxu0 0
      %592 = vmatprep.subr.bf16.mxu0 0
      %593 = vmatpush1.bf16.msra.mxu0 0
      %594 = vmatprep.subr.bf16.mxu0 0
      %595 = vmatpush1.bf16.msra.mxu0 0
      %596 = vmatprep.subr.bf16.mxu0 0
      %597 = vmatpush1.bf16.msra.mxu0 0
      %598 = vmatprep.subr.bf16.mxu0 0
      %599 = vmatpush1.bf16.msra.mxu0 0
      %600 = vmatprep.subr.bf16.mxu0 0
      %601 = vmatpush1.bf16.msra.mxu0 0
      %602 = vmatprep.subr.bf16.mxu0 0
      %603 = vmatpush1.bf16.msra.mxu0 0
      %604 = vmatprep.subr.bf16.mxu0 0
      %605 = vmatpush1.bf16.msra.mxu0 0
      %606 = vmatprep.subr.bf16.mxu0 0
      %607 = vmatpush1.bf16.msra.mxu0 0
      %608 = vmatprep.subr.bf16.mxu0 0
      %609 = vmatpush1.bf16.msra.mxu0 0
      %610 = vmatprep.subr.bf16.mxu0 0
      %611 = vmatpush1.bf16.msra.mxu0 0
      %612 = vmatprep.mubr.bf16.mxu0 0
      %613 = vmatmul.mubr.bf16.gmra.mrb[0].mxu0 %v376
      %v614 = vpop.f32.mrb[0].mxu0
      %v615 = vadd.f32 %v448, %v614
      %v616 = vpop.f32.mrb[0].mxu0
      %v617 = vadd.f32 %v452, %v616
      %v618 = vpop.f32.mrb[0].mxu0
      %v619 = vadd.f32 %v448, %v618
      %v620 = vpop.f32.mrb[0].mxu0
      %v621 = vadd.f32 %v452, %v620
      %622 = vdwg.mxu0
      %625 = vrot.lane.b32.xlu0 %v413, 124
      %v626 = vpop.permute.xlu0 %625
      %627 = vrot.lane.b32.xlu0 %v416, 124
      %v628 = vpop.permute.xlu0 %627
      %v631 = vmax.f32 %v413, %v626
      %v632 = vmax.f32 %v416, %v628
      %633 = vrot.lane.b32.xlu0 %v413, 120
      %v634 = vpop.permute.xlu0 %633
      %635 = vrot.lane.b32.xlu0 %v416, 120
      %v636 = vpop.permute.xlu0 %635
      %v639 = vmax.f32 %v631, %v634
      %v640 = vmax.f32 %v632, %v636
      %641 = vrot.lane.b32.xlu0 %v413, 116
      %v642 = vpop.permute.xlu0 %641
      %643 = vrot.lane.b32.xlu0 %v416, 116
      %v644 = vpop.permute.xlu0 %643
      %v647 = vmax.f32 %v639, %v642
      %v648 = vmax.f32 %v640, %v644
      %v649 = vsub.f32 %v413, %v647
      %v650 = vsub.f32 %v416, %v648
      %v651 = vmul.f32 %v649, 1.442695
      %v652 = vpow.pop %v651
      %v653 = vmul.f32 %v650, 1.442695
      %v654 = vpow.pop %v653
      %657 = vrot.lane.b32.xlu0 %v647, 4
      %v658 = vpop.permute.xlu0 %657
      %659 = vrot.lane.b32.xlu0 %v648, 4
      %v660 = vpop.permute.xlu0 %659
      %v663 = vsub.f32 %v413, %v658
      %v664 = vsub.f32 %v416, %v660
      %v665 = vmul.f32 %v663, 1.442695
      %v666 = vpow.pop %v665
      %v667 = vmul.f32 %v664, 1.442695
      %v668 = vpow.pop %v667
      %669 = vrot.lane.b32.xlu0 %v647, 8
      %v670 = vpop.permute.xlu0 %669
      %671 = vrot.lane.b32.xlu0 %v648, 8
      %v672 = vpop.permute.xlu0 %671
      %v675 = vsub.f32 %v413, %v670
      %v676 = vsub.f32 %v416, %v672
      %v677 = vmul.f32 %v675, 1.442695
      %v678 = vpow.pop %v677
      %v679 = vmul.f32 %v676, 1.442695
      %v680 = vpow.pop %v679
      %681 = vrot.lane.b32.xlu0 %v647, 12
      %v682 = vpop.permute.xlu0 %681
      %683 = vrot.lane.b32.xlu0 %v648, 12
      %v684 = vpop.permute.xlu0 %683
      %v687 = vsub.f32 %v413, %v682
      %v688 = vsub.f32 %v416, %v684
      %v689 = vmul.f32 %v687, 1.442695
      %v690 = vpow.pop %v689
      %v691 = vmul.f32 %v688, 1.442695
      %v692 = vpow.pop %v691
      %695 = vrot.lane.b32.xlu0 %v666, 124
      %v696 = vpop.permute.xlu0 %695
      %697 = vrot.lane.b32.xlu0 %v668, 124
      %v698 = vpop.permute.xlu0 %697
      %v701 = vadd.f32 %v652, %v696
      %v702 = vadd.f32 %v654, %v698
      %705 = vrot.lane.b32.xlu0 %v678, 120
      %v706 = vpop.permute.xlu0 %705
      %707 = vrot.lane.b32.xlu0 %v680, 120
      %v708 = vpop.permute.xlu0 %707
      %v711 = vadd.f32 %v701, %v706
      %v712 = vadd.f32 %v702, %v708
      %715 = vrot.lane.b32.xlu0 %v690, 116
      %v716 = vpop.permute.xlu0 %715
      %717 = vrot.lane.b32.xlu0 %v692, 116
      %v718 = vpop.permute.xlu0 %717
      %v721 = vadd.f32 %v711, %v716
      %v722 = vadd.f32 %v712, %v718
      %v723 = vrcp.pop %v721
      %v724 = vrcp.pop %v722
      %v725 = vmul.f32 %v652, %v723
      %v726 = vmul.f32 %v654, %v724
      %v727 = vld [vmem:[%s5] sm:$0x3]
      %v728 = vpack.c.bf16 %v726, %v725
      %vm729 = vcmask 31744
      %v731 = vsel %vm729, %v728, 0
      %vm733 = vcmask 1041408
      %v735 = vsel %vm733, %v727, 0
      %737 = vmatprep.subr.bf16.mxu0 0
      %738 = vmatpush1.bf16.msra.mxu0 %v735
      %739 = vmatprep.subr.bf16.mxu0 0
      %740 = vmatpush1.bf16.msra.mxu0 0
      %741 = vmatprep.subr.bf16.mxu0 0
      %742 = vmatpush1.bf16.msra.mxu0 0
      %743 = vmatprep.subr.bf16.mxu0 0
      %744 = vmatpush1.bf16.msra.mxu0 0
      %745 = vmatprep.subr.bf16.mxu0 0
      %746 = vmatpush1.bf16.msra.mxu0 0
      %747 = vmatprep.subr.bf16.mxu0 0
      %748 = vmatpush1.bf16.msra.mxu0 0
      %749 = vmatprep.subr.bf16.mxu0 0
      %750 = vmatpush1.bf16.msra.mxu0 0
      %751 = vmatprep.subr.bf16.mxu0 0
      %752 = vmatpush1.bf16.msra.mxu0 0
      %753 = vmatprep.subr.bf16.mxu0 0
      %754 = vmatpush1.bf16.msra.mxu0 0
      %755 = vmatprep.subr.bf16.mxu0 0
      %756 = vmatpush1.bf16.msra.mxu0 0
      %757 = vmatprep.subr.bf16.mxu0 0
      %758 = vmatpush1.bf16.msra.mxu0 0
      %759 = vmatprep.subr.bf16.mxu0 0
      %760 = vmatpush1.bf16.msra.mxu0 0
      %761 = vmatprep.subr.bf16.mxu0 0
      %762 = vmatpush1.bf16.msra.mxu0 0
      %763 = vmatprep.subr.bf16.mxu0 0
      %764 = vmatpush1.bf16.msra.mxu0 0
      %765 = vmatprep.subr.bf16.mxu0 0
      %766 = vmatpush1.bf16.msra.mxu0 0
      %767 = vmatprep.subr.bf16.mxu0 0
      %768 = vmatpush1.bf16.msra.mxu0 0
      %769 = vmatprep.mubr.bf16.mxu0 0
      %770 = vmatmul.mubr.bf16.gmra.mrb[0].mxu0 %v731
      %v771 = vpop.f32.mrb[0].mxu0
      %v772 = vadd.f32 0.0, %v771
      %v773 = vpop.f32.mrb[0].mxu0
      %v774 = vpop.f32.mrb[0].mxu0
      %v775 = vadd.f32 0.0, %v774
      %v776 = vpop.f32.mrb[0].mxu0
      %777 = vdwg.mxu0
      %v778 = vmul.f32 %v772, %v572
      %v779 = vmul.f32 %v775, %v576
      %782 = vrot.lane.b32.xlu0 %v723, 4
      %v783 = vpop.permute.xlu0 %782
      %784 = vrot.lane.b32.xlu0 %v724, 4
      %v785 = vpop.permute.xlu0 %784
      %v788 = vmul.f32 %v666, %v783
      %v789 = vmul.f32 %v668, %v785
      %v790 = vpack.c.bf16 %v789, %v788
      %792 = vrot.lane.b32.xlu0 %v790, 124
      %v793 = vpop.permute.xlu0 %792
      %v795 = vsel %vm729, %v793, 0
      %797 = vmatprep.subr.bf16.mxu0 0
      %798 = vmatpush1.bf16.msra.mxu0 %v735
      %799 = vmatprep.subr.bf16.mxu0 0
      %800 = vmatpush1.bf16.msra.mxu0 0
      %801 = vmatprep.subr.bf16.mxu0 0
      %802 = vmatpush1.bf16.msra.mxu0 0
      %803 = vmatprep.subr.bf16.mxu0 0
      %804 = vmatpush1.bf16.msra.mxu0 0
      %805 = vmatprep.subr.bf16.mxu0 0
      %806 = vmatpush1.bf16.msra.mxu0 0
      %807 = vmatprep.subr.bf16.mxu0 0
      %808 = vmatpush1.bf16.msra.mxu0 0
      %809 = vmatprep.subr.bf16.mxu0 0
      %810 = vmatpush1.bf16.msra.mxu0 0
      %811 = vmatprep.subr.bf16.mxu0 0
      %812 = vmatpush1.bf16.msra.mxu0 0
      %813 = vmatprep.subr.bf16.mxu0 0
      %814 = vmatpush1.bf16.msra.mxu0 0
      %815 = vmatprep.subr.bf16.mxu0 0
      %816 = vmatpush1.bf16.msra.mxu0 0
      %817 = vmatprep.subr.bf16.mxu0 0
      %818 = vmatpush1.bf16.msra.mxu0 0
      %819 = vmatprep.subr.bf16.mxu0 0
      %820 = vmatpush1.bf16.msra.mxu0 0
      %821 = vmatprep.subr.bf16.mxu0 0
      %822 = vmatpush1.bf16.msra.mxu0 0
      %823 = vmatprep.subr.bf16.mxu0 0
      %824 = vmatpush1.bf16.msra.mxu0 0
      %825 = vmatprep.subr.bf16.mxu0 0
      %826 = vmatpush1.bf16.msra.mxu0 0
      %827 = vmatprep.subr.bf16.mxu0 0
      %828 = vmatpush1.bf16.msra.mxu0 0
      %829 = vmatprep.mubr.bf16.mxu0 0
      %830 = vmatmul.mubr.bf16.gmra.mrb[0].mxu0 %v795
      %v831 = vpop.f32.mrb[0].mxu0
      %v832 = vadd.f32 0.0, %v831
      %v833 = vpop.f32.mrb[0].mxu0
      %v834 = vpop.f32.mrb[0].mxu0
      %v835 = vadd.f32 0.0, %v834
      %v836 = vpop.f32.mrb[0].mxu0
      %837 = vdwg.mxu0
      %v838 = vmul.f32 %v832, %v574
      %v839 = vmul.f32 %v835, %v578
      %v840 = vadd.f32 %v778, %v838
      %v841 = vadd.f32 %v779, %v839
      %842 = vrot.lane.b32.xlu0 %v723, 8
      %v843 = vpop.permute.xlu0 %842
      %844 = vrot.lane.b32.xlu0 %v724, 8
      %v845 = vpop.permute.xlu0 %844
      %v848 = vmul.f32 %v678, %v843
      %v849 = vmul.f32 %v680, %v845
      %v850 = vpack.c.bf16 %v849, %v848
      %852 = vrot.lane.b32.xlu0 %v850, 120
      %v853 = vpop.permute.xlu0 %852
      %v855 = vsel %vm729, %v853, 0
      %857 = vmatprep.subr.bf16.mxu0 0
      %858 = vmatpush1.bf16.msra.mxu0 %v735
      %859 = vmatprep.subr.bf16.mxu0 0
      %860 = vmatpush1.bf16.msra.mxu0 0
      %861 = vmatprep.subr.bf16.mxu0 0
      %862 = vmatpush1.bf16.msra.mxu0 0
      %863 = vmatprep.subr.bf16.mxu0 0
      %864 = vmatpush1.bf16.msra.mxu0 0
      %865 = vmatprep.subr.bf16.mxu0 0
      %866 = vmatpush1.bf16.msra.mxu0 0
      %867 = vmatprep.subr.bf16.mxu0 0
      %868 = vmatpush1.bf16.msra.mxu0 0
      %869 = vmatprep.subr.bf16.mxu0 0
      %870 = vmatpush1.bf16.msra.mxu0 0
      %871 = vmatprep.subr.bf16.mxu0 0
      %872 = vmatpush1.bf16.msra.mxu0 0
      %873 = vmatprep.subr.bf16.mxu0 0
      %874 = vmatpush1.bf16.msra.mxu0 0
      %875 = vmatprep.subr.bf16.mxu0 0
      %876 = vmatpush1.bf16.msra.mxu0 0
      %877 = vmatprep.subr.bf16.mxu0 0
      %878 = vmatpush1.bf16.msra.mxu0 0
      %879 = vmatprep.subr.bf16.mxu0 0
      %880 = vmatpush1.bf16.msra.mxu0 0
      %881 = vmatprep.subr.bf16.mxu0 0
      %882 = vmatpush1.bf16.msra.mxu0 0
      %883 = vmatprep.subr.bf16.mxu0 0
      %884 = vmatpush1.bf16.msra.mxu0 0
      %885 = vmatprep.subr.bf16.mxu0 0
      %886 = vmatpush1.bf16.msra.mxu0 0
      %887 = vmatprep.subr.bf16.mxu0 0
      %888 = vmatpush1.bf16.msra.mxu0 0
      %889 = vmatprep.mubr.bf16.mxu0 0
      %890 = vmatmul.mubr.bf16.gmra.mrb[0].mxu0 %v855
      %v891 = vpop.f32.mrb[0].mxu0
      %v892 = vadd.f32 0.0, %v891
      %v893 = vpop.f32.mrb[0].mxu0
      %v894 = vpop.f32.mrb[0].mxu0
      %v895 = vadd.f32 0.0, %v894
      %v896 = vpop.f32.mrb[0].mxu0
      %897 = vdwg.mxu0
      %v898 = vmul.f32 %v892, %v615
      %v899 = vmul.f32 %v895, %v619
      %v900 = vadd.f32 %v840, %v898
      %v901 = vadd.f32 %v841, %v899
      %902 = vrot.lane.b32.xlu0 %v723, 12
      %v903 = vpop.permute.xlu0 %902
      %904 = vrot.lane.b32.xlu0 %v724, 12
      %v905 = vpop.permute.xlu0 %904
      %v908 = vmul.f32 %v690, %v903
      %v909 = vmul.f32 %v692, %v905
      %v910 = vpack.c.bf16 %v909, %v908
      %912 = vrot.lane.b32.xlu0 %v910, 116
      %v913 = vpop.permute.xlu0 %912
      %v915 = vsel %vm729, %v913, 0
      %917 = vmatprep.subr.bf16.mxu0 0
      %918 = vmatpush1.bf16.msra.mxu0 %v735
      %919 = vmatprep.subr.bf16.mxu0 0
      %920 = vmatpush1.bf16.msra.mxu0 0
      %921 = vmatprep.subr.bf16.mxu0 0
      %922 = vmatpush1.bf16.msra.mxu0 0
      %923 = vmatprep.subr.bf16.mxu0 0
      %924 = vmatpush1.bf16.msra.mxu0 0
      %925 = vmatprep.subr.bf16.mxu0 0
      %926 = vmatpush1.bf16.msra.mxu0 0
      %927 = vmatprep.subr.bf16.mxu0 0
      %928 = vmatpush1.bf16.msra.mxu0 0
      %929 = vmatprep.subr.bf16.mxu0 0
      %930 = vmatpush1.bf16.msra.mxu0 0
      %931 = vmatprep.subr.bf16.mxu0 0
      %932 = vmatpush1.bf16.msra.mxu0 0
      %933 = vmatprep.subr.bf16.mxu0 0
      %934 = vmatpush1.bf16.msra.mxu0 0
      %935 = vmatprep.subr.bf16.mxu0 0
      %936 = vmatpush1.bf16.msra.mxu0 0
      %937 = vmatprep.subr.bf16.mxu0 0
      %938 = vmatpush1.bf16.msra.mxu0 0
      %939 = vmatprep.subr.bf16.mxu0 0
      %940 = vmatpush1.bf16.msra.mxu0 0
      %941 = vmatprep.subr.bf16.mxu0 0
      %942 = vmatpush1.bf16.msra.mxu0 0
      %943 = vmatprep.subr.bf16.mxu0 0
      %944 = vmatpush1.bf16.msra.mxu0 0
      %945 = vmatprep.subr.bf16.mxu0 0
      %946 = vmatpush1.bf16.msra.mxu0 0
      %947 = vmatprep.subr.bf16.mxu0 0
      %948 = vmatpush1.bf16.msra.mxu0 0
      %949 = vmatprep.mubr.bf16.mxu0 0
      %950 = vmatmul.mubr.bf16.gmra.mrb[0].mxu0 %v915
      %v951 = vpop.f32.mrb[0].mxu0
      %v952 = vadd.f32 0.0, %v951
      %v953 = vpop.f32.mrb[0].mxu0
      %v954 = vpop.f32.mrb[0].mxu0
      %v955 = vadd.f32 0.0, %v954
      %v956 = vpop.f32.mrb[0].mxu0
      %957 = vdwg.mxu0
      %v958 = vmul.f32 %v952, %v617
      %v959 = vmul.f32 %v955, %v621
      %v960 = vadd.f32 %v900, %v958
      %v961 = vadd.f32 %v901, %v959
      %v962 = vld [vmem:[%s6] sm:$0xf]
      %v963 = vld [vmem:[%s6 + $0x4] sm:$0xf]
      %v964 = vld [vmem:[%s6 + $0x8] sm:$0xf]
      %v965 = vld [vmem:[%s6 + $0xc] sm:$0xf]
      %v966 = vld [vmem:[%s6 + $0x10] sm:$0xf]
      %v967 = vld [vmem:[%s6 + $0x14] sm:$0xf]
      %v968 = vld [vmem:[%s6 + $0x18] sm:$0xf]
      %v969 = vld [vmem:[%s6 + $0x1c] sm:$0xf]
      %v970 = vld [vmem:[%s6 + $0x20] sm:$0xf]
      %v971 = vld [vmem:[%s6 + $0x24] sm:$0xf]
      %v972 = vld [vmem:[%s6 + $0x28] sm:$0xf]
      %v973 = vld [vmem:[%s6 + $0x2c] sm:$0xf]
      %v974 = vld [vmem:[%s6 + $0x30] sm:$0xf]
      %v975 = vld [vmem:[%s6 + $0x34] sm:$0xf]
      %v976 = vld [vmem:[%s6 + $0x38] sm:$0xf]
      %v977 = vld [vmem:[%s6 + $0x3c] sm:$0xf]
      %v978 = vpack.c.bf16 %v961, %v960
      %v979 = vld [vmem:[%s323] sm:$0xff]
      %v980 = vld [vmem:[%s323 + $0x8] sm:$0xff]
      %v997 = vunpack.c.l.b16 %v962
      %v998 = vunpack.c.l.b16 %v963
      %v999 = vunpack.c.l.b16 %v964
      %v1000 = vunpack.c.l.b16 %v965
      %v1001 = vunpack.c.l.b16 %v966
      %v1002 = vunpack.c.l.b16 %v967
      %v1003 = vunpack.c.l.b16 %v968
      %v1004 = vunpack.c.l.b16 %v969
      %v1005 = vunpack.c.l.b16 %v970
      %v1006 = vunpack.c.l.b16 %v971
      %v1007 = vunpack.c.l.b16 %v972
      %v1008 = vunpack.c.l.b16 %v973
      %v1009 = vunpack.c.l.b16 %v974
      %v1010 = vunpack.c.l.b16 %v975
      %v1011 = vunpack.c.l.b16 %v976
      %v1012 = vunpack.c.l.b16 %v977
      %v1013 = vpack.c.b16 %v998, %v997
      %v1014 = vpack.c.b16 %v1000, %v999
      %v1015 = vpack.c.b16 %v1002, %v1001
      %v1016 = vpack.c.b16 %v1004, %v1003
      %v1017 = vpack.c.b16 %v1006, %v1005
      %v1018 = vpack.c.b16 %v1008, %v1007
      %v1019 = vpack.c.b16 %v1010, %v1009
      %v1020 = vpack.c.b16 %v1012, %v1011
      %1029 = vmatprep.subr.bf16.mxu0 0
      %1030 = vmatpush1.bf16.msra.mxu0 %v1013
      %1031 = vmatprep.subr.bf16.mxu0 0
      %1032 = vmatpush1.bf16.msra.mxu0 %v1014
      %1033 = vmatprep.subr.bf16.mxu0 0
      %1034 = vmatpush1.bf16.msra.mxu0 %v1015
      %1035 = vmatprep.subr.bf16.mxu0 0
      %1036 = vmatpush1.bf16.msra.mxu0 %v1016
      %1037 = vmatprep.subr.bf16.mxu0 0
      %1038 = vmatpush1.bf16.msra.mxu0 %v1017
      %1039 = vmatprep.subr.bf16.mxu0 0
      %1040 = vmatpush1.bf16.msra.mxu0 %v1018
      %1041 = vmatprep.subr.bf16.mxu0 0
      %1042 = vmatpush1.bf16.msra.mxu0 %v1019
      %1043 = vmatprep.subr.bf16.mxu0 0
      %1044 = vmatpush1.bf16.msra.mxu0 %v1020
      %1045 = vmatprep.subr.bf16.mxu0 0
      %1046 = vmatpush1.bf16.msra.mxu0 0
      %1047 = vmatprep.subr.bf16.mxu0 0
      %1048 = vmatpush1.bf16.msra.mxu0 0
      %1049 = vmatprep.subr.bf16.mxu0 0
      %1050 = vmatpush1.bf16.msra.mxu0 0
      %1051 = vmatprep.subr.bf16.mxu0 0
      %1052 = vmatpush1.bf16.msra.mxu0 0
      %1053 = vmatprep.subr.bf16.mxu0 0
      %1054 = vmatpush1.bf16.msra.mxu0 0
      %1055 = vmatprep.subr.bf16.mxu0 0
      %1056 = vmatpush1.bf16.msra.mxu0 0
      %1057 = vmatprep.subr.bf16.mxu0 0
      %1058 = vmatpush1.bf16.msra.mxu0 0
      %1059 = vmatprep.subr.bf16.mxu0 0
      %1060 = vmatpush1.bf16.msra.mxu0 0
      %1061 = vmatprep.mubr.bf16.mxu0 0
      %1062 = vmatmul.mubr.bf16.gmra.mrb[0].mxu0 %v978
      %v1063 = vpop.f32.mrb[0].mxu0
      %v1064 = vadd.f32 %v979, %v1063
      %v1065 = vpop.f32.mrb[0].mxu0
      %v1066 = vpop.f32.mrb[0].mxu0
      %v1067 = vadd.f32 %v980, %v1066
      %v1068 = vpop.f32.mrb[0].mxu0
      %1069 = vdwg.mxu0
      %1070 = vst [vmem:[%s329] sm:$0xff] %v1064
      %1071 = vst [vmem:[%s329 + $0x8] sm:$0xff] %v1067
      %s1072 = smul.u32 2, %s19
      %p1073 = scmp.lt.s32.totalorder %s1072, 3
      %s1074 = scalar_select %p1073, %s1072, 3
      %s1075 = smul.addr %s1074, 8
      %s1076 = scalar_lea.vmem %s8, %s1075
      // Predicated region
      $region53: #{climax_pm25_forward.2} parent=51 // pred_check
        %p1077 = pneg %p215
      $region54: #{climax_pm25_forward.2} parent=51 // pred_check_branch
        %1079 = sbr.rel (%p1077) target = $region56
      $region55: #{climax_pm25_forward.2} parent=51 // pred_region
        %s1080 = smul.u32 2, %s19
      $region56: #{climax_pm25_forward.2} parent=51 // pred_fallthru
        _
    $region52: #{climax_pm25_forward.2} parent=5 // pred_fallthru
      _
    %p1081 = scmp.le.s32.totalorder 2, %s14
    // Predicated region
    $region57: #{climax_pm25_forward.2} parent=5 // pred_check
      %p1082 = pneg %p1081
    $region58: #{climax_pm25_forward.2} parent=5 // pred_check_branch
      %1084 = sbr.rel (%p1082) target = $region60
    $region59: #{climax_pm25_forward.2} parent=5 // pred_region
      %s1085 = ssub.s32 %s14, 2
      // Predicated region
      $region61: #{climax_pm25_forward.2} parent=59 // pred_check
        %p1086 = pneg %p221
      $region62: #{climax_pm25_forward.2} parent=59 // pred_check_branch
        %1088 = sbr.rel (%p1086) target = $region64
      $region63: #{climax_pm25_forward.2} parent=59 // pred_region
        %s1089 = smul.u32 2, %s20
        %p1090 = scmp.lt.s32.totalorder %s1089, 3
        %s1091 = scalar_select %p1090, %s1089, 3
        %s1092 = smul.addr %s1091, 8
        %s1093 = scalar_lea.vmem %s8, %s1092
      $region64: #{climax_pm25_forward.2} parent=59 // pred_fallthru
        _
    $region60: #{climax_pm25_forward.2} parent=5 // pred_fallthru
      _
  $region6: #{climax_pm25_forward.2} parent=0 // loop_footer
    %s18 = sadd.s32 1, %s14
  $region7: #{climax_pm25_forward.2} parent=0 // loop_footer_branch
    %13 = sbr.rel target = $region3
  $region8: #{climax_pm25_forward.2} parent=0 // loop_exit
    _

// kernel: climax_pm25_forward.3
$region0: #{climax_pm25_forward.3}
  #allocation0 [shape = 'u32[]', space=smem, size = 0x4, offset = 0x4, fixed_abs, tag = 'smem constant byte address 0x4 - core index']
  #allocation1 [shape = 'u32[144,128]{1,0:T(1,128)}', space=vmem, size = 0x12000, scoped, tag = 'internal scratch']
  #allocation2 [shape = 'f32[16,128]{1,0:T(8,128)}', space=vmem, size = 0x2000, scoped, tag = 'scratch operand']
  #allocation3 [shape = 'f32[1,16,128]{2,1,0:T(8,128)}', space=vmem, size = 0x2000, scoped, tag = 'scratch operand']
  %s0 = inlined_call_operand.vmem [shape: f32[2,16,128], index: 0, kind: input, shape index: {}]
  %s1 = inlined_call_operand.vmem [shape: f32[2,1,128], index: 1, kind: input, shape index: {}]
  %s2 = inlined_call_operand.vmem [shape: f32[2,1,128], index: 2, kind: input, shape index: {}]
  %s3 = inlined_call_operand.vmem [shape: bf16[2,128,384], index: 3, kind: input, shape index: {}]
  %s4 = inlined_call_operand.vmem [shape: f32[2,1,384], index: 4, kind: input, shape index: {}]
  %s5 = inlined_call_operand.vmem [shape: bf16[2,128,128], index: 5, kind: input, shape index: {}]
  %s6 = inlined_call_operand.vmem [shape: f32[2,1,128], index: 6, kind: input, shape index: {}]
  %s7 = inlined_call_operand.vmem [shape: f32[2,1,128], index: 7, kind: input, shape index: {}]
  %s8 = inlined_call_operand.vmem [shape: f32[2,1,128], index: 8, kind: input, shape index: {}]
  %s9 = inlined_call_operand.vmem [shape: bf16[2,128,512], index: 9, kind: input, shape index: {}]
  %s10 = inlined_call_operand.vmem [shape: f32[2,1,512], index: 10, kind: input, shape index: {}]
  %s11 = inlined_call_operand.vmem [shape: bf16[2,512,128], index: 11, kind: input, shape index: {}]
  %s12 = inlined_call_operand.vmem [shape: f32[2,1,128], index: 12, kind: input, shape index: {}]
  %s13 = inlined_call_operand.vmem [shape: f32[1,128], index: 13, kind: input, shape index: {}]
  %s14 = inlined_call_operand.vmem [shape: f32[1,128], index: 14, kind: input, shape index: {}]
  %s15 = inlined_call_operand.vmem [shape: bf16[2,128,128], index: 15, kind: input, shape index: {}]
  %s16 = inlined_call_operand.vmem [shape: f32[2,1,128], index: 16, kind: input, shape index: {}]
  %s17 = inlined_call_operand.vmem [shape: bf16[128,128], index: 17, kind: input, shape index: {}]
  %s18 = inlined_call_operand.vmem [shape: f32[1,128], index: 18, kind: input, shape index: {}]
  %s19 = inlined_call_operand.vmem [shape: f32[2,16,128], index: 19, kind: output, shape index: {}]
  %s20 = sld [smem:[#allocation0]]
  $region117: #{climax_pm25_forward.3} parent=0
    _
  %s22 = ssub.s32 1, %s20
  %s23 = scalar_select 0, %s22, %s20
  loop: start=0, step=1, limit=6
  $region2: #{climax_pm25_forward.3} parent=0 // loop_pre_header
    _
  $region3: #{climax_pm25_forward.3} parent=0 // loop_header
    %s25 = sphi 0, %s29
    %p26 = scmp.ge.s32.totalorder %s25, 6
    %s32 = sphi 0, %s44
    %s33 = sphi 0, %s40
    %s34 = sphi 0, %s32
    %s35 = sphi 0, %s33
    %s36 = sphi 0, %s34
    %s37 = sphi 0, %s35
    %s47 = sphi 0, %s49
    %s50 = sphi 0, %s47
    %s51 = sphi 0, %s50
    %s67 = sphi 0, %s51
    %s73 = sphi 0, %s75
    %s76 = sphi 0, %s73
    %s77 = sphi 0, %s76
    %s93 = sphi 0, %s77
    %s99 = sphi 0, %s101
    %s102 = sphi 0, %s99
    %s103 = sphi 0, %s102
    %s119 = sphi 0, %s103
    %s125 = sphi 0, %s127
    %s128 = sphi 0, %s125
    %s129 = sphi 0, %s128
    %s145 = sphi 0, %s129
    %s151 = sphi 0, %s153
    %s154 = sphi 0, %s151
    %s155 = sphi 0, %s154
    %s171 = sphi 0, %s155
    %s177 = sphi 0, %s179
    %s180 = sphi 0, %s177
    %s181 = sphi 0, %s180
    %s197 = sphi 0, %s181
    %s203 = sphi 0, %s205
    %s206 = sphi 0, %s203
    %s207 = sphi 0, %s206
    %s223 = sphi 0, %s207
    %s229 = sphi 0, %s231
    %s232 = sphi 0, %s229
    %s233 = sphi 0, %s232
    %s249 = sphi 0, %s233
    %s255 = sphi 0, %s257
    %s258 = sphi 0, %s255
    %s259 = sphi 0, %s258
    %s275 = sphi 0, %s259
    %s281 = sphi 0, %s283
    %s284 = sphi 0, %s281
    %s285 = sphi 0, %s284
    %s301 = sphi 0, %s285
    %s307 = sphi 0, %s309
    %s310 = sphi 0, %s307
    %s311 = sphi 0, %s310
    %s327 = sphi 0, %s311
    %s333 = sphi 0, %s335
    %s336 = sphi 0, %s333
    %s337 = sphi 0, %s336
    %s353 = sphi 0, %s337
    %s359 = sphi 0, %s361
    %s362 = sphi 0, %s359
    %s363 = sphi 0, %s362
    %s379 = sphi 0, %s363
    %s383 = sphi 0, %s383
    %s385 = sphi 0, %s383
    %s386 = sphi 0, %s385
    %s400 = sphi 0, %s386
    %s404 = sphi 0, %s404
    %s406 = sphi 0, %s404
    %s407 = sphi 0, %s406
    %s421 = sphi 0, %s407
    %s425 = sphi 0, %s425
    %s427 = sphi 0, %s425
    %s428 = sphi 0, %s427
    %s442 = sphi 0, %s428
    %s446 = sphi 0, %s446
    %s448 = sphi 0, %s446
    %s449 = sphi 0, %s448
    %s463 = sphi 0, %s449
    %s467 = sphi 0, %s467
    %s469 = sphi 0, %s467
    %s470 = sphi 0, %s469
    %s484 = sphi 0, %s470
    %s488 = sphi 0, %s488
    %s490 = sphi 0, %s488
    %s491 = sphi 0, %s490
    %s505 = sphi 0, %s491
    %s511 = sphi 0, %s513
    %s514 = sphi 0, %s511
    %s515 = sphi 0, %s514
    %s531 = sphi 0, %s515
  $region4: #{climax_pm25_forward.3} parent=0 // loop_header_branch
    %28 = sbr.rel (%p26) target = $region8
  $region5: #{climax_pm25_forward.3} parent=0 // loop_body
    %s30 = ssub.s32 %s25, 1
    %s31 = ssub.s32 %s25, 2
    %s38 = sadd.s32 1, %s33
    %p39 = scmp.ge.s32.totalorder %s38, 2
    %s40 = scalar_select %p39, 0, %s38
    %s41 = sadd.s32 1, %s32
    %s42 = scalar_select %p39, %s41, %s32
    %p43 = scmp.ge.s32.totalorder %s42, 2
    %s44 = scalar_select %p43, 0, %s42
    %s45 = ssub.s32 %s32, %s44
    %p46 = scmp.eq.s32.totalorder %s45, 0
    %s48 = sadd.s32 %s47, 1
    %s49 = scalar_select %p46, %s47, %s48
    %p52 = pneg %p46
    %p53 = scmp.eq.s32.totalorder %s25, 3
    %p54 = por %p52, %p53
    %p55 = scmp.ne.s32.totalorder %s47, %s50
    %p56 = scmp.eq.s32.totalorder %s25, 0
    %p57 = por %p55, %p56
    %p58 = scmp.ne.s32.totalorder %s47, %s50
    %p59 = scmp.eq.s32.totalorder %s30, 3
    %p60 = por %p58, %p59
    %p61 = scmp.ne.s32.totalorder %s50, %s51
    %p62 = scmp.eq.s32.totalorder %s30, 0
    %p63 = por %p61, %p62
    %p64 = scmp.ne.s32.totalorder %s50, %s51
    %p65 = scmp.eq.s32.totalorder %s31, 3
    %p66 = por %p64, %p65
    %p68 = scmp.ne.s32.totalorder %s51, %s67
    %p69 = scmp.eq.s32.totalorder %s31, 0
    %p70 = por %p68, %p69
    %s71 = ssub.s32 %s33, %s40
    %p72 = scmp.eq.s32.totalorder %s71, 0
    %s74 = sadd.s32 %s73, 1
    %s75 = scalar_select %p72, %s73, %s74
    %p78 = pneg %p72
    %p79 = scmp.eq.s32.totalorder %s25, 3
    %p80 = por %p78, %p79
    %p81 = scmp.ne.s32.totalorder %s73, %s76
    %p82 = scmp.eq.s32.totalorder %s25, 0
    %p83 = por %p81, %p82
    %p84 = scmp.ne.s32.totalorder %s73, %s76
    %p85 = scmp.eq.s32.totalorder %s30, 3
    %p86 = por %p84, %p85
    %p87 = scmp.ne.s32.totalorder %s76, %s77
    %p88 = scmp.eq.s32.totalorder %s30, 0
    %p89 = por %p87, %p88
    %p90 = scmp.ne.s32.totalorder %s76, %s77
    %p91 = scmp.eq.s32.totalorder %s31, 3
    %p92 = por %p90, %p91
    %p94 = scmp.ne.s32.totalorder %s77, %s93
    %p95 = scmp.eq.s32.totalorder %s31, 0
    %p96 = por %p94, %p95
    %s97 = ssub.s32 %s33, %s40
    %p98 = scmp.eq.s32.totalorder %s97, 0
    %s100 = sadd.s32 %s99, 1
    %s101 = scalar_select %p98, %s99, %s100
    %p104 = pneg %p98
    %p105 = scmp.eq.s32.totalorder %s25, 3
    %p106 = por %p104, %p105
    %p107 = scmp.ne.s32.totalorder %s99, %s102
    %p108 = scmp.eq.s32.totalorder %s25, 0
    %p109 = por %p107, %p108
    %p110 = scmp.ne.s32.totalorder %s99, %s102
    %p111 = scmp.eq.s32.totalorder %s30, 3
    %p112 = por %p110, %p111
    %p113 = scmp.ne.s32.totalorder %s102, %s103
    %p114 = scmp.eq.s32.totalorder %s30, 0
    %p115 = por %p113, %p114
    %p116 = scmp.ne.s32.totalorder %s102, %s103
    %p117 = scmp.eq.s32.totalorder %s31, 3
    %p118 = por %p116, %p117
    %p120 = scmp.ne.s32.totalorder %s103, %s119
    %p121 = scmp.eq.s32.totalorder %s31, 0
    %p122 = por %p120, %p121
    %s123 = ssub.s32 %s33, %s40
    %p124 = scmp.eq.s32.totalorder %s123, 0
    %s126 = sadd.s32 %s125, 1
    %s127 = scalar_select %p124, %s125, %s126
    %p130 = pneg %p124
    %p131 = scmp.eq.s32.totalorder %s25, 3
    %p132 = por %p130, %p131
    %p133 = scmp.ne.s32.totalorder %s125, %s128
    %p134 = scmp.eq.s32.totalorder %s25, 0
    %p135 = por %p133, %p134
    %p136 = scmp.ne.s32.totalorder %s125, %s128
    %p137 = scmp.eq.s32.totalorder %s30, 3
    %p138 = por %p136, %p137
    %p139 = scmp.ne.s32.totalorder %s128, %s129
    %p140 = scmp.eq.s32.totalorder %s30, 0
    %p141 = por %p139, %p140
    %p142 = scmp.ne.s32.totalorder %s128, %s129
    %p143 = scmp.eq.s32.totalorder %s31, 3
    %p144 = por %p142, %p143
    %p146 = scmp.ne.s32.totalorder %s129, %s145
    %p147 = scmp.eq.s32.totalorder %s31, 0
    %p148 = por %p146, %p147
    %s149 = ssub.s32 %s33, %s40
    %p150 = scmp.eq.s32.totalorder %s149, 0
    %s152 = sadd.s32 %s151, 1
    %s153 = scalar_select %p150, %s151, %s152
    %p156 = pneg %p150
    %p157 = scmp.eq.s32.totalorder %s25, 3
    %p158 = por %p156, %p157
    %p159 = scmp.ne.s32.totalorder %s151, %s154
    %p160 = scmp.eq.s32.totalorder %s25, 0
    %p161 = por %p159, %p160
    %p162 = scmp.ne.s32.totalorder %s151, %s154
    %p163 = scmp.eq.s32.totalorder %s30, 3
    %p164 = por %p162, %p163
    %p165 = scmp.ne.s32.totalorder %s154, %s155
    %p166 = scmp.eq.s32.totalorder %s30, 0
    %p167 = por %p165, %p166
    %p168 = scmp.ne.s32.totalorder %s154, %s155
    %p169 = scmp.eq.s32.totalorder %s31, 3
    %p170 = por %p168, %p169
    %p172 = scmp.ne.s32.totalorder %s155, %s171
    %p173 = scmp.eq.s32.totalorder %s31, 0
    %p174 = por %p172, %p173
    %s175 = ssub.s32 %s33, %s40
    %p176 = scmp.eq.s32.totalorder %s175, 0
    %s178 = sadd.s32 %s177, 1
    %s179 = scalar_select %p176, %s177, %s178
    %p182 = pneg %p176
    %p183 = scmp.eq.s32.totalorder %s25, 3
    %p184 = por %p182, %p183
    %p185 = scmp.ne.s32.totalorder %s177, %s180
    %p186 = scmp.eq.s32.totalorder %s25, 0
    %p187 = por %p185, %p186
    %p188 = scmp.ne.s32.totalorder %s177, %s180
    %p189 = scmp.eq.s32.totalorder %s30, 3
    %p190 = por %p188, %p189
    %p191 = scmp.ne.s32.totalorder %s180, %s181
    %p192 = scmp.eq.s32.totalorder %s30, 0
    %p193 = por %p191, %p192
    %p194 = scmp.ne.s32.totalorder %s180, %s181
    %p195 = scmp.eq.s32.totalorder %s31, 3
    %p196 = por %p194, %p195
    %p198 = scmp.ne.s32.totalorder %s181, %s197
    %p199 = scmp.eq.s32.totalorder %s31, 0
    %p200 = por %p198, %p199
    %s201 = ssub.s32 %s33, %s40
    %p202 = scmp.eq.s32.totalorder %s201, 0
    %s204 = sadd.s32 %s203, 1
    %s205 = scalar_select %p202, %s203, %s204
    %p208 = pneg %p202
    %p209 = scmp.eq.s32.totalorder %s25, 3
    %p210 = por %p208, %p209
    %p211 = scmp.ne.s32.totalorder %s203, %s206
    %p212 = scmp.eq.s32.totalorder %s25, 0
    %p213 = por %p211, %p212
    %p214 = scmp.ne.s32.totalorder %s203, %s206
    %p215 = scmp.eq.s32.totalorder %s30, 3
    %p216 = por %p214, %p215
    %p217 = scmp.ne.s32.totalorder %s206, %s207
    %p218 = scmp.eq.s32.totalorder %s30, 0
    %p219 = por %p217, %p218
    %p220 = scmp.ne.s32.totalorder %s206, %s207
    %p221 = scmp.eq.s32.totalorder %s31, 3
    %p222 = por %p220, %p221
    %p224 = scmp.ne.s32.totalorder %s207, %s223
    %p225 = scmp.eq.s32.totalorder %s31, 0
    %p226 = por %p224, %p225
    %s227 = ssub.s32 %s33, %s40
    %p228 = scmp.eq.s32.totalorder %s227, 0
    %s230 = sadd.s32 %s229, 1
    %s231 = scalar_select %p228, %s229, %s230
    %p234 = pneg %p228
    %p235 = scmp.eq.s32.totalorder %s25, 3
    %p236 = por %p234, %p235
    %p237 = scmp.ne.s32.totalorder %s229, %s232
    %p238 = scmp.eq.s32.totalorder %s25, 0
    %p239 = por %p237, %p238
    %p240 = scmp.ne.s32.totalorder %s229, %s232
    %p241 = scmp.eq.s32.totalorder %s30, 3
    %p242 = por %p240, %p241
    %p243 = scmp.ne.s32.totalorder %s232, %s233
    %p244 = scmp.eq.s32.totalorder %s30, 0
    %p245 = por %p243, %p244
    %p246 = scmp.ne.s32.totalorder %s232, %s233
    %p247 = scmp.eq.s32.totalorder %s31, 3
    %p248 = por %p246, %p247
    %p250 = scmp.ne.s32.totalorder %s233, %s249
    %p251 = scmp.eq.s32.totalorder %s31, 0
    %p252 = por %p250, %p251
    %s253 = ssub.s32 %s33, %s40
    %p254 = scmp.eq.s32.totalorder %s253, 0
    %s256 = sadd.s32 %s255, 1
    %s257 = scalar_select %p254, %s255, %s256
    %p260 = pneg %p254
    %p261 = scmp.eq.s32.totalorder %s25, 3
    %p262 = por %p260, %p261
    %p263 = scmp.ne.s32.totalorder %s255, %s258
    %p264 = scmp.eq.s32.totalorder %s25, 0
    %p265 = por %p263, %p264
    %p266 = scmp.ne.s32.totalorder %s255, %s258
    %p267 = scmp.eq.s32.totalorder %s30, 3
    %p268 = por %p266, %p267
    %p269 = scmp.ne.s32.totalorder %s258, %s259
    %p270 = scmp.eq.s32.totalorder %s30, 0
    %p271 = por %p269, %p270
    %p272 = scmp.ne.s32.totalorder %s258, %s259
    %p273 = scmp.eq.s32.totalorder %s31, 3
    %p274 = por %p272, %p273
    %p276 = scmp.ne.s32.totalorder %s259, %s275
    %p277 = scmp.eq.s32.totalorder %s31, 0
    %p278 = por %p276, %p277
    %s279 = ssub.s32 %s33, %s40
    %p280 = scmp.eq.s32.totalorder %s279, 0
    %s282 = sadd.s32 %s281, 1
    %s283 = scalar_select %p280, %s281, %s282
    %p286 = pneg %p280
    %p287 = scmp.eq.s32.totalorder %s25, 3
    %p288 = por %p286, %p287
    %p289 = scmp.ne.s32.totalorder %s281, %s284
    %p290 = scmp.eq.s32.totalorder %s25, 0
    %p291 = por %p289, %p290
    %p292 = scmp.ne.s32.totalorder %s281, %s284
    %p293 = scmp.eq.s32.totalorder %s30, 3
    %p294 = por %p292, %p293
    %p295 = scmp.ne.s32.totalorder %s284, %s285
    %p296 = scmp.eq.s32.totalorder %s30, 0
    %p297 = por %p295, %p296
    %p298 = scmp.ne.s32.totalorder %s284, %s285
    %p299 = scmp.eq.s32.totalorder %s31, 3
    %p300 = por %p298, %p299
    %p302 = scmp.ne.s32.totalorder %s285, %s301
    %p303 = scmp.eq.s32.totalorder %s31, 0
    %p304 = por %p302, %p303
    %s305 = ssub.s32 %s33, %s40
    %p306 = scmp.eq.s32.totalorder %s305, 0
    %s308 = sadd.s32 %s307, 1
    %s309 = scalar_select %p306, %s307, %s308
    %p312 = pneg %p306
    %p313 = scmp.eq.s32.totalorder %s25, 3
    %p314 = por %p312, %p313
    %p315 = scmp.ne.s32.totalorder %s307, %s310
    %p316 = scmp.eq.s32.totalorder %s25, 0
    %p317 = por %p315, %p316
    %p318 = scmp.ne.s32.totalorder %s307, %s310
    %p319 = scmp.eq.s32.totalorder %s30, 3
    %p320 = por %p318, %p319
    %p321 = scmp.ne.s32.totalorder %s310, %s311
    %p322 = scmp.eq.s32.totalorder %s30, 0
    %p323 = por %p321, %p322
    %p324 = scmp.ne.s32.totalorder %s310, %s311
    %p325 = scmp.eq.s32.totalorder %s31, 3
    %p326 = por %p324, %p325
    %p328 = scmp.ne.s32.totalorder %s311, %s327
    %p329 = scmp.eq.s32.totalorder %s31, 0
    %p330 = por %p328, %p329
    %s331 = ssub.s32 %s33, %s40
    %p332 = scmp.eq.s32.totalorder %s331, 0
    %s334 = sadd.s32 %s333, 1
    %s335 = scalar_select %p332, %s333, %s334
    %p338 = pneg %p332
    %p339 = scmp.eq.s32.totalorder %s25, 3
    %p340 = por %p338, %p339
    %p341 = scmp.ne.s32.totalorder %s333, %s336
    %p342 = scmp.eq.s32.totalorder %s25, 0
    %p343 = por %p341, %p342
    %p344 = scmp.ne.s32.totalorder %s333, %s336
    %p345 = scmp.eq.s32.totalorder %s30, 3
    %p346 = por %p344, %p345
    %p347 = scmp.ne.s32.totalorder %s336, %s337
    %p348 = scmp.eq.s32.totalorder %s30, 0
    %p349 = por %p347, %p348
    %p350 = scmp.ne.s32.totalorder %s336, %s337
    %p351 = scmp.eq.s32.totalorder %s31, 3
    %p352 = por %p350, %p351
    %p354 = scmp.ne.s32.totalorder %s337, %s353
    %p355 = scmp.eq.s32.totalorder %s31, 0
    %p356 = por %p354, %p355
    %s357 = ssub.s32 %s33, %s40
    %p358 = scmp.eq.s32.totalorder %s357, 0
    %s360 = sadd.s32 %s359, 1
    %s361 = scalar_select %p358, %s359, %s360
    %p364 = pneg %p358
    %p365 = scmp.eq.s32.totalorder %s25, 3
    %p366 = por %p364, %p365
    %p367 = scmp.ne.s32.totalorder %s359, %s362
    %p368 = scmp.eq.s32.totalorder %s25, 0
    %p369 = por %p367, %p368
    %p370 = scmp.ne.s32.totalorder %s359, %s362
    %p371 = scmp.eq.s32.totalorder %s30, 3
    %p372 = por %p370, %p371
    %p373 = scmp.ne.s32.totalorder %s362, %s363
    %p374 = scmp.eq.s32.totalorder %s30, 0
    %p375 = por %p373, %p374
    %p376 = scmp.ne.s32.totalorder %s362, %s363
    %p377 = scmp.eq.s32.totalorder %s31, 3
    %p378 = por %p376, %p377
    %p380 = scmp.ne.s32.totalorder %s363, %s379
    %p381 = scmp.eq.s32.totalorder %s31, 0
    %p382 = por %p380, %p381
    %s384 = sadd.s32 %s383, 1
    %p387 = scmp.eq.s32.totalorder %s25, 3
    %p388 = scmp.ne.s32.totalorder %s383, %s385
    %p389 = scmp.eq.s32.totalorder %s25, 0
    %p390 = por %p388, %p389
    %p391 = scmp.ne.s32.totalorder %s383, %s385
    %p392 = scmp.eq.s32.totalorder %s30, 3
    %p393 = por %p391, %p392
    %p394 = scmp.ne.s32.totalorder %s385, %s386
    %p395 = scmp.eq.s32.totalorder %s30, 0
    %p396 = por %p394, %p395
    %p397 = scmp.ne.s32.totalorder %s385, %s386
    %p398 = scmp.eq.s32.totalorder %s31, 3
    %p399 = por %p397, %p398
    %p401 = scmp.ne.s32.totalorder %s386, %s400
    %p402 = scmp.eq.s32.totalorder %s31, 0
    %p403 = por %p401, %p402
    %s405 = sadd.s32 %s404, 1
    %p408 = scmp.eq.s32.totalorder %s25, 3
    %p409 = scmp.ne.s32.totalorder %s404, %s406
    %p410 = scmp.eq.s32.totalorder %s25, 0
    %p411 = por %p409, %p410
    %p412 = scmp.ne.s32.totalorder %s404, %s406
    %p413 = scmp.eq.s32.totalorder %s30, 3
    %p414 = por %p412, %p413
    %p415 = scmp.ne.s32.totalorder %s406, %s407
    %p416 = scmp.eq.s32.totalorder %s30, 0
    %p417 = por %p415, %p416
    %p418 = scmp.ne.s32.totalorder %s406, %s407
    %p419 = scmp.eq.s32.totalorder %s31, 3
    %p420 = por %p418, %p419
    %p422 = scmp.ne.s32.totalorder %s407, %s421
    %p423 = scmp.eq.s32.totalorder %s31, 0
    %p424 = por %p422, %p423
    %s426 = sadd.s32 %s425, 1
    %p429 = scmp.eq.s32.totalorder %s25, 3
    %p430 = scmp.ne.s32.totalorder %s425, %s427
    %p431 = scmp.eq.s32.totalorder %s25, 0
    %p432 = por %p430, %p431
    %p433 = scmp.ne.s32.totalorder %s425, %s427
    %p434 = scmp.eq.s32.totalorder %s30, 3
    %p435 = por %p433, %p434
    %p436 = scmp.ne.s32.totalorder %s427, %s428
    %p437 = scmp.eq.s32.totalorder %s30, 0
    %p438 = por %p436, %p437
    %p439 = scmp.ne.s32.totalorder %s427, %s428
    %p440 = scmp.eq.s32.totalorder %s31, 3
    %p441 = por %p439, %p440
    %p443 = scmp.ne.s32.totalorder %s428, %s442
    %p444 = scmp.eq.s32.totalorder %s31, 0
    %p445 = por %p443, %p444
    %s447 = sadd.s32 %s446, 1
    %p450 = scmp.eq.s32.totalorder %s25, 3
    %p451 = scmp.ne.s32.totalorder %s446, %s448
    %p452 = scmp.eq.s32.totalorder %s25, 0
    %p453 = por %p451, %p452
    %p454 = scmp.ne.s32.totalorder %s446, %s448
    %p455 = scmp.eq.s32.totalorder %s30, 3
    %p456 = por %p454, %p455
    %p457 = scmp.ne.s32.totalorder %s448, %s449
    %p458 = scmp.eq.s32.totalorder %s30, 0
    %p459 = por %p457, %p458
    %p460 = scmp.ne.s32.totalorder %s448, %s449
    %p461 = scmp.eq.s32.totalorder %s31, 3
    %p462 = por %p460, %p461
    %p464 = scmp.ne.s32.totalorder %s449, %s463
    %p465 = scmp.eq.s32.totalorder %s31, 0
    %p466 = por %p464, %p465
    %s468 = sadd.s32 %s467, 1
    %p471 = scmp.eq.s32.totalorder %s25, 3
    %p472 = scmp.ne.s32.totalorder %s467, %s469
    %p473 = scmp.eq.s32.totalorder %s25, 0
    %p474 = por %p472, %p473
    %p475 = scmp.ne.s32.totalorder %s467, %s469
    %p476 = scmp.eq.s32.totalorder %s30, 3
    %p477 = por %p475, %p476
    %p478 = scmp.ne.s32.totalorder %s469, %s470
    %p479 = scmp.eq.s32.totalorder %s30, 0
    %p480 = por %p478, %p479
    %p481 = scmp.ne.s32.totalorder %s469, %s470
    %p482 = scmp.eq.s32.totalorder %s31, 3
    %p483 = por %p481, %p482
    %p485 = scmp.ne.s32.totalorder %s470, %s484
    %p486 = scmp.eq.s32.totalorder %s31, 0
    %p487 = por %p485, %p486
    %s489 = sadd.s32 %s488, 1
    %p492 = scmp.eq.s32.totalorder %s25, 3
    %p493 = scmp.ne.s32.totalorder %s488, %s490
    %p494 = scmp.eq.s32.totalorder %s25, 0
    %p495 = por %p493, %p494
    %p496 = scmp.ne.s32.totalorder %s488, %s490
    %p497 = scmp.eq.s32.totalorder %s30, 3
    %p498 = por %p496, %p497
    %p499 = scmp.ne.s32.totalorder %s490, %s491
    %p500 = scmp.eq.s32.totalorder %s30, 0
    %p501 = por %p499, %p500
    %p502 = scmp.ne.s32.totalorder %s490, %s491
    %p503 = scmp.eq.s32.totalorder %s31, 3
    %p504 = por %p502, %p503
    %p506 = scmp.ne.s32.totalorder %s491, %s505
    %p507 = scmp.eq.s32.totalorder %s31, 0
    %p508 = por %p506, %p507
    %s509 = ssub.s32 %s32, %s44
    %p510 = scmp.eq.s32.totalorder %s509, 0
    %s512 = sadd.s32 %s511, 1
    %s513 = scalar_select %p510, %s511, %s512
    %p516 = pneg %p510
    %p517 = scmp.eq.s32.totalorder %s25, 3
    %p518 = por %p516, %p517
    %p519 = scmp.ne.s32.totalorder %s511, %s514
    %p520 = scmp.eq.s32.totalorder %s25, 0
    %p521 = por %p519, %p520
    %p522 = scmp.ne.s32.totalorder %s511, %s514
    %p523 = scmp.eq.s32.totalorder %s30, 3
    %p524 = por %p522, %p523
    %p525 = scmp.ne.s32.totalorder %s514, %s515
    %p526 = scmp.eq.s32.totalorder %s30, 0
    %p527 = por %p525, %p526
    %p528 = scmp.ne.s32.totalorder %s514, %s515
    %p529 = scmp.eq.s32.totalorder %s31, 3
    %p530 = por %p528, %p529
    %p532 = scmp.ne.s32.totalorder %s515, %s531
    %p533 = scmp.eq.s32.totalorder %s31, 0
    %p534 = por %p532, %p533
    %p535 = scmp.le.s32.totalorder 1, %s25
    %p536 = scmp.lt.s32.totalorder %s25, 5
    %p537 = pnand %p535, %p536
    %p538 = pneg %p537
    // Predicated region
    $region9: #{climax_pm25_forward.3} parent=5 // pred_check
      _
    $region10: #{climax_pm25_forward.3} parent=5 // pred_check_branch
      %540 = sbr.rel (%p537) target = $region12
    $region11: #{climax_pm25_forward.3} parent=5 // pred_region
      %s541 = ssub.s32 %s25, 1
      // Predicated region
      $region13: #{climax_pm25_forward.3} parent=11 // pred_check
        %p542 = pneg %p396
      $region14: #{climax_pm25_forward.3} parent=11 // pred_check_branch
        %544 = sbr.rel (%p542) target = $region16
      $region15: #{climax_pm25_forward.3} parent=11 // pred_region
        _
      $region16: #{climax_pm25_forward.3} parent=11 // pred_fallthru
        _
      // Predicated region
      $region17: #{climax_pm25_forward.3} parent=11 // pred_check
        %p545 = pneg %p417
      $region18: #{climax_pm25_forward.3} parent=11 // pred_check_branch
        %547 = sbr.rel (%p545) target = $region20
      $region19: #{climax_pm25_forward.3} parent=11 // pred_region
        _
      $region20: #{climax_pm25_forward.3} parent=11 // pred_fallthru
        _
      // Predicated region
      $region21: #{climax_pm25_forward.3} parent=11 // pred_check
        %p548 = pneg %p438
      $region22: #{climax_pm25_forward.3} parent=11 // pred_check_branch
        %550 = sbr.rel (%p548) target = $region24
      $region23: #{climax_pm25_forward.3} parent=11 // pred_region
        _
      $region24: #{climax_pm25_forward.3} parent=11 // pred_fallthru
        _
      // Predicated region
      $region25: #{climax_pm25_forward.3} parent=11 // pred_check
        %p551 = pneg %p459
      $region26: #{climax_pm25_forward.3} parent=11 // pred_check_branch
        %553 = sbr.rel (%p551) target = $region28
      $region27: #{climax_pm25_forward.3} parent=11 // pred_region
        _
      $region28: #{climax_pm25_forward.3} parent=11 // pred_fallthru
        _
      // Predicated region
      $region29: #{climax_pm25_forward.3} parent=11 // pred_check
        %p554 = pneg %p480
      $region30: #{climax_pm25_forward.3} parent=11 // pred_check_branch
        %556 = sbr.rel (%p554) target = $region32
      $region31: #{climax_pm25_forward.3} parent=11 // pred_region
        _
      $region32: #{climax_pm25_forward.3} parent=11 // pred_fallthru
        _
      // Predicated region
      $region33: #{climax_pm25_forward.3} parent=11 // pred_check
        %p557 = pneg %p501
      $region34: #{climax_pm25_forward.3} parent=11 // pred_check_branch
        %559 = sbr.rel (%p557) target = $region36
      $region35: #{climax_pm25_forward.3} parent=11 // pred_region
        _
      $region36: #{climax_pm25_forward.3} parent=11 // pred_fallthru
        _
    $region12: #{climax_pm25_forward.3} parent=5 // pred_fallthru
      _
    %p560 = scmp.lt.s32.totalorder %s25, 4
    // Predicated region
    $region37: #{climax_pm25_forward.3} parent=5 // pred_check
      %p561 = pneg %p560
    $region38: #{climax_pm25_forward.3} parent=5 // pred_check_branch
      %563 = sbr.rel (%p561) target = $region40
    $region39: #{climax_pm25_forward.3} parent=5 // pred_region
      // Predicated region
      $region41: #{climax_pm25_forward.3} parent=39 // pred_check
        %p564 = pneg %p57
      $region42: #{climax_pm25_forward.3} parent=39 // pred_check_branch
        %566 = sbr.rel (%p564) target = $region44
      $region43: #{climax_pm25_forward.3} parent=39 // pred_region
        %p567 = scmp.lt.s32.totalorder %s32, 1
        %s568 = scalar_select %p567, %s32, 1
        %s569 = smul.addr %s568, 2
        %s570 = smul.addr %s569, 8
        %s571 = scalar_lea.vmem %s0, %s570
      $region44: #{climax_pm25_forward.3} parent=39 // pred_fallthru
        _
      // Predicated region
      $region45: #{climax_pm25_forward.3} parent=39 // pred_check
        %p572 = pneg %p83
      $region46: #{climax_pm25_forward.3} parent=39 // pred_check_branch
        %574 = sbr.rel (%p572) target = $region48
      $region47: #{climax_pm25_forward.3} parent=39 // pred_region
        %p575 = scmp.lt.s32.totalorder %s33, 1
        %s576 = scalar_select %p575, %s33, 1
        %s577 = scalar_lea.vmem %s1, %s576
      $region48: #{climax_pm25_forward.3} parent=39 // pred_fallthru
        _
      // Predicated region
      $region49: #{climax_pm25_forward.3} parent=39 // pred_check
        %p578 = pneg %p109
      $region50: #{climax_pm25_forward.3} parent=39 // pred_check_branch
        %580 = sbr.rel (%p578) target = $region52
      $region51: #{climax_pm25_forward.3} parent=39 // pred_region
        %p581 = scmp.lt.s32.totalorder %s33, 1
        %s582 = scalar_select %p581, %s33, 1
        %s583 = scalar_lea.vmem %s2, %s582
      $region52: #{climax_pm25_forward.3} parent=39 // pred_fallthru
        _
      // Predicated region
      $region53: #{climax_pm25_forward.3} parent=39 // pred_check
        %p584 = pneg %p135
      $region54: #{climax_pm25_forward.3} parent=39 // pred_check_branch
        %586 = sbr.rel (%p584) target = $region56
      $region55: #{climax_pm25_forward.3} parent=39 // pred_region
        %p587 = scmp.lt.s32.totalorder %s33, 1
        %s588 = scalar_select %p587, %s33, 1
        %s589 = smul.addr %s588, 48
        %s590 = smul.addr %s589, 4
        %s591 = scalar_lea.vmem %s3, %s590
      $region56: #{climax_pm25_forward.3} parent=39 // pred_fallthru
        _
      // Predicated region
      $region57: #{climax_pm25_forward.3} parent=39 // pred_check
        %p592 = pneg %p161
      $region58: #{climax_pm25_forward.3} parent=39 // pred_check_branch
        %594 = sbr.rel (%p592) target = $region60
      $region59: #{climax_pm25_forward.3} parent=39 // pred_region
        %p595 = scmp.lt.s32.totalorder %s33, 1
        %s596 = scalar_select %p595, %s33, 1
        %s597 = smul.addr %s596, 3
        %s598 = scalar_lea.vmem %s4, %s597
      $region60: #{climax_pm25_forward.3} parent=39 // pred_fallthru
        _
      // Predicated region
      $region61: #{climax_pm25_forward.3} parent=39 // pred_check
        %p599 = pneg %p187
      $region62: #{climax_pm25_forward.3} parent=39 // pred_check_branch
        %601 = sbr.rel (%p599) target = $region64
      $region63: #{climax_pm25_forward.3} parent=39 // pred_region
        %p602 = scmp.lt.s32.totalorder %s33, 1
        %s603 = scalar_select %p602, %s33, 1
        %s604 = smul.addr %s603, 16
        %s605 = smul.addr %s604, 4
        %s606 = scalar_lea.vmem %s5, %s605
      $region64: #{climax_pm25_forward.3} parent=39 // pred_fallthru
        _
      // Predicated region
      $region65: #{climax_pm25_forward.3} parent=39 // pred_check
        %p607 = pneg %p213
      $region66: #{climax_pm25_forward.3} parent=39 // pred_check_branch
        %609 = sbr.rel (%p607) target = $region68
      $region67: #{climax_pm25_forward.3} parent=39 // pred_region
        %p610 = scmp.lt.s32.totalorder %s33, 1
        %s611 = scalar_select %p610, %s33, 1
        %s612 = scalar_lea.vmem %s6, %s611
      $region68: #{climax_pm25_forward.3} parent=39 // pred_fallthru
        _
      // Predicated region
      $region69: #{climax_pm25_forward.3} parent=39 // pred_check
        %p613 = pneg %p239
      $region70: #{climax_pm25_forward.3} parent=39 // pred_check_branch
        %615 = sbr.rel (%p613) target = $region72
      $region71: #{climax_pm25_forward.3} parent=39 // pred_region
        %p616 = scmp.lt.s32.totalorder %s33, 1
        %s617 = scalar_select %p616, %s33, 1
        %s618 = scalar_lea.vmem %s7, %s617
      $region72: #{climax_pm25_forward.3} parent=39 // pred_fallthru
        _
      // Predicated region
      $region73: #{climax_pm25_forward.3} parent=39 // pred_check
        %p619 = pneg %p265
      $region74: #{climax_pm25_forward.3} parent=39 // pred_check_branch
        %621 = sbr.rel (%p619) target = $region76
      $region75: #{climax_pm25_forward.3} parent=39 // pred_region
        %p622 = scmp.lt.s32.totalorder %s33, 1
        %s623 = scalar_select %p622, %s33, 1
        %s624 = scalar_lea.vmem %s8, %s623
      $region76: #{climax_pm25_forward.3} parent=39 // pred_fallthru
        _
      // Predicated region
      $region77: #{climax_pm25_forward.3} parent=39 // pred_check
        %p625 = pneg %p291
      $region78: #{climax_pm25_forward.3} parent=39 // pred_check_branch
        %627 = sbr.rel (%p625) target = $region80
      $region79: #{climax_pm25_forward.3} parent=39 // pred_region
        %p628 = scmp.lt.s32.totalorder %s33, 1
        %s629 = scalar_select %p628, %s33, 1
        %s630 = smul.addr %s629, 64
        %s631 = smul.addr %s630, 4
        %s632 = scalar_lea.vmem %s9, %s631
      $region80: #{climax_pm25_forward.3} parent=39 // pred_fallthru
        _
      // Predicated region
      $region81: #{climax_pm25_forward.3} parent=39 // pred_check
        %p633 = pneg %p317
      $region82: #{climax_pm25_forward.3} parent=39 // pred_check_branch
        %635 = sbr.rel (%p633) target = $region84
      $region83: #{climax_pm25_forward.3} parent=39 // pred_region
        %p636 = scmp.lt.s32.totalorder %s33, 1
        %s637 = scalar_select %p636, %s33, 1
        %s638 = smul.addr %s637, 4
        %s639 = scalar_lea.vmem %s10, %s638
      $region84: #{climax_pm25_forward.3} parent=39 // pred_fallthru
        _
      // Predicated region
      $region85: #{climax_pm25_forward.3} parent=39 // pred_check
        %p640 = pneg %p343
      $region86: #{climax_pm25_forward.3} parent=39 // pred_check_branch
        %642 = sbr.rel (%p640) target = $region88
      $region87: #{climax_pm25_forward.3} parent=39 // pred_region
        %p643 = scmp.lt.s32.totalorder %s33, 1
        %s644 = scalar_select %p643, %s33, 1
        %s645 = smul.addr %s644, 64
        %s646 = smul.addr %s645, 4
        %s647 = scalar_lea.vmem %s11, %s646
      $region88: #{climax_pm25_forward.3} parent=39 // pred_fallthru
        _
      // Predicated region
      $region89: #{climax_pm25_forward.3} parent=39 // pred_check
        %p648 = pneg %p369
      $region90: #{climax_pm25_forward.3} parent=39 // pred_check_branch
        %650 = sbr.rel (%p648) target = $region92
      $region91: #{climax_pm25_forward.3} parent=39 // pred_region
        %p651 = scmp.lt.s32.totalorder %s33, 1
        %s652 = scalar_select %p651, %s33, 1
        %s653 = scalar_lea.vmem %s12, %s652
      $region92: #{climax_pm25_forward.3} parent=39 // pred_fallthru
        _
    $region40: #{climax_pm25_forward.3} parent=5 // pred_fallthru
      _
    %p654 = scmp.le.s32.totalorder 1, %s25
    %p655 = scmp.lt.s32.totalorder %s25, 5
    %p656 = pnand %p654, %p655
    %p657 = pneg %p656
    // Predicated region
    $region93: #{climax_pm25_forward.3} parent=5 // pred_check
      _
    $region94: #{climax_pm25_forward.3} parent=5 // pred_check_branch
      %659 = sbr.rel (%p656) target = $region96
    $region95: #{climax_pm25_forward.3} parent=5 // pred_region
      %s660 = ssub.s32 %s25, 1
      %p661 = scmp.lt.s32.totalorder %s34, 1
      %s662 = scalar_select %p661, %s34, 1
      %s663 = smul.addr %s662, 2
      %s664 = smul.addr %s663, 8
      %s665 = scalar_lea.vmem %s0, %s664
      %p666 = pneg %p63
      %p667 = pneg %p60
      %p668 = scmp.lt.s32.totalorder %s35, 1
      %s669 = scalar_select %p668, %s35, 1
      %s670 = scalar_lea.vmem %s1, %s669
      %p671 = pneg %p89
      %p672 = pneg %p86
      %p673 = scmp.lt.s32.totalorder %s35, 1
      %s674 = scalar_select %p673, %s35, 1
      %s675 = scalar_lea.vmem %s2, %s674
      %p676 = pneg %p115
      %p677 = pneg %p112
      %p678 = scmp.lt.s32.totalorder %s35, 1
      %s679 = scalar_select %p678, %s35, 1
      %s680 = smul.addr %s679, 48
      %s681 = smul.addr %s680, 4
      %s682 = scalar_lea.vmem %s3, %s681
      %p683 = pneg %p141
      %p684 = pneg %p138
      %p685 = scmp.lt.s32.totalorder %s35, 1
      %s686 = scalar_select %p685, %s35, 1
      %s687 = smul.addr %s686, 3
      %s688 = scalar_lea.vmem %s4, %s687
      %p689 = pneg %p167
      %p690 = pneg %p164
      %p691 = scmp.lt.s32.totalorder %s35, 1
      %s692 = scalar_select %p691, %s35, 1
      %s693 = smul.addr %s692, 16
      %s694 = smul.addr %s693, 4
      %s695 = scalar_lea.vmem %s5, %s694
      %p696 = pneg %p193
      %p697 = pneg %p190
      %p698 = scmp.lt.s32.totalorder %s35, 1
      %s699 = scalar_select %p698, %s35, 1
      %s700 = scalar_lea.vmem %s6, %s699
      %p701 = pneg %p219
      %p702 = pneg %p216
      %p703 = scmp.lt.s32.totalorder %s35, 1
      %s704 = scalar_select %p703, %s35, 1
      %s705 = scalar_lea.vmem %s7, %s704
      %p706 = pneg %p245
      %p707 = pneg %p242
      %p708 = scmp.lt.s32.totalorder %s35, 1
      %s709 = scalar_select %p708, %s35, 1
      %s710 = scalar_lea.vmem %s8, %s709
      %p711 = pneg %p271
      %p712 = pneg %p268
      %p713 = scmp.lt.s32.totalorder %s35, 1
      %s714 = scalar_select %p713, %s35, 1
      %s715 = smul.addr %s714, 64
      %s716 = smul.addr %s715, 4
      %s717 = scalar_lea.vmem %s9, %s716
      %p718 = pneg %p297
      %p719 = pneg %p294
      %p720 = scmp.lt.s32.totalorder %s35, 1
      %s721 = scalar_select %p720, %s35, 1
      %s722 = smul.addr %s721, 4
      %s723 = scalar_lea.vmem %s10, %s722
      %p724 = pneg %p323
      %p725 = pneg %p320
      %p726 = scmp.lt.s32.totalorder %s35, 1
      %s727 = scalar_select %p726, %s35, 1
      %s728 = smul.addr %s727, 64
      %s729 = smul.addr %s728, 4
      %s730 = scalar_lea.vmem %s11, %s729
      %p731 = pneg %p349
      %p732 = pneg %p346
      %p733 = scmp.lt.s32.totalorder %s35, 1
      %s734 = scalar_select %p733, %s35, 1
      %s735 = scalar_lea.vmem %s12, %s734
      %p736 = pneg %p375
      %p737 = pneg %p372
      %p738 = pneg %p396
      %p739 = pneg %p393
      %p740 = pneg %p417
      %p741 = pneg %p414
      %p742 = pneg %p438
      %p743 = pneg %p435
      %p744 = pneg %p459
      %p745 = pneg %p456
      %p746 = pneg %p480
      %p747 = pneg %p477
      %p748 = pneg %p501
      %p749 = pneg %p498
      %p750 = pneg %p527
      %p751 = pneg %p524
      %p752 = scmp.lt.s32.totalorder %s34, 1
      %s753 = scalar_select %p752, %s34, 1
      %s754 = smul.addr %s753, 2
      %s755 = smul.addr %s754, 8
      %s756 = scalar_lea.vmem %s19, %s755
      %p757 = scmp.lt.s32.totalorder %s34, 1
      %s758 = scalar_select %p757, %s34, 1
      %s759 = smul.addr %s758, 2
      %s760 = smul.addr %s759, 8
      %s761 = scalar_lea.vmem %s0, %s760
      %p762 = scmp.lt.s32.totalorder %s35, 1
      %s763 = scalar_select %p762, %s35, 1
      %s764 = scalar_lea.vmem %s1, %s763
      %p765 = scmp.lt.s32.totalorder %s35, 1
      %s766 = scalar_select %p765, %s35, 1
      %s767 = scalar_lea.vmem %s2, %s766
      %p768 = scmp.lt.s32.totalorder %s35, 1
      %s769 = scalar_select %p768, %s35, 1
      %s770 = smul.addr %s769, 48
      %s771 = smul.addr %s770, 4
      %s772 = scalar_lea.vmem %s3, %s771
      %p773 = scmp.lt.s32.totalorder %s35, 1
      %s774 = scalar_select %p773, %s35, 1
      %s775 = smul.addr %s774, 3
      %s776 = scalar_lea.vmem %s4, %s775
      %p777 = scmp.lt.s32.totalorder %s35, 1
      %s778 = scalar_select %p777, %s35, 1
      %s779 = smul.addr %s778, 16
      %s780 = smul.addr %s779, 4
      %s781 = scalar_lea.vmem %s5, %s780
      %p782 = scmp.lt.s32.totalorder %s35, 1
      %s783 = scalar_select %p782, %s35, 1
      %s784 = scalar_lea.vmem %s6, %s783
      %p785 = scmp.lt.s32.totalorder %s35, 1
      %s786 = scalar_select %p785, %s35, 1
      %s787 = scalar_lea.vmem %s7, %s786
      %p788 = scmp.lt.s32.totalorder %s35, 1
      %s789 = scalar_select %p788, %s35, 1
      %s790 = scalar_lea.vmem %s8, %s789
      %p791 = scmp.lt.s32.totalorder %s35, 1
      %s792 = scalar_select %p791, %s35, 1
      %s793 = smul.addr %s792, 64
      %s794 = smul.addr %s793, 4
      %s795 = scalar_lea.vmem %s9, %s794
      %p796 = scmp.lt.s32.totalorder %s35, 1
      %s797 = scalar_select %p796, %s35, 1
      %s798 = smul.addr %s797, 4
      %s799 = scalar_lea.vmem %s10, %s798
      %p800 = scmp.lt.s32.totalorder %s35, 1
      %s801 = scalar_select %p800, %s35, 1
      %s802 = smul.addr %s801, 64
      %s803 = smul.addr %s802, 4
      %s804 = scalar_lea.vmem %s11, %s803
      %p805 = scmp.lt.s32.totalorder %s35, 1
      %s806 = scalar_select %p805, %s35, 1
      %s807 = scalar_lea.vmem %s12, %s806
      %p808 = scmp.lt.s32.totalorder %s34, 1
      %s809 = scalar_select %p808, %s34, 1
      %s810 = smul.addr %s809, 2
      %s811 = smul.addr %s810, 8
      %s812 = scalar_lea.vmem %s19, %s811
      %p814 = scmp.eq.s32.totalorder %s35, 0
      // Predicated region
      $region97: #{climax_pm25_forward.3} parent=95 // pred_check
        %p815 = pneg %p814
      $region98: #{climax_pm25_forward.3} parent=95 // pred_check_branch
        %817 = sbr.rel (%p815) target = $region100
      $region99: #{climax_pm25_forward.3} parent=95 // pred_region
        %v818 = vld [vmem:[%s761] sm:$0xff]
        %v819 = vld [vmem:[%s761 + $0x8] sm:$0xff]
        %820 = vst [vmem:[#allocation2] sm:$0xff] %v818
        %821 = vst [vmem:[#allocation2 + $0x8] sm:$0xff] %v819
      $region100: #{climax_pm25_forward.3} parent=95 // pred_fallthru
        _
      %v822 = vld [vmem:[#allocation2] sm:$0xff]
      %v823 = vld [vmem:[#allocation2 + $0x8] sm:$0xff]
      %v824 = vld [vmem:[%s764] sm:$0x1]
      %v825 = vld [vmem:[%s767] sm:$0x1]
      %826 = vadd.xlane.f32.xlu0 %v822
      %v827 = vpop.xlane.xlu0 %826
      %828 = vadd.xlane.f32.xlu0 %v823
      %v829 = vpop.xlane.xlu0 %828
      %v830 = vrcp.pop 128.0
      %v831 = vmul.f32 %v827, %v830
      %v832 = vmul.f32 %v829, %v830
      %v833 = vsub.f32 %v822, %v831
      %v834 = vsub.f32 %v823, %v832
      %v835 = vmul.f32 %v833, %v833
      %v836 = vmul.f32 %v834, %v834
      %837 = vadd.xlane.f32.xlu0 %v835
      %v838 = vpop.xlane.xlu0 %837
      %839 = vadd.xlane.f32.xlu0 %v836
      %v840 = vpop.xlane.xlu0 %839
      %v841 = vmul.f32 %v838, %v830
      %v842 = vmul.f32 %v840, %v830
      %v843 = vadd.f32 %v841, 1e-05
      %v844 = vadd.f32 %v842, 1e-05
      %v845 = vrsqrt.pop %v843
      %v846 = vrsqrt.pop %v844
      %v847 = vmul.f32 %v833, %v845
      %v848 = vmul.f32 %v834, %v846
      %v850 = vlaneseq
      %v851 = vshrl.u32 %v850, 7
      %v852 = vsub.s32 0, %v851
      %v853 = vrot.slane %v824, %v852
      %v855 = vmul.f32 %v847, %v853
      %v856 = vmul.f32 %v848, %v853
      %v858 = vlaneseq
      %v859 = vshrl.u32 %v858, 7
      %v860 = vsub.s32 0, %v859
      %v861 = vrot.slane %v825, %v860
      %v863 = vadd.f32 %v855, %v861
      %v864 = vadd.f32 %v856, %v861
      %v865 = vld [vmem:[%s772] sm:$0xff]
      %v866 = vld [vmem:[%s772 + $0x8] sm:$0xf]
      %v867 = vld [vmem:[%s772 + $0xc] sm:$0xff]
      %v868 = vld [vmem:[%s772 + $0x14] sm:$0xf]
      %v869 = vld [vmem:[%s772 + $0x18] sm:$0xff]
      %v870 = vld [vmem:[%s772 + $0x20] sm:$0xf]
      %v871 = vld [vmem:[%s772 + $0x24] sm:$0xff]
      %v872 = vld [vmem:[%s772 + $0x2c] sm:$0xf]
      %v873 = vld [vmem:[%s772 + $0x30] sm:$0xff]
      %v874 = vld [vmem:[%s772 + $0x38] sm:$0xf]
      %v875 = vld [vmem:[%s772 + $0x3c] sm:$0xff]
      %v876 = vld [vmem:[%s772 + $0x44] sm:$0xf]
      %v877 = vld [vmem:[%s772 + $0x48] sm:$0xff]
      %v878 = vld [vmem:[%s772 + $0x50] sm:$0xf]
      %v879 = vld [vmem:[%s772 + $0x54] sm:$0xff]
      %v880 = vld [vmem:[%s772 + $0x5c] sm:$0xf]
      %v881 = vld [vmem:[%s772 + $0x60] sm:$0xff]
      %v882 = vld [vmem:[%s772 + $0x68] sm:$0xf]
      %v883 = vld [vmem:[%s772 + $0x6c] sm:$0xff]
      %v884 = vld [vmem:[%s772 + $0x74] sm:$0xf]
      %v885 = vld [vmem:[%s772 + $0x78] sm:$0xff]
      %v886 = vld [vmem:[%s772 + $0x80] sm:$0xf]
      %v887 = vld [vmem:[%s772 + $0x84] sm:$0xff]
      %v888 = vld [vmem:[%s772 + $0x8c] sm:$0xf]
      %v889 = vld [vmem:[%s772 + $0x90] sm:$0xff]
      %v890 = vld [vmem:[%s772 + $0x98] sm:$0xf]
      %v891 = vld [vmem:[%s772 + $0x9c] sm:$0xff]
      %v892 = vld [vmem:[%s772 + $0xa4] sm:$0xf]
      %v893 = vld [vmem:[%s772 + $0xa8] sm:$0xff]
      %v894 = vld [vmem:[%s772 + $0xb0] sm:$0xf]
      %v895 = vld [vmem:[%s772 + $0xb4] sm:$0xff]
      %v896 = vld [vmem:[%s772 + $0xbc] sm:$0xf]
      %v897 = vpack.c.bf16 %v864, %v863
      %v898 = vld [vmem:[%s776] sm:$0x7]
      %v900 = vlaneseq
      %v901 = vshrl.u32 %v900, 7
      %v902 = vsub.s32 0, %v901
      %v903 = vrot.slane %v898, %v902
      %v904 = vlaneseq
      %v905 = vshrl.u32 %v904, 7
      %v906 = vsub.s32 1, %v905
      %v907 = vrot.slane %v898, %v906
      %v908 = vlaneseq
      %v909 = vshrl.u32 %v908, 7
      %v910 = vsub.s32 2, %v909
      %v911 = vrot.slane %v898, %v910
      %v947 = vunpack.c.l.b16 %v865
      %v948 = vunpack.c.h.b16 %v865
      %v949 = vunpack.c.l.b16 %v866
      %v950 = vunpack.c.l.b16 %v867
      %v951 = vunpack.c.h.b16 %v867
      %v952 = vunpack.c.l.b16 %v868
      %v953 = vunpack.c.l.b16 %v869
      %v954 = vunpack.c.h.b16 %v869
      %v955 = vunpack.c.l.b16 %v870
      %v956 = vunpack.c.l.b16 %v871
      %v957 = vunpack.c.h.b16 %v871
      %v958 = vunpack.c.l.b16 %v872
      %v959 = vunpack.c.l.b16 %v873
      %v960 = vunpack.c.h.b16 %v873
      %v961 = vunpack.c.l.b16 %v874
      %v962 = vunpack.c.l.b16 %v875
      %v963 = vunpack.c.h.b16 %v875
      %v964 = vunpack.c.l.b16 %v876
      %v965 = vunpack.c.l.b16 %v877
      %v966 = vunpack.c.h.b16 %v877
      %v967 = vunpack.c.l.b16 %v878
      %v968 = vunpack.c.l.b16 %v879
      %v969 = vunpack.c.h.b16 %v879
      %v970 = vunpack.c.l.b16 %v880
      %v971 = vunpack.c.l.b16 %v881
      %v972 = vunpack.c.h.b16 %v881
      %v973 = vunpack.c.l.b16 %v882
      %v974 = vunpack.c.l.b16 %v883
      %v975 = vunpack.c.h.b16 %v883
      %v976 = vunpack.c.l.b16 %v884
      %v977 = vunpack.c.l.b16 %v885
      %v978 = vunpack.c.h.b16 %v885
      %v979 = vunpack.c.l.b16 %v886
      %v980 = vunpack.c.l.b16 %v887
      %v981 = vunpack.c.h.b16 %v887
      %v982 = vunpack.c.l.b16 %v888
      %v983 = vunpack.c.l.b16 %v889
      %v984 = vunpack.c.h.b16 %v889
      %v985 = vunpack.c.l.b16 %v890
      %v986 = vunpack.c.l.b16 %v891
      %v987 = vunpack.c.h.b16 %v891
      %v988 = vunpack.c.l.b16 %v892
      %v989 = vunpack.c.l.b16 %v893
      %v990 = vunpack.c.h.b16 %v893
      %v991 = vunpack.c.l.b16 %v894
      %v992 = vunpack.c.l.b16 %v895
      %v993 = vunpack.c.h.b16 %v895
      %v994 = vunpack.c.l.b16 %v896
      %v995 = vpack.c.b16 %v950, %v947
      %v996 = vpack.c.b16 %v951, %v948
      %v997 = vpack.c.b16 %v952, %v949
      %v998 = vpack.c.b16 %v956, %v953
      %v999 = vpack.c.b16 %v957, %v954
      %v1000 = vpack.c.b16 %v958, %v955
      %v1001 = vpack.c.b16 %v962, %v959
      %v1002 = vpack.c.b16 %v963, %v960
      %v1003 = vpack.c.b16 %v964, %v961
      %v1004 = vpack.c.b16 %v968, %v965
      %v1005 = vpack.c.b16 %v969, %v966
      %v1006 = vpack.c.b16 %v970, %v967
      %v1007 = vpack.c.b16 %v974, %v971
      %v1008 = vpack.c.b16 %v975, %v972
      %v1009 = vpack.c.b16 %v976, %v973
      %v1010 = vpack.c.b16 %v980, %v977
      %v1011 = vpack.c.b16 %v981, %v978
      %v1012 = vpack.c.b16 %v982, %v979
      %v1013 = vpack.c.b16 %v986, %v983
      %v1014 = vpack.c.b16 %v987, %v984
      %v1015 = vpack.c.b16 %v988, %v985
      %v1016 = vpack.c.b16 %v992, %v989
      %v1017 = vpack.c.b16 %v993, %v990
      %v1018 = vpack.c.b16 %v994, %v991
      %1043 = vmatprep.subr.bf16.mxu0 %v996
      %1044 = vmatpush1.bf16.msra.mxu0 %v995
      %1045 = vmatprep.subr.bf16.mxu0 %v999
      %1046 = vmatpush1.bf16.msra.mxu0 %v998
      %1047 = vmatprep.subr.bf16.mxu0 %v1002
      %1048 = vmatpush1.bf16.msra.mxu0 %v1001
      %1049 = vmatprep.subr.bf16.mxu0 %v1005
      %1050 = vmatpush1.bf16.msra.mxu0 %v1004
      %1051 = vmatprep.subr.bf16.mxu0 %v1008
      %1052 = vmatpush1.bf16.msra.mxu0 %v1007
      %1053 = vmatprep.subr.bf16.mxu0 %v1011
      %1054 = vmatpush1.bf16.msra.mxu0 %v1010
      %1055 = vmatprep.subr.bf16.mxu0 %v1014
      %1056 = vmatpush1.bf16.msra.mxu0 %v1013
      %1057 = vmatprep.subr.bf16.mxu0 %v1017
      %1058 = vmatpush1.bf16.msra.mxu0 %v1016
      %1059 = vmatprep.subr.bf16.mxu0 0
      %1060 = vmatpush1.bf16.msra.mxu0 0
      %1061 = vmatprep.subr.bf16.mxu0 0
      %1062 = vmatpush1.bf16.msra.mxu0 0
      %1063 = vmatprep.subr.bf16.mxu0 0
      %1064 = vmatpush1.bf16.msra.mxu0 0
      %1065 = vmatprep.subr.bf16.mxu0 0
      %1066 = vmatpush1.bf16.msra.mxu0 0
      %1067 = vmatprep.subr.bf16.mxu0 0
      %1068 = vmatpush1.bf16.msra.mxu0 0
      %1069 = vmatprep.subr.bf16.mxu0 0
      %1070 = vmatpush1.bf16.msra.mxu0 0
      %1071 = vmatprep.subr.bf16.mxu0 0
      %1072 = vmatpush1.bf16.msra.mxu0 0
      %1073 = vmatprep.subr.bf16.mxu0 0
      %1074 = vmatpush1.bf16.msra.mxu0 0
      %1075 = vmatprep.mubr.bf16.mxu0 0
      %1076 = vmatmul.mubr.bf16.gmra.mrb[0].mxu0 %v897
      %v1077 = vpop.f32.mrb[0].mxu0
      %v1078 = vadd.f32 %v903, %v1077
      %v1079 = vpop.f32.mrb[0].mxu0
      %v1080 = vadd.f32 %v907, %v1079
      %v1081 = vpop.f32.mrb[0].mxu0
      %v1082 = vadd.f32 %v903, %v1081
      %v1083 = vpop.f32.mrb[0].mxu0
      %v1084 = vadd.f32 %v907, %v1083
      %1085 = vdwg.mxu0
      %1086 = vmatprep.subr.bf16.mxu0 0
      %1087 = vmatpush1.bf16.msra.mxu0 %v997
      %1088 = vmatprep.subr.bf16.mxu0 0
      %1089 = vmatpush1.bf16.msra.mxu0 %v1000
      %1090 = vmatprep.subr.bf16.mxu0 0
      %1091 = vmatpush1.bf16.msra.mxu0 %v1003
      %1092 = vmatprep.subr.bf16.mxu0 0
      %1093 = vmatpush1.bf16.msra.mxu0 %v1006
      %1094 = vmatprep.subr.bf16.mxu0 0
      %1095 = vmatpush1.bf16.msra.mxu0 %v1009
      %1096 = vmatprep.subr.bf16.mxu0 0
      %1097 = vmatpush1.bf16.msra.mxu0 %v1012
      %1098 = vmatprep.subr.bf16.mxu0 0
      %1099 = vmatpush1.bf16.msra.mxu0 %v1015
      %1100 = vmatprep.subr.bf16.mxu0 0
      %1101 = vmatpush1.bf16.msra.mxu0 %v1018
      %1102 = vmatprep.subr.bf16.mxu0 0
      %1103 = vmatpush1.bf16.msra.mxu0 0
      %1104 = vmatprep.subr.bf16.mxu0 0
      %1105 = vmatpush1.bf16.msra.mxu0 0
      %1106 = vmatprep.subr.bf16.mxu0 0
      %1107 = vmatpush1.bf16.msra.mxu0 0
      %1108 = vmatprep.subr.bf16.mxu0 0
      %1109 = vmatpush1.bf16.msra.mxu0 0
      %1110 = vmatprep.subr.bf16.mxu0 0
      %1111 = vmatpush1.bf16.msra.mxu0 0
      %1112 = vmatprep.subr.bf16.mxu0 0
      %1113 = vmatpush1.bf16.msra.mxu0 0
      %1114 = vmatprep.subr.bf16.mxu0 0
      %1115 = vmatpush1.bf16.msra.mxu0 0
      %1116 = vmatprep.subr.bf16.mxu0 0
      %1117 = vmatpush1.bf16.msra.mxu0 0
      %1118 = vmatprep.mubr.bf16.mxu0 0
      %1119 = vmatmul.mubr.bf16.gmra.mrb[0].mxu0 %v897
      %v1120 = vpop.f32.mrb[0].mxu0
      %v1121 = vadd.f32 %v911, %v1120
      %v1122 = vpop.f32.mrb[0].mxu0
      %v1123 = vpop.f32.mrb[0].mxu0
      %v1124 = vadd.f32 %v911, %v1123
      %v1125 = vpop.f32.mrb[0].mxu0
      %1126 = vdwg.mxu0
      %v1127 = vpack.c.bf16 %v1082, %v1078
      %v1128 = vpack.c.bf16 %v1084, %v1080
      %vm1129 = vcmask 261120
      %v1131 = vsel %vm1129, %v1127, 0
      %v1134 = vsel %vm1129, %v1128, 0
      %1136 = vmatprep.subr.bf16.mxu0 0
      %1137 = vmatpush1.bf16.xpose.msra.mxu0 %v1134
      %1138 = vmatprep.subr.bf16.mxu0 0
      %1139 = vmatpush1.bf16.xpose.msra.mxu0 0
      %1140 = vmatprep.subr.bf16.mxu0 0
      %1141 = vmatpush1.bf16.xpose.msra.mxu0 0
      %1142 = vmatprep.subr.bf16.mxu0 0
      %1143 = vmatpush1.bf16.xpose.msra.mxu0 0
      %1144 = vmatprep.subr.bf16.mxu0 0
      %1145 = vmatpush1.bf16.xpose.msra.mxu0 0
      %1146 = vmatprep.subr.bf16.mxu0 0
      %1147 = vmatpush1.bf16.xpose.msra.mxu0 0
      %1148 = vmatprep.subr.bf16.mxu0 0
      %1149 = vmatpush1.bf16.xpose.msra.mxu0 0
      %1150 = vmatprep.subr.bf16.mxu0 0
      %1151 = vmatpush1.bf16.xpose.msra.mxu0 0
      %1152 = vmatprep.subr.bf16.mxu0 0
      %1153 = vmatpush1.bf16.xpose.msra.mxu0 0
      %1154 = vmatprep.subr.bf16.mxu0 0
      %1155 = vmatpush1.bf16.xpose.msra.mxu0 0
      %1156 = vmatprep.subr.bf16.mxu0 0
      %1157 = vmatpush1.bf16.xpose.msra.mxu0 0
      %1158 = vmatprep.subr.bf16.mxu0 0
      %1159 = vmatpush1.bf16.xpose.msra.mxu0 0
      %1160 = vmatprep.subr.bf16.mxu0 0
      %1161 = vmatpush1.bf16.xpose.msra.mxu0 0
      %1162 = vmatprep.subr.bf16.mxu0 0
      %1163 = vmatpush1.bf16.xpose.msra.mxu0 0
      %1164 = vmatprep.subr.bf16.mxu0 0
      %1165 = vmatpush1.bf16.xpose.msra.mxu0 0
      %1166 = vmatprep.subr.bf16.mxu0 0
      %1167 = vmatpush1.bf16.xpose.msra.mxu0 0
      %1168 = vmatprep.mubr.bf16.mxu0 0
      %1169 = vmatmul.mubr.bf16.gmra.mrb[0].mxu0 %v1131
      %v1170 = vpop.f32.mrb[0].mxu0
      %v1171 = vadd.f32 0.0, %v1170
      %v1172 = vpop.f32.mrb[0].mxu0
      %v1173 = vpop.f32.mrb[0].mxu0
      %v1174 = vadd.f32 0.0, %v1173
      %v1175 = vpop.f32.mrb[0].mxu0
      %1176 = vdwg.mxu0
      %vm1177 = vcmask 130048
      %v1178 = vsel %vm1177, %v1171, -inf
      %1179 = vmax.xlane.f32.xlu0 %v1178
      %v1180 = vpop.xlane.xlu0 %1179
      %v1181 = vsel %vm1177, %v1174, -inf
      %1182 = vmax.xlane.f32.xlu0 %v1181
      %v1183 = vpop.xlane.xlu0 %1182
      %v1184 = vsub.f32 %v1171, %v1180
      %v1185 = vsub.f32 %v1174, %v1183
      %v1186 = vmul.f32 %v1184, 1.442695
      %v1187 = vpow.pop %v1186
      %v1188 = vmul.f32 %v1185, 1.442695
      %v1189 = vpow.pop %v1188
      %v1190 = vsel %vm1177, %v1187, 0.0
      %1191 = vadd.xlane.f32.xlu0 %v1190
      %v1192 = vpop.xlane.xlu0 %1191
      %v1193 = vsel %vm1177, %v1189, 0.0
      %1194 = vadd.xlane.f32.xlu0 %v1193
      %v1195 = vpop.xlane.xlu0 %1194
      %v1196 = vrcp.pop %v1192
      %v1197 = vrcp.pop %v1195
      %v1198 = vmul.f32 %v1187, %v1196
      %v1199 = vmul.f32 %v1189, %v1197
      %v1200 = vpack.c.bf16 %v1199, %v1198
      %v1201 = vpack.c.bf16 %v1124, %v1121
      %v1203 = vsel %vm1177, %v1200, 0
      %1205 = vmatprep.subr.bf16.mxu0 0
      %1206 = vmatpush1.bf16.msra.mxu0 %v1201
      %1207 = vmatprep.subr.bf16.mxu0 0
      %1208 = vmatpush1.bf16.msra.mxu0 0
      %1209 = vmatprep.subr.bf16.mxu0 0
      %1210 = vmatpush1.bf16.msra.mxu0 0
      %1211 = vmatprep.subr.bf16.mxu0 0
      %1212 = vmatpush1.bf16.msra.mxu0 0
      %1213 = vmatprep.subr.bf16.mxu0 0
      %1214 = vmatpush1.bf16.msra.mxu0 0
      %1215 = vmatprep.subr.bf16.mxu0 0
      %1216 = vmatpush1.bf16.msra.mxu0 0
      %1217 = vmatprep.subr.bf16.mxu0 0
      %1218 = vmatpush1.bf16.msra.mxu0 0
      %1219 = vmatprep.subr.bf16.mxu0 0
      %1220 = vmatpush1.bf16.msra.mxu0 0
      %1221 = vmatprep.subr.bf16.mxu0 0
      %1222 = vmatpush1.bf16.msra.mxu0 0
      %1223 = vmatprep.subr.bf16.mxu0 0
      %1224 = vmatpush1.bf16.msra.mxu0 0
      %1225 = vmatprep.subr.bf16.mxu0 0
      %1226 = vmatpush1.bf16.msra.mxu0 0
      %1227 = vmatprep.subr.bf16.mxu0 0
      %1228 = vmatpush1.bf16.msra.mxu0 0
      %1229 = vmatprep.subr.bf16.mxu0 0
      %1230 = vmatpush1.bf16.msra.mxu0 0
      %1231 = vmatprep.subr.bf16.mxu0 0
      %1232 = vmatpush1.bf16.msra.mxu0 0
      %1233 = vmatprep.subr.bf16.mxu0 0
      %1234 = vmatpush1.bf16.msra.mxu0 0
      %1235 = vmatprep.subr.bf16.mxu0 0
      %1236 = vmatpush1.bf16.msra.mxu0 0
      %1237 = vmatprep.mubr.bf16.mxu0 0
      %1238 = vmatmul.mubr.bf16.gmra.mrb[0].mxu0 %v1203
      %v1239 = vpop.f32.mrb[0].mxu0
      %v1240 = vadd.f32 0.0, %v1239
      %v1241 = vpop.f32.mrb[0].mxu0
      %v1242 = vpop.f32.mrb[0].mxu0
      %v1243 = vadd.f32 0.0, %v1242
      %v1244 = vpop.f32.mrb[0].mxu0
      %1245 = vdwg.mxu0
      %1246 = vst.msk [vmem:[#allocation3] sm:$0xff] %vm1129, %v1240
      %1247 = vst.msk [vmem:[#allocation3 + $0x8] sm:$0xff] %vm1129, %v1243
      %1249 = vrot.lane.b32.xlu0 %v1127, 96
      %v1250 = vpop.permute.xlu0 %1249
      %1252 = vrot.lane.b32.xlu0 %v1128, 96
      %v1253 = vpop.permute.xlu0 %1252
      %v1255 = vsel %vm1129, %v1250, 0
      %v1258 = vsel %vm1129, %v1253, 0
      %1260 = vmatprep.subr.bf16.mxu0 0
      %1261 = vmatpush1.bf16.xpose.msra.mxu0 %v1258
      %1262 = vmatprep.subr.bf16.mxu0 0
      %1263 = vmatpush1.bf16.xpose.msra.mxu0 0
      %1264 = vmatprep.subr.bf16.mxu0 0
      %1265 = vmatpush1.bf16.xpose.msra.mxu0 0
      %1266 = vmatprep.subr.bf16.mxu0 0
      %1267 = vmatpush1.bf16.xpose.msra.mxu0 0
      %1268 = vmatprep.subr.bf16.mxu0 0
      %1269 = vmatpush1.bf16.xpose.msra.mxu0 0
      %1270 = vmatprep.subr.bf16.mxu0 0
      %1271 = vmatpush1.bf16.xpose.msra.mxu0 0
      %1272 = vmatprep.subr.bf16.mxu0 0
      %1273 = vmatpush1.bf16.xpose.msra.mxu0 0
      %1274 = vmatprep.subr.bf16.mxu0 0
      %1275 = vmatpush1.bf16.xpose.msra.mxu0 0
      %1276 = vmatprep.subr.bf16.mxu0 0
      %1277 = vmatpush1.bf16.xpose.msra.mxu0 0
      %1278 = vmatprep.subr.bf16.mxu0 0
      %1279 = vmatpush1.bf16.xpose.msra.mxu0 0
      %1280 = vmatprep.subr.bf16.mxu0 0
      %1281 = vmatpush1.bf16.xpose.msra.mxu0 0
      %1282 = vmatprep.subr.bf16.mxu0 0
      %1283 = vmatpush1.bf16.xpose.msra.mxu0 0
      %1284 = vmatprep.subr.bf16.mxu0 0
      %1285 = vmatpush1.bf16.xpose.msra.mxu0 0
      %1286 = vmatprep.subr.bf16.mxu0 0
      %1287 = vmatpush1.bf16.xpose.msra.mxu0 0
      %1288 = vmatprep.subr.bf16.mxu0 0
      %1289 = vmatpush1.bf16.xpose.msra.mxu0 0
      %1290 = vmatprep.subr.bf16.mxu0 0
      %1291 = vmatpush1.bf16.xpose.msra.mxu0 0
      %1292 = vmatprep.mubr.bf16.mxu0 0
      %1293 = vmatmul.mubr.bf16.gmra.mrb[0].mxu0 %v1255
      %v1294 = vpop.f32.mrb[0].mxu0
      %v1295 = vadd.f32 0.0, %v1294
      %v1296 = vpop.f32.mrb[0].mxu0
      %v1297 = vpop.f32.mrb[0].mxu0
      %v1298 = vadd.f32 0.0, %v1297
      %v1299 = vpop.f32.mrb[0].mxu0
      %1300 = vdwg.mxu0
      %v1301 = vsel %vm1177, %v1295, -inf
      %1302 = vmax.xlane.f32.xlu0 %v1301
      %v1303 = vpop.xlane.xlu0 %1302
      %v1304 = vsel %vm1177, %v1298, -inf
      %1305 = vmax.xlane.f32.xlu0 %v1304
      %v1306 = vpop.xlane.xlu0 %1305
      %v1307 = vsub.f32 %v1295, %v1303
      %v1308 = vsub.f32 %v1298, %v1306
      %v1309 = vmul.f32 %v1307, 1.442695
      %v1310 = vpow.pop %v1309
      %v1311 = vmul.f32 %v1308, 1.442695
      %v1312 = vpow.pop %v1311
      %v1313 = vsel %vm1177, %v1310, 0.0
      %1314 = vadd.xlane.f32.xlu0 %v1313
      %v1315 = vpop.xlane.xlu0 %1314
      %v1316 = vsel %vm1177, %v1312, 0.0
      %1317 = vadd.xlane.f32.xlu0 %v1316
      %v1318 = vpop.xlane.xlu0 %1317
      %v1319 = vrcp.pop %v1315
      %v1320 = vrcp.pop %v1318
      %v1321 = vmul.f32 %v1310, %v1319
      %v1322 = vmul.f32 %v1312, %v1320
      %v1323 = vpack.c.bf16 %v1322, %v1321
      %1325 = vrot.lane.b32.xlu0 %v1201, 96
      %v1326 = vpop.permute.xlu0 %1325
      %v1329 = vsel %vm1177, %v1323, 0
      %1331 = vmatprep.subr.bf16.mxu0 0
      %1332 = vmatpush1.bf16.msra.mxu0 %v1326
      %1333 = vmatprep.subr.bf16.mxu0 0
      %1334 = vmatpush1.bf16.msra.mxu0 0
      %1335 = vmatprep.subr.bf16.mxu0 0
      %1336 = vmatpush1.bf16.msra.mxu0 0
      %1337 = vmatprep.subr.bf16.mxu0 0
      %1338 = vmatpush1.bf16.msra.mxu0 0
      %1339 = vmatprep.subr.bf16.mxu0 0
      %1340 = vmatpush1.bf16.msra.mxu0 0
      %1341 = vmatprep.subr.bf16.mxu0 0
      %1342 = vmatpush1.bf16.msra.mxu0 0
      %1343 = vmatprep.subr.bf16.mxu0 0
      %1344 = vmatpush1.bf16.msra.mxu0 0
      %1345 = vmatprep.subr.bf16.mxu0 0
      %1346 = vmatpush1.bf16.msra.mxu0 0
      %1347 = vmatprep.subr.bf16.mxu0 0
      %1348 = vmatpush1.bf16.msra.mxu0 0
      %1349 = vmatprep.subr.bf16.mxu0 0
      %1350 = vmatpush1.bf16.msra.mxu0 0
      %1351 = vmatprep.subr.bf16.mxu0 0
      %1352 = vmatpush1.bf16.msra.mxu0 0
      %1353 = vmatprep.subr.bf16.mxu0 0
      %1354 = vmatpush1.bf16.msra.mxu0 0
      %1355 = vmatprep.subr.bf16.mxu0 0
      %1356 = vmatpush1.bf16.msra.mxu0 0
      %1357 = vmatprep.subr.bf16.mxu0 0
      %1358 = vmatpush1.bf16.msra.mxu0 0
      %1359 = vmatprep.subr.bf16.mxu0 0
      %1360 = vmatpush1.bf16.msra.mxu0 0
      %1361 = vmatprep.subr.bf16.mxu0 0
      %1362 = vmatpush1.bf16.msra.mxu0 0
      %1363 = vmatprep.mubr.bf16.mxu0 0
      %1364 = vmatmul.mubr.bf16.gmra.mrb[0].mxu0 %v1329
      %v1365 = vpop.f32.mrb[0].mxu0
      %v1366 = vadd.f32 0.0, %v1365
      %v1367 = vpop.f32.mrb[0].mxu0
      %v1368 = vpop.f32.mrb[0].mxu0
      %v1369 = vadd.f32 0.0, %v1368
      %v1370 = vpop.f32.mrb[0].mxu0
      %1371 = vdwg.mxu0
      %1374 = vrot.lane.b32.xlu0 %v1366, 32
      %v1375 = vpop.permute.xlu0 %1374
      %1376 = vrot.lane.b32.xlu0 %v1369, 32
      %v1377 = vpop.permute.xlu0 %1376
      %vm1380 = vcmask 523520
      %1381 = vst.msk [vmem:[#allocation3] sm:$0xff] %vm1380, %v1375
      %1382 = vst.msk [vmem:[#allocation3 + $0x8] sm:$0xff] %vm1380, %v1377
      %1383 = vrot.lane.b32.xlu0 %v1127, 64
      %v1384 = vpop.permute.xlu0 %1383
      %1385 = vrot.lane.b32.xlu0 %v1128, 64
      %v1386 = vpop.permute.xlu0 %1385
      %v1388 = vsel %vm1129, %v1384, 0
      %v1391 = vsel %vm1129, %v1386, 0
      %1393 = vmatprep.subr.bf16.mxu0 0
      %1394 = vmatpush1.bf16.xpose.msra.mxu0 %v1391
      %1395 = vmatprep.subr.bf16.mxu0 0
      %1396 = vmatpush1.bf16.xpose.msra.mxu0 0
      %1397 = vmatprep.subr.bf16.mxu0 0
      %1398 = vmatpush1.bf16.xpose.msra.mxu0 0
      %1399 = vmatprep.subr.bf16.mxu0 0
      %1400 = vmatpush1.bf16.xpose.msra.mxu0 0
      %1401 = vmatprep.subr.bf16.mxu0 0
      %1402 = vmatpush1.bf16.xpose.msra.mxu0 0
      %1403 = vmatprep.subr.bf16.mxu0 0
      %1404 = vmatpush1.bf16.xpose.msra.mxu0 0
      %1405 = vmatprep.subr.bf16.mxu0 0
      %1406 = vmatpush1.bf16.xpose.msra.mxu0 0
      %1407 = vmatprep.subr.bf16.mxu0 0
      %1408 = vmatpush1.bf16.xpose.msra.mxu0 0
      %1409 = vmatprep.subr.bf16.mxu0 0
      %1410 = vmatpush1.bf16.xpose.msra.mxu0 0
      %1411 = vmatprep.subr.bf16.mxu0 0
      %1412 = vmatpush1.bf16.xpose.msra.mxu0 0
      %1413 = vmatprep.subr.bf16.mxu0 0
      %1414 = vmatpush1.bf16.xpose.msra.mxu0 0
      %1415 = vmatprep.subr.bf16.mxu0 0
      %1416 = vmatpush1.bf16.xpose.msra.mxu0 0
      %1417 = vmatprep.subr.bf16.mxu0 0
      %1418 = vmatpush1.bf16.xpose.msra.mxu0 0
      %1419 = vmatprep.subr.bf16.mxu0 0
      %1420 = vmatpush1.bf16.xpose.msra.mxu0 0
      %1421 = vmatprep.subr.bf16.mxu0 0
      %1422 = vmatpush1.bf16.xpose.msra.mxu0 0
      %1423 = vmatprep.subr.bf16.mxu0 0
      %1424 = vmatpush1.bf16.xpose.msra.mxu0 0
      %1425 = vmatprep.mubr.bf16.mxu0 0
      %1426 = vmatmul.mubr.bf16.gmra.mrb[0].mxu0 %v1388
      %v1427 = vpop.f32.mrb[0].mxu0
      %v1428 = vadd.f32 0.0, %v1427
      %v1429 = vpop.f32.mrb[0].mxu0
      %v1430 = vpop.f32.mrb[0].mxu0
      %v1431 = vadd.f32 0.0, %v1430
      %v1432 = vpop.f32.mrb[0].mxu0
      %1433 = vdwg.mxu0
      %v1434 = vsel %vm1177, %v1428, -inf
      %1435 = vmax.xlane.f32.xlu0 %v1434
      %v1436 = vpop.xlane.xlu0 %1435
      %v1437 = vsel %vm1177, %v1431, -inf
      %1438 = vmax.xlane.f32.xlu0 %v1437
      %v1439 = vpop.xlane.xlu0 %1438
      %v1440 = vsub.f32 %v1428, %v1436
      %v1441 = vsub.f32 %v1431, %v1439
      %v1442 = vmul.f32 %v1440, 1.442695
      %v1443 = vpow.pop %v1442
      %v1444 = vmul.f32 %v1441, 1.442695
      %v1445 = vpow.pop %v1444
      %v1446 = vsel %vm1177, %v1443, 0.0
      %1447 = vadd.xlane.f32.xlu0 %v1446
      %v1448 = vpop.xlane.xlu0 %1447
      %v1449 = vsel %vm1177, %v1445, 0.0
      %1450 = vadd.xlane.f32.xlu0 %v1449
      %v1451 = vpop.xlane.xlu0 %1450
      %v1452 = vrcp.pop %v1448
      %v1453 = vrcp.pop %v1451
      %v1454 = vmul.f32 %v1443, %v1452
      %v1455 = vmul.f32 %v1445, %v1453
      %v1456 = vpack.c.bf16 %v1455, %v1454
      %1457 = vrot.lane.b32.xlu0 %v1201, 64
      %v1458 = vpop.permute.xlu0 %1457
      %v1461 = vsel %vm1177, %v1456, 0
      %1463 = vmatprep.subr.bf16.mxu0 0
      %1464 = vmatpush1.bf16.msra.mxu0 %v1458
      %1465 = vmatprep.subr.bf16.mxu0 0
      %1466 = vmatpush1.bf16.msra.mxu0 0
      %1467 = vmatprep.subr.bf16.mxu0 0
      %1468 = vmatpush1.bf16.msra.mxu0 0
      %1469 = vmatprep.subr.bf16.mxu0 0
      %1470 = vmatpush1.bf16.msra.mxu0 0
      %1471 = vmatprep.subr.bf16.mxu0 0
      %1472 = vmatpush1.bf16.msra.mxu0 0
      %1473 = vmatprep.subr.bf16.mxu0 0
      %1474 = vmatpush1.bf16.msra.mxu0 0
      %1475 = vmatprep.subr.bf16.mxu0 0
      %1476 = vmatpush1.bf16.msra.mxu0 0
      %1477 = vmatprep.subr.bf16.mxu0 0
      %1478 = vmatpush1.bf16.msra.mxu0 0
      %1479 = vmatprep.subr.bf16.mxu0 0
      %1480 = vmatpush1.bf16.msra.mxu0 0
      %1481 = vmatprep.subr.bf16.mxu0 0
      %1482 = vmatpush1.bf16.msra.mxu0 0
      %1483 = vmatprep.subr.bf16.mxu0 0
      %1484 = vmatpush1.bf16.msra.mxu0 0
      %1485 = vmatprep.subr.bf16.mxu0 0
      %1486 = vmatpush1.bf16.msra.mxu0 0
      %1487 = vmatprep.subr.bf16.mxu0 0
      %1488 = vmatpush1.bf16.msra.mxu0 0
      %1489 = vmatprep.subr.bf16.mxu0 0
      %1490 = vmatpush1.bf16.msra.mxu0 0
      %1491 = vmatprep.subr.bf16.mxu0 0
      %1492 = vmatpush1.bf16.msra.mxu0 0
      %1493 = vmatprep.subr.bf16.mxu0 0
      %1494 = vmatpush1.bf16.msra.mxu0 0
      %1495 = vmatprep.mubr.bf16.mxu0 0
      %1496 = vmatmul.mubr.bf16.gmra.mrb[0].mxu0 %v1461
      %v1497 = vpop.f32.mrb[0].mxu0
      %v1498 = vadd.f32 0.0, %v1497
      %v1499 = vpop.f32.mrb[0].mxu0
      %v1500 = vpop.f32.mrb[0].mxu0
      %v1501 = vadd.f32 0.0, %v1500
      %v1502 = vpop.f32.mrb[0].mxu0
      %1503 = vdwg.mxu0
      %1506 = vrot.lane.b32.xlu0 %v1498, 64
      %v1507 = vpop.permute.xlu0 %1506
      %1508 = vrot.lane.b32.xlu0 %v1501, 64
      %v1509 = vpop.permute.xlu0 %1508
      %vm1512 = vcmask 785920
      %1513 = vst.msk [vmem:[#allocation3] sm:$0xff] %vm1512, %v1507
      %1514 = vst.msk [vmem:[#allocation3 + $0x8] sm:$0xff] %vm1512, %v1509
      %1515 = vrot.lane.b32.xlu0 %v1127, 32
      %v1516 = vpop.permute.xlu0 %1515
      %1517 = vrot.lane.b32.xlu0 %v1128, 32
      %v1518 = vpop.permute.xlu0 %1517
      %v1520 = vsel %vm1129, %v1516, 0
      %v1523 = vsel %vm1129, %v1518, 0
      %1525 = vmatprep.subr.bf16.mxu0 0
      %1526 = vmatpush1.bf16.xpose.msra.mxu0 %v1523
      %1527 = vmatprep.subr.bf16.mxu0 0
      %1528 = vmatpush1.bf16.xpose.msra.mxu0 0
      %1529 = vmatprep.subr.bf16.mxu0 0
      %1530 = vmatpush1.bf16.xpose.msra.mxu0 0
      %1531 = vmatprep.subr.bf16.mxu0 0
      %1532 = vmatpush1.bf16.xpose.msra.mxu0 0
      %1533 = vmatprep.subr.bf16.mxu0 0
      %1534 = vmatpush1.bf16.xpose.msra.mxu0 0
      %1535 = vmatprep.subr.bf16.mxu0 0
      %1536 = vmatpush1.bf16.xpose.msra.mxu0 0
      %1537 = vmatprep.subr.bf16.mxu0 0
      %1538 = vmatpush1.bf16.xpose.msra.mxu0 0
      %1539 = vmatprep.subr.bf16.mxu0 0
      %1540 = vmatpush1.bf16.xpose.msra.mxu0 0
      %1541 = vmatprep.subr.bf16.mxu0 0
      %1542 = vmatpush1.bf16.xpose.msra.mxu0 0
      %1543 = vmatprep.subr.bf16.mxu0 0
      %1544 = vmatpush1.bf16.xpose.msra.mxu0 0
      %1545 = vmatprep.subr.bf16.mxu0 0
      %1546 = vmatpush1.bf16.xpose.msra.mxu0 0
      %1547 = vmatprep.subr.bf16.mxu0 0
      %1548 = vmatpush1.bf16.xpose.msra.mxu0 0
      %1549 = vmatprep.subr.bf16.mxu0 0
      %1550 = vmatpush1.bf16.xpose.msra.mxu0 0
      %1551 = vmatprep.subr.bf16.mxu0 0
      %1552 = vmatpush1.bf16.xpose.msra.mxu0 0
      %1553 = vmatprep.subr.bf16.mxu0 0
      %1554 = vmatpush1.bf16.xpose.msra.mxu0 0
      %1555 = vmatprep.subr.bf16.mxu0 0
      %1556 = vmatpush1.bf16.xpose.msra.mxu0 0
      %1557 = vmatprep.mubr.bf16.mxu0 0
      %1558 = vmatmul.mubr.bf16.gmra.mrb[0].mxu0 %v1520
      %v1559 = vpop.f32.mrb[0].mxu0
      %v1560 = vadd.f32 0.0, %v1559
      %v1561 = vpop.f32.mrb[0].mxu0
      %v1562 = vpop.f32.mrb[0].mxu0
      %v1563 = vadd.f32 0.0, %v1562
      %v1564 = vpop.f32.mrb[0].mxu0
      %1565 = vdwg.mxu0
      %v1566 = vsel %vm1177, %v1560, -inf
      %1567 = vmax.xlane.f32.xlu0 %v1566
      %v1568 = vpop.xlane.xlu0 %1567
      %v1569 = vsel %vm1177, %v1563, -inf
      %1570 = vmax.xlane.f32.xlu0 %v1569
      %v1571 = vpop.xlane.xlu0 %1570
      %v1572 = vsub.f32 %v1560, %v1568
      %v1573 = vsub.f32 %v1563, %v1571
      %v1574 = vmul.f32 %v1572, 1.442695
      %v1575 = vpow.pop %v1574
      %v1576 = vmul.f32 %v1573, 1.442695
      %v1577 = vpow.pop %v1576
      %v1578 = vsel %vm1177, %v1575, 0.0
      %1579 = vadd.xlane.f32.xlu0 %v1578
      %v1580 = vpop.xlane.xlu0 %1579
      %v1581 = vsel %vm1177, %v1577, 0.0
      %1582 = vadd.xlane.f32.xlu0 %v1581
      %v1583 = vpop.xlane.xlu0 %1582
      %v1584 = vrcp.pop %v1580
      %v1585 = vrcp.pop %v1583
      %v1586 = vmul.f32 %v1575, %v1584
      %v1587 = vmul.f32 %v1577, %v1585
      %v1588 = vpack.c.bf16 %v1587, %v1586
      %1589 = vrot.lane.b32.xlu0 %v1201, 32
      %v1590 = vpop.permute.xlu0 %1589
      %v1593 = vsel %vm1177, %v1588, 0
      %1595 = vmatprep.subr.bf16.mxu0 0
      %1596 = vmatpush1.bf16.msra.mxu0 %v1590
      %1597 = vmatprep.subr.bf16.mxu0 0
      %1598 = vmatpush1.bf16.msra.mxu0 0
      %1599 = vmatprep.subr.bf16.mxu0 0
      %1600 = vmatpush1.bf16.msra.mxu0 0
      %1601 = vmatprep.subr.bf16.mxu0 0
      %1602 = vmatpush1.bf16.msra.mxu0 0
      %1603 = vmatprep.subr.bf16.mxu0 0
      %1604 = vmatpush1.bf16.msra.mxu0 0
      %1605 = vmatprep.subr.bf16.mxu0 0
      %1606 = vmatpush1.bf16.msra.mxu0 0
      %1607 = vmatprep.subr.bf16.mxu0 0
      %1608 = vmatpush1.bf16.msra.mxu0 0
      %1609 = vmatprep.subr.bf16.mxu0 0
      %1610 = vmatpush1.bf16.msra.mxu0 0
      %1611 = vmatprep.subr.bf16.mxu0 0
      %1612 = vmatpush1.bf16.msra.mxu0 0
      %1613 = vmatprep.subr.bf16.mxu0 0
      %1614 = vmatpush1.bf16.msra.mxu0 0
      %1615 = vmatprep.subr.bf16.mxu0 0
      %1616 = vmatpush1.bf16.msra.mxu0 0
      %1617 = vmatprep.subr.bf16.mxu0 0
      %1618 = vmatpush1.bf16.msra.mxu0 0
      %1619 = vmatprep.subr.bf16.mxu0 0
      %1620 = vmatpush1.bf16.msra.mxu0 0
      %1621 = vmatprep.subr.bf16.mxu0 0
      %1622 = vmatpush1.bf16.msra.mxu0 0
      %1623 = vmatprep.subr.bf16.mxu0 0
      %1624 = vmatpush1.bf16.msra.mxu0 0
      %1625 = vmatprep.subr.bf16.mxu0 0
      %1626 = vmatpush1.bf16.msra.mxu0 0
      %1627 = vmatprep.mubr.bf16.mxu0 0
      %1628 = vmatmul.mubr.bf16.gmra.mrb[0].mxu0 %v1593
      %v1629 = vpop.f32.mrb[0].mxu0
      %v1630 = vadd.f32 0.0, %v1629
      %v1631 = vpop.f32.mrb[0].mxu0
      %v1632 = vpop.f32.mrb[0].mxu0
      %v1633 = vadd.f32 0.0, %v1632
      %v1634 = vpop.f32.mrb[0].mxu0
      %1635 = vdwg.mxu0
      %1638 = vrot.lane.b32.xlu0 %v1630, 96
      %v1639 = vpop.permute.xlu0 %1638
      %1640 = vrot.lane.b32.xlu0 %v1633, 96
      %v1641 = vpop.permute.xlu0 %1640
      %vm1644 = vcmask 1048320
      %1645 = vst.msk [vmem:[#allocation3] sm:$0xff] %vm1644, %v1639
      %1646 = vst.msk [vmem:[#allocation3 + $0x8] sm:$0xff] %vm1644, %v1641
      %v1647 = vld [vmem:[#allocation3] sm:$0xff]
      %v1648 = vld [vmem:[#allocation3 + $0x8] sm:$0xff]
      %v1649 = vld [vmem:[%s781] sm:$0xf]
      %v1650 = vld [vmem:[%s781 + $0x4] sm:$0xf]
      %v1651 = vld [vmem:[%s781 + $0x8] sm:$0xf]
      %v1652 = vld [vmem:[%s781 + $0xc] sm:$0xf]
      %v1653 = vld [vmem:[%s781 + $0x10] sm:$0xf]
      %v1654 = vld [vmem:[%s781 + $0x14] sm:$0xf]
      %v1655 = vld [vmem:[%s781 + $0x18] sm:$0xf]
      %v1656 = vld [vmem:[%s781 + $0x1c] sm:$0xf]
      %v1657 = vld [vmem:[%s781 + $0x20] sm:$0xf]
      %v1658 = vld [vmem:[%s781 + $0x24] sm:$0xf]
      %v1659 = vld [vmem:[%s781 + $0x28] sm:$0xf]
      %v1660 = vld [vmem:[%s781 + $0x2c] sm:$0xf]
      %v1661 = vld [vmem:[%s781 + $0x30] sm:$0xf]
      %v1662 = vld [vmem:[%s781 + $0x34] sm:$0xf]
      %v1663 = vld [vmem:[%s781 + $0x38] sm:$0xf]
      %v1664 = vld [vmem:[%s781 + $0x3c] sm:$0xf]
      %v1665 = vpack.c.bf16 %v1648, %v1647
      %v1682 = vunpack.c.l.b16 %v1649
      %v1683 = vunpack.c.l.b16 %v1650
      %v1684 = vunpack.c.l.b16 %v1651
      %v1685 = vunpack.c.l.b16 %v1652
      %v1686 = vunpack.c.l.b16 %v1653
      %v1687 = vunpack.c.l.b16 %v1654
      %v1688 = vunpack.c.l.b16 %v1655
      %v1689 = vunpack.c.l.b16 %v1656
      %v1690 = vunpack.c.l.b16 %v1657
      %v1691 = vunpack.c.l.b16 %v1658
      %v1692 = vunpack.c.l.b16 %v1659
      %v1693 = vunpack.c.l.b16 %v1660
      %v1694 = vunpack.c.l.b16 %v1661
      %v1695 = vunpack.c.l.b16 %v1662
      %v1696 = vunpack.c.l.b16 %v1663
      %v1697 = vunpack.c.l.b16 %v1664
      %v1698 = vpack.c.b16 %v1683, %v1682
      %v1699 = vpack.c.b16 %v1685, %v1684
      %v1700 = vpack.c.b16 %v1687, %v1686
      %v1701 = vpack.c.b16 %v1689, %v1688
      %v1702 = vpack.c.b16 %v1691, %v1690
      %v1703 = vpack.c.b16 %v1693, %v1692
      %v1704 = vpack.c.b16 %v1695, %v1694
      %v1705 = vpack.c.b16 %v1697, %v1696
      %1714 = vmatprep.subr.bf16.mxu0 0
      %1715 = vmatpush1.bf16.msra.mxu0 %v1698
      %1716 = vmatprep.subr.bf16.mxu0 0
      %1717 = vmatpush1.bf16.msra.mxu0 %v1699
      %1718 = vmatprep.subr.bf16.mxu0 0
      %1719 = vmatpush1.bf16.msra.mxu0 %v1700
      %1720 = vmatprep.subr.bf16.mxu0 0
      %1721 = vmatpush1.bf16.msra.mxu0 %v1701
      %1722 = vmatprep.subr.bf16.mxu0 0
      %1723 = vmatpush1.bf16.msra.mxu0 %v1702
      %1724 = vmatprep.subr.bf16.mxu0 0
      %1725 = vmatpush1.bf16.msra.mxu0 %v1703
      %1726 = vmatprep.subr.bf16.mxu0 0
      %1727 = vmatpush1.bf16.msra.mxu0 %v1704
      %1728 = vmatprep.subr.bf16.mxu0 0
      %1729 = vmatpush1.bf16.msra.mxu0 %v1705
      %1730 = vmatprep.subr.bf16.mxu0 0
      %1731 = vmatpush1.bf16.msra.mxu0 0
      %1732 = vmatprep.subr.bf16.mxu0 0
      %1733 = vmatpush1.bf16.msra.mxu0 0
      %1734 = vmatprep.subr.bf16.mxu0 0
      %1735 = vmatpush1.bf16.msra.mxu0 0
      %1736 = vmatprep.subr.bf16.mxu0 0
      %1737 = vmatpush1.bf16.msra.mxu0 0
      %1738 = vmatprep.subr.bf16.mxu0 0
      %1739 = vmatpush1.bf16.msra.mxu0 0
      %1740 = vmatprep.subr.bf16.mxu0 0
      %1741 = vmatpush1.bf16.msra.mxu0 0
      %1742 = vmatprep.subr.bf16.mxu0 0
      %1743 = vmatpush1.bf16.msra.mxu0 0
      %1744 = vmatprep.subr.bf16.mxu0 0
      %1745 = vmatpush1.bf16.msra.mxu0 0
      %1746 = vmatprep.mubr.bf16.mxu0 0
      %1747 = vmatmul.mubr.bf16.gmra.mrb[0].mxu0 %v1665
      %v1748 = vpop.f32.mrb[0].mxu0
      %v1749 = vadd.f32 0.0, %v1748
      %v1750 = vpop.f32.mrb[0].mxu0
      %v1751 = vpop.f32.mrb[0].mxu0
      %v1752 = vadd.f32 0.0, %v1751
      %v1753 = vpop.f32.mrb[0].mxu0
      %1754 = vdwg.mxu0
      %v1755 = vadd.f32 %v822, %v1749
      %v1756 = vadd.f32 %v823, %v1752
      %v1757 = vld [vmem:[%s784] sm:$0x1]
      %v1759 = vlaneseq
      %v1760 = vshrl.u32 %v1759, 7
      %v1761 = vsub.s32 0, %v1760
      %v1762 = vrot.slane %v1757, %v1761
      %v1764 = vadd.f32 %v1755, %v1762
      %v1765 = vadd.f32 %v1756, %v1762
      %v1766 = vld [vmem:[%s787] sm:$0x1]
      %v1767 = vld [vmem:[%s790] sm:$0x1]
      %1768 = vadd.xlane.f32.xlu0 %v1764
      %v1769 = vpop.xlane.xlu0 %1768
      %1770 = vadd.xlane.f32.xlu0 %v1765
      %v1771 = vpop.xlane.xlu0 %1770
      %v1772 = vmul.f32 %v1769, %v830
      %v1773 = vmul.f32 %v1771, %v830
      %v1774 = vsub.f32 %v1764, %v1772
      %v1775 = vsub.f32 %v1765, %v1773
      %v1776 = vmul.f32 %v1774, %v1774
      %v1777 = vmul.f32 %v1775, %v1775
      %1778 = vadd.xlane.f32.xlu0 %v1776
      %v1779 = vpop.xlane.xlu0 %1778
      %1780 = vadd.xlane.f32.xlu0 %v1777
      %v1781 = vpop.xlane.xlu0 %1780
      %v1782 = vmul.f32 %v1779, %v830
      %v1783 = vmul.f32 %v1781, %v830
      %v1784 = vadd.f32 %v1782, 1e-05
      %v1785 = vadd.f32 %v1783, 1e-05
      %v1786 = vrsqrt.pop %v1784
      %v1787 = vrsqrt.pop %v1785
      %v1788 = vmul.f32 %v1774, %v1786
      %v1789 = vmul.f32 %v1775, %v1787
      %v1791 = vlaneseq
      %v1792 = vshrl.u32 %v1791, 7
      %v1793 = vsub.s32 0, %v1792
      %v1794 = vrot.slane %v1766, %v1793
      %v1796 = vmul.f32 %v1788, %v1794
      %v1797 = vmul.f32 %v1789, %v1794
      %v1799 = vlaneseq
      %v1800 = vshrl.u32 %v1799, 7
      %v1801 = vsub.s32 0, %v1800
      %v1802 = vrot.slane %v1767, %v1801
      %v1804 = vadd.f32 %v1796, %v1802
      %v1805 = vadd.f32 %v1797, %v1802
      %v1806 = vld [vmem:[%s795] sm:$0xff]
      %v1807 = vld [vmem:[%s795 + $0x8] sm:$0xff]
      %v1808 = vld [vmem:[%s795 + $0x10] sm:$0xff]
      %v1809 = vld [vmem:[%s795 + $0x18] sm:$0xff]
      %v1810 = vld [vmem:[%s795 + $0x20] sm:$0xff]
      %v1811 = vld [vmem:[%s795 + $0x28] sm:$0xff]
      %v1812 = vld [vmem:[%s795 + $0x30] sm:$0xff]
      %v1813 = vld [vmem:[%s795 + $0x38] sm:$0xff]
      %v1814 = vld [vmem:[%s795 + $0x40] sm:$0xff]
      %v1815 = vld [vmem:[%s795 + $0x48] sm:$0xff]
      %v1816 = vld [vmem:[%s795 + $0x50] sm:$0xff]
      %v1817 = vld [vmem:[%s795 + $0x58] sm:$0xff]
      %v1818 = vld [vmem:[%s795 + $0x60] sm:$0xff]
      %v1819 = vld [vmem:[%s795 + $0x68] sm:$0xff]
      %v1820 = vld [vmem:[%s795 + $0x70] sm:$0xff]
      %v1821 = vld [vmem:[%s795 + $0x78] sm:$0xff]
      %v1822 = vld [vmem:[%s795 + $0x80] sm:$0xff]
      %v1823 = vld [vmem:[%s795 + $0x88] sm:$0xff]
      %v1824 = vld [vmem:[%s795 + $0x90] sm:$0xff]
      %v1825 = vld [vmem:[%s795 + $0x98] sm:$0xff]
      %v1826 = vld [vmem:[%s795 + $0xa0] sm:$0xff]
      %v1827 = vld [vmem:[%s795 + $0xa8] sm:$0xff]
      %v1828 = vld [vmem:[%s795 + $0xb0] sm:$0xff]
      %v1829 = vld [vmem:[%s795 + $0xb8] sm:$0xff]
      %v1830 = vld [vmem:[%s795 + $0xc0] sm:$0xff]
      %v1831 = vld [vmem:[%s795 + $0xc8] sm:$0xff]
      %v1832 = vld [vmem:[%s795 + $0xd0] sm:$0xff]
      %v1833 = vld [vmem:[%s795 + $0xd8] sm:$0xff]
      %v1834 = vld [vmem:[%s795 + $0xe0] sm:$0xff]
      %v1835 = vld [vmem:[%s795 + $0xe8] sm:$0xff]
      %v1836 = vld [vmem:[%s795 + $0xf0] sm:$0xff]
      %v1837 = vld [vmem:[%s795 + $0xf8] sm:$0xff]
      %v1838 = vpack.c.bf16 %v1805, %v1804
      %v1839 = vld [vmem:[%s799] sm:$0xf]
      %v1841 = vlaneseq
      %v1842 = vshrl.u32 %v1841, 7
      %v1843 = vsub.s32 0, %v1842
      %v1844 = vrot.slane %v1839, %v1843
      %v1845 = vlaneseq
      %v1846 = vshrl.u32 %v1845, 7
      %v1847 = vsub.s32 1, %v1846
      %v1848 = vrot.slane %v1839, %v1847
      %v1849 = vlaneseq
      %v1850 = vshrl.u32 %v1849, 7
      %v1851 = vsub.s32 2, %v1850
      %v1852 = vrot.slane %v1839, %v1851
      %v1853 = vlaneseq
      %v1854 = vshrl.u32 %v1853, 7
      %v1855 = vsub.s32 3, %v1854
      %v1856 = vrot.slane %v1839, %v1855
      %v1893 = vunpack.c.l.b16 %v1806
      %v1894 = vunpack.c.h.b16 %v1806
      %v1895 = vunpack.c.l.b16 %v1807
      %v1896 = vunpack.c.h.b16 %v1807
      %v1897 = vunpack.c.l.b16 %v1808
      %v1898 = vunpack.c.h.b16 %v1808
      %v1899 = vunpack.c.l.b16 %v1809
      %v1900 = vunpack.c.h.b16 %v1809
      %v1901 = vunpack.c.l.b16 %v1810
      %v1902 = vunpack.c.h.b16 %v1810
      %v1903 = vunpack.c.l.b16 %v1811
      %v1904 = vunpack.c.h.b16 %v1811
      %v1905 = vunpack.c.l.b16 %v1812
      %v1906 = vunpack.c.h.b16 %v1812
      %v1907 = vunpack.c.l.b16 %v1813
      %v1908 = vunpack.c.h.b16 %v1813
      %v1909 = vunpack.c.l.b16 %v1814
      %v1910 = vunpack.c.h.b16 %v1814
      %v1911 = vunpack.c.l.b16 %v1815
      %v1912 = vunpack.c.h.b16 %v1815
      %v1913 = vunpack.c.l.b16 %v1816
      %v1914 = vunpack.c.h.b16 %v1816
      %v1915 = vunpack.c.l.b16 %v1817
      %v1916 = vunpack.c.h.b16 %v1817
      %v1917 = vunpack.c.l.b16 %v1818
      %v1918 = vunpack.c.h.b16 %v1818
      %v1919 = vunpack.c.l.b16 %v1819
      %v1920 = vunpack.c.h.b16 %v1819
      %v1921 = vunpack.c.l.b16 %v1820
      %v1922 = vunpack.c.h.b16 %v1820
      %v1923 = vunpack.c.l.b16 %v1821
      %v1924 = vunpack.c.h.b16 %v1821
      %v1925 = vunpack.c.l.b16 %v1822
      %v1926 = vunpack.c.h.b16 %v1822
      %v1927 = vunpack.c.l.b16 %v1823
      %v1928 = vunpack.c.h.b16 %v1823
      %v1929 = vunpack.c.l.b16 %v1824
      %v1930 = vunpack.c.h.b16 %v1824
      %v1931 = vunpack.c.l.b16 %v1825
      %v1932 = vunpack.c.h.b16 %v1825
      %v1933 = vunpack.c.l.b16 %v1826
      %v1934 = vunpack.c.h.b16 %v1826
      %v1935 = vunpack.c.l.b16 %v1827
      %v1936 = vunpack.c.h.b16 %v1827
      %v1937 = vunpack.c.l.b16 %v1828
      %v1938 = vunpack.c.h.b16 %v1828
      %v1939 = vunpack.c.l.b16 %v1829
      %v1940 = vunpack.c.h.b16 %v1829
      %v1941 = vunpack.c.l.b16 %v1830
      %v1942 = vunpack.c.h.b16 %v1830
      %v1943 = vunpack.c.l.b16 %v1831
      %v1944 = vunpack.c.h.b16 %v1831
      %v1945 = vunpack.c.l.b16 %v1832
      %v1946 = vunpack.c.h.b16 %v1832
      %v1947 = vunpack.c.l.b16 %v1833
      %v1948 = vunpack.c.h.b16 %v1833
      %v1949 = vunpack.c.l.b16 %v1834
      %v1950 = vunpack.c.h.b16 %v1834
      %v1951 = vunpack.c.l.b16 %v1835
      %v1952 = vunpack.c.h.b16 %v1835
      %v1953 = vunpack.c.l.b16 %v1836
      %v1954 = vunpack.c.h.b16 %v1836
      %v1955 = vunpack.c.l.b16 %v1837
      %v1956 = vunpack.c.h.b16 %v1837
      %v1957 = vpack.c.b16 %v1897, %v1893
      %v1958 = vpack.c.b16 %v1898, %v1894
      %v1959 = vpack.c.b16 %v1899, %v1895
      %v1960 = vpack.c.b16 %v1900, %v1896
      %v1961 = vpack.c.b16 %v1905, %v1901
      %v1962 = vpack.c.b16 %v1906, %v1902
      %v1963 = vpack.c.b16 %v1907, %v1903
      %v1964 = vpack.c.b16 %v1908, %v1904
      %v1965 = vpack.c.b16 %v1913, %v1909
      %v1966 = vpack.c.b16 %v1914, %v1910
      %v1967 = vpack.c.b16 %v1915, %v1911
      %v1968 = vpack.c.b16 %v1916, %v1912
      %v1969 = vpack.c.b16 %v1921, %v1917
      %v1970 = vpack.c.b16 %v1922, %v1918
      %v1971 = vpack.c.b16 %v1923, %v1919
      %v1972 = vpack.c.b16 %v1924, %v1920
      %v1973 = vpack.c.b16 %v1929, %v1925
      %v1974 = vpack.c.b16 %v1930, %v1926
      %v1975 = vpack.c.b16 %v1931, %v1927
      %v1976 = vpack.c.b16 %v1932, %v1928
      %v1977 = vpack.c.b16 %v1937, %v1933
      %v1978 = vpack.c.b16 %v1938, %v1934
      %v1979 = vpack.c.b16 %v1939, %v1935
      %v1980 = vpack.c.b16 %v1940, %v1936
      %v1981 = vpack.c.b16 %v1945, %v1941
      %v1982 = vpack.c.b16 %v1946, %v1942
      %v1983 = vpack.c.b16 %v1947, %v1943
      %v1984 = vpack.c.b16 %v1948, %v1944
      %v1985 = vpack.c.b16 %v1953, %v1949
      %v1986 = vpack.c.b16 %v1954, %v1950
      %v1987 = vpack.c.b16 %v1955, %v1951
      %v1988 = vpack.c.b16 %v1956, %v1952
      %2021 = vmatprep.subr.bf16.mxu0 %v1958
      %2022 = vmatpush1.bf16.msra.mxu0 %v1957
      %2023 = vmatprep.subr.bf16.mxu0 %v1962
      %2024 = vmatpush1.bf16.msra.mxu0 %v1961
      %2025 = vmatprep.subr.bf16.mxu0 %v1966
      %2026 = vmatpush1.bf16.msra.mxu0 %v1965
      %2027 = vmatprep.subr.bf16.mxu0 %v1970
      %2028 = vmatpush1.bf16.msra.mxu0 %v1969
      %2029 = vmatprep.subr.bf16.mxu0 %v1974
      %2030 = vmatpush1.bf16.msra.mxu0 %v1973
      %2031 = vmatprep.subr.bf16.mxu0 %v1978
      %2032 = vmatpush1.bf16.msra.mxu0 %v1977
      %2033 = vmatprep.subr.bf16.mxu0 %v1982
      %2034 = vmatpush1.bf16.msra.mxu0 %v1981
      %2035 = vmatprep.subr.bf16.mxu0 %v1986
      %2036 = vmatpush1.bf16.msra.mxu0 %v1985
      %2037 = vmatprep.subr.bf16.mxu0 0
      %2038 = vmatpush1.bf16.msra.mxu0 0
      %2039 = vmatprep.subr.bf16.mxu0 0
      %2040 = vmatpush1.bf16.msra.mxu0 0
      %2041 = vmatprep.subr.bf16.mxu0 0
      %2042 = vmatpush1.bf16.msra.mxu0 0
      %2043 = vmatprep.subr.bf16.mxu0 0
      %2044 = vmatpush1.bf16.msra.mxu0 0
      %2045 = vmatprep.subr.bf16.mxu0 0
      %2046 = vmatpush1.bf16.msra.mxu0 0
      %2047 = vmatprep.subr.bf16.mxu0 0
      %2048 = vmatpush1.bf16.msra.mxu0 0
      %2049 = vmatprep.subr.bf16.mxu0 0
      %2050 = vmatpush1.bf16.msra.mxu0 0
      %2051 = vmatprep.subr.bf16.mxu0 0
      %2052 = vmatpush1.bf16.msra.mxu0 0
      %2053 = vmatprep.mubr.bf16.mxu0 0
      %2054 = vmatmul.mubr.bf16.gmra.mrb[0].mxu0 %v1838
      %v2055 = vpop.f32.mrb[0].mxu0
      %v2056 = vadd.f32 %v1844, %v2055
      %v2057 = vpop.f32.mrb[0].mxu0
      %v2058 = vadd.f32 %v1848, %v2057
      %v2059 = vpop.f32.mrb[0].mxu0
      %v2060 = vadd.f32 %v1844, %v2059
      %v2061 = vpop.f32.mrb[0].mxu0
      %v2062 = vadd.f32 %v1848, %v2061
      %2063 = vdwg.mxu0
      %2064 = vmatprep.subr.bf16.mxu0 %v1960
      %2065 = vmatpush1.bf16.msra.mxu0 %v1959
      %2066 = vmatprep.subr.bf16.mxu0 %v1964
      %2067 = vmatpush1.bf16.msra.mxu0 %v1963
      %2068 = vmatprep.subr.bf16.mxu0 %v1968
      %2069 = vmatpush1.bf16.msra.mxu0 %v1967
      %2070 = vmatprep.subr.bf16.mxu0 %v1972
      %2071 = vmatpush1.bf16.msra.mxu0 %v1971
      %2072 = vmatprep.subr.bf16.mxu0 %v1976
      %2073 = vmatpush1.bf16.msra.mxu0 %v1975
      %2074 = vmatprep.subr.bf16.mxu0 %v1980
      %2075 = vmatpush1.bf16.msra.mxu0 %v1979
      %2076 = vmatprep.subr.bf16.mxu0 %v1984
      %2077 = vmatpush1.bf16.msra.mxu0 %v1983
      %2078 = vmatprep.subr.bf16.mxu0 %v1988
      %2079 = vmatpush1.bf16.msra.mxu0 %v1987
      %2080 = vmatprep.subr.bf16.mxu0 0
      %2081 = vmatpush1.bf16.msra.mxu0 0
      %2082 = vmatprep.subr.bf16.mxu0 0
      %2083 = vmatpush1.bf16.msra.mxu0 0
      %2084 = vmatprep.subr.bf16.mxu0 0
      %2085 = vmatpush1.bf16.msra.mxu0 0
      %2086 = vmatprep.subr.bf16.mxu0 0
      %2087 = vmatpush1.bf16.msra.mxu0 0
      %2088 = vmatprep.subr.bf16.mxu0 0
      %2089 = vmatpush1.bf16.msra.mxu0 0
      %2090 = vmatprep.subr.bf16.mxu0 0
      %2091 = vmatpush1.bf16.msra.mxu0 0
      %2092 = vmatprep.subr.bf16.mxu0 0
      %2093 = vmatpush1.bf16.msra.mxu0 0
      %2094 = vmatprep.subr.bf16.mxu0 0
      %2095 = vmatpush1.bf16.msra.mxu0 0
      %2096 = vmatprep.mubr.bf16.mxu0 0
      %2097 = vmatmul.mubr.bf16.gmra.mrb[0].mxu0 %v1838
      %v2098 = vpop.f32.mrb[0].mxu0
      %v2099 = vadd.f32 %v1852, %v2098
      %v2100 = vpop.f32.mrb[0].mxu0
      %v2101 = vadd.f32 %v1856, %v2100
      %v2102 = vpop.f32.mrb[0].mxu0
      %v2103 = vadd.f32 %v1852, %v2102
      %v2104 = vpop.f32.mrb[0].mxu0
      %v2105 = vadd.f32 %v1856, %v2104
      %2106 = vdwg.mxu0
      %v2107 = vmul.f32 %v2056, 0.5
      %v2108 = vmul.f32 %v2058, 0.5
      %v2109 = vmul.f32 %v2099, 0.5
      %v2110 = vmul.f32 %v2101, 0.5
      %v2111 = vmul.f32 %v2060, 0.5
      %v2112 = vmul.f32 %v2062, 0.5
      %v2113 = vmul.f32 %v2103, 0.5
      %v2114 = vmul.f32 %v2105, 0.5
      %v2115 = vmul.f32 %v2056, 0.70710677
      %v2116 = vmul.f32 %v2058, 0.70710677
      %v2117 = vmul.f32 %v2099, 0.70710677
      %v2118 = vmul.f32 %v2101, 0.70710677
      %v2119 = vmul.f32 %v2060, 0.70710677
      %v2120 = vmul.f32 %v2062, 0.70710677
      %v2121 = vmul.f32 %v2103, 0.70710677
      %v2122 = vmul.f32 %v2105, 0.70710677
      %v2123 = vand.u32 2147483647, %v2115
      %v2124 = vand.u32 2147483647, %v2116
      %v2125 = vand.u32 2147483647, %v2117
      %v2126 = vand.u32 2147483647, %v2118
      %v2127 = vand.u32 2147483647, %v2119
      %v2128 = vand.u32 2147483647, %v2120
      %v2129 = vand.u32 2147483647, %v2121
      %v2130 = vand.u32 2147483647, %v2122
      %v2131 = vmul.f32 %v2123, 0.3275911
      %v2132 = vmul.f32 %v2124, 0.3275911
      %v2133 = vmul.f32 %v2125, 0.3275911
      %v2134 = vmul.f32 %v2126, 0.3275911
      %v2135 = vmul.f32 %v2127, 0.3275911
      %v2136 = vmul.f32 %v2128, 0.3275911
      %v2137 = vmul.f32 %v2129, 0.3275911
      %v2138 = vmul.f32 %v2130, 0.3275911
      %v2139 = vadd.f32 %v2131, 1.0
      %v2140 = vadd.f32 %v2132, 1.0
      %v2141 = vadd.f32 %v2133, 1.0
      %v2142 = vadd.f32 %v2134, 1.0
      %v2143 = vadd.f32 %v2135, 1.0
      %v2144 = vadd.f32 %v2136, 1.0
      %v2145 = vadd.f32 %v2137, 1.0
      %v2146 = vadd.f32 %v2138, 1.0
      %v2147 = vrcp.pop %v2139
      %v2148 = vmul.f32 1.0, %v2147
      %v2149 = vrcp.pop %v2140
      %v2150 = vmul.f32 1.0, %v2149
      %v2151 = vrcp.pop %v2141
      %v2152 = vmul.f32 1.0, %v2151
      %v2153 = vrcp.pop %v2142
      %v2154 = vmul.f32 1.0, %v2153
      %v2155 = vrcp.pop %v2143
      %v2156 = vmul.f32 1.0, %v2155
      %v2157 = vrcp.pop %v2144
      %v2158 = vmul.f32 1.0, %v2157
      %v2159 = vrcp.pop %v2145
      %v2160 = vmul.f32 1.0, %v2159
      %v2161 = vrcp.pop %v2146
      %v2162 = vmul.f32 1.0, %v2161
      %v2163 = vmul.f32 %v2148, 1.0614054
      %v2164 = vmul.f32 %v2150, 1.0614054
      %v2165 = vmul.f32 %v2152, 1.0614054
      %v2166 = vmul.f32 %v2154, 1.0614054
      %v2167 = vmul.f32 %v2156, 1.0614054
      %v2168 = vmul.f32 %v2158, 1.0614054
      %v2169 = vmul.f32 %v2160, 1.0614054
      %v2170 = vmul.f32 %v2162, 1.0614054
      %v2171 = vadd.f32 %v2163, -1.4531521
      %v2172 = vadd.f32 %v2164, -1.4531521
      %v2173 = vadd.f32 %v2165, -1.4531521
      %v2174 = vadd.f32 %v2166, -1.4531521
      %v2175 = vadd.f32 %v2167, -1.4531521
      %v2176 = vadd.f32 %v2168, -1.4531521
      %v2177 = vadd.f32 %v2169, -1.4531521
      %v2178 = vadd.f32 %v2170, -1.4531521
      %v2179 = vmul.f32 %v2171, %v2148
      %v2180 = vmul.f32 %v2172, %v2150
      %v2181 = vmul.f32 %v2173, %v2152
      %v2182 = vmul.f32 %v2174, %v2154
      %v2183 = vmul.f32 %v2175, %v2156
      %v2184 = vmul.f32 %v2176, %v2158
      %v2185 = vmul.f32 %v2177, %v2160
      %v2186 = vmul.f32 %v2178, %v2162
      %v2187 = vadd.f32 %v2179, 1.4214138
      %v2188 = vadd.f32 %v2180, 1.4214138
      %v2189 = vadd.f32 %v2181, 1.4214138
      %v2190 = vadd.f32 %v2182, 1.4214138
      %v2191 = vadd.f32 %v2183, 1.4214138
      %v2192 = vadd.f32 %v2184, 1.4214138
      %v2193 = vadd.f32 %v2185, 1.4214138
      %v2194 = vadd.f32 %v2186, 1.4214138
      %v2195 = vmul.f32 %v2187, %v2148
      %v2196 = vmul.f32 %v2188, %v2150
      %v2197 = vmul.f32 %v2189, %v2152
      %v2198 = vmul.f32 %v2190, %v2154
      %v2199 = vmul.f32 %v2191, %v2156
      %v2200 = vmul.f32 %v2192, %v2158
      %v2201 = vmul.f32 %v2193, %v2160
      %v2202 = vmul.f32 %v2194, %v2162
      %v2203 = vadd.f32 %v2195, -0.28449672
      %v2204 = vadd.f32 %v2196, -0.28449672
      %v2205 = vadd.f32 %v2197, -0.28449672
      %v2206 = vadd.f32 %v2198, -0.28449672
      %v2207 = vadd.f32 %v2199, -0.28449672
      %v2208 = vadd.f32 %v2200, -0.28449672
      %v2209 = vadd.f32 %v2201, -0.28449672
      %v2210 = vadd.f32 %v2202, -0.28449672
      %v2211 = vmul.f32 %v2203, %v2148
      %v2212 = vmul.f32 %v2204, %v2150
      %v2213 = vmul.f32 %v2205, %v2152
      %v2214 = vmul.f32 %v2206, %v2154
      %v2215 = vmul.f32 %v2207, %v2156
      %v2216 = vmul.f32 %v2208, %v2158
      %v2217 = vmul.f32 %v2209, %v2160
      %v2218 = vmul.f32 %v2210, %v2162
      %v2219 = vadd.f32 %v2211, 0.2548296
      %v2220 = vadd.f32 %v2212, 0.2548296
      %v2221 = vadd.f32 %v2213, 0.2548296
      %v2222 = vadd.f32 %v2214, 0.2548296
      %v2223 = vadd.f32 %v2215, 0.2548296
      %v2224 = vadd.f32 %v2216, 0.2548296
      %v2225 = vadd.f32 %v2217, 0.2548296
      %v2226 = vadd.f32 %v2218, 0.2548296
      %v2227 = vmul.f32 %v2219, %v2148
      %v2228 = vmul.f32 %v2220, %v2150
      %v2229 = vmul.f32 %v2221, %v2152
      %v2230 = vmul.f32 %v2222, %v2154
      %v2231 = vmul.f32 %v2223, %v2156
      %v2232 = vmul.f32 %v2224, %v2158
      %v2233 = vmul.f32 %v2225, %v2160
      %v2234 = vmul.f32 %v2226, %v2162
      %v2235 = vsub.f32 0.0, %v2123
      %v2236 = vsub.f32 0.0, %v2124
      %v2237 = vsub.f32 0.0, %v2125
      %v2238 = vsub.f32 0.0, %v2126
      %v2239 = vsub.f32 0.0, %v2127
      %v2240 = vsub.f32 0.0, %v2128
      %v2241 = vsub.f32 0.0, %v2129
      %v2242 = vsub.f32 0.0, %v2130
      %v2243 = vmul.f32 %v2235, %v2123
      %v2244 = vmul.f32 %v2236, %v2124
      %v2245 = vmul.f32 %v2237, %v2125
      %v2246 = vmul.f32 %v2238, %v2126
      %v2247 = vmul.f32 %v2239, %v2127
      %v2248 = vmul.f32 %v2240, %v2128
      %v2249 = vmul.f32 %v2241, %v2129
      %v2250 = vmul.f32 %v2242, %v2130
      %v2251 = vmul.f32 %v2243, 1.442695
      %v2252 = vpow.pop %v2251
      %v2253 = vmul.f32 %v2244, 1.442695
      %v2254 = vpow.pop %v2253
      %v2255 = vmul.f32 %v2245, 1.442695
      %v2256 = vpow.pop %v2255
      %v2257 = vmul.f32 %v2246, 1.442695
      %v2258 = vpow.pop %v2257
      %v2259 = vmul.f32 %v2247, 1.442695
      %v2260 = vpow.pop %v2259
      %v2261 = vmul.f32 %v2248, 1.442695
      %v2262 = vpow.pop %v2261
      %v2263 = vmul.f32 %v2249, 1.442695
      %v2264 = vpow.pop %v2263
      %v2265 = vmul.f32 %v2250, 1.442695
      %v2266 = vpow.pop %v2265
      %v2267 = vmul.f32 %v2227, %v2252
      %v2268 = vmul.f32 %v2228, %v2254
      %v2269 = vmul.f32 %v2229, %v2256
      %v2270 = vmul.f32 %v2230, %v2258
      %v2271 = vmul.f32 %v2231, %v2260
      %v2272 = vmul.f32 %v2232, %v2262
      %v2273 = vmul.f32 %v2233, %v2264
      %v2274 = vmul.f32 %v2234, %v2266
      %v2275 = vsub.f32 1.0, %v2267
      %v2276 = vsub.f32 1.0, %v2268
      %v2277 = vsub.f32 1.0, %v2269
      %v2278 = vsub.f32 1.0, %v2270
      %v2279 = vsub.f32 1.0, %v2271
      %v2280 = vsub.f32 1.0, %v2272
      %v2281 = vsub.f32 1.0, %v2273
      %v2282 = vsub.f32 1.0, %v2274
      %vm2283 = vcmp.lt.f32.partialorder %v2115, 0.0
      %vm2284 = vcmp.lt.f32.partialorder %v2116, 0.0
      %vm2285 = vcmp.lt.f32.partialorder %v2117, 0.0
      %vm2286 = vcmp.lt.f32.partialorder %v2118, 0.0
      %vm2287 = vcmp.lt.f32.partialorder %v2119, 0.0
      %vm2288 = vcmp.lt.f32.partialorder %v2120, 0.0
      %vm2289 = vcmp.lt.f32.partialorder %v2121, 0.0
      %vm2290 = vcmp.lt.f32.partialorder %v2122, 0.0
      %v2291 = vsub.f32 0.0, %v2275
      %v2292 = vsub.f32 0.0, %v2276
      %v2293 = vsub.f32 0.0, %v2277
      %v2294 = vsub.f32 0.0, %v2278
      %v2295 = vsub.f32 0.0, %v2279
      %v2296 = vsub.f32 0.0, %v2280
      %v2297 = vsub.f32 0.0, %v2281
      %v2298 = vsub.f32 0.0, %v2282
      %v2299 = vsel %vm2283, %v2291, %v2275
      %v2300 = vsel %vm2284, %v2292, %v2276
      %v2301 = vsel %vm2285, %v2293, %v2277
      %v2302 = vsel %vm2286, %v2294, %v2278
      %v2303 = vsel %vm2287, %v2295, %v2279
      %v2304 = vsel %vm2288, %v2296, %v2280
      %v2305 = vsel %vm2289, %v2297, %v2281
      %v2306 = vsel %vm2290, %v2298, %v2282
      %v2307 = vadd.f32 %v2299, 1.0
      %v2308 = vadd.f32 %v2300, 1.0
      %v2309 = vadd.f32 %v2301, 1.0
      %v2310 = vadd.f32 %v2302, 1.0
      %v2311 = vadd.f32 %v2303, 1.0
      %v2312 = vadd.f32 %v2304, 1.0
      %v2313 = vadd.f32 %v2305, 1.0
      %v2314 = vadd.f32 %v2306, 1.0
      %v2315 = vmul.f32 %v2107, %v2307
      %v2316 = vmul.f32 %v2108, %v2308
      %v2317 = vmul.f32 %v2109, %v2309
      %v2318 = vmul.f32 %v2110, %v2310
      %v2319 = vmul.f32 %v2111, %v2311
      %v2320 = vmul.f32 %v2112, %v2312
      %v2321 = vmul.f32 %v2113, %v2313
      %v2322 = vmul.f32 %v2114, %v2314
      %v2323 = vld [vmem:[%s804] sm:$0xf]
      %v2324 = vld [vmem:[%s804 + $0x4] sm:$0xf]
      %v2325 = vld [vmem:[%s804 + $0x8] sm:$0xf]
      %v2326 = vld [vmem:[%s804 + $0xc] sm:$0xf]
      %v2327 = vld [vmem:[%s804 + $0x10] sm:$0xf]
      %v2328 = vld [vmem:[%s804 + $0x14] sm:$0xf]
      %v2329 = vld [vmem:[%s804 + $0x18] sm:$0xf]
      %v2330 = vld [vmem:[%s804 + $0x1c] sm:$0xf]
      %v2331 = vld [vmem:[%s804 + $0x20] sm:$0xf]
      %v2332 = vld [vmem:[%s804 + $0x24] sm:$0xf]
      %v2333 = vld [vmem:[%s804 + $0x28] sm:$0xf]
      %v2334 = vld [vmem:[%s804 + $0x2c] sm:$0xf]
      %v2335 = vld [vmem:[%s804 + $0x30] sm:$0xf]
      %v2336 = vld [vmem:[%s804 + $0x34] sm:$0xf]
      %v2337 = vld [vmem:[%s804 + $0x38] sm:$0xf]
      %v2338 = vld [vmem:[%s804 + $0x3c] sm:$0xf]
      %v2339 = vld [vmem:[%s804 + $0x40] sm:$0xf]
      %v2340 = vld [vmem:[%s804 + $0x44] sm:$0xf]
      %v2341 = vld [vmem:[%s804 + $0x48] sm:$0xf]
      %v2342 = vld [vmem:[%s804 + $0x4c] sm:$0xf]
      %v2343 = vld [vmem:[%s804 + $0x50] sm:$0xf]
      %v2344 = vld [vmem:[%s804 + $0x54] sm:$0xf]
      %v2345 = vld [vmem:[%s804 + $0x58] sm:$0xf]
      %v2346 = vld [vmem:[%s804 + $0x5c] sm:$0xf]
      %v2347 = vld [vmem:[%s804 + $0x60] sm:$0xf]
      %v2348 = vld [vmem:[%s804 + $0x64] sm:$0xf]
      %v2349 = vld [vmem:[%s804 + $0x68] sm:$0xf]
      %v2350 = vld [vmem:[%s804 + $0x6c] sm:$0xf]
      %v2351 = vld [vmem:[%s804 + $0x70] sm:$0xf]
      %v2352 = vld [vmem:[%s804 + $0x74] sm:$0xf]
      %v2353 = vld [vmem:[%s804 + $0x78] sm:$0xf]
      %v2354 = vld [vmem:[%s804 + $0x7c] sm:$0xf]
      %v2355 = vld [vmem:[%s804 + $0x80] sm:$0xf]
      %v2356 = vld [vmem:[%s804 + $0x84] sm:$0xf]
      %v2357 = vld [vmem:[%s804 + $0x88] sm:$0xf]
      %v2358 = vld [vmem:[%s804 + $0x8c] sm:$0xf]
      %v2359 = vld [vmem:[%s804 + $0x90] sm:$0xf]
      %v2360 = vld [vmem:[%s804 + $0x94] sm:$0xf]
      %v2361 = vld [vmem:[%s804 + $0x98] sm:$0xf]
      %v2362 = vld [vmem:[%s804 + $0x9c] sm:$0xf]
      %v2363 = vld [vmem:[%s804 + $0xa0] sm:$0xf]
      %v2364 = vld [vmem:[%s804 + $0xa4] sm:$0xf]
      %v2365 = vld [vmem:[%s804 + $0xa8] sm:$0xf]
      %v2366 = vld [vmem:[%s804 + $0xac] sm:$0xf]
      %v2367 = vld [vmem:[%s804 + $0xb0] sm:$0xf]
      %v2368 = vld [vmem:[%s804 + $0xb4] sm:$0xf]
      %v2369 = vld [vmem:[%s804 + $0xb8] sm:$0xf]
      %v2370 = vld [vmem:[%s804 + $0xbc] sm:$0xf]
      %v2371 = vld [vmem:[%s804 + $0xc0] sm:$0xf]
      %v2372 = vld [vmem:[%s804 + $0xc4] sm:$0xf]
      %v2373 = vld [vmem:[%s804 + $0xc8] sm:$0xf]
      %v2374 = vld [vmem:[%s804 + $0xcc] sm:$0xf]
      %v2375 = vld [vmem:[%s804 + $0xd0] sm:$0xf]
      %v2376 = vld [vmem:[%s804 + $0xd4] sm:$0xf]
      %v2377 = vld [vmem:[%s804 + $0xd8] sm:$0xf]
      %v2378 = vld [vmem:[%s804 + $0xdc] sm:$0xf]
      %v2379 = vld [vmem:[%s804 + $0xe0] sm:$0xf]
      %v2380 = vld [vmem:[%s804 + $0xe4] sm:$0xf]
      %v2381 = vld [vmem:[%s804 + $0xe8] sm:$0xf]
      %v2382 = vld [vmem:[%s804 + $0xec] sm:$0xf]
      %v2383 = vld [vmem:[%s804 + $0xf0] sm:$0xf]
      %v2384 = vld [vmem:[%s804 + $0xf4] sm:$0xf]
      %v2385 = vld [vmem:[%s804 + $0xf8] sm:$0xf]
      %v2386 = vld [vmem:[%s804 + $0xfc] sm:$0xf]
      %v2387 = vpack.c.bf16 %v2319, %v2315
      %v2388 = vpack.c.bf16 %v2320, %v2316
      %v2389 = vpack.c.bf16 %v2321, %v2317
      %v2390 = vpack.c.bf16 %v2322, %v2318
      %v2455 = vunpack.c.l.b16 %v2323
      %v2456 = vunpack.c.l.b16 %v2324
      %v2457 = vunpack.c.l.b16 %v2325
      %v2458 = vunpack.c.l.b16 %v2326
      %v2459 = vunpack.c.l.b16 %v2327
      %v2460 = vunpack.c.l.b16 %v2328
      %v2461 = vunpack.c.l.b16 %v2329
      %v2462 = vunpack.c.l.b16 %v2330
      %v2463 = vunpack.c.l.b16 %v2331
      %v2464 = vunpack.c.l.b16 %v2332
      %v2465 = vunpack.c.l.b16 %v2333
      %v2466 = vunpack.c.l.b16 %v2334
      %v2467 = vunpack.c.l.b16 %v2335
      %v2468 = vunpack.c.l.b16 %v2336
      %v2469 = vunpack.c.l.b16 %v2337
      %v2470 = vunpack.c.l.b16 %v2338
      %v2471 = vunpack.c.l.b16 %v2339
      %v2472 = vunpack.c.l.b16 %v2340
      %v2473 = vunpack.c.l.b16 %v2341
      %v2474 = vunpack.c.l.b16 %v2342
      %v2475 = vunpack.c.l.b16 %v2343
      %v2476 = vunpack.c.l.b16 %v2344
      %v2477 = vunpack.c.l.b16 %v2345
      %v2478 = vunpack.c.l.b16 %v2346
      %v2479 = vunpack.c.l.b16 %v2347
      %v2480 = vunpack.c.l.b16 %v2348
      %v2481 = vunpack.c.l.b16 %v2349
      %v2482 = vunpack.c.l.b16 %v2350
      %v2483 = vunpack.c.l.b16 %v2351
      %v2484 = vunpack.c.l.b16 %v2352
      %v2485 = vunpack.c.l.b16 %v2353
      %v2486 = vunpack.c.l.b16 %v2354
      %v2487 = vunpack.c.l.b16 %v2355
      %v2488 = vunpack.c.l.b16 %v2356
      %v2489 = vunpack.c.l.b16 %v2357
      %v2490 = vunpack.c.l.b16 %v2358
      %v2491 = vunpack.c.l.b16 %v2359
      %v2492 = vunpack.c.l.b16 %v2360
      %v2493 = vunpack.c.l.b16 %v2361
      %v2494 = vunpack.c.l.b16 %v2362
      %v2495 = vunpack.c.l.b16 %v2363
      %v2496 = vunpack.c.l.b16 %v2364
      %v2497 = vunpack.c.l.b16 %v2365
      %v2498 = vunpack.c.l.b16 %v2366
      %v2499 = vunpack.c.l.b16 %v2367
      %v2500 = vunpack.c.l.b16 %v2368
      %v2501 = vunpack.c.l.b16 %v2369
      %v2502 = vunpack.c.l.b16 %v2370
      %v2503 = vunpack.c.l.b16 %v2371
      %v2504 = vunpack.c.l.b16 %v2372
      %v2505 = vunpack.c.l.b16 %v2373
      %v2506 = vunpack.c.l.b16 %v2374
      %v2507 = vunpack.c.l.b16 %v2375
      %v2508 = vunpack.c.l.b16 %v2376
      %v2509 = vunpack.c.l.b16 %v2377
      %v2510 = vunpack.c.l.b16 %v2378
      %v2511 = vunpack.c.l.b16 %v2379
      %v2512 = vunpack.c.l.b16 %v2380
      %v2513 = vunpack.c.l.b16 %v2381
      %v2514 = vunpack.c.l.b16 %v2382
      %v2515 = vunpack.c.l.b16 %v2383
      %v2516 = vunpack.c.l.b16 %v2384
      %v2517 = vunpack.c.l.b16 %v2385
      %v2518 = vunpack.c.l.b16 %v2386
      %v2519 = vpack.c.b16 %v2456, %v2455
      %v2520 = vpack.c.b16 %v2458, %v2457
      %v2521 = vpack.c.b16 %v2460, %v2459
      %v2522 = vpack.c.b16 %v2462, %v2461
      %v2523 = vpack.c.b16 %v2464, %v2463
      %v2524 = vpack.c.b16 %v2466, %v2465
      %v2525 = vpack.c.b16 %v2468, %v2467
      %v2526 = vpack.c.b16 %v2470, %v2469
      %v2527 = vpack.c.b16 %v2472, %v2471
      %v2528 = vpack.c.b16 %v2474, %v2473
      %v2529 = vpack.c.b16 %v2476, %v2475
      %v2530 = vpack.c.b16 %v2478, %v2477
      %v2531 = vpack.c.b16 %v2480, %v2479
      %v2532 = vpack.c.b16 %v2482, %v2481
      %v2533 = vpack.c.b16 %v2484, %v2483
      %v2534 = vpack.c.b16 %v2486, %v2485
      %v2535 = vpack.c.b16 %v2488, %v2487
      %v2536 = vpack.c.b16 %v2490, %v2489
      %v2537 = vpack.c.b16 %v2492, %v2491
      %v2538 = vpack.c.b16 %v2494, %v2493
      %v2539 = vpack.c.b16 %v2496, %v2495
      %v2540 = vpack.c.b16 %v2498, %v2497
      %v2541 = vpack.c.b16 %v2500, %v2499
      %v2542 = vpack.c.b16 %v2502, %v2501
      %v2543 = vpack.c.b16 %v2504, %v2503
      %v2544 = vpack.c.b16 %v2506, %v2505
      %v2545 = vpack.c.b16 %v2508, %v2507
      %v2546 = vpack.c.b16 %v2510, %v2509
      %v2547 = vpack.c.b16 %v2512, %v2511
      %v2548 = vpack.c.b16 %v2514, %v2513
      %v2549 = vpack.c.b16 %v2516, %v2515
      %v2550 = vpack.c.b16 %v2518, %v2517
      %2583 = vmatprep.subr.bf16.mxu0 0
      %2584 = vmatpush1.bf16.msra.mxu0 %v2519
      %2585 = vmatprep.subr.bf16.mxu0 0
      %2586 = vmatpush1.bf16.msra.mxu0 %v2520
      %2587 = vmatprep.subr.bf16.mxu0 0
      %2588 = vmatpush1.bf16.msra.mxu0 %v2521
      %2589 = vmatprep.subr.bf16.mxu0 0
      %2590 = vmatpush1.bf16.msra.mxu0 %v2522
      %2591 = vmatprep.subr.bf16.mxu0 0
      %2592 = vmatpush1.bf16.msra.mxu0 %v2523
      %2593 = vmatprep.subr.bf16.mxu0 0
      %2594 = vmatpush1.bf16.msra.mxu0 %v2524
      %2595 = vmatprep.subr.bf16.mxu0 0
      %2596 = vmatpush1.bf16.msra.mxu0 %v2525
      %2597 = vmatprep.subr.bf16.mxu0 0
      %2598 = vmatpush1.bf16.msra.mxu0 %v2526
      %2599 = vmatprep.subr.bf16.mxu0 0
      %2600 = vmatpush1.bf16.msra.mxu0 %v2527
      %2601 = vmatprep.subr.bf16.mxu0 0
      %2602 = vmatpush1.bf16.msra.mxu0 %v2528
      %2603 = vmatprep.subr.bf16.mxu0 0
      %2604 = vmatpush1.bf16.msra.mxu0 %v2529
      %2605 = vmatprep.subr.bf16.mxu0 0
      %2606 = vmatpush1.bf16.msra.mxu0 %v2530
      %2607 = vmatprep.subr.bf16.mxu0 0
      %2608 = vmatpush1.bf16.msra.mxu0 %v2531
      %2609 = vmatprep.subr.bf16.mxu0 0
      %2610 = vmatpush1.bf16.msra.mxu0 %v2532
      %2611 = vmatprep.subr.bf16.mxu0 0
      %2612 = vmatpush1.bf16.msra.mxu0 %v2533
      %2613 = vmatprep.subr.bf16.mxu0 0
      %2614 = vmatpush1.bf16.msra.mxu0 %v2534
      %2615 = vmatprep.mubr.bf16.mxu0 %v2388
      %2616 = vmatmul.mubr.bf16.gmra.mrb[0].mxu0 %v2387
      %v2617 = vpop.f32.mrb[0].mxu0
      %v2618 = vadd.f32 0.0, %v2617
      %v2619 = vpop.f32.mrb[0].mxu0
      %v2620 = vpop.f32.mrb[0].mxu0
      %v2621 = vadd.f32 0.0, %v2620
      %v2622 = vpop.f32.mrb[0].mxu0
      %2623 = vdwg.mxu0
      %2624 = vmatprep.subr.bf16.mxu0 0
      %2625 = vmatpush1.bf16.msra.mxu0 %v2535
      %2626 = vmatprep.subr.bf16.mxu0 0
      %2627 = vmatpush1.bf16.msra.mxu0 %v2536
      %2628 = vmatprep.subr.bf16.mxu0 0
      %2629 = vmatpush1.bf16.msra.mxu0 %v2537
      %2630 = vmatprep.subr.bf16.mxu0 0
      %2631 = vmatpush1.bf16.msra.mxu0 %v2538
      %2632 = vmatprep.subr.bf16.mxu0 0
      %2633 = vmatpush1.bf16.msra.mxu0 %v2539
      %2634 = vmatprep.subr.bf16.mxu0 0
      %2635 = vmatpush1.bf16.msra.mxu0 %v2540
      %2636 = vmatprep.subr.bf16.mxu0 0
      %2637 = vmatpush1.bf16.msra.mxu0 %v2541
      %2638 = vmatprep.subr.bf16.mxu0 0
      %2639 = vmatpush1.bf16.msra.mxu0 %v2542
      %2640 = vmatprep.subr.bf16.mxu0 0
      %2641 = vmatpush1.bf16.msra.mxu0 %v2543
      %2642 = vmatprep.subr.bf16.mxu0 0
      %2643 = vmatpush1.bf16.msra.mxu0 %v2544
      %2644 = vmatprep.subr.bf16.mxu0 0
      %2645 = vmatpush1.bf16.msra.mxu0 %v2545
      %2646 = vmatprep.subr.bf16.mxu0 0
      %2647 = vmatpush1.bf16.msra.mxu0 %v2546
      %2648 = vmatprep.subr.bf16.mxu0 0
      %2649 = vmatpush1.bf16.msra.mxu0 %v2547
      %2650 = vmatprep.subr.bf16.mxu0 0
      %2651 = vmatpush1.bf16.msra.mxu0 %v2548
      %2652 = vmatprep.subr.bf16.mxu0 0
      %2653 = vmatpush1.bf16.msra.mxu0 %v2549
      %2654 = vmatprep.subr.bf16.mxu0 0
      %2655 = vmatpush1.bf16.msra.mxu0 %v2550
      %2656 = vmatprep.mubr.bf16.mxu0 %v2390
      %2657 = vmatmul.mubr.bf16.gmra.mrb[0].mxu0 %v2389
      %v2658 = vpop.f32.mrb[0].mxu0
      %v2659 = vadd.f32 %v2618, %v2658
      %v2660 = vpop.f32.mrb[0].mxu0
      %v2661 = vpop.f32.mrb[0].mxu0
      %v2662 = vadd.f32 %v2621, %v2661
      %v2663 = vpop.f32.mrb[0].mxu0
      %2664 = vdwg.mxu0
      %v2665 = vadd.f32 %v1764, %v2659
      %v2666 = vadd.f32 %v1765, %v2662
      %v2667 = vld [vmem:[%s807] sm:$0x1]
      %v2669 = vlaneseq
      %v2670 = vshrl.u32 %v2669, 7
      %v2671 = vsub.s32 0, %v2670
      %v2672 = vrot.slane %v2667, %v2671
      %v2674 = vadd.f32 %v2665, %v2672
      %v2675 = vadd.f32 %v2666, %v2672
      %2676 = vst [vmem:[#allocation2] sm:$0xff] %v2674
      %2677 = vst [vmem:[#allocation2 + $0x8] sm:$0xff] %v2675
      %p2678 = scmp.eq.s32.totalorder %s35, 1
      // Predicated region
      $region101: #{climax_pm25_forward.3} parent=95 // pred_check
        %p2679 = pneg %p2678
      $region102: #{climax_pm25_forward.3} parent=95 // pred_check_branch
        %2681 = sbr.rel (%p2679) target = $region104
      $region103: #{climax_pm25_forward.3} parent=95 // pred_region
        %v2682 = vld [vmem:[%s13] sm:$0x1]
        %v2683 = vld [vmem:[%s14] sm:$0x1]
        %2684 = vadd.xlane.f32.xlu0 %v2674
        %v2685 = vpop.xlane.xlu0 %2684
        %2686 = vadd.xlane.f32.xlu0 %v2675
        %v2687 = vpop.xlane.xlu0 %2686
        %v2688 = vmul.f32 %v2685, %v830
        %v2689 = vmul.f32 %v2687, %v830
        %v2690 = vsub.f32 %v2674, %v2688
        %v2691 = vsub.f32 %v2675, %v2689
        %v2692 = vmul.f32 %v2690, %v2690
        %v2693 = vmul.f32 %v2691, %v2691
        %2694 = vadd.xlane.f32.xlu0 %v2692
        %v2695 = vpop.xlane.xlu0 %2694
        %2696 = vadd.xlane.f32.xlu0 %v2693
        %v2697 = vpop.xlane.xlu0 %2696
        %v2698 = vmul.f32 %v2695, %v830
        %v2699 = vmul.f32 %v2697, %v830
        %v2700 = vadd.f32 %v2698, 1e-05
        %v2701 = vadd.f32 %v2699, 1e-05
        %v2702 = vrsqrt.pop %v2700
        %v2703 = vrsqrt.pop %v2701
        %v2704 = vmul.f32 %v2690, %v2702
        %v2705 = vmul.f32 %v2691, %v2703
        %v2707 = vlaneseq
        %v2708 = vshrl.u32 %v2707, 7
        %v2709 = vsub.s32 0, %v2708
        %v2710 = vrot.slane %v2682, %v2709
        %v2712 = vmul.f32 %v2704, %v2710
        %v2713 = vmul.f32 %v2705, %v2710
        %v2715 = vlaneseq
        %v2716 = vshrl.u32 %v2715, 7
        %v2717 = vsub.s32 0, %v2716
        %v2718 = vrot.slane %v2683, %v2717
        %v2720 = vadd.f32 %v2712, %v2718
        %v2721 = vadd.f32 %v2713, %v2718
        %v2722 = vld [vmem:[%s15] sm:$0xf]
        %v2723 = vld [vmem:[%s15 + $0x4] sm:$0xf]
        %v2724 = vld [vmem:[%s15 + $0x8] sm:$0xf]
        %v2725 = vld [vmem:[%s15 + $0xc] sm:$0xf]
        %v2726 = vld [vmem:[%s15 + $0x10] sm:$0xf]
        %v2727 = vld [vmem:[%s15 + $0x14] sm:$0xf]
        %v2728 = vld [vmem:[%s15 + $0x18] sm:$0xf]
        %v2729 = vld [vmem:[%s15 + $0x1c] sm:$0xf]
        %v2730 = vld [vmem:[%s15 + $0x20] sm:$0xf]
        %v2731 = vld [vmem:[%s15 + $0x24] sm:$0xf]
        %v2732 = vld [vmem:[%s15 + $0x28] sm:$0xf]
        %v2733 = vld [vmem:[%s15 + $0x2c] sm:$0xf]
        %v2734 = vld [vmem:[%s15 + $0x30] sm:$0xf]
        %v2735 = vld [vmem:[%s15 + $0x34] sm:$0xf]
        %v2736 = vld [vmem:[%s15 + $0x38] sm:$0xf]
        %v2737 = vld [vmem:[%s15 + $0x3c] sm:$0xf]
        %v2738 = vpack.c.bf16 %v2721, %v2720
        %v2739 = vld [vmem:[%s16] sm:$0x1]
        %v2741 = vlaneseq
        %v2742 = vshrl.u32 %v2741, 7
        %v2743 = vsub.s32 0, %v2742
        %v2744 = vrot.slane %v2739, %v2743
        %v2762 = vunpack.c.l.b16 %v2722
        %v2763 = vunpack.c.l.b16 %v2723
        %v2764 = vunpack.c.l.b16 %v2724
        %v2765 = vunpack.c.l.b16 %v2725
        %v2766 = vunpack.c.l.b16 %v2726
        %v2767 = vunpack.c.l.b16 %v2727
        %v2768 = vunpack.c.l.b16 %v2728
        %v2769 = vunpack.c.l.b16 %v2729
        %v2770 = vunpack.c.l.b16 %v2730
        %v2771 = vunpack.c.l.b16 %v2731
        %v2772 = vunpack.c.l.b16 %v2732
        %v2773 = vunpack.c.l.b16 %v2733
        %v2774 = vunpack.c.l.b16 %v2734
        %v2775 = vunpack.c.l.b16 %v2735
        %v2776 = vunpack.c.l.b16 %v2736
        %v2777 = vunpack.c.l.b16 %v2737
        %v2778 = vpack.c.b16 %v2763, %v2762
        %v2779 = vpack.c.b16 %v2765, %v2764
        %v2780 = vpack.c.b16 %v2767, %v2766
        %v2781 = vpack.c.b16 %v2769, %v2768
        %v2782 = vpack.c.b16 %v2771, %v2770
        %v2783 = vpack.c.b16 %v2773, %v2772
        %v2784 = vpack.c.b16 %v2775, %v2774
        %v2785 = vpack.c.b16 %v2777, %v2776
        %2794 = vmatprep.subr.bf16.mxu0 0
        %2795 = vmatpush1.bf16.msra.mxu0 %v2778
        %2796 = vmatprep.subr.bf16.mxu0 0
        %2797 = vmatpush1.bf16.msra.mxu0 %v2779
        %2798 = vmatprep.subr.bf16.mxu0 0
        %2799 = vmatpush1.bf16.msra.mxu0 %v2780
        %2800 = vmatprep.subr.bf16.mxu0 0
        %2801 = vmatpush1.bf16.msra.mxu0 %v2781
        %2802 = vmatprep.subr.bf16.mxu0 0
        %2803 = vmatpush1.bf16.msra.mxu0 %v2782
        %2804 = vmatprep.subr.bf16.mxu0 0
        %2805 = vmatpush1.bf16.msra.mxu0 %v2783
        %2806 = vmatprep.subr.bf16.mxu0 0
        %2807 = vmatpush1.bf16.msra.mxu0 %v2784
        %2808 = vmatprep.subr.bf16.mxu0 0
        %2809 = vmatpush1.bf16.msra.mxu0 %v2785
        %2810 = vmatprep.subr.bf16.mxu0 0
        %2811 = vmatpush1.bf16.msra.mxu0 0
        %2812 = vmatprep.subr.bf16.mxu0 0
        %2813 = vmatpush1.bf16.msra.mxu0 0
        %2814 = vmatprep.subr.bf16.mxu0 0
        %2815 = vmatpush1.bf16.msra.mxu0 0
        %2816 = vmatprep.subr.bf16.mxu0 0
        %2817 = vmatpush1.bf16.msra.mxu0 0
        %2818 = vmatprep.subr.bf16.mxu0 0
        %2819 = vmatpush1.bf16.msra.mxu0 0
        %2820 = vmatprep.subr.bf16.mxu0 0
        %2821 = vmatpush1.bf16.msra.mxu0 0
        %2822 = vmatprep.subr.bf16.mxu0 0
        %2823 = vmatpush1.bf16.msra.mxu0 0
        %2824 = vmatprep.subr.bf16.mxu0 0
        %2825 = vmatpush1.bf16.msra.mxu0 0
        %2826 = vmatprep.mubr.bf16.mxu0 0
        %2827 = vmatmul.mubr.bf16.gmra.mrb[0].mxu0 %v2738
        %v2828 = vpop.f32.mrb[0].mxu0
        %v2829 = vadd.f32 %v2744, %v2828
        %v2830 = vpop.f32.mrb[0].mxu0
        %v2831 = vpop.f32.mrb[0].mxu0
        %v2832 = vadd.f32 %v2744, %v2831
        %v2833 = vpop.f32.mrb[0].mxu0
        %2834 = vdwg.mxu0
        %v2835 = vmul.f32 %v2829, 0.5
        %v2836 = vmul.f32 %v2832, 0.5
        %v2837 = vmul.f32 %v2829, 0.70710677
        %v2838 = vmul.f32 %v2832, 0.70710677
        %v2839 = vand.u32 2147483647, %v2837
        %v2840 = vand.u32 2147483647, %v2838
        %v2841 = vmul.f32 %v2839, 0.3275911
        %v2842 = vmul.f32 %v2840, 0.3275911
        %v2843 = vadd.f32 %v2841, 1.0
        %v2844 = vadd.f32 %v2842, 1.0
        %v2845 = vrcp.pop %v2843
        %v2846 = vmul.f32 1.0, %v2845
        %v2847 = vrcp.pop %v2844
        %v2848 = vmul.f32 1.0, %v2847
        %v2849 = vmul.f32 %v2846, 1.0614054
        %v2850 = vmul.f32 %v2848, 1.0614054
        %v2851 = vadd.f32 %v2849, -1.4531521
        %v2852 = vadd.f32 %v2850, -1.4531521
        %v2853 = vmul.f32 %v2851, %v2846
        %v2854 = vmul.f32 %v2852, %v2848
        %v2855 = vadd.f32 %v2853, 1.4214138
        %v2856 = vadd.f32 %v2854, 1.4214138
        %v2857 = vmul.f32 %v2855, %v2846
        %v2858 = vmul.f32 %v2856, %v2848
        %v2859 = vadd.f32 %v2857, -0.28449672
        %v2860 = vadd.f32 %v2858, -0.28449672
        %v2861 = vmul.f32 %v2859, %v2846
        %v2862 = vmul.f32 %v2860, %v2848
        %v2863 = vadd.f32 %v2861, 0.2548296
        %v2864 = vadd.f32 %v2862, 0.2548296
        %v2865 = vmul.f32 %v2863, %v2846
        %v2866 = vmul.f32 %v2864, %v2848
        %v2867 = vsub.f32 0.0, %v2839
        %v2868 = vsub.f32 0.0, %v2840
        %v2869 = vmul.f32 %v2867, %v2839
        %v2870 = vmul.f32 %v2868, %v2840
        %v2871 = vmul.f32 %v2869, 1.442695
        %v2872 = vpow.pop %v2871
        %v2873 = vmul.f32 %v2870, 1.442695
        %v2874 = vpow.pop %v2873
        %v2875 = vmul.f32 %v2865, %v2872
        %v2876 = vmul.f32 %v2866, %v2874
        %v2877 = vsub.f32 1.0, %v2875
        %v2878 = vsub.f32 1.0, %v2876
        %vm2879 = vcmp.lt.f32.partialorder %v2837, 0.0
        %vm2880 = vcmp.lt.f32.partialorder %v2838, 0.0
        %v2881 = vsub.f32 0.0, %v2877
        %v2882 = vsub.f32 0.0, %v2878
        %v2883 = vsel %vm2879, %v2881, %v2877
        %v2884 = vsel %vm2880, %v2882, %v2878
        %v2885 = vadd.f32 %v2883, 1.0
        %v2886 = vadd.f32 %v2884, 1.0
        %v2887 = vmul.f32 %v2835, %v2885
        %v2888 = vmul.f32 %v2836, %v2886
        %s2889 = scalar_lea.vmem %s15, 64
        %v2890 = vld [vmem:[%s2889] sm:$0xf]
        %v2891 = vld [vmem:[%s2889 + $0x4] sm:$0xf]
        %v2892 = vld [vmem:[%s2889 + $0x8] sm:$0xf]
        %v2893 = vld [vmem:[%s2889 + $0xc] sm:$0xf]
        %v2894 = vld [vmem:[%s2889 + $0x10] sm:$0xf]
        %v2895 = vld [vmem:[%s2889 + $0x14] sm:$0xf]
        %v2896 = vld [vmem:[%s2889 + $0x18] sm:$0xf]
        %v2897 = vld [vmem:[%s2889 + $0x1c] sm:$0xf]
        %v2898 = vld [vmem:[%s2889 + $0x20] sm:$0xf]
        %v2899 = vld [vmem:[%s2889 + $0x24] sm:$0xf]
        %v2900 = vld [vmem:[%s2889 + $0x28] sm:$0xf]
        %v2901 = vld [vmem:[%s2889 + $0x2c] sm:$0xf]
        %v2902 = vld [vmem:[%s2889 + $0x30] sm:$0xf]
        %v2903 = vld [vmem:[%s2889 + $0x34] sm:$0xf]
        %v2904 = vld [vmem:[%s2889 + $0x38] sm:$0xf]
        %v2905 = vld [vmem:[%s2889 + $0x3c] sm:$0xf]
        %v2906 = vpack.c.bf16 %v2888, %v2887
        %s2907 = scalar_lea.vmem %s16, 1
        %v2908 = vld [vmem:[%s2907] sm:$0x1]
        %v2910 = vlaneseq
        %v2911 = vshrl.u32 %v2910, 7
        %v2912 = vsub.s32 0, %v2911
        %v2913 = vrot.slane %v2908, %v2912
        %v2931 = vunpack.c.l.b16 %v2890
        %v2932 = vunpack.c.l.b16 %v2891
        %v2933 = vunpack.c.l.b16 %v2892
        %v2934 = vunpack.c.l.b16 %v2893
        %v2935 = vunpack.c.l.b16 %v2894
        %v2936 = vunpack.c.l.b16 %v2895
        %v2937 = vunpack.c.l.b16 %v2896
        %v2938 = vunpack.c.l.b16 %v2897
        %v2939 = vunpack.c.l.b16 %v2898
        %v2940 = vunpack.c.l.b16 %v2899
        %v2941 = vunpack.c.l.b16 %v2900
        %v2942 = vunpack.c.l.b16 %v2901
        %v2943 = vunpack.c.l.b16 %v2902
        %v2944 = vunpack.c.l.b16 %v2903
        %v2945 = vunpack.c.l.b16 %v2904
        %v2946 = vunpack.c.l.b16 %v2905
        %v2947 = vpack.c.b16 %v2932, %v2931
        %v2948 = vpack.c.b16 %v2934, %v2933
        %v2949 = vpack.c.b16 %v2936, %v2935
        %v2950 = vpack.c.b16 %v2938, %v2937
        %v2951 = vpack.c.b16 %v2940, %v2939
        %v2952 = vpack.c.b16 %v2942, %v2941
        %v2953 = vpack.c.b16 %v2944, %v2943
        %v2954 = vpack.c.b16 %v2946, %v2945
        %2963 = vmatprep.subr.bf16.mxu0 0
        %2964 = vmatpush1.bf16.msra.mxu0 %v2947
        %2965 = vmatprep.subr.bf16.mxu0 0
        %2966 = vmatpush1.bf16.msra.mxu0 %v2948
        %2967 = vmatprep.subr.bf16.mxu0 0
        %2968 = vmatpush1.bf16.msra.mxu0 %v2949
        %2969 = vmatprep.subr.bf16.mxu0 0
        %2970 = vmatpush1.bf16.msra.mxu0 %v2950
        %2971 = vmatprep.subr.bf16.mxu0 0
        %2972 = vmatpush1.bf16.msra.mxu0 %v2951
        %2973 = vmatprep.subr.bf16.mxu0 0
        %2974 = vmatpush1.bf16.msra.mxu0 %v2952
        %2975 = vmatprep.subr.bf16.mxu0 0
        %2976 = vmatpush1.bf16.msra.mxu0 %v2953
        %2977 = vmatprep.subr.bf16.mxu0 0
        %2978 = vmatpush1.bf16.msra.mxu0 %v2954
        %2979 = vmatprep.subr.bf16.mxu0 0
        %2980 = vmatpush1.bf16.msra.mxu0 0
        %2981 = vmatprep.subr.bf16.mxu0 0
        %2982 = vmatpush1.bf16.msra.mxu0 0
        %2983 = vmatprep.subr.bf16.mxu0 0
        %2984 = vmatpush1.bf16.msra.mxu0 0
        %2985 = vmatprep.subr.bf16.mxu0 0
        %2986 = vmatpush1.bf16.msra.mxu0 0
        %2987 = vmatprep.subr.bf16.mxu0 0
        %2988 = vmatpush1.bf16.msra.mxu0 0
        %2989 = vmatprep.subr.bf16.mxu0 0
        %2990 = vmatpush1.bf16.msra.mxu0 0
        %2991 = vmatprep.subr.bf16.mxu0 0
        %2992 = vmatpush1.bf16.msra.mxu0 0
        %2993 = vmatprep.subr.bf16.mxu0 0
        %2994 = vmatpush1.bf16.msra.mxu0 0
        %2995 = vmatprep.mubr.bf16.mxu0 0
        %2996 = vmatmul.mubr.bf16.gmra.mrb[0].mxu0 %v2906
        %v2997 = vpop.f32.mrb[0].mxu0
        %v2998 = vadd.f32 %v2913, %v2997
        %v2999 = vpop.f32.mrb[0].mxu0
        %v3000 = vpop.f32.mrb[0].mxu0
        %v3001 = vadd.f32 %v2913, %v3000
        %v3002 = vpop.f32.mrb[0].mxu0
        %3003 = vdwg.mxu0
        %v3004 = vmul.f32 %v2998, 0.5
        %v3005 = vmul.f32 %v3001, 0.5
        %v3006 = vmul.f32 %v2998, 0.70710677
        %v3007 = vmul.f32 %v3001, 0.70710677
        %v3008 = vand.u32 2147483647, %v3006
        %v3009 = vand.u32 2147483647, %v3007
        %v3010 = vmul.f32 %v3008, 0.3275911
        %v3011 = vmul.f32 %v3009, 0.3275911
        %v3012 = vadd.f32 %v3010, 1.0
        %v3013 = vadd.f32 %v3011, 1.0
        %v3014 = vrcp.pop %v3012
        %v3015 = vmul.f32 1.0, %v3014
        %v3016 = vrcp.pop %v3013
        %v3017 = vmul.f32 1.0, %v3016
        %v3018 = vmul.f32 %v3015, 1.0614054
        %v3019 = vmul.f32 %v3017, 1.0614054
        %v3020 = vadd.f32 %v3018, -1.4531521
        %v3021 = vadd.f32 %v3019, -1.4531521
        %v3022 = vmul.f32 %v3020, %v3015
        %v3023 = vmul.f32 %v3021, %v3017
        %v3024 = vadd.f32 %v3022, 1.4214138
        %v3025 = vadd.f32 %v3023, 1.4214138
        %v3026 = vmul.f32 %v3024, %v3015
        %v3027 = vmul.f32 %v3025, %v3017
        %v3028 = vadd.f32 %v3026, -0.28449672
        %v3029 = vadd.f32 %v3027, -0.28449672
        %v3030 = vmul.f32 %v3028, %v3015
        %v3031 = vmul.f32 %v3029, %v3017
        %v3032 = vadd.f32 %v3030, 0.2548296
        %v3033 = vadd.f32 %v3031, 0.2548296
        %v3034 = vmul.f32 %v3032, %v3015
        %v3035 = vmul.f32 %v3033, %v3017
        %v3036 = vsub.f32 0.0, %v3008
        %v3037 = vsub.f32 0.0, %v3009
        %v3038 = vmul.f32 %v3036, %v3008
        %v3039 = vmul.f32 %v3037, %v3009
        %v3040 = vmul.f32 %v3038, 1.442695
        %v3041 = vpow.pop %v3040
        %v3042 = vmul.f32 %v3039, 1.442695
        %v3043 = vpow.pop %v3042
        %v3044 = vmul.f32 %v3034, %v3041
        %v3045 = vmul.f32 %v3035, %v3043
        %v3046 = vsub.f32 1.0, %v3044
        %v3047 = vsub.f32 1.0, %v3045
        %vm3048 = vcmp.lt.f32.partialorder %v3006, 0.0
        %vm3049 = vcmp.lt.f32.partialorder %v3007, 0.0
        %v3050 = vsub.f32 0.0, %v3046
        %v3051 = vsub.f32 0.0, %v3047
        %v3052 = vsel %vm3048, %v3050, %v3046
        %v3053 = vsel %vm3049, %v3051, %v3047
        %v3054 = vadd.f32 %v3052, 1.0
        %v3055 = vadd.f32 %v3053, 1.0
        %v3056 = vmul.f32 %v3004, %v3054
        %v3057 = vmul.f32 %v3005, %v3055
        %v3058 = vld [vmem:[%s17] sm:$0xf]
        %v3059 = vld [vmem:[%s17 + $0x4] sm:$0xf]
        %v3060 = vld [vmem:[%s17 + $0x8] sm:$0xf]
        %v3061 = vld [vmem:[%s17 + $0xc] sm:$0xf]
        %v3062 = vld [vmem:[%s17 + $0x10] sm:$0xf]
        %v3063 = vld [vmem:[%s17 + $0x14] sm:$0xf]
        %v3064 = vld [vmem:[%s17 + $0x18] sm:$0xf]
        %v3065 = vld [vmem:[%s17 + $0x1c] sm:$0xf]
        %v3066 = vld [vmem:[%s17 + $0x20] sm:$0xf]
        %v3067 = vld [vmem:[%s17 + $0x24] sm:$0xf]
        %v3068 = vld [vmem:[%s17 + $0x28] sm:$0xf]
        %v3069 = vld [vmem:[%s17 + $0x2c] sm:$0xf]
        %v3070 = vld [vmem:[%s17 + $0x30] sm:$0xf]
        %v3071 = vld [vmem:[%s17 + $0x34] sm:$0xf]
        %v3072 = vld [vmem:[%s17 + $0x38] sm:$0xf]
        %v3073 = vld [vmem:[%s17 + $0x3c] sm:$0xf]
        %v3074 = vpack.c.bf16 %v3057, %v3056
        %v3075 = vld [vmem:[%s18] sm:$0x1]
        %v3077 = vlaneseq
        %v3078 = vshrl.u32 %v3077, 7
        %v3079 = vsub.s32 0, %v3078
        %v3080 = vrot.slane %v3075, %v3079
        %v3098 = vunpack.c.l.b16 %v3058
        %v3099 = vunpack.c.l.b16 %v3059
        %v3100 = vunpack.c.l.b16 %v3060
        %v3101 = vunpack.c.l.b16 %v3061
        %v3102 = vunpack.c.l.b16 %v3062
        %v3103 = vunpack.c.l.b16 %v3063
        %v3104 = vunpack.c.l.b16 %v3064
        %v3105 = vunpack.c.l.b16 %v3065
        %v3106 = vunpack.c.l.b16 %v3066
        %v3107 = vunpack.c.l.b16 %v3067
        %v3108 = vunpack.c.l.b16 %v3068
        %v3109 = vunpack.c.l.b16 %v3069
        %v3110 = vunpack.c.l.b16 %v3070
        %v3111 = vunpack.c.l.b16 %v3071
        %v3112 = vunpack.c.l.b16 %v3072
        %v3113 = vunpack.c.l.b16 %v3073
        %v3114 = vpack.c.b16 %v3099, %v3098
        %v3115 = vpack.c.b16 %v3101, %v3100
        %v3116 = vpack.c.b16 %v3103, %v3102
        %v3117 = vpack.c.b16 %v3105, %v3104
        %v3118 = vpack.c.b16 %v3107, %v3106
        %v3119 = vpack.c.b16 %v3109, %v3108
        %v3120 = vpack.c.b16 %v3111, %v3110
        %v3121 = vpack.c.b16 %v3113, %v3112
        %3130 = vmatprep.subr.bf16.mxu0 0
        %3131 = vmatpush1.bf16.msra.mxu0 %v3114
        %3132 = vmatprep.subr.bf16.mxu0 0
        %3133 = vmatpush1.bf16.msra.mxu0 %v3115
        %3134 = vmatprep.subr.bf16.mxu0 0
        %3135 = vmatpush1.bf16.msra.mxu0 %v3116
        %3136 = vmatprep.subr.bf16.mxu0 0
        %3137 = vmatpush1.bf16.msra.mxu0 %v3117
        %3138 = vmatprep.subr.bf16.mxu0 0
        %3139 = vmatpush1.bf16.msra.mxu0 %v3118
        %3140 = vmatprep.subr.bf16.mxu0 0
        %3141 = vmatpush1.bf16.msra.mxu0 %v3119
        %3142 = vmatprep.subr.bf16.mxu0 0
        %3143 = vmatpush1.bf16.msra.mxu0 %v3120
        %3144 = vmatprep.subr.bf16.mxu0 0
        %3145 = vmatpush1.bf16.msra.mxu0 %v3121
        %3146 = vmatprep.subr.bf16.mxu0 0
        %3147 = vmatpush1.bf16.msra.mxu0 0
        %3148 = vmatprep.subr.bf16.mxu0 0
        %3149 = vmatpush1.bf16.msra.mxu0 0
        %3150 = vmatprep.subr.bf16.mxu0 0
        %3151 = vmatpush1.bf16.msra.mxu0 0
        %3152 = vmatprep.subr.bf16.mxu0 0
        %3153 = vmatpush1.bf16.msra.mxu0 0
        %3154 = vmatprep.subr.bf16.mxu0 0
        %3155 = vmatpush1.bf16.msra.mxu0 0
        %3156 = vmatprep.subr.bf16.mxu0 0
        %3157 = vmatpush1.bf16.msra.mxu0 0
        %3158 = vmatprep.subr.bf16.mxu0 0
        %3159 = vmatpush1.bf16.msra.mxu0 0
        %3160 = vmatprep.subr.bf16.mxu0 0
        %3161 = vmatpush1.bf16.msra.mxu0 0
        %3162 = vmatprep.mubr.bf16.mxu0 0
        %3163 = vmatmul.mubr.bf16.gmra.mrb[0].mxu0 %v3074
        %v3164 = vpop.f32.mrb[0].mxu0
        %v3165 = vadd.f32 %v3080, %v3164
        %v3166 = vpop.f32.mrb[0].mxu0
        %v3167 = vpop.f32.mrb[0].mxu0
        %v3168 = vadd.f32 %v3080, %v3167
        %v3169 = vpop.f32.mrb[0].mxu0
        %3170 = vdwg.mxu0
        %3171 = vst [vmem:[%s812] sm:$0xff] %v3165
        %3172 = vst [vmem:[%s812 + $0x8] sm:$0xff] %v3168
      $region104: #{climax_pm25_forward.3} parent=95 // pred_fallthru
        _
      %p3173 = scmp.lt.s32.totalorder %s34, 1
      %s3174 = scalar_select %p3173, %s34, 1
      %s3175 = smul.addr %s3174, 2
      %s3176 = smul.addr %s3175, 8
      %s3177 = scalar_lea.vmem %s19, %s3176
      // Predicated region
      $region105: #{climax_pm25_forward.3} parent=95 // pred_check
        %p3178 = pneg %p524
      $region106: #{climax_pm25_forward.3} parent=95 // pred_check_branch
        %3180 = sbr.rel (%p3178) target = $region108
      $region107: #{climax_pm25_forward.3} parent=95 // pred_region
        _
      $region108: #{climax_pm25_forward.3} parent=95 // pred_fallthru
        _
    $region96: #{climax_pm25_forward.3} parent=5 // pred_fallthru
      _
    %p3181 = scmp.le.s32.totalorder 2, %s25
    // Predicated region
    $region109: #{climax_pm25_forward.3} parent=5 // pred_check
      %p3182 = pneg %p3181
    $region110: #{climax_pm25_forward.3} parent=5 // pred_check_branch
      %3184 = sbr.rel (%p3182) target = $region112
    $region111: #{climax_pm25_forward.3} parent=5 // pred_region
      %s3185 = ssub.s32 %s25, 2
      // Predicated region
      $region113: #{climax_pm25_forward.3} parent=111 // pred_check
        %p3186 = pneg %p530
      $region114: #{climax_pm25_forward.3} parent=111 // pred_check_branch
        %3188 = sbr.rel (%p3186) target = $region116
      $region115: #{climax_pm25_forward.3} parent=111 // pred_region
        %p3189 = scmp.lt.s32.totalorder %s36, 1
        %s3190 = scalar_select %p3189, %s36, 1
        %s3191 = smul.addr %s3190, 2
        %s3192 = smul.addr %s3191, 8
        %s3193 = scalar_lea.vmem %s19, %s3192
      $region116: #{climax_pm25_forward.3} parent=111 // pred_fallthru
        _
    $region112: #{climax_pm25_forward.3} parent=5 // pred_fallthru
      _
  $region6: #{climax_pm25_forward.3} parent=0 // loop_footer
    %s29 = sadd.s32 1, %s25
  $region7: #{climax_pm25_forward.3} parent=0 // loop_footer_branch
    %24 = sbr.rel target = $region3
  $region8: #{climax_pm25_forward.3} parent=0 // loop_exit
    _

</llo_original>
